<compile_context>
chip_gen: v7x
topology: tpu7x:2x2x1
jax: 0.10.0
libtpu: 0.0.40
codegen_flags: <defaults>
</compile_context>

<pallas_src>
import functools
import math

import jax
import jax.numpy as jnp
from jax.experimental import pallas as pl
from jax.experimental.pallas import tpu as pltpu

LANE = 128                      # TPU vreg lane width

# Matmul operand dtype (accumulation is always f32 via preferred_element_type).
MXU_DTYPE = jnp.bfloat16
# Inter-layer sequence activation dtype (HBM between LSTM layers).
SEQ_DTYPE = jnp.bfloat16
# Classifier-head weights stay f32 (tiny matmuls; keeps log_softmax numerics tight).
HEAD_DTYPE = jnp.float32
# Batch (sublane) padding: 16 keeps bf16 (16,128) tiles unmasked; 8 suffices for f32.
BATCH_PAD = 16 if SEQ_DTYPE == jnp.bfloat16 else 8


def _round_up(x, m):
    return (x + m - 1) // m * m


def _nbytes(a):
    return math.prod(a.shape) * jnp.dtype(a.dtype).itemsize


_VMEM = pl.BlockSpec(memory_space=pltpu.MemorySpace.VMEM)


# ----------------------------------------------------------------------------
# In-kernel helpers
# ----------------------------------------------------------------------------
def _run_direction(x_ref, w_ih_ref, w_hh_ref, b_ref, gx_scr,
                   out_ref=None, col_off=0, reverse=False):
    """One LSTM direction over the full sequence (traced inline into a kernel).

    x_ref   : (S, Bp, Din)      time-major input (VMEM; f32 or bf16)
    w_ih_ref: (Din, 4*Hp)       pre-transposed, gate blocks padded to Hp lanes (bf16)
    w_hh_ref: (Hp, 4*Hp)        pre-transposed (bf16)
    b_ref   : (1, 4*Hp)         b_ih + b_hh, gate-block padded (f32)
    gx_scr  : (S, Bp, 4*Hp)     f32 scratch for the hoisted input projection
    out_ref : (S, Bp, ndir*Hp)  optional per-step hidden-state output (SEQ_DTYPE)

    Returns the final hidden state (Bp, Hp) f32.
    """
    S, Bp, Din = x_ref.shape
    Hp = w_hh_ref.shape[0]

    # Hoisted input projection: one big MXU matmul; bias broadcast happens once.
    # Operands in MXU_DTYPE, accumulation + scratch in f32.
    x2d = x_ref[...].reshape(S * Bp, Din).astype(w_ih_ref.dtype)
    gx_scr[...] = (
        jnp.dot(x2d, w_ih_ref[...], preferred_element_type=jnp.float32) + b_ref[...]
    ).reshape(S, Bp, 4 * Hp)

    def step(k, carry):
        h, c = carry                                   # f32, vreg-resident carries
        t = (S - 1 - k) if reverse else k
        # TODO(synk): stage W_hh in MXU weight regs once per direction via
        # pltpu.matmul_push_rhs / matmul_acc_lhs to kill the per-step weight reload.
        gates = gx_scr[t] + jnp.dot(h.astype(w_hh_ref.dtype), w_hh_ref[...],
                                    preferred_element_type=jnp.float32)
        # Gate blocks are padded to Hp (multiple of 128) -> lane-tile aligned slices.
        i_g = jax.nn.sigmoid(gates[:, 0 * Hp:1 * Hp])
        f_g = jax.nn.sigmoid(gates[:, 1 * Hp:2 * Hp])
        g_g = jnp.tanh(gates[:, 2 * Hp:3 * Hp])
        o_g = jax.nn.sigmoid(gates[:, 3 * Hp:4 * Hp])
        c_new = f_g * c + i_g * g_g
        h_new = o_g * jnp.tanh(c_new)
        if out_ref is not None:
            # Lane-dense (Bp, 128) store; bf16 cast happens on store.
            out_ref[t, :, pl.ds(col_off, Hp)] = h_new.astype(out_ref.dtype)
        return (h_new, c_new)

    h0 = jnp.zeros((Bp, Hp), jnp.float32)
    c0 = jnp.zeros((Bp, Hp), jnp.float32)
    # Full unroll for short sequences; partial unroll (4) for long ones so the LLO
    # scheduler can overlap gx loads / W_hh reload / MXU / EUP across adjacent steps.
    unroll = S if S <= 32 else 4
    h_last, _ = jax.lax.fori_loop(0, S, step, (h0, c0), unroll=unroll)
    return h_last


# ----------------------------------------------------------------------------
# Pallas kernels
# ----------------------------------------------------------------------------
def _lstm_layer_kernel(*refs, bidirectional):
    """One (bi)LSTM layer producing the full sequence output (intermediate layers)."""
    if bidirectional:
        (x_ref, wif, whf, bf, wib, whb, bb, out_ref, gx_scr) = refs
    else:
        (x_ref, wif, whf, bf, out_ref, gx_scr) = refs
    Hp = whf.shape[0]
    # TODO(synk): on v7x, split the two directions across the 2 TensorCores via a
    # grid axis of size 2 with dimension_semantics=("parallel",) (stacked weights,
    # output last dim blocked by Hp); they run sequentially on one TC here.
    _run_direction(x_ref, wif, whf, bf, gx_scr,
                   out_ref=out_ref, col_off=0, reverse=False)
    if bidirectional:
        _run_direction(x_ref, wib, whb, bb, gx_scr,
                       out_ref=out_ref, col_off=Hp, reverse=True)


def _lstm_final_head_kernel(*refs, bidirectional, out_dim):
    """Final (bi)LSTM layer fused with fc1 -> relu -> fc2 -> log_softmax.

    Only out[-1] of the final layer feeds the head, so the forward direction keeps
    just its last hidden state (no per-step HBM writeback) and the backward half of
    out[-1] is a single LSTM step on x[S-1] (first step of the reverse recurrence,
    valid only because the initial (h, c) are zero).
    """
    if bidirectional:
        (x_ref, wif, whf, bf, wib, whb, bb,
         w1f, w1b, b1, w2, b2, out_ref, gx_scr) = refs
    else:
        (x_ref, wif, whf, bf, w1f, b1, w2, b2, out_ref, gx_scr) = refs
    S = x_ref.shape[0]
    Hp = whf.shape[0]

    # Forward direction: full recurrence, final state only (vreg carry).
    h_fwd = _run_direction(x_ref, wif, whf, bf, gx_scr, out_ref=None, reverse=False)

    if bidirectional:
        gates_b = (jnp.dot(x_ref[S - 1].astype(wib.dtype), wib[...],
                           preferred_element_type=jnp.float32) + bb[...])
        i_g = jax.nn.sigmoid(gates_b[:, 0 * Hp:1 * Hp])
        g_g = jnp.tanh(gates_b[:, 2 * Hp:3 * Hp])
        o_g = jax.nn.sigmoid(gates_b[:, 3 * Hp:4 * Hp])
        h_bwd = o_g * jnp.tanh(i_g * g_g)            # zero initial (h, c)

    # Fused classifier head (f32 weights, f32 math).
    z1 = jnp.dot(h_fwd.astype(w1f.dtype), w1f[...], preferred_element_type=jnp.float32)
    if bidirectional:
        z1 = z1 + jnp.dot(h_bwd.astype(w1b.dtype), w1b[...],
                          preferred_element_type=jnp.float32)
    z1 = jnp.maximum(z1 + b1[...], 0.0)
    z2 = jnp.dot(z1.astype(w2.dtype), w2[...],
                 preferred_element_type=jnp.float32) + b2[...]
    # Mask padded logit lanes so log_softmax only sees the real out_dim classes.
    lane = jax.lax.broadcasted_iota(jnp.int32, z2.shape, 1)
    z2 = jnp.where(lane < out_dim, z2, jnp.float32(-1e30))
    m = jnp.max(z2, axis=1, keepdims=True)
    lse = jnp.log(jnp.sum(jnp.exp(z2 - m), axis=1, keepdims=True)) + m
    out_ref[...] = z2 - lse


# ----------------------------------------------------------------------------
# pallas_call wrappers
# ----------------------------------------------------------------------------
def _vmem_limit(args, out_shape, scratch_bytes):
    """Scoped-VMEM request sized from actual resident buffers (+4 MiB headroom)."""
    need = sum(_nbytes(a) for a in args)
    need += math.prod(out_shape.shape) * jnp.dtype(out_shape.dtype).itemsize
    need += scratch_bytes
    return int(min(128 * 1024 * 1024, max(need + (4 << 20), 32 << 20)))


def lstm_layer(x, dir_params, *, bidirectional):
    """One fused (bi)LSTM layer: x (S, Bp, Din) -> (S, Bp, num_dirs*Hp) in SEQ_DTYPE."""
    S, Bp, _ = x.shape
    Hp = dir_params[0][1].shape[0]
    num_dirs = 2 if bidirectional else 1
    args = [x]
    for d in range(num_dirs):
        args += list(dir_params[d])
    out_shape = jax.ShapeDtypeStruct((S, Bp, num_dirs * Hp), SEQ_DTYPE)
    gx_bytes = S * Bp * 4 * Hp * 4
    # TODO(synk): for very long sequences (v7x 64 MiB VMEM) switch to a pipelined
    # grid over S chunks (persistent h/c scratch, pl.when reset at chunk 0, reversed
    # index_map for the backward pass) instead of whole-sequence VMEM residency.
    return pl.pallas_call(
        functools.partial(_lstm_layer_kernel, bidirectional=bidirectional),
        out_shape=out_shape,
        in_specs=[_VMEM] * len(args),
        out_specs=_VMEM,
        scratch_shapes=[
            pltpu.VMEM((S, Bp, 4 * Hp), jnp.float32),  # hoisted input projection
        ],
        compiler_params=pltpu.CompilerParams(
            vmem_limit_bytes=_vmem_limit(args, out_shape, gx_bytes)),
    )(*args)


def lstm_final_with_head(x, dir_params, head_params, *, bidirectional, out_dim):
    """Final (bi)LSTM layer fused with the classifier head -> (Bp, Op) log-probs."""
    S, Bp, _ = x.shape
    Hp = dir_params[0][1].shape[0]
    Op = head_params[-2].shape[1]
    num_dirs = 2 if bidirectional else 1
    args = [x]
    for d in range(num_dirs):
        args += list(dir_params[d])
    args += list(head_params)
    out_shape = jax.ShapeDtypeStruct((Bp, Op), jnp.float32)
    gx_bytes = S * Bp * 4 * Hp * 4
    return pl.pallas_call(
        functools.partial(_lstm_final_head_kernel,
                          bidirectional=bidirectional, out_dim=out_dim),
        out_shape=out_shape,
        in_specs=[_VMEM] * len(args),
        out_specs=_VMEM,
        scratch_shapes=[
            pltpu.VMEM((S, Bp, 4 * Hp), jnp.float32),
        ],
        compiler_params=pltpu.CompilerParams(
            vmem_limit_bytes=_vmem_limit(args, out_shape, gx_bytes)),
    )(*args)


def lstm_classifier_forward(X, prep, *, bidirectional, num_layers, out_dim):
    """Full forward pass. X: (B, S) int32 token ids -> (B, out_dim) log-probs."""
    B, S = X.shape
    Bp = _round_up(B, BATCH_PAD)
    Xp = jnp.pad(X, ((0, Bp - B), (0, 0)))             # pad batch (sublane multiple)
    # Gather time-major directly: transposing the tiny (B, S) index array is free and
    # avoids a full (Bp, S, Ep) HBM transpose of the embedded activations.
    x = jnp.take(prep["embedding"], Xp.T, axis=0)      # (S, Bp, Ep) == permute(1,0,2)
    # NOTE: recur_dropout / dropout are identity in eval mode.
    for layer in range(num_layers - 1):
        x = lstm_layer(x, prep["lstm"][layer], bidirectional=bidirectional)
    logp = lstm_final_with_head(x, prep["lstm"][num_layers - 1], prep["head"],
                                bidirectional=bidirectional, out_dim=out_dim)
    return logp[:B, :out_dim]


# ----------------------------------------------------------------------------
# Host-side, one-time weight preparation (transpose + tile padding + dtype cast)
# ----------------------------------------------------------------------------
def prepare_params(params, *, emb_dim, hidden, out_dim, bidirectional, num_layers,
                   mxu_dtype=MXU_DTYPE, head_dtype=HEAD_DTYPE):
    num_dirs = 2 if bidirectional else 1
    Hp = _round_up(hidden, LANE)
    Ep = _round_up(emb_dim, LANE)
    Op = _round_up(out_dim, LANE)

    def gate_pad(w_t):
        # (rows, 4*hidden) -> (rows, 4*Hp); gate k occupies lanes [k*Hp, k*Hp+hidden)
        rows = w_t.shape[0]
        out = jnp.zeros((rows, 4 * Hp), jnp.float32)
        for k in range(4):
            out = out.at[:, k * Hp:k * Hp + hidden].set(
                w_t[:, k * hidden:(k + 1) * hidden])
        return out

    prep = {"embedding": jnp.pad(params["embedding"], ((0, 0), (0, Ep - emb_dim)))}

    layers = []
    for layer in range(num_layers):
        if layer == 0:
            segs = [(0, emb_dim, Ep)]                              # (src, real, padded)
        else:
            segs = [(d * hidden, hidden, Hp) for d in range(num_dirs)]
        in_pad = sum(p for _, _, p in segs)
        dirs = []
        for d in range(num_dirs):
            w_ih, w_hh, b = params["lstm"][(layer, d)]
            w_ih_t = gate_pad(jnp.transpose(w_ih))                 # (in_real, 4*Hp)
            w_ih_p = jnp.zeros((in_pad, 4 * Hp), jnp.float32)
            row = 0
            for src, ln, padlen in segs:
                w_ih_p = w_ih_p.at[row:row + ln].set(w_ih_t[src:src + ln])
                row += padlen
            w_hh_p = jnp.zeros((Hp, 4 * Hp), jnp.float32)
            w_hh_p = w_hh_p.at[:hidden].set(gate_pad(jnp.transpose(w_hh)))
            b_p = gate_pad(b.reshape(1, 4 * hidden))               # bias stays f32
            dirs.append((w_ih_p.astype(mxu_dtype), w_hh_p.astype(mxu_dtype), b_p))
        layers.append(tuple(dirs))
    prep["lstm"] = layers

    # Classifier head, split per direction so the kernel never concatenates h_last.
    fc1_w, fc1_b = params["fc1_w"], params["fc1_b"]
    fc2_w, fc2_b = params["fc2_w"], params["fc2_b"]

    def pad_fc1(w_part):                                           # (hidden, hidden)
        out = jnp.zeros((Hp, Hp), jnp.float32)
        return out.at[:hidden, :hidden].set(jnp.transpose(w_part))

    b1 = jnp.zeros((1, Hp), jnp.float32).at[:, :hidden].set(fc1_b)
    w2 = jnp.zeros((Hp, Op), jnp.float32).at[:hidden, :out_dim].set(jnp.transpose(fc2_w))
    b2 = jnp.zeros((1, Op), jnp.float32).at[:, :out_dim].set(fc2_b)
    if bidirectional:
        prep["head"] = (pad_fc1(fc1_w[:, :hidden]).astype(head_dtype),
                        pad_fc1(fc1_w[:, hidden:2 * hidden]).astype(head_dtype),
                        b1, w2.astype(head_dtype), b2)
    else:
        prep["head"] = (pad_fc1(fc1_w).astype(head_dtype), b1, w2.astype(head_dtype), b2)
    return prep


# ----------------------------------------------------------------------------
# Deterministic parameter init (PyTorch-style layout and uniform ranges)
# ----------------------------------------------------------------------------
def init_params(key, *, vocab, emb_dim, hidden, out_dim, bidirectional, num_layers):
    num_dirs = 2 if bidirectional else 1
    k_emb, k_lstm, k_fc1, k_fc2 = jax.random.split(key, 4)

    params = {"embedding": jax.random.normal(k_emb, (vocab, emb_dim), jnp.float32)}

    bound = 1.0 / jnp.sqrt(hidden)
    lstm = {}
    lk = k_lstm
    for layer in range(num_layers):
        in_dim = emb_dim if layer == 0 else hidden * num_dirs
        for d in range(num_dirs):
            lk, k1, k2, k3, k4 = jax.random.split(lk, 5)
            w_ih = jax.random.uniform(k1, (4 * hidden, in_dim), jnp.float32, -bound, bound)
            w_hh = jax.random.uniform(k2, (4 * hidden, hidden), jnp.float32, -bound, bound)
            b_ih = jax.random.uniform(k3, (4 * hidden,), jnp.float32, -bound, bound)
            b_hh = jax.random.uniform(k4, (4 * hidden,), jnp.float32, -bound, bound)
            lstm[(layer, d)] = (w_ih, w_hh, (b_ih + b_hh).reshape(1, 4 * hidden))
    params["lstm"] = lstm

    fc1_in = hidden * num_dirs
    b1 = 1.0 / jnp.sqrt(fc1_in)
    k_fc1, ka, kb = jax.random.split(k_fc1, 3)
    params["fc1_w"] = jax.random.uniform(ka, (hidden, fc1_in), jnp.float32, -b1, b1)
    params["fc1_b"] = jax.random.uniform(kb, (1, hidden), jnp.float32, -b1, b1)

    b2 = 1.0 / jnp.sqrt(hidden)
    k_fc2, kc, kd = jax.random.split(k_fc2, 3)
    params["fc2_w"] = jax.random.uniform(kc, (out_dim, hidden), jnp.float32, -b2, b2)
    params["fc2_b"] = jax.random.uniform(kd, (1, out_dim), jnp.float32, -b2, b2)
    return params


# ----------------------------------------------------------------------------
# Pure-JAX f32 reference (PyTorch LSTM semantics) for validation
# ----------------------------------------------------------------------------
def reference_forward(X, params, *, bidirectional, num_layers):
    num_dirs = 2 if bidirectional else 1
    hidden = params["lstm"][(0, 0)][1].shape[1]
    B = X.shape[0]
    emb = jnp.take(params["embedding"], X, axis=0)
    out = jnp.transpose(emb, (1, 0, 2))                    # (S, B, E)

    def run(x_seq, w_ih, w_hh, b):
        def step(carry, x_t):
            h, c = carry
            gates = x_t @ w_ih.T + h @ w_hh.T + b[0]
            i, f, g, o = jnp.split(gates, 4, axis=1)
            c = jax.nn.sigmoid(f) * c + jax.nn.sigmoid(i) * jnp.tanh(g)
            h = jax.nn.sigmoid(o) * jnp.tanh(c)
            return (h, c), h
        init = (jnp.zeros((B, hidden), jnp.float32), jnp.zeros((B, hidden), jnp.float32))
        return jax.lax.scan(step, init, x_seq)[1]

    for layer in range(num_layers):
        ys = []
        for d in range(num_dirs):
            w_ih, w_hh, b = params["lstm"][(layer, d)]
            xin = out if d == 0 else out[::-1]
            y = run(xin, w_ih, w_hh, b)
            ys.append(y if d == 0 else y[::-1])
        out = jnp.concatenate(ys, axis=-1)
    h = out[-1]
    z1 = jnp.maximum(h @ params["fc1_w"].T + params["fc1_b"][0], 0.0)
    z2 = z1 @ params["fc2_w"].T + params["fc2_b"][0]
    return jax.nn.log_softmax(z2, axis=1)


# ----------------------------------------------------------------------------
# Demo
# ----------------------------------------------------------------------------
if __name__ == "__main__":
    BATCH, SEQ = 2, 8
    VOCAB, EMB, HIDDEN, OUT = 32, 16, 32, 5
    BIDIRECTIONAL, LAYERS = True, 2

    key = jax.random.PRNGKey(0)
    k_params, k_x = jax.random.split(key)
    params = init_params(k_params, vocab=VOCAB, emb_dim=EMB, hidden=HIDDEN,
                         out_dim=OUT, bidirectional=BIDIRECTIONAL, num_layers=LAYERS)
    prep = prepare_params(params, emb_dim=EMB, hidden=HIDDEN, out_dim=OUT,
                          bidirectional=BIDIRECTIONAL, num_layers=LAYERS)
    X = jax.random.randint(k_x, (BATCH, SEQ), 0, VOCAB, dtype=jnp.int32)

    fwd = jax.jit(functools.partial(lstm_classifier_forward,
                                    bidirectional=BIDIRECTIONAL,
                                    num_layers=LAYERS, out_dim=OUT))
    logp = jax.block_until_ready(fwd(X, prep))
    assert logp.shape == (BATCH, OUT)
    # log_softmax rows sum to ~1 in prob space (head math is f32)
    assert bool(jnp.allclose(jnp.sum(jnp.exp(logp), axis=1), 1.0, atol=1e-4))

    # Validate against a pure-JAX f32 reference with PyTorch LSTM semantics.
    # bf16 matmul operands + bf16 inter-layer activations (f32 accumulation/head)
    # need a looser tolerance than an all-f32 pipeline.
    ref = reference_forward(X, params, bidirectional=BIDIRECTIONAL, num_layers=LAYERS)
    all_f32 = (MXU_DTYPE == jnp.float32) and (SEQ_DTYPE == jnp.float32)
    tol = 2e-3 if all_f32 else 3e-2
    assert bool(jnp.allclose(logp, ref, atol=tol, rtol=tol)), \
        float(jnp.max(jnp.abs(logp - ref)))
    assert bool(jnp.all(jnp.argmax(logp, axis=1) == jnp.argmax(ref, axis=1)))
    print("KERNEL_OK")
</pallas_src>

<mosaic_0001>
module attributes {stable_mosaic.version = 11 : i64} {
  func.func @_lstm_final_head_kernel(%arg0: memref<8x16x256xbf16, #tpu.memory_space<vmem>>, %arg1: memref<256x512xbf16, #tpu.memory_space<vmem>>, %arg2: memref<128x512xbf16, #tpu.memory_space<vmem>>, %arg3: memref<1x512xf32, #tpu.memory_space<vmem>>, %arg4: memref<256x512xbf16, #tpu.memory_space<vmem>>, %arg5: memref<128x512xbf16, #tpu.memory_space<vmem>>, %arg6: memref<1x512xf32, #tpu.memory_space<vmem>>, %arg7: memref<128x128xf32, #tpu.memory_space<vmem>>, %arg8: memref<128x128xf32, #tpu.memory_space<vmem>>, %arg9: memref<1x128xf32, #tpu.memory_space<vmem>>, %arg10: memref<128x128xf32, #tpu.memory_space<vmem>>, %arg11: memref<1x128xf32, #tpu.memory_space<vmem>>, %arg12: memref<16x128xf32, #tpu.memory_space<vmem>>, %arg13: memref<8x16x512xf32, #tpu.memory_space<vmem>>) attributes {dimension_semantics = [], scalar_prefetch = 0 : i64, scratch_operands = 1 : i64, tpu.core_type = #tpu.core_type<tc>} {
    %c0 = arith.constant 0 : index
    %c0_0 = arith.constant 0 : index
    %c0_1 = arith.constant 0 : index
    %0 = vector.load %arg0[%c0, %c0_0, %c0_1] : memref<8x16x256xbf16, #tpu.memory_space<vmem>>, vector<8x16x256xbf16>
    %1 = vector.shape_cast %0 : vector<8x16x256xbf16> to vector<128x256xbf16>
    %c0_2 = arith.constant 0 : index
    %c0_3 = arith.constant 0 : index
    %2 = vector.load %arg1[%c0_2, %c0_3] : memref<256x512xbf16, #tpu.memory_space<vmem>>, vector<256x512xbf16>
    %cst = arith.constant dense<0.000000e+00> : vector<128x512xf32>
    %3 = tpu.matmul %1, %2, %cst {dimension_numbers = #tpu.dot_dimension_numbers<[1], [0], [0], [1], [0, 0, 1, 1], [], []>} : vector<128x256xbf16>, vector<256x512xbf16>, vector<128x512xf32> -> vector<128x512xf32>
    %c0_4 = arith.constant 0 : index
    %c0_5 = arith.constant 0 : index
    %4 = vector.load %arg3[%c0_4, %c0_5] : memref<1x512xf32, #tpu.memory_space<vmem>>, vector<1x512xf32>
    %5 = vector.broadcast %4 : vector<1x512xf32> to vector<128x512xf32>
    %6 = arith.addf %3, %5 : vector<128x512xf32>
    %7 = vector.shape_cast %6 : vector<128x512xf32> to vector<8x16x512xf32>
    %c0_6 = arith.constant 0 : index
    %c0_7 = arith.constant 0 : index
    %c0_8 = arith.constant 0 : index
    %8 = vector.load %arg13[%c0_6, %c0_7, %c0_8] : memref<8x16x512xf32, #tpu.memory_space<vmem>>, vector<8x16x512xf32>
    tpu.vector_store %arg13[%c0_6, %c0_7, %c0_8], %7 {strides = array<i32>} : memref<8x16x512xf32, #tpu.memory_space<vmem>>, vector<8x16x512xf32>,
    %cst_9 = arith.constant 0.000000e+00 : f32
    %9 = vector.broadcast %cst_9 : f32 to vector<16x128xf32>
    %cst_10 = arith.constant 0.000000e+00 : f32
    %10 = vector.broadcast %cst_10 : f32 to vector<16x128xf32>
    %c0_i32 = arith.constant 0 : i32
    %11 = arith.index_cast %c0_i32 : i32 to index
    %c0_11 = arith.constant 0 : index
    %c0_12 = arith.constant 0 : index
    %12 = vector.load %arg13[%11, %c0_11, %c0_12] : memref<8x16x512xf32, #tpu.memory_space<vmem>>, vector<1x16x512xf32>
    %13 = vector.shape_cast %12 : vector<1x16x512xf32> to vector<16x512xf32>
    %14 = arith.truncf %9 : vector<16x128xf32> to vector<16x128xbf16>
    %c0_13 = arith.constant 0 : index
    %c0_14 = arith.constant 0 : index
    %15 = vector.load %arg2[%c0_13, %c0_14] : memref<128x512xbf16, #tpu.memory_space<vmem>>, vector<128x512xbf16>
    %cst_15 = arith.constant dense<0.000000e+00> : vector<16x512xf32>
    %16 = tpu.matmul %14, %15, %cst_15 {dimension_numbers = #tpu.dot_dimension_numbers<[1], [0], [0], [1], [0, 0, 1, 1], [], []>} : vector<16x128xbf16>, vector<128x512xbf16>, vector<16x512xf32> -> vector<16x512xf32>
    %17 = arith.addf %13, %16 : vector<16x512xf32>
    %18 = vector.extract_strided_slice %17 {offsets = [0, 0], sizes = [16, 128], strides = [1, 1]} : vector<16x512xf32> to vector<16x128xf32>
    %19 = arith.negf %18 : vector<16x128xf32>
    %20 = math.exp %19 : vector<16x128xf32>
    %cst_16 = arith.constant 1.000000e+00 : f32
    %21 = vector.broadcast %cst_16 : f32 to vector<16x128xf32>
    %22 = arith.addf %21, %20 : vector<16x128xf32>
    %23 = arith.divf %21, %22 : vector<16x128xf32>
    %24 = vector.extract_strided_slice %17 {offsets = [0, 128], sizes = [16, 128], strides = [1, 1]} : vector<16x512xf32> to vector<16x128xf32>
    %25 = arith.negf %24 : vector<16x128xf32>
    %26 = math.exp %25 : vector<16x128xf32>
    %cst_17 = arith.constant 1.000000e+00 : f32
    %27 = vector.broadcast %cst_17 : f32 to vector<16x128xf32>
    %28 = arith.addf %27, %26 : vector<16x128xf32>
    %29 = arith.divf %27, %28 : vector<16x128xf32>
    %30 = vector.extract_strided_slice %17 {offsets = [0, 256], sizes = [16, 128], strides = [1, 1]} : vector<16x512xf32> to vector<16x128xf32>
    %31 = math.tanh %30 : vector<16x128xf32>
    %32 = vector.extract_strided_slice %17 {offsets = [0, 384], sizes = [16, 128], strides = [1, 1]} : vector<16x512xf32> to vector<16x128xf32>
    %33 = arith.negf %32 : vector<16x128xf32>
    %34 = math.exp %33 : vector<16x128xf32>
    %cst_18 = arith.constant 1.000000e+00 : f32
    %35 = vector.broadcast %cst_18 : f32 to vector<16x128xf32>
    %36 = arith.addf %35, %34 : vector<16x128xf32>
    %37 = arith.divf %35, %36 : vector<16x128xf32>
    %38 = arith.mulf %29, %10 : vector<16x128xf32>
    %39 = arith.mulf %23, %31 : vector<16x128xf32>
    %40 = arith.addf %38, %39 : vector<16x128xf32>
    %41 = math.tanh %40 : vector<16x128xf32>
    %42 = arith.mulf %37, %41 : vector<16x128xf32>
    %c1_i32 = arith.constant 1 : i32
    %43 = arith.index_cast %c1_i32 : i32 to index
    %c0_19 = arith.constant 0 : index
    %c0_20 = arith.constant 0 : index
    %44 = vector.load %arg13[%43, %c0_19, %c0_20] : memref<8x16x512xf32, #tpu.memory_space<vmem>>, vector<1x16x512xf32>
    %45 = vector.shape_cast %44 : vector<1x16x512xf32> to vector<16x512xf32>
    %46 = arith.truncf %42 : vector<16x128xf32> to vector<16x128xbf16>
    %c0_21 = arith.constant 0 : index
    %c0_22 = arith.constant 0 : index
    %47 = vector.load %arg2[%c0_21, %c0_22] : memref<128x512xbf16, #tpu.memory_space<vmem>>, vector<128x512xbf16>
    %cst_23 = arith.constant dense<0.000000e+00> : vector<16x512xf32>
    %48 = tpu.matmul %46, %47, %cst_23 {dimension_numbers = #tpu.dot_dimension_numbers<[1], [0], [0], [1], [0, 0, 1, 1], [], []>} : vector<16x128xbf16>, vector<128x512xbf16>, vector<16x512xf32> -> vector<16x512xf32>
    %49 = arith.addf %45, %48 : vector<16x512xf32>
    %50 = vector.extract_strided_slice %49 {offsets = [0, 0], sizes = [16, 128], strides = [1, 1]} : vector<16x512xf32> to vector<16x128xf32>
    %51 = arith.negf %50 : vector<16x128xf32>
    %52 = math.exp %51 : vector<16x128xf32>
    %cst_24 = arith.constant 1.000000e+00 : f32
    %53 = vector.broadcast %cst_24 : f32 to vector<16x128xf32>
    %54 = arith.addf %53, %52 : vector<16x128xf32>
    %55 = arith.divf %53, %54 : vector<16x128xf32>
    %56 = vector.extract_strided_slice %49 {offsets = [0, 128], sizes = [16, 128], strides = [1, 1]} : vector<16x512xf32> to vector<16x128xf32>
    %57 = arith.negf %56 : vector<16x128xf32>
    %58 = math.exp %57 : vector<16x128xf32>
    %cst_25 = arith.constant 1.000000e+00 : f32
    %59 = vector.broadcast %cst_25 : f32 to vector<16x128xf32>
    %60 = arith.addf %59, %58 : vector<16x128xf32>
    %61 = arith.divf %59, %60 : vector<16x128xf32>
    %62 = vector.extract_strided_slice %49 {offsets = [0, 256], sizes = [16, 128], strides = [1, 1]} : vector<16x512xf32> to vector<16x128xf32>
    %63 = math.tanh %62 : vector<16x128xf32>
    %64 = vector.extract_strided_slice %49 {offsets = [0, 384], sizes = [16, 128], strides = [1, 1]} : vector<16x512xf32> to vector<16x128xf32>
    %65 = arith.negf %64 : vector<16x128xf32>
    %66 = math.exp %65 : vector<16x128xf32>
    %cst_26 = arith.constant 1.000000e+00 : f32
    %67 = vector.broadcast %cst_26 : f32 to vector<16x128xf32>
    %68 = arith.addf %67, %66 : vector<16x128xf32>
    %69 = arith.divf %67, %68 : vector<16x128xf32>
    %70 = arith.mulf %61, %40 : vector<16x128xf32>
    %71 = arith.mulf %55, %63 : vector<16x128xf32>
    %72 = arith.addf %70, %71 : vector<16x128xf32>
    %73 = math.tanh %72 : vector<16x128xf32>
    %74 = arith.mulf %69, %73 : vector<16x128xf32>
    %c2_i32 = arith.constant 2 : i32
    %75 = arith.index_cast %c2_i32 : i32 to index
    %c0_27 = arith.constant 0 : index
    %c0_28 = arith.constant 0 : index
    %76 = vector.load %arg13[%75, %c0_27, %c0_28] : memref<8x16x512xf32, #tpu.memory_space<vmem>>, vector<1x16x512xf32>
    %77 = vector.shape_cast %76 : vector<1x16x512xf32> to vector<16x512xf32>
    %78 = arith.truncf %74 : vector<16x128xf32> to vector<16x128xbf16>
    %c0_29 = arith.constant 0 : index
    %c0_30 = arith.constant 0 : index
    %79 = vector.load %arg2[%c0_29, %c0_30] : memref<128x512xbf16, #tpu.memory_space<vmem>>, vector<128x512xbf16>
    %cst_31 = arith.constant dense<0.000000e+00> : vector<16x512xf32>
    %80 = tpu.matmul %78, %79, %cst_31 {dimension_numbers = #tpu.dot_dimension_numbers<[1], [0], [0], [1], [0, 0, 1, 1], [], []>} : vector<16x128xbf16>, vector<128x512xbf16>, vector<16x512xf32> -> vector<16x512xf32>
    %81 = arith.addf %77, %80 : vector<16x512xf32>
    %82 = vector.extract_strided_slice %81 {offsets = [0, 0], sizes = [16, 128], strides = [1, 1]} : vector<16x512xf32> to vector<16x128xf32>
    %83 = arith.negf %82 : vector<16x128xf32>
    %84 = math.exp %83 : vector<16x128xf32>
    %cst_32 = arith.constant 1.000000e+00 : f32
    %85 = vector.broadcast %cst_32 : f32 to vector<16x128xf32>
    %86 = arith.addf %85, %84 : vector<16x128xf32>
    %87 = arith.divf %85, %86 : vector<16x128xf32>
    %88 = vector.extract_strided_slice %81 {offsets = [0, 128], sizes = [16, 128], strides = [1, 1]} : vector<16x512xf32> to vector<16x128xf32>
    %89 = arith.negf %88 : vector<16x128xf32>
    %90 = math.exp %89 : vector<16x128xf32>
    %cst_33 = arith.constant 1.000000e+00 : f32
    %91 = vector.broadcast %cst_33 : f32 to vector<16x128xf32>
    %92 = arith.addf %91, %90 : vector<16x128xf32>
    %93 = arith.divf %91, %92 : vector<16x128xf32>
    %94 = vector.extract_strided_slice %81 {offsets = [0, 256], sizes = [16, 128], strides = [1, 1]} : vector<16x512xf32> to vector<16x128xf32>
    %95 = math.tanh %94 : vector<16x128xf32>
    %96 = vector.extract_strided_slice %81 {offsets = [0, 384], sizes = [16, 128], strides = [1, 1]} : vector<16x512xf32> to vector<16x128xf32>
    %97 = arith.negf %96 : vector<16x128xf32>
    %98 = math.exp %97 : vector<16x128xf32>
    %cst_34 = arith.constant 1.000000e+00 : f32
    %99 = vector.broadcast %cst_34 : f32 to vector<16x128xf32>
    %100 = arith.addf %99, %98 : vector<16x128xf32>
    %101 = arith.divf %99, %100 : vector<16x128xf32>
    %102 = arith.mulf %93, %72 : vector<16x128xf32>
    %103 = arith.mulf %87, %95 : vector<16x128xf32>
    %104 = arith.addf %102, %103 : vector<16x128xf32>
    %105 = math.tanh %104 : vector<16x128xf32>
    %106 = arith.mulf %101, %105 : vector<16x128xf32>
    %c3_i32 = arith.constant 3 : i32
    %107 = arith.index_cast %c3_i32 : i32 to index
    %c0_35 = arith.constant 0 : index
    %c0_36 = arith.constant 0 : index
    %108 = vector.load %arg13[%107, %c0_35, %c0_36] : memref<8x16x512xf32, #tpu.memory_space<vmem>>, vector<1x16x512xf32>
    %109 = vector.shape_cast %108 : vector<1x16x512xf32> to vector<16x512xf32>
    %110 = arith.truncf %106 : vector<16x128xf32> to vector<16x128xbf16>
    %c0_37 = arith.constant 0 : index
    %c0_38 = arith.constant 0 : index
    %111 = vector.load %arg2[%c0_37, %c0_38] : memref<128x512xbf16, #tpu.memory_space<vmem>>, vector<128x512xbf16>
    %cst_39 = arith.constant dense<0.000000e+00> : vector<16x512xf32>
    %112 = tpu.matmul %110, %111, %cst_39 {dimension_numbers = #tpu.dot_dimension_numbers<[1], [0], [0], [1], [0, 0, 1, 1], [], []>} : vector<16x128xbf16>, vector<128x512xbf16>, vector<16x512xf32> -> vector<16x512xf32>
    %113 = arith.addf %109, %112 : vector<16x512xf32>
    %114 = vector.extract_strided_slice %113 {offsets = [0, 0], sizes = [16, 128], strides = [1, 1]} : vector<16x512xf32> to vector<16x128xf32>
    %115 = arith.negf %114 : vector<16x128xf32>
    %116 = math.exp %115 : vector<16x128xf32>
    %cst_40 = arith.constant 1.000000e+00 : f32
    %117 = vector.broadcast %cst_40 : f32 to vector<16x128xf32>
    %118 = arith.addf %117, %116 : vector<16x128xf32>
    %119 = arith.divf %117, %118 : vector<16x128xf32>
    %120 = vector.extract_strided_slice %113 {offsets = [0, 128], sizes = [16, 128], strides = [1, 1]} : vector<16x512xf32> to vector<16x128xf32>
    %121 = arith.negf %120 : vector<16x128xf32>
    %122 = math.exp %121 : vector<16x128xf32>
    %cst_41 = arith.constant 1.000000e+00 : f32
    %123 = vector.broadcast %cst_41 : f32 to vector<16x128xf32>
    %124 = arith.addf %123, %122 : vector<16x128xf32>
    %125 = arith.divf %123, %124 : vector<16x128xf32>
    %126 = vector.extract_strided_slice %113 {offsets = [0, 256], sizes = [16, 128], strides = [1, 1]} : vector<16x512xf32> to vector<16x128xf32>
    %127 = math.tanh %126 : vector<16x128xf32>
    %128 = vector.extract_strided_slice %113 {offsets = [0, 384], sizes = [16, 128], strides = [1, 1]} : vector<16x512xf32> to vector<16x128xf32>
    %129 = arith.negf %128 : vector<16x128xf32>
    %130 = math.exp %129 : vector<16x128xf32>
    %cst_42 = arith.constant 1.000000e+00 : f32
    %131 = vector.broadcast %cst_42 : f32 to vector<16x128xf32>
    %132 = arith.addf %131, %130 : vector<16x128xf32>
    %133 = arith.divf %131, %132 : vector<16x128xf32>
    %134 = arith.mulf %125, %104 : vector<16x128xf32>
    %135 = arith.mulf %119, %127 : vector<16x128xf32>
    %136 = arith.addf %134, %135 : vector<16x128xf32>
    %137 = math.tanh %136 : vector<16x128xf32>
    %138 = arith.mulf %133, %137 : vector<16x128xf32>
    %c4_i32 = arith.constant 4 : i32
    %139 = arith.index_cast %c4_i32 : i32 to index
    %c0_43 = arith.constant 0 : index
    %c0_44 = arith.constant 0 : index
    %140 = vector.load %arg13[%139, %c0_43, %c0_44] : memref<8x16x512xf32, #tpu.memory_space<vmem>>, vector<1x16x512xf32>
    %141 = vector.shape_cast %140 : vector<1x16x512xf32> to vector<16x512xf32>
    %142 = arith.truncf %138 : vector<16x128xf32> to vector<16x128xbf16>
    %c0_45 = arith.constant 0 : index
    %c0_46 = arith.constant 0 : index
    %143 = vector.load %arg2[%c0_45, %c0_46] : memref<128x512xbf16, #tpu.memory_space<vmem>>, vector<128x512xbf16>
    %cst_47 = arith.constant dense<0.000000e+00> : vector<16x512xf32>
    %144 = tpu.matmul %142, %143, %cst_47 {dimension_numbers = #tpu.dot_dimension_numbers<[1], [0], [0], [1], [0, 0, 1, 1], [], []>} : vector<16x128xbf16>, vector<128x512xbf16>, vector<16x512xf32> -> vector<16x512xf32>
    %145 = arith.addf %141, %144 : vector<16x512xf32>
    %146 = vector.extract_strided_slice %145 {offsets = [0, 0], sizes = [16, 128], strides = [1, 1]} : vector<16x512xf32> to vector<16x128xf32>
    %147 = arith.negf %146 : vector<16x128xf32>
    %148 = math.exp %147 : vector<16x128xf32>
    %cst_48 = arith.constant 1.000000e+00 : f32
    %149 = vector.broadcast %cst_48 : f32 to vector<16x128xf32>
    %150 = arith.addf %149, %148 : vector<16x128xf32>
    %151 = arith.divf %149, %150 : vector<16x128xf32>
    %152 = vector.extract_strided_slice %145 {offsets = [0, 128], sizes = [16, 128], strides = [1, 1]} : vector<16x512xf32> to vector<16x128xf32>
    %153 = arith.negf %152 : vector<16x128xf32>
    %154 = math.exp %153 : vector<16x128xf32>
    %cst_49 = arith.constant 1.000000e+00 : f32
    %155 = vector.broadcast %cst_49 : f32 to vector<16x128xf32>
    %156 = arith.addf %155, %154 : vector<16x128xf32>
    %157 = arith.divf %155, %156 : vector<16x128xf32>
    %158 = vector.extract_strided_slice %145 {offsets = [0, 256], sizes = [16, 128], strides = [1, 1]} : vector<16x512xf32> to vector<16x128xf32>
    %159 = math.tanh %158 : vector<16x128xf32>
    %160 = vector.extract_strided_slice %145 {offsets = [0, 384], sizes = [16, 128], strides = [1, 1]} : vector<16x512xf32> to vector<16x128xf32>
    %161 = arith.negf %160 : vector<16x128xf32>
    %162 = math.exp %161 : vector<16x128xf32>
    %cst_50 = arith.constant 1.000000e+00 : f32
    %163 = vector.broadcast %cst_50 : f32 to vector<16x128xf32>
    %164 = arith.addf %163, %162 : vector<16x128xf32>
    %165 = arith.divf %163, %164 : vector<16x128xf32>
    %166 = arith.mulf %157, %136 : vector<16x128xf32>
    %167 = arith.mulf %151, %159 : vector<16x128xf32>
    %168 = arith.addf %166, %167 : vector<16x128xf32>
    %169 = math.tanh %168 : vector<16x128xf32>
    %170 = arith.mulf %165, %169 : vector<16x128xf32>
    %c5_i32 = arith.constant 5 : i32
    %171 = arith.index_cast %c5_i32 : i32 to index
    %c0_51 = arith.constant 0 : index
    %c0_52 = arith.constant 0 : index
    %172 = vector.load %arg13[%171, %c0_51, %c0_52] : memref<8x16x512xf32, #tpu.memory_space<vmem>>, vector<1x16x512xf32>
    %173 = vector.shape_cast %172 : vector<1x16x512xf32> to vector<16x512xf32>
    %174 = arith.truncf %170 : vector<16x128xf32> to vector<16x128xbf16>
    %c0_53 = arith.constant 0 : index
    %c0_54 = arith.constant 0 : index
    %175 = vector.load %arg2[%c0_53, %c0_54] : memref<128x512xbf16, #tpu.memory_space<vmem>>, vector<128x512xbf16>
    %cst_55 = arith.constant dense<0.000000e+00> : vector<16x512xf32>
    %176 = tpu.matmul %174, %175, %cst_55 {dimension_numbers = #tpu.dot_dimension_numbers<[1], [0], [0], [1], [0, 0, 1, 1], [], []>} : vector<16x128xbf16>, vector<128x512xbf16>, vector<16x512xf32> -> vector<16x512xf32>
    %177 = arith.addf %173, %176 : vector<16x512xf32>
    %178 = vector.extract_strided_slice %177 {offsets = [0, 0], sizes = [16, 128], strides = [1, 1]} : vector<16x512xf32> to vector<16x128xf32>
    %179 = arith.negf %178 : vector<16x128xf32>
    %180 = math.exp %179 : vector<16x128xf32>
    %cst_56 = arith.constant 1.000000e+00 : f32
    %181 = vector.broadcast %cst_56 : f32 to vector<16x128xf32>
    %182 = arith.addf %181, %180 : vector<16x128xf32>
    %183 = arith.divf %181, %182 : vector<16x128xf32>
    %184 = vector.extract_strided_slice %177 {offsets = [0, 128], sizes = [16, 128], strides = [1, 1]} : vector<16x512xf32> to vector<16x128xf32>
    %185 = arith.negf %184 : vector<16x128xf32>
    %186 = math.exp %185 : vector<16x128xf32>
    %cst_57 = arith.constant 1.000000e+00 : f32
    %187 = vector.broadcast %cst_57 : f32 to vector<16x128xf32>
    %188 = arith.addf %187, %186 : vector<16x128xf32>
    %189 = arith.divf %187, %188 : vector<16x128xf32>
    %190 = vector.extract_strided_slice %177 {offsets = [0, 256], sizes = [16, 128], strides = [1, 1]} : vector<16x512xf32> to vector<16x128xf32>
    %191 = math.tanh %190 : vector<16x128xf32>
    %192 = vector.extract_strided_slice %177 {offsets = [0, 384], sizes = [16, 128], strides = [1, 1]} : vector<16x512xf32> to vector<16x128xf32>
    %193 = arith.negf %192 : vector<16x128xf32>
    %194 = math.exp %193 : vector<16x128xf32>
    %cst_58 = arith.constant 1.000000e+00 : f32
    %195 = vector.broadcast %cst_58 : f32 to vector<16x128xf32>
    %196 = arith.addf %195, %194 : vector<16x128xf32>
    %197 = arith.divf %195, %196 : vector<16x128xf32>
    %198 = arith.mulf %189, %168 : vector<16x128xf32>
    %199 = arith.mulf %183, %191 : vector<16x128xf32>
    %200 = arith.addf %198, %199 : vector<16x128xf32>
    %201 = math.tanh %200 : vector<16x128xf32>
    %202 = arith.mulf %197, %201 : vector<16x128xf32>
    %c6_i32 = arith.constant 6 : i32
    %203 = arith.index_cast %c6_i32 : i32 to index
    %c0_59 = arith.constant 0 : index
    %c0_60 = arith.constant 0 : index
    %204 = vector.load %arg13[%203, %c0_59, %c0_60] : memref<8x16x512xf32, #tpu.memory_space<vmem>>, vector<1x16x512xf32>
    %205 = vector.shape_cast %204 : vector<1x16x512xf32> to vector<16x512xf32>
    %206 = arith.truncf %202 : vector<16x128xf32> to vector<16x128xbf16>
    %c0_61 = arith.constant 0 : index
    %c0_62 = arith.constant 0 : index
    %207 = vector.load %arg2[%c0_61, %c0_62] : memref<128x512xbf16, #tpu.memory_space<vmem>>, vector<128x512xbf16>
    %cst_63 = arith.constant dense<0.000000e+00> : vector<16x512xf32>
    %208 = tpu.matmul %206, %207, %cst_63 {dimension_numbers = #tpu.dot_dimension_numbers<[1], [0], [0], [1], [0, 0, 1, 1], [], []>} : vector<16x128xbf16>, vector<128x512xbf16>, vector<16x512xf32> -> vector<16x512xf32>
    %209 = arith.addf %205, %208 : vector<16x512xf32>
    %210 = vector.extract_strided_slice %209 {offsets = [0, 0], sizes = [16, 128], strides = [1, 1]} : vector<16x512xf32> to vector<16x128xf32>
    %211 = arith.negf %210 : vector<16x128xf32>
    %212 = math.exp %211 : vector<16x128xf32>
    %cst_64 = arith.constant 1.000000e+00 : f32
    %213 = vector.broadcast %cst_64 : f32 to vector<16x128xf32>
    %214 = arith.addf %213, %212 : vector<16x128xf32>
    %215 = arith.divf %213, %214 : vector<16x128xf32>
    %216 = vector.extract_strided_slice %209 {offsets = [0, 128], sizes = [16, 128], strides = [1, 1]} : vector<16x512xf32> to vector<16x128xf32>
    %217 = arith.negf %216 : vector<16x128xf32>
    %218 = math.exp %217 : vector<16x128xf32>
    %cst_65 = arith.constant 1.000000e+00 : f32
    %219 = vector.broadcast %cst_65 : f32 to vector<16x128xf32>
    %220 = arith.addf %219, %218 : vector<16x128xf32>
    %221 = arith.divf %219, %220 : vector<16x128xf32>
    %222 = vector.extract_strided_slice %209 {offsets = [0, 256], sizes = [16, 128], strides = [1, 1]} : vector<16x512xf32> to vector<16x128xf32>
    %223 = math.tanh %222 : vector<16x128xf32>
    %224 = vector.extract_strided_slice %209 {offsets = [0, 384], sizes = [16, 128], strides = [1, 1]} : vector<16x512xf32> to vector<16x128xf32>
    %225 = arith.negf %224 : vector<16x128xf32>
    %226 = math.exp %225 : vector<16x128xf32>
    %cst_66 = arith.constant 1.000000e+00 : f32
    %227 = vector.broadcast %cst_66 : f32 to vector<16x128xf32>
    %228 = arith.addf %227, %226 : vector<16x128xf32>
    %229 = arith.divf %227, %228 : vector<16x128xf32>
    %230 = arith.mulf %221, %200 : vector<16x128xf32>
    %231 = arith.mulf %215, %223 : vector<16x128xf32>
    %232 = arith.addf %230, %231 : vector<16x128xf32>
    %233 = math.tanh %232 : vector<16x128xf32>
    %234 = arith.mulf %229, %233 : vector<16x128xf32>
    %c7_i32 = arith.constant 7 : i32
    %235 = arith.index_cast %c7_i32 : i32 to index
    %c0_67 = arith.constant 0 : index
    %c0_68 = arith.constant 0 : index
    %236 = vector.load %arg13[%235, %c0_67, %c0_68] : memref<8x16x512xf32, #tpu.memory_space<vmem>>, vector<1x16x512xf32>
    %237 = vector.shape_cast %236 : vector<1x16x512xf32> to vector<16x512xf32>
    %238 = arith.truncf %234 : vector<16x128xf32> to vector<16x128xbf16>
    %c0_69 = arith.constant 0 : index
    %c0_70 = arith.constant 0 : index
    %239 = vector.load %arg2[%c0_69, %c0_70] : memref<128x512xbf16, #tpu.memory_space<vmem>>, vector<128x512xbf16>
    %cst_71 = arith.constant dense<0.000000e+00> : vector<16x512xf32>
    %240 = tpu.matmul %238, %239, %cst_71 {dimension_numbers = #tpu.dot_dimension_numbers<[1], [0], [0], [1], [0, 0, 1, 1], [], []>} : vector<16x128xbf16>, vector<128x512xbf16>, vector<16x512xf32> -> vector<16x512xf32>
    %241 = arith.addf %237, %240 : vector<16x512xf32>
    %242 = vector.extract_strided_slice %241 {offsets = [0, 0], sizes = [16, 128], strides = [1, 1]} : vector<16x512xf32> to vector<16x128xf32>
    %243 = arith.negf %242 : vector<16x128xf32>
    %244 = math.exp %243 : vector<16x128xf32>
    %cst_72 = arith.constant 1.000000e+00 : f32
    %245 = vector.broadcast %cst_72 : f32 to vector<16x128xf32>
    %246 = arith.addf %245, %244 : vector<16x128xf32>
    %247 = arith.divf %245, %246 : vector<16x128xf32>
    %248 = vector.extract_strided_slice %241 {offsets = [0, 128], sizes = [16, 128], strides = [1, 1]} : vector<16x512xf32> to vector<16x128xf32>
    %249 = arith.negf %248 : vector<16x128xf32>
    %250 = math.exp %249 : vector<16x128xf32>
    %cst_73 = arith.constant 1.000000e+00 : f32
    %251 = vector.broadcast %cst_73 : f32 to vector<16x128xf32>
    %252 = arith.addf %251, %250 : vector<16x128xf32>
    %253 = arith.divf %251, %252 : vector<16x128xf32>
    %254 = vector.extract_strided_slice %241 {offsets = [0, 256], sizes = [16, 128], strides = [1, 1]} : vector<16x512xf32> to vector<16x128xf32>
    %255 = math.tanh %254 : vector<16x128xf32>
    %256 = vector.extract_strided_slice %241 {offsets = [0, 384], sizes = [16, 128], strides = [1, 1]} : vector<16x512xf32> to vector<16x128xf32>
    %257 = arith.negf %256 : vector<16x128xf32>
    %258 = math.exp %257 : vector<16x128xf32>
    %cst_74 = arith.constant 1.000000e+00 : f32
    %259 = vector.broadcast %cst_74 : f32 to vector<16x128xf32>
    %260 = arith.addf %259, %258 : vector<16x128xf32>
    %261 = arith.divf %259, %260 : vector<16x128xf32>
    %262 = arith.mulf %253, %232 : vector<16x128xf32>
    %263 = arith.mulf %247, %255 : vector<16x128xf32>
    %264 = arith.addf %262, %263 : vector<16x128xf32>
    %265 = math.tanh %264 : vector<16x128xf32>
    %266 = arith.mulf %261, %265 : vector<16x128xf32>
    %c8_i32 = arith.constant 8 : i32
    %c7 = arith.constant 7 : index
    %c0_75 = arith.constant 0 : index
    %c0_76 = arith.constant 0 : index
    %267 = vector.load %arg0[%c7, %c0_75, %c0_76] : memref<8x16x256xbf16, #tpu.memory_space<vmem>>, vector<1x16x256xbf16>
    %268 = vector.shape_cast %267 : vector<1x16x256xbf16> to vector<16x256xbf16>
    %c0_77 = arith.constant 0 : index
    %c0_78 = arith.constant 0 : index
    %269 = vector.load %arg4[%c0_77, %c0_78] : memref<256x512xbf16, #tpu.memory_space<vmem>>, vector<256x512xbf16>
    %cst_79 = arith.constant dense<0.000000e+00> : vector<16x512xf32>
    %270 = tpu.matmul %268, %269, %cst_79 {dimension_numbers = #tpu.dot_dimension_numbers<[1], [0], [0], [1], [0, 0, 1, 1], [], []>} : vector<16x256xbf16>, vector<256x512xbf16>, vector<16x512xf32> -> vector<16x512xf32>
    %c0_80 = arith.constant 0 : index
    %c0_81 = arith.constant 0 : index
    %271 = vector.load %arg6[%c0_80, %c0_81] : memref<1x512xf32, #tpu.memory_space<vmem>>, vector<1x512xf32>
    %272 = vector.broadcast %271 : vector<1x512xf32> to vector<16x512xf32>
    %273 = arith.addf %270, %272 : vector<16x512xf32>
    %274 = vector.extract_strided_slice %273 {offsets = [0, 0], sizes = [16, 128], strides = [1, 1]} : vector<16x512xf32> to vector<16x128xf32>
    %275 = arith.negf %274 : vector<16x128xf32>
    %276 = math.exp %275 : vector<16x128xf32>
    %cst_82 = arith.constant 1.000000e+00 : f32
    %277 = vector.broadcast %cst_82 : f32 to vector<16x128xf32>
    %278 = arith.addf %277, %276 : vector<16x128xf32>
    %279 = arith.divf %277, %278 : vector<16x128xf32>
    %280 = vector.extract_strided_slice %273 {offsets = [0, 256], sizes = [16, 128], strides = [1, 1]} : vector<16x512xf32> to vector<16x128xf32>
    %281 = math.tanh %280 : vector<16x128xf32>
    %282 = vector.extract_strided_slice %273 {offsets = [0, 384], sizes = [16, 128], strides = [1, 1]} : vector<16x512xf32> to vector<16x128xf32>
    %283 = arith.negf %282 : vector<16x128xf32>
    %284 = math.exp %283 : vector<16x128xf32>
    %cst_83 = arith.constant 1.000000e+00 : f32
    %285 = vector.broadcast %cst_83 : f32 to vector<16x128xf32>
    %286 = arith.addf %285, %284 : vector<16x128xf32>
    %287 = arith.divf %285, %286 : vector<16x128xf32>
    %288 = arith.mulf %279, %281 : vector<16x128xf32>
    %289 = math.tanh %288 : vector<16x128xf32>
    %290 = arith.mulf %287, %289 : vector<16x128xf32>
    %c0_84 = arith.constant 0 : index
    %c0_85 = arith.constant 0 : index
    %291 = vector.load %arg7[%c0_84, %c0_85] : memref<128x128xf32, #tpu.memory_space<vmem>>, vector<128x128xf32>
    %cst_86 = arith.constant dense<0.000000e+00> : vector<16x128xf32>
    %292 = tpu.matmul %266, %291, %cst_86 {dimension_numbers = #tpu.dot_dimension_numbers<[1], [0], [0], [1], [0, 0, 1, 1], [], []>} : vector<16x128xf32>, vector<128x128xf32>, vector<16x128xf32> -> vector<16x128xf32>
    %c0_87 = arith.constant 0 : index
    %c0_88 = arith.constant 0 : index
    %293 = vector.load %arg8[%c0_87, %c0_88] : memref<128x128xf32, #tpu.memory_space<vmem>>, vector<128x128xf32>
    %cst_89 = arith.constant dense<0.000000e+00> : vector<16x128xf32>
    %294 = tpu.matmul %290, %293, %cst_89 {dimension_numbers = #tpu.dot_dimension_numbers<[1], [0], [0], [1], [0, 0, 1, 1], [], []>} : vector<16x128xf32>, vector<128x128xf32>, vector<16x128xf32> -> vector<16x128xf32>
    %295 = arith.addf %292, %294 : vector<16x128xf32>
    %c0_90 = arith.constant 0 : index
    %c0_91 = arith.constant 0 : index
    %296 = vector.load %arg9[%c0_90, %c0_91] : memref<1x128xf32, #tpu.memory_space<vmem>>, vector<1x128xf32>
    %297 = vector.broadcast %296 : vector<1x128xf32> to vector<16x128xf32>
    %298 = arith.addf %295, %297 : vector<16x128xf32>
    %cst_92 = arith.constant 0.000000e+00 : f32
    %299 = vector.broadcast %cst_92 : f32 to vector<16x128xf32>
    %300 = arith.maximumf %298, %299 : vector<16x128xf32>
    %c0_93 = arith.constant 0 : index
    %c0_94 = arith.constant 0 : index
    %301 = vector.load %arg10[%c0_93, %c0_94] : memref<128x128xf32, #tpu.memory_space<vmem>>, vector<128x128xf32>
    %cst_95 = arith.constant dense<0.000000e+00> : vector<16x128xf32>
    %302 = tpu.matmul %300, %301, %cst_95 {dimension_numbers = #tpu.dot_dimension_numbers<[1], [0], [0], [1], [0, 0, 1, 1], [], []>} : vector<16x128xf32>, vector<128x128xf32>, vector<16x128xf32> -> vector<16x128xf32>
    %c0_96 = arith.constant 0 : index
    %c0_97 = arith.constant 0 : index
    %303 = vector.load %arg11[%c0_96, %c0_97] : memref<1x128xf32, #tpu.memory_space<vmem>>, vector<1x128xf32>
    %304 = vector.broadcast %303 : vector<1x128xf32> to vector<16x128xf32>
    %305 = arith.addf %302, %304 : vector<16x128xf32>
    %306 = tpu.iota {dimensions = array<i32: 1>} : vector<16x128xi32>
    %c5_i32_98 = arith.constant 5 : i32
    %307 = vector.broadcast %c5_i32_98 : i32 to vector<16x128xi32>
    %308 = arith.cmpi slt, %306, %307 : vector<16x128xi32>
    %cst_99 = arith.constant -1.000000e+30 : f32
    %309 = vector.broadcast %cst_99 : f32 to vector<16x128xf32>
    %310 = arith.select %308, %305, %309 : vector<16x128xi1>, vector<16x128xf32>
    %cst_100 = arith.constant dense<0xFF800000> : vector<16xf32>
    %311 = vector.multi_reduction <maximumf>, %310, %cst_100 [1] : vector<16x128xf32> to vector<16xf32>
    %312 = vector.shape_cast %311 : vector<16xf32> to vector<16x1xf32>
    %313 = vector.broadcast %312 : vector<16x1xf32> to vector<16x128xf32>
    %314 = arith.subf %310, %313 : vector<16x128xf32>
    %315 = math.exp %314 : vector<16x128xf32>
    %cst_101 = arith.constant dense<0.000000e+00> : vector<16xf32>
    %316 = vector.multi_reduction <add>, %315, %cst_101 [1] : vector<16x128xf32> to vector<16xf32>
    %317 = vector.shape_cast %316 : vector<16xf32> to vector<16x1xf32>
    %318 = math.log %317 : vector<16x1xf32>
    %319 = arith.addf %318, %312 : vector<16x1xf32>
    %320 = vector.broadcast %319 : vector<16x1xf32> to vector<16x128xf32>
    %321 = arith.subf %310, %320 : vector<16x128xf32>
    %c0_102 = arith.constant 0 : index
    %c0_103 = arith.constant 0 : index
    %322 = vector.load %arg12[%c0_102, %c0_103] : memref<16x128xf32, #tpu.memory_space<vmem>>, vector<16x128xf32>
    tpu.vector_store %arg12[%c0_102, %c0_103], %321 {strides = array<i32>} : memref<16x128xf32, #tpu.memory_space<vmem>>, vector<16x128xf32>,
    return
  }
}

module attributes {stable_mosaic.version = 11 : i64} {
  func.func @_lstm_layer_kernel(%arg0: memref<8x16x128xf32, #tpu.memory_space<vmem>>, %arg1: memref<128x512xbf16, #tpu.memory_space<vmem>>, %arg2: memref<128x512xbf16, #tpu.memory_space<vmem>>, %arg3: memref<1x512xf32, #tpu.memory_space<vmem>>, %arg4: memref<128x512xbf16, #tpu.memory_space<vmem>>, %arg5: memref<128x512xbf16, #tpu.memory_space<vmem>>, %arg6: memref<1x512xf32, #tpu.memory_space<vmem>>, %arg7: memref<8x16x256xbf16, #tpu.memory_space<vmem>>, %arg8: memref<8x16x512xf32, #tpu.memory_space<vmem>>) attributes {dimension_semantics = [], scalar_prefetch = 0 : i64, scratch_operands = 1 : i64, tpu.core_type = #tpu.core_type<tc>} {
    %c0 = arith.constant 0 : index
    %c0_0 = arith.constant 0 : index
    %c0_1 = arith.constant 0 : index
    %0 = vector.load %arg0[%c0, %c0_0, %c0_1] : memref<8x16x128xf32, #tpu.memory_space<vmem>>, vector<8x16x128xf32>
    %1 = vector.shape_cast %0 : vector<8x16x128xf32> to vector<128x128xf32>
    %2 = arith.truncf %1 : vector<128x128xf32> to vector<128x128xbf16>
    %c0_2 = arith.constant 0 : index
    %c0_3 = arith.constant 0 : index
    %3 = vector.load %arg1[%c0_2, %c0_3] : memref<128x512xbf16, #tpu.memory_space<vmem>>, vector<128x512xbf16>
    %cst = arith.constant dense<0.000000e+00> : vector<128x512xf32>
    %4 = tpu.matmul %2, %3, %cst {dimension_numbers = #tpu.dot_dimension_numbers<[1], [0], [0], [1], [0, 0, 1, 1], [], []>} : vector<128x128xbf16>, vector<128x512xbf16>, vector<128x512xf32> -> vector<128x512xf32>
    %c0_4 = arith.constant 0 : index
    %c0_5 = arith.constant 0 : index
    %5 = vector.load %arg3[%c0_4, %c0_5] : memref<1x512xf32, #tpu.memory_space<vmem>>, vector<1x512xf32>
    %6 = vector.broadcast %5 : vector<1x512xf32> to vector<128x512xf32>
    %7 = arith.addf %4, %6 : vector<128x512xf32>
    %8 = vector.shape_cast %7 : vector<128x512xf32> to vector<8x16x512xf32>
    %c0_6 = arith.constant 0 : index
    %c0_7 = arith.constant 0 : index
    %c0_8 = arith.constant 0 : index
    %9 = vector.load %arg8[%c0_6, %c0_7, %c0_8] : memref<8x16x512xf32, #tpu.memory_space<vmem>>, vector<8x16x512xf32>
    tpu.vector_store %arg8[%c0_6, %c0_7, %c0_8], %8 {strides = array<i32>} : memref<8x16x512xf32, #tpu.memory_space<vmem>>, vector<8x16x512xf32>,
    %cst_9 = arith.constant 0.000000e+00 : f32
    %10 = vector.broadcast %cst_9 : f32 to vector<16x128xf32>
    %cst_10 = arith.constant 0.000000e+00 : f32
    %11 = vector.broadcast %cst_10 : f32 to vector<16x128xf32>
    %c0_i32 = arith.constant 0 : i32
    %12 = arith.index_cast %c0_i32 : i32 to index
    %c0_11 = arith.constant 0 : index
    %c0_12 = arith.constant 0 : index
    %13 = vector.load %arg8[%12, %c0_11, %c0_12] : memref<8x16x512xf32, #tpu.memory_space<vmem>>, vector<1x16x512xf32>
    %14 = vector.shape_cast %13 : vector<1x16x512xf32> to vector<16x512xf32>
    %15 = arith.truncf %10 : vector<16x128xf32> to vector<16x128xbf16>
    %c0_13 = arith.constant 0 : index
    %c0_14 = arith.constant 0 : index
    %16 = vector.load %arg2[%c0_13, %c0_14] : memref<128x512xbf16, #tpu.memory_space<vmem>>, vector<128x512xbf16>
    %cst_15 = arith.constant dense<0.000000e+00> : vector<16x512xf32>
    %17 = tpu.matmul %15, %16, %cst_15 {dimension_numbers = #tpu.dot_dimension_numbers<[1], [0], [0], [1], [0, 0, 1, 1], [], []>} : vector<16x128xbf16>, vector<128x512xbf16>, vector<16x512xf32> -> vector<16x512xf32>
    %18 = arith.addf %14, %17 : vector<16x512xf32>
    %19 = vector.extract_strided_slice %18 {offsets = [0, 0], sizes = [16, 128], strides = [1, 1]} : vector<16x512xf32> to vector<16x128xf32>
    %20 = arith.negf %19 : vector<16x128xf32>
    %21 = math.exp %20 : vector<16x128xf32>
    %cst_16 = arith.constant 1.000000e+00 : f32
    %22 = vector.broadcast %cst_16 : f32 to vector<16x128xf32>
    %23 = arith.addf %22, %21 : vector<16x128xf32>
    %24 = arith.divf %22, %23 : vector<16x128xf32>
    %25 = vector.extract_strided_slice %18 {offsets = [0, 128], sizes = [16, 128], strides = [1, 1]} : vector<16x512xf32> to vector<16x128xf32>
    %26 = arith.negf %25 : vector<16x128xf32>
    %27 = math.exp %26 : vector<16x128xf32>
    %cst_17 = arith.constant 1.000000e+00 : f32
    %28 = vector.broadcast %cst_17 : f32 to vector<16x128xf32>
    %29 = arith.addf %28, %27 : vector<16x128xf32>
    %30 = arith.divf %28, %29 : vector<16x128xf32>
    %31 = vector.extract_strided_slice %18 {offsets = [0, 256], sizes = [16, 128], strides = [1, 1]} : vector<16x512xf32> to vector<16x128xf32>
    %32 = math.tanh %31 : vector<16x128xf32>
    %33 = vector.extract_strided_slice %18 {offsets = [0, 384], sizes = [16, 128], strides = [1, 1]} : vector<16x512xf32> to vector<16x128xf32>
    %34 = arith.negf %33 : vector<16x128xf32>
    %35 = math.exp %34 : vector<16x128xf32>
    %cst_18 = arith.constant 1.000000e+00 : f32
    %36 = vector.broadcast %cst_18 : f32 to vector<16x128xf32>
    %37 = arith.addf %36, %35 : vector<16x128xf32>
    %38 = arith.divf %36, %37 : vector<16x128xf32>
    %39 = arith.mulf %30, %11 : vector<16x128xf32>
    %40 = arith.mulf %24, %32 : vector<16x128xf32>
    %41 = arith.addf %39, %40 : vector<16x128xf32>
    %42 = math.tanh %41 : vector<16x128xf32>
    %43 = arith.mulf %38, %42 : vector<16x128xf32>
    %44 = arith.truncf %43 : vector<16x128xf32> to vector<16x128xbf16>
    %45 = arith.index_cast %c0_i32 : i32 to index
    %c0_19 = arith.constant 0 : index
    %c0_20 = arith.constant 0 : index
    %46 = vector.load %arg7[%45, %c0_19, %c0_20] : memref<8x16x256xbf16, #tpu.memory_space<vmem>>, vector<1x16x128xbf16>
    %47 = vector.shape_cast %46 : vector<1x16x128xbf16> to vector<16x128xbf16>
    %48 = vector.shape_cast %44 : vector<16x128xbf16> to vector<1x16x128xbf16>
    tpu.vector_store %arg7[%45, %c0_19, %c0_20], %48 {strides = array<i32>} : memref<8x16x256xbf16, #tpu.memory_space<vmem>>, vector<1x16x128xbf16>,
    %c1_i32 = arith.constant 1 : i32
    %49 = arith.index_cast %c1_i32 : i32 to index
    %c0_21 = arith.constant 0 : index
    %c0_22 = arith.constant 0 : index
    %50 = vector.load %arg8[%49, %c0_21, %c0_22] : memref<8x16x512xf32, #tpu.memory_space<vmem>>, vector<1x16x512xf32>
    %51 = vector.shape_cast %50 : vector<1x16x512xf32> to vector<16x512xf32>
    %52 = arith.truncf %43 : vector<16x128xf32> to vector<16x128xbf16>
    %c0_23 = arith.constant 0 : index
    %c0_24 = arith.constant 0 : index
    %53 = vector.load %arg2[%c0_23, %c0_24] : memref<128x512xbf16, #tpu.memory_space<vmem>>, vector<128x512xbf16>
    %cst_25 = arith.constant dense<0.000000e+00> : vector<16x512xf32>
    %54 = tpu.matmul %52, %53, %cst_25 {dimension_numbers = #tpu.dot_dimension_numbers<[1], [0], [0], [1], [0, 0, 1, 1], [], []>} : vector<16x128xbf16>, vector<128x512xbf16>, vector<16x512xf32> -> vector<16x512xf32>
    %55 = arith.addf %51, %54 : vector<16x512xf32>
    %56 = vector.extract_strided_slice %55 {offsets = [0, 0], sizes = [16, 128], strides = [1, 1]} : vector<16x512xf32> to vector<16x128xf32>
    %57 = arith.negf %56 : vector<16x128xf32>
    %58 = math.exp %57 : vector<16x128xf32>
    %cst_26 = arith.constant 1.000000e+00 : f32
    %59 = vector.broadcast %cst_26 : f32 to vector<16x128xf32>
    %60 = arith.addf %59, %58 : vector<16x128xf32>
    %61 = arith.divf %59, %60 : vector<16x128xf32>
    %62 = vector.extract_strided_slice %55 {offsets = [0, 128], sizes = [16, 128], strides = [1, 1]} : vector<16x512xf32> to vector<16x128xf32>
    %63 = arith.negf %62 : vector<16x128xf32>
    %64 = math.exp %63 : vector<16x128xf32>
    %cst_27 = arith.constant 1.000000e+00 : f32
    %65 = vector.broadcast %cst_27 : f32 to vector<16x128xf32>
    %66 = arith.addf %65, %64 : vector<16x128xf32>
    %67 = arith.divf %65, %66 : vector<16x128xf32>
    %68 = vector.extract_strided_slice %55 {offsets = [0, 256], sizes = [16, 128], strides = [1, 1]} : vector<16x512xf32> to vector<16x128xf32>
    %69 = math.tanh %68 : vector<16x128xf32>
    %70 = vector.extract_strided_slice %55 {offsets = [0, 384], sizes = [16, 128], strides = [1, 1]} : vector<16x512xf32> to vector<16x128xf32>
    %71 = arith.negf %70 : vector<16x128xf32>
    %72 = math.exp %71 : vector<16x128xf32>
    %cst_28 = arith.constant 1.000000e+00 : f32
    %73 = vector.broadcast %cst_28 : f32 to vector<16x128xf32>
    %74 = arith.addf %73, %72 : vector<16x128xf32>
    %75 = arith.divf %73, %74 : vector<16x128xf32>
    %76 = arith.mulf %67, %41 : vector<16x128xf32>
    %77 = arith.mulf %61, %69 : vector<16x128xf32>
    %78 = arith.addf %76, %77 : vector<16x128xf32>
    %79 = math.tanh %78 : vector<16x128xf32>
    %80 = arith.mulf %75, %79 : vector<16x128xf32>
    %81 = arith.truncf %80 : vector<16x128xf32> to vector<16x128xbf16>
    %82 = arith.index_cast %c1_i32 : i32 to index
    %c0_29 = arith.constant 0 : index
    %c0_30 = arith.constant 0 : index
    %83 = vector.load %arg7[%82, %c0_29, %c0_30] : memref<8x16x256xbf16, #tpu.memory_space<vmem>>, vector<1x16x128xbf16>
    %84 = vector.shape_cast %83 : vector<1x16x128xbf16> to vector<16x128xbf16>
    %85 = vector.shape_cast %81 : vector<16x128xbf16> to vector<1x16x128xbf16>
    tpu.vector_store %arg7[%82, %c0_29, %c0_30], %85 {strides = array<i32>} : memref<8x16x256xbf16, #tpu.memory_space<vmem>>, vector<1x16x128xbf16>,
    %c2_i32 = arith.constant 2 : i32
    %86 = arith.index_cast %c2_i32 : i32 to index
    %c0_31 = arith.constant 0 : index
    %c0_32 = arith.constant 0 : index
    %87 = vector.load %arg8[%86, %c0_31, %c0_32] : memref<8x16x512xf32, #tpu.memory_space<vmem>>, vector<1x16x512xf32>
    %88 = vector.shape_cast %87 : vector<1x16x512xf32> to vector<16x512xf32>
    %89 = arith.truncf %80 : vector<16x128xf32> to vector<16x128xbf16>
    %c0_33 = arith.constant 0 : index
    %c0_34 = arith.constant 0 : index
    %90 = vector.load %arg2[%c0_33, %c0_34] : memref<128x512xbf16, #tpu.memory_space<vmem>>, vector<128x512xbf16>
    %cst_35 = arith.constant dense<0.000000e+00> : vector<16x512xf32>
    %91 = tpu.matmul %89, %90, %cst_35 {dimension_numbers = #tpu.dot_dimension_numbers<[1], [0], [0], [1], [0, 0, 1, 1], [], []>} : vector<16x128xbf16>, vector<128x512xbf16>, vector<16x512xf32> -> vector<16x512xf32>
    %92 = arith.addf %88, %91 : vector<16x512xf32>
    %93 = vector.extract_strided_slice %92 {offsets = [0, 0], sizes = [16, 128], strides = [1, 1]} : vector<16x512xf32> to vector<16x128xf32>
    %94 = arith.negf %93 : vector<16x128xf32>
    %95 = math.exp %94 : vector<16x128xf32>
    %cst_36 = arith.constant 1.000000e+00 : f32
    %96 = vector.broadcast %cst_36 : f32 to vector<16x128xf32>
    %97 = arith.addf %96, %95 : vector<16x128xf32>
    %98 = arith.divf %96, %97 : vector<16x128xf32>
    %99 = vector.extract_strided_slice %92 {offsets = [0, 128], sizes = [16, 128], strides = [1, 1]} : vector<16x512xf32> to vector<16x128xf32>
    %100 = arith.negf %99 : vector<16x128xf32>
    %101 = math.exp %100 : vector<16x128xf32>
    %cst_37 = arith.constant 1.000000e+00 : f32
    %102 = vector.broadcast %cst_37 : f32 to vector<16x128xf32>
    %103 = arith.addf %102, %101 : vector<16x128xf32>
    %104 = arith.divf %102, %103 : vector<16x128xf32>
    %105 = vector.extract_strided_slice %92 {offsets = [0, 256], sizes = [16, 128], strides = [1, 1]} : vector<16x512xf32> to vector<16x128xf32>
    %106 = math.tanh %105 : vector<16x128xf32>
    %107 = vector.extract_strided_slice %92 {offsets = [0, 384], sizes = [16, 128], strides = [1, 1]} : vector<16x512xf32> to vector<16x128xf32>
    %108 = arith.negf %107 : vector<16x128xf32>
    %109 = math.exp %108 : vector<16x128xf32>
    %cst_38 = arith.constant 1.000000e+00 : f32
    %110 = vector.broadcast %cst_38 : f32 to vector<16x128xf32>
    %111 = arith.addf %110, %109 : vector<16x128xf32>
    %112 = arith.divf %110, %111 : vector<16x128xf32>
    %113 = arith.mulf %104, %78 : vector<16x128xf32>
    %114 = arith.mulf %98, %106 : vector<16x128xf32>
    %115 = arith.addf %113, %114 : vector<16x128xf32>
    %116 = math.tanh %115 : vector<16x128xf32>
    %117 = arith.mulf %112, %116 : vector<16x128xf32>
    %118 = arith.truncf %117 : vector<16x128xf32> to vector<16x128xbf16>
    %119 = arith.index_cast %c2_i32 : i32 to index
    %c0_39 = arith.constant 0 : index
    %c0_40 = arith.constant 0 : index
    %120 = vector.load %arg7[%119, %c0_39, %c0_40] : memref<8x16x256xbf16, #tpu.memory_space<vmem>>, vector<1x16x128xbf16>
    %121 = vector.shape_cast %120 : vector<1x16x128xbf16> to vector<16x128xbf16>
    %122 = vector.shape_cast %118 : vector<16x128xbf16> to vector<1x16x128xbf16>
    tpu.vector_store %arg7[%119, %c0_39, %c0_40], %122 {strides = array<i32>} : memref<8x16x256xbf16, #tpu.memory_space<vmem>>, vector<1x16x128xbf16>,
    %c3_i32 = arith.constant 3 : i32
    %123 = arith.index_cast %c3_i32 : i32 to index
    %c0_41 = arith.constant 0 : index
    %c0_42 = arith.constant 0 : index
    %124 = vector.load %arg8[%123, %c0_41, %c0_42] : memref<8x16x512xf32, #tpu.memory_space<vmem>>, vector<1x16x512xf32>
    %125 = vector.shape_cast %124 : vector<1x16x512xf32> to vector<16x512xf32>
    %126 = arith.truncf %117 : vector<16x128xf32> to vector<16x128xbf16>
    %c0_43 = arith.constant 0 : index
    %c0_44 = arith.constant 0 : index
    %127 = vector.load %arg2[%c0_43, %c0_44] : memref<128x512xbf16, #tpu.memory_space<vmem>>, vector<128x512xbf16>
    %cst_45 = arith.constant dense<0.000000e+00> : vector<16x512xf32>
    %128 = tpu.matmul %126, %127, %cst_45 {dimension_numbers = #tpu.dot_dimension_numbers<[1], [0], [0], [1], [0, 0, 1, 1], [], []>} : vector<16x128xbf16>, vector<128x512xbf16>, vector<16x512xf32> -> vector<16x512xf32>
    %129 = arith.addf %125, %128 : vector<16x512xf32>
    %130 = vector.extract_strided_slice %129 {offsets = [0, 0], sizes = [16, 128], strides = [1, 1]} : vector<16x512xf32> to vector<16x128xf32>
    %131 = arith.negf %130 : vector<16x128xf32>
    %132 = math.exp %131 : vector<16x128xf32>
    %cst_46 = arith.constant 1.000000e+00 : f32
    %133 = vector.broadcast %cst_46 : f32 to vector<16x128xf32>
    %134 = arith.addf %133, %132 : vector<16x128xf32>
    %135 = arith.divf %133, %134 : vector<16x128xf32>
    %136 = vector.extract_strided_slice %129 {offsets = [0, 128], sizes = [16, 128], strides = [1, 1]} : vector<16x512xf32> to vector<16x128xf32>
    %137 = arith.negf %136 : vector<16x128xf32>
    %138 = math.exp %137 : vector<16x128xf32>
    %cst_47 = arith.constant 1.000000e+00 : f32
    %139 = vector.broadcast %cst_47 : f32 to vector<16x128xf32>
    %140 = arith.addf %139, %138 : vector<16x128xf32>
    %141 = arith.divf %139, %140 : vector<16x128xf32>
    %142 = vector.extract_strided_slice %129 {offsets = [0, 256], sizes = [16, 128], strides = [1, 1]} : vector<16x512xf32> to vector<16x128xf32>
    %143 = math.tanh %142 : vector<16x128xf32>
    %144 = vector.extract_strided_slice %129 {offsets = [0, 384], sizes = [16, 128], strides = [1, 1]} : vector<16x512xf32> to vector<16x128xf32>
    %145 = arith.negf %144 : vector<16x128xf32>
    %146 = math.exp %145 : vector<16x128xf32>
    %cst_48 = arith.constant 1.000000e+00 : f32
    %147 = vector.broadcast %cst_48 : f32 to vector<16x128xf32>
    %148 = arith.addf %147, %146 : vector<16x128xf32>
    %149 = arith.divf %147, %148 : vector<16x128xf32>
    %150 = arith.mulf %141, %115 : vector<16x128xf32>
    %151 = arith.mulf %135, %143 : vector<16x128xf32>
    %152 = arith.addf %150, %151 : vector<16x128xf32>
    %153 = math.tanh %152 : vector<16x128xf32>
    %154 = arith.mulf %149, %153 : vector<16x128xf32>
    %155 = arith.truncf %154 : vector<16x128xf32> to vector<16x128xbf16>
    %156 = arith.index_cast %c3_i32 : i32 to index
    %c0_49 = arith.constant 0 : index
    %c0_50 = arith.constant 0 : index
    %157 = vector.load %arg7[%156, %c0_49, %c0_50] : memref<8x16x256xbf16, #tpu.memory_space<vmem>>, vector<1x16x128xbf16>
    %158 = vector.shape_cast %157 : vector<1x16x128xbf16> to vector<16x128xbf16>
    %159 = vector.shape_cast %155 : vector<16x128xbf16> to vector<1x16x128xbf16>
    tpu.vector_store %arg7[%156, %c0_49, %c0_50], %159 {strides = array<i32>} : memref<8x16x256xbf16, #tpu.memory_space<vmem>>, vector<1x16x128xbf16>,
    %c4_i32 = arith.constant 4 : i32
    %160 = arith.index_cast %c4_i32 : i32 to index
    %c0_51 = arith.constant 0 : index
    %c0_52 = arith.constant 0 : index
    %161 = vector.load %arg8[%160, %c0_51, %c0_52] : memref<8x16x512xf32, #tpu.memory_space<vmem>>, vector<1x16x512xf32>
    %162 = vector.shape_cast %161 : vector<1x16x512xf32> to vector<16x512xf32>
    %163 = arith.truncf %154 : vector<16x128xf32> to vector<16x128xbf16>
    %c0_53 = arith.constant 0 : index
    %c0_54 = arith.constant 0 : index
    %164 = vector.load %arg2[%c0_53, %c0_54] : memref<128x512xbf16, #tpu.memory_space<vmem>>, vector<128x512xbf16>
    %cst_55 = arith.constant dense<0.000000e+00> : vector<16x512xf32>
    %165 = tpu.matmul %163, %164, %cst_55 {dimension_numbers = #tpu.dot_dimension_numbers<[1], [0], [0], [1], [0, 0, 1, 1], [], []>} : vector<16x128xbf16>, vector<128x512xbf16>, vector<16x512xf32> -> vector<16x512xf32>
    %166 = arith.addf %162, %165 : vector<16x512xf32>
    %167 = vector.extract_strided_slice %166 {offsets = [0, 0], sizes = [16, 128], strides = [1, 1]} : vector<16x512xf32> to vector<16x128xf32>
    %168 = arith.negf %167 : vector<16x128xf32>
    %169 = math.exp %168 : vector<16x128xf32>
    %cst_56 = arith.constant 1.000000e+00 : f32
    %170 = vector.broadcast %cst_56 : f32 to vector<16x128xf32>
    %171 = arith.addf %170, %169 : vector<16x128xf32>
    %172 = arith.divf %170, %171 : vector<16x128xf32>
    %173 = vector.extract_strided_slice %166 {offsets = [0, 128], sizes = [16, 128], strides = [1, 1]} : vector<16x512xf32> to vector<16x128xf32>
    %174 = arith.negf %173 : vector<16x128xf32>
    %175 = math.exp %174 : vector<16x128xf32>
    %cst_57 = arith.constant 1.000000e+00 : f32
    %176 = vector.broadcast %cst_57 : f32 to vector<16x128xf32>
    %177 = arith.addf %176, %175 : vector<16x128xf32>
    %178 = arith.divf %176, %177 : vector<16x128xf32>
    %179 = vector.extract_strided_slice %166 {offsets = [0, 256], sizes = [16, 128], strides = [1, 1]} : vector<16x512xf32> to vector<16x128xf32>
    %180 = math.tanh %179 : vector<16x128xf32>
    %181 = vector.extract_strided_slice %166 {offsets = [0, 384], sizes = [16, 128], strides = [1, 1]} : vector<16x512xf32> to vector<16x128xf32>
    %182 = arith.negf %181 : vector<16x128xf32>
    %183 = math.exp %182 : vector<16x128xf32>
    %cst_58 = arith.constant 1.000000e+00 : f32
    %184 = vector.broadcast %cst_58 : f32 to vector<16x128xf32>
    %185 = arith.addf %184, %183 : vector<16x128xf32>
    %186 = arith.divf %184, %185 : vector<16x128xf32>
    %187 = arith.mulf %178, %152 : vector<16x128xf32>
    %188 = arith.mulf %172, %180 : vector<16x128xf32>
    %189 = arith.addf %187, %188 : vector<16x128xf32>
    %190 = math.tanh %189 : vector<16x128xf32>
    %191 = arith.mulf %186, %190 : vector<16x128xf32>
    %192 = arith.truncf %191 : vector<16x128xf32> to vector<16x128xbf16>
    %193 = arith.index_cast %c4_i32 : i32 to index
    %c0_59 = arith.constant 0 : index
    %c0_60 = arith.constant 0 : index
    %194 = vector.load %arg7[%193, %c0_59, %c0_60] : memref<8x16x256xbf16, #tpu.memory_space<vmem>>, vector<1x16x128xbf16>
    %195 = vector.shape_cast %194 : vector<1x16x128xbf16> to vector<16x128xbf16>
    %196 = vector.shape_cast %192 : vector<16x128xbf16> to vector<1x16x128xbf16>
    tpu.vector_store %arg7[%193, %c0_59, %c0_60], %196 {strides = array<i32>} : memref<8x16x256xbf16, #tpu.memory_space<vmem>>, vector<1x16x128xbf16>,
    %c5_i32 = arith.constant 5 : i32
    %197 = arith.index_cast %c5_i32 : i32 to index
    %c0_61 = arith.constant 0 : index
    %c0_62 = arith.constant 0 : index
    %198 = vector.load %arg8[%197, %c0_61, %c0_62] : memref<8x16x512xf32, #tpu.memory_space<vmem>>, vector<1x16x512xf32>
    %199 = vector.shape_cast %198 : vector<1x16x512xf32> to vector<16x512xf32>
    %200 = arith.truncf %191 : vector<16x128xf32> to vector<16x128xbf16>
    %c0_63 = arith.constant 0 : index
    %c0_64 = arith.constant 0 : index
    %201 = vector.load %arg2[%c0_63, %c0_64] : memref<128x512xbf16, #tpu.memory_space<vmem>>, vector<128x512xbf16>
    %cst_65 = arith.constant dense<0.000000e+00> : vector<16x512xf32>
    %202 = tpu.matmul %200, %201, %cst_65 {dimension_numbers = #tpu.dot_dimension_numbers<[1], [0], [0], [1], [0, 0, 1, 1], [], []>} : vector<16x128xbf16>, vector<128x512xbf16>, vector<16x512xf32> -> vector<16x512xf32>
    %203 = arith.addf %199, %202 : vector<16x512xf32>
    %204 = vector.extract_strided_slice %203 {offsets = [0, 0], sizes = [16, 128], strides = [1, 1]} : vector<16x512xf32> to vector<16x128xf32>
    %205 = arith.negf %204 : vector<16x128xf32>
    %206 = math.exp %205 : vector<16x128xf32>
    %cst_66 = arith.constant 1.000000e+00 : f32
    %207 = vector.broadcast %cst_66 : f32 to vector<16x128xf32>
    %208 = arith.addf %207, %206 : vector<16x128xf32>
    %209 = arith.divf %207, %208 : vector<16x128xf32>
    %210 = vector.extract_strided_slice %203 {offsets = [0, 128], sizes = [16, 128], strides = [1, 1]} : vector<16x512xf32> to vector<16x128xf32>
    %211 = arith.negf %210 : vector<16x128xf32>
    %212 = math.exp %211 : vector<16x128xf32>
    %cst_67 = arith.constant 1.000000e+00 : f32
    %213 = vector.broadcast %cst_67 : f32 to vector<16x128xf32>
    %214 = arith.addf %213, %212 : vector<16x128xf32>
    %215 = arith.divf %213, %214 : vector<16x128xf32>
    %216 = vector.extract_strided_slice %203 {offsets = [0, 256], sizes = [16, 128], strides = [1, 1]} : vector<16x512xf32> to vector<16x128xf32>
    %217 = math.tanh %216 : vector<16x128xf32>
    %218 = vector.extract_strided_slice %203 {offsets = [0, 384], sizes = [16, 128], strides = [1, 1]} : vector<16x512xf32> to vector<16x128xf32>
    %219 = arith.negf %218 : vector<16x128xf32>
    %220 = math.exp %219 : vector<16x128xf32>
    %cst_68 = arith.constant 1.000000e+00 : f32
    %221 = vector.broadcast %cst_68 : f32 to vector<16x128xf32>
    %222 = arith.addf %221, %220 : vector<16x128xf32>
    %223 = arith.divf %221, %222 : vector<16x128xf32>
    %224 = arith.mulf %215, %189 : vector<16x128xf32>
    %225 = arith.mulf %209, %217 : vector<16x128xf32>
    %226 = arith.addf %224, %225 : vector<16x128xf32>
    %227 = math.tanh %226 : vector<16x128xf32>
    %228 = arith.mulf %223, %227 : vector<16x128xf32>
    %229 = arith.truncf %228 : vector<16x128xf32> to vector<16x128xbf16>
    %230 = arith.index_cast %c5_i32 : i32 to index
    %c0_69 = arith.constant 0 : index
    %c0_70 = arith.constant 0 : index
    %231 = vector.load %arg7[%230, %c0_69, %c0_70] : memref<8x16x256xbf16, #tpu.memory_space<vmem>>, vector<1x16x128xbf16>
    %232 = vector.shape_cast %231 : vector<1x16x128xbf16> to vector<16x128xbf16>
    %233 = vector.shape_cast %229 : vector<16x128xbf16> to vector<1x16x128xbf16>
    tpu.vector_store %arg7[%230, %c0_69, %c0_70], %233 {strides = array<i32>} : memref<8x16x256xbf16, #tpu.memory_space<vmem>>, vector<1x16x128xbf16>,
    %c6_i32 = arith.constant 6 : i32
    %234 = arith.index_cast %c6_i32 : i32 to index
    %c0_71 = arith.constant 0 : index
    %c0_72 = arith.constant 0 : index
    %235 = vector.load %arg8[%234, %c0_71, %c0_72] : memref<8x16x512xf32, #tpu.memory_space<vmem>>, vector<1x16x512xf32>
    %236 = vector.shape_cast %235 : vector<1x16x512xf32> to vector<16x512xf32>
    %237 = arith.truncf %228 : vector<16x128xf32> to vector<16x128xbf16>
    %c0_73 = arith.constant 0 : index
    %c0_74 = arith.constant 0 : index
    %238 = vector.load %arg2[%c0_73, %c0_74] : memref<128x512xbf16, #tpu.memory_space<vmem>>, vector<128x512xbf16>
    %cst_75 = arith.constant dense<0.000000e+00> : vector<16x512xf32>
    %239 = tpu.matmul %237, %238, %cst_75 {dimension_numbers = #tpu.dot_dimension_numbers<[1], [0], [0], [1], [0, 0, 1, 1], [], []>} : vector<16x128xbf16>, vector<128x512xbf16>, vector<16x512xf32> -> vector<16x512xf32>
    %240 = arith.addf %236, %239 : vector<16x512xf32>
    %241 = vector.extract_strided_slice %240 {offsets = [0, 0], sizes = [16, 128], strides = [1, 1]} : vector<16x512xf32> to vector<16x128xf32>
    %242 = arith.negf %241 : vector<16x128xf32>
    %243 = math.exp %242 : vector<16x128xf32>
    %cst_76 = arith.constant 1.000000e+00 : f32
    %244 = vector.broadcast %cst_76 : f32 to vector<16x128xf32>
    %245 = arith.addf %244, %243 : vector<16x128xf32>
    %246 = arith.divf %244, %245 : vector<16x128xf32>
    %247 = vector.extract_strided_slice %240 {offsets = [0, 128], sizes = [16, 128], strides = [1, 1]} : vector<16x512xf32> to vector<16x128xf32>
    %248 = arith.negf %247 : vector<16x128xf32>
    %249 = math.exp %248 : vector<16x128xf32>
    %cst_77 = arith.constant 1.000000e+00 : f32
    %250 = vector.broadcast %cst_77 : f32 to vector<16x128xf32>
    %251 = arith.addf %250, %249 : vector<16x128xf32>
    %252 = arith.divf %250, %251 : vector<16x128xf32>
    %253 = vector.extract_strided_slice %240 {offsets = [0, 256], sizes = [16, 128], strides = [1, 1]} : vector<16x512xf32> to vector<16x128xf32>
    %254 = math.tanh %253 : vector<16x128xf32>
    %255 = vector.extract_strided_slice %240 {offsets = [0, 384], sizes = [16, 128], strides = [1, 1]} : vector<16x512xf32> to vector<16x128xf32>
    %256 = arith.negf %255 : vector<16x128xf32>
    %257 = math.exp %256 : vector<16x128xf32>
    %cst_78 = arith.constant 1.000000e+00 : f32
    %258 = vector.broadcast %cst_78 : f32 to vector<16x128xf32>
    %259 = arith.addf %258, %257 : vector<16x128xf32>
    %260 = arith.divf %258, %259 : vector<16x128xf32>
    %261 = arith.mulf %252, %226 : vector<16x128xf32>
    %262 = arith.mulf %246, %254 : vector<16x128xf32>
    %263 = arith.addf %261, %262 : vector<16x128xf32>
    %264 = math.tanh %263 : vector<16x128xf32>
    %265 = arith.mulf %260, %264 : vector<16x128xf32>
    %266 = arith.truncf %265 : vector<16x128xf32> to vector<16x128xbf16>
    %267 = arith.index_cast %c6_i32 : i32 to index
    %c0_79 = arith.constant 0 : index
    %c0_80 = arith.constant 0 : index
    %268 = vector.load %arg7[%267, %c0_79, %c0_80] : memref<8x16x256xbf16, #tpu.memory_space<vmem>>, vector<1x16x128xbf16>
    %269 = vector.shape_cast %268 : vector<1x16x128xbf16> to vector<16x128xbf16>
    %270 = vector.shape_cast %266 : vector<16x128xbf16> to vector<1x16x128xbf16>
    tpu.vector_store %arg7[%267, %c0_79, %c0_80], %270 {strides = array<i32>} : memref<8x16x256xbf16, #tpu.memory_space<vmem>>, vector<1x16x128xbf16>,
    %c7_i32 = arith.constant 7 : i32
    %271 = arith.index_cast %c7_i32 : i32 to index
    %c0_81 = arith.constant 0 : index
    %c0_82 = arith.constant 0 : index
    %272 = vector.load %arg8[%271, %c0_81, %c0_82] : memref<8x16x512xf32, #tpu.memory_space<vmem>>, vector<1x16x512xf32>
    %273 = vector.shape_cast %272 : vector<1x16x512xf32> to vector<16x512xf32>
    %274 = arith.truncf %265 : vector<16x128xf32> to vector<16x128xbf16>
    %c0_83 = arith.constant 0 : index
    %c0_84 = arith.constant 0 : index
    %275 = vector.load %arg2[%c0_83, %c0_84] : memref<128x512xbf16, #tpu.memory_space<vmem>>, vector<128x512xbf16>
    %cst_85 = arith.constant dense<0.000000e+00> : vector<16x512xf32>
    %276 = tpu.matmul %274, %275, %cst_85 {dimension_numbers = #tpu.dot_dimension_numbers<[1], [0], [0], [1], [0, 0, 1, 1], [], []>} : vector<16x128xbf16>, vector<128x512xbf16>, vector<16x512xf32> -> vector<16x512xf32>
    %277 = arith.addf %273, %276 : vector<16x512xf32>
    %278 = vector.extract_strided_slice %277 {offsets = [0, 0], sizes = [16, 128], strides = [1, 1]} : vector<16x512xf32> to vector<16x128xf32>
    %279 = arith.negf %278 : vector<16x128xf32>
    %280 = math.exp %279 : vector<16x128xf32>
    %cst_86 = arith.constant 1.000000e+00 : f32
    %281 = vector.broadcast %cst_86 : f32 to vector<16x128xf32>
    %282 = arith.addf %281, %280 : vector<16x128xf32>
    %283 = arith.divf %281, %282 : vector<16x128xf32>
    %284 = vector.extract_strided_slice %277 {offsets = [0, 128], sizes = [16, 128], strides = [1, 1]} : vector<16x512xf32> to vector<16x128xf32>
    %285 = arith.negf %284 : vector<16x128xf32>
    %286 = math.exp %285 : vector<16x128xf32>
    %cst_87 = arith.constant 1.000000e+00 : f32
    %287 = vector.broadcast %cst_87 : f32 to vector<16x128xf32>
    %288 = arith.addf %287, %286 : vector<16x128xf32>
    %289 = arith.divf %287, %288 : vector<16x128xf32>
    %290 = vector.extract_strided_slice %277 {offsets = [0, 256], sizes = [16, 128], strides = [1, 1]} : vector<16x512xf32> to vector<16x128xf32>
    %291 = math.tanh %290 : vector<16x128xf32>
    %292 = vector.extract_strided_slice %277 {offsets = [0, 384], sizes = [16, 128], strides = [1, 1]} : vector<16x512xf32> to vector<16x128xf32>
    %293 = arith.negf %292 : vector<16x128xf32>
    %294 = math.exp %293 : vector<16x128xf32>
    %cst_88 = arith.constant 1.000000e+00 : f32
    %295 = vector.broadcast %cst_88 : f32 to vector<16x128xf32>
    %296 = arith.addf %295, %294 : vector<16x128xf32>
    %297 = arith.divf %295, %296 : vector<16x128xf32>
    %298 = arith.mulf %289, %263 : vector<16x128xf32>
    %299 = arith.mulf %283, %291 : vector<16x128xf32>
    %300 = arith.addf %298, %299 : vector<16x128xf32>
    %301 = math.tanh %300 : vector<16x128xf32>
    %302 = arith.mulf %297, %301 : vector<16x128xf32>
    %303 = arith.truncf %302 : vector<16x128xf32> to vector<16x128xbf16>
    %304 = arith.index_cast %c7_i32 : i32 to index
    %c0_89 = arith.constant 0 : index
    %c0_90 = arith.constant 0 : index
    %305 = vector.load %arg7[%304, %c0_89, %c0_90] : memref<8x16x256xbf16, #tpu.memory_space<vmem>>, vector<1x16x128xbf16>
    %306 = vector.shape_cast %305 : vector<1x16x128xbf16> to vector<16x128xbf16>
    %307 = vector.shape_cast %303 : vector<16x128xbf16> to vector<1x16x128xbf16>
    tpu.vector_store %arg7[%304, %c0_89, %c0_90], %307 {strides = array<i32>} : memref<8x16x256xbf16, #tpu.memory_space<vmem>>, vector<1x16x128xbf16>,
    %c8_i32 = arith.constant 8 : i32
    %c0_91 = arith.constant 0 : index
    %c0_92 = arith.constant 0 : index
    %c0_93 = arith.constant 0 : index
    %308 = vector.load %arg0[%c0_91, %c0_92, %c0_93] : memref<8x16x128xf32, #tpu.memory_space<vmem>>, vector<8x16x128xf32>
    %309 = vector.shape_cast %308 : vector<8x16x128xf32> to vector<128x128xf32>
    %310 = arith.truncf %309 : vector<128x128xf32> to vector<128x128xbf16>
    %c0_94 = arith.constant 0 : index
    %c0_95 = arith.constant 0 : index
    %311 = vector.load %arg4[%c0_94, %c0_95] : memref<128x512xbf16, #tpu.memory_space<vmem>>, vector<128x512xbf16>
    %cst_96 = arith.constant dense<0.000000e+00> : vector<128x512xf32>
    %312 = tpu.matmul %310, %311, %cst_96 {dimension_numbers = #tpu.dot_dimension_numbers<[1], [0], [0], [1], [0, 0, 1, 1], [], []>} : vector<128x128xbf16>, vector<128x512xbf16>, vector<128x512xf32> -> vector<128x512xf32>
    %c0_97 = arith.constant 0 : index
    %c0_98 = arith.constant 0 : index
    %313 = vector.load %arg6[%c0_97, %c0_98] : memref<1x512xf32, #tpu.memory_space<vmem>>, vector<1x512xf32>
    %314 = vector.broadcast %313 : vector<1x512xf32> to vector<128x512xf32>
    %315 = arith.addf %312, %314 : vector<128x512xf32>
    %316 = vector.shape_cast %315 : vector<128x512xf32> to vector<8x16x512xf32>
    %c0_99 = arith.constant 0 : index
    %c0_100 = arith.constant 0 : index
    %c0_101 = arith.constant 0 : index
    %317 = vector.load %arg8[%c0_99, %c0_100, %c0_101] : memref<8x16x512xf32, #tpu.memory_space<vmem>>, vector<8x16x512xf32>
    tpu.vector_store %arg8[%c0_99, %c0_100, %c0_101], %316 {strides = array<i32>} : memref<8x16x512xf32, #tpu.memory_space<vmem>>, vector<8x16x512xf32>,
    %cst_102 = arith.constant 0.000000e+00 : f32
    %318 = vector.broadcast %cst_102 : f32 to vector<16x128xf32>
    %cst_103 = arith.constant 0.000000e+00 : f32
    %319 = vector.broadcast %cst_103 : f32 to vector<16x128xf32>
    %c0_i32_104 = arith.constant 0 : i32
    %c7_i32_105 = arith.constant 7 : i32
    %320 = arith.subi %c7_i32_105, %c0_i32_104 : i32
    %321 = arith.index_cast %320 : i32 to index
    %c0_106 = arith.constant 0 : index
    %c0_107 = arith.constant 0 : index
    %322 = vector.load %arg8[%321, %c0_106, %c0_107] : memref<8x16x512xf32, #tpu.memory_space<vmem>>, vector<1x16x512xf32>
    %323 = vector.shape_cast %322 : vector<1x16x512xf32> to vector<16x512xf32>
    %324 = arith.truncf %318 : vector<16x128xf32> to vector<16x128xbf16>
    %c0_108 = arith.constant 0 : index
    %c0_109 = arith.constant 0 : index
    %325 = vector.load %arg5[%c0_108, %c0_109] : memref<128x512xbf16, #tpu.memory_space<vmem>>, vector<128x512xbf16>
    %cst_110 = arith.constant dense<0.000000e+00> : vector<16x512xf32>
    %326 = tpu.matmul %324, %325, %cst_110 {dimension_numbers = #tpu.dot_dimension_numbers<[1], [0], [0], [1], [0, 0, 1, 1], [], []>} : vector<16x128xbf16>, vector<128x512xbf16>, vector<16x512xf32> -> vector<16x512xf32>
    %327 = arith.addf %323, %326 : vector<16x512xf32>
    %328 = vector.extract_strided_slice %327 {offsets = [0, 0], sizes = [16, 128], strides = [1, 1]} : vector<16x512xf32> to vector<16x128xf32>
    %329 = arith.negf %328 : vector<16x128xf32>
    %330 = math.exp %329 : vector<16x128xf32>
    %cst_111 = arith.constant 1.000000e+00 : f32
    %331 = vector.broadcast %cst_111 : f32 to vector<16x128xf32>
    %332 = arith.addf %331, %330 : vector<16x128xf32>
    %333 = arith.divf %331, %332 : vector<16x128xf32>
    %334 = vector.extract_strided_slice %327 {offsets = [0, 128], sizes = [16, 128], strides = [1, 1]} : vector<16x512xf32> to vector<16x128xf32>
    %335 = arith.negf %334 : vector<16x128xf32>
    %336 = math.exp %335 : vector<16x128xf32>
    %cst_112 = arith.constant 1.000000e+00 : f32
    %337 = vector.broadcast %cst_112 : f32 to vector<16x128xf32>
    %338 = arith.addf %337, %336 : vector<16x128xf32>
    %339 = arith.divf %337, %338 : vector<16x128xf32>
    %340 = vector.extract_strided_slice %327 {offsets = [0, 256], sizes = [16, 128], strides = [1, 1]} : vector<16x512xf32> to vector<16x128xf32>
    %341 = math.tanh %340 : vector<16x128xf32>
    %342 = vector.extract_strided_slice %327 {offsets = [0, 384], sizes = [16, 128], strides = [1, 1]} : vector<16x512xf32> to vector<16x128xf32>
    %343 = arith.negf %342 : vector<16x128xf32>
    %344 = math.exp %343 : vector<16x128xf32>
    %cst_113 = arith.constant 1.000000e+00 : f32
    %345 = vector.broadcast %cst_113 : f32 to vector<16x128xf32>
    %346 = arith.addf %345, %344 : vector<16x128xf32>
    %347 = arith.divf %345, %346 : vector<16x128xf32>
    %348 = arith.mulf %339, %319 : vector<16x128xf32>
    %349 = arith.mulf %333, %341 : vector<16x128xf32>
    %350 = arith.addf %348, %349 : vector<16x128xf32>
    %351 = math.tanh %350 : vector<16x128xf32>
    %352 = arith.mulf %347, %351 : vector<16x128xf32>
    %353 = arith.truncf %352 : vector<16x128xf32> to vector<16x128xbf16>
    %354 = arith.index_cast %320 : i32 to index
    %c0_114 = arith.constant 0 : index
    %c128 = arith.constant 128 : index
    %355 = vector.load %arg7[%354, %c0_114, %c128] : memref<8x16x256xbf16, #tpu.memory_space<vmem>>, vector<1x16x128xbf16>
    %356 = vector.shape_cast %355 : vector<1x16x128xbf16> to vector<16x128xbf16>
    %357 = vector.shape_cast %353 : vector<16x128xbf16> to vector<1x16x128xbf16>
    tpu.vector_store %arg7[%354, %c0_114, %c128], %357 {strides = array<i32>} : memref<8x16x256xbf16, #tpu.memory_space<vmem>>, vector<1x16x128xbf16>,
    %c1_i32_115 = arith.constant 1 : i32
    %c7_i32_116 = arith.constant 7 : i32
    %358 = arith.subi %c7_i32_116, %c1_i32_115 : i32
    %359 = arith.index_cast %358 : i32 to index
    %c0_117 = arith.constant 0 : index
    %c0_118 = arith.constant 0 : index
    %360 = vector.load %arg8[%359, %c0_117, %c0_118] : memref<8x16x512xf32, #tpu.memory_space<vmem>>, vector<1x16x512xf32>
    %361 = vector.shape_cast %360 : vector<1x16x512xf32> to vector<16x512xf32>
    %362 = arith.truncf %352 : vector<16x128xf32> to vector<16x128xbf16>
    %c0_119 = arith.constant 0 : index
    %c0_120 = arith.constant 0 : index
    %363 = vector.load %arg5[%c0_119, %c0_120] : memref<128x512xbf16, #tpu.memory_space<vmem>>, vector<128x512xbf16>
    %cst_121 = arith.constant dense<0.000000e+00> : vector<16x512xf32>
    %364 = tpu.matmul %362, %363, %cst_121 {dimension_numbers = #tpu.dot_dimension_numbers<[1], [0], [0], [1], [0, 0, 1, 1], [], []>} : vector<16x128xbf16>, vector<128x512xbf16>, vector<16x512xf32> -> vector<16x512xf32>
    %365 = arith.addf %361, %364 : vector<16x512xf32>
    %366 = vector.extract_strided_slice %365 {offsets = [0, 0], sizes = [16, 128], strides = [1, 1]} : vector<16x512xf32> to vector<16x128xf32>
    %367 = arith.negf %366 : vector<16x128xf32>
    %368 = math.exp %367 : vector<16x128xf32>
    %cst_122 = arith.constant 1.000000e+00 : f32
    %369 = vector.broadcast %cst_122 : f32 to vector<16x128xf32>
    %370 = arith.addf %369, %368 : vector<16x128xf32>
    %371 = arith.divf %369, %370 : vector<16x128xf32>
    %372 = vector.extract_strided_slice %365 {offsets = [0, 128], sizes = [16, 128], strides = [1, 1]} : vector<16x512xf32> to vector<16x128xf32>
    %373 = arith.negf %372 : vector<16x128xf32>
    %374 = math.exp %373 : vector<16x128xf32>
    %cst_123 = arith.constant 1.000000e+00 : f32
    %375 = vector.broadcast %cst_123 : f32 to vector<16x128xf32>
    %376 = arith.addf %375, %374 : vector<16x128xf32>
    %377 = arith.divf %375, %376 : vector<16x128xf32>
    %378 = vector.extract_strided_slice %365 {offsets = [0, 256], sizes = [16, 128], strides = [1, 1]} : vector<16x512xf32> to vector<16x128xf32>
    %379 = math.tanh %378 : vector<16x128xf32>
    %380 = vector.extract_strided_slice %365 {offsets = [0, 384], sizes = [16, 128], strides = [1, 1]} : vector<16x512xf32> to vector<16x128xf32>
    %381 = arith.negf %380 : vector<16x128xf32>
    %382 = math.exp %381 : vector<16x128xf32>
    %cst_124 = arith.constant 1.000000e+00 : f32
    %383 = vector.broadcast %cst_124 : f32 to vector<16x128xf32>
    %384 = arith.addf %383, %382 : vector<16x128xf32>
    %385 = arith.divf %383, %384 : vector<16x128xf32>
    %386 = arith.mulf %377, %350 : vector<16x128xf32>
    %387 = arith.mulf %371, %379 : vector<16x128xf32>
    %388 = arith.addf %386, %387 : vector<16x128xf32>
    %389 = math.tanh %388 : vector<16x128xf32>
    %390 = arith.mulf %385, %389 : vector<16x128xf32>
    %391 = arith.truncf %390 : vector<16x128xf32> to vector<16x128xbf16>
    %392 = arith.index_cast %358 : i32 to index
    %c0_125 = arith.constant 0 : index
    %c128_126 = arith.constant 128 : index
    %393 = vector.load %arg7[%392, %c0_125, %c128_126] : memref<8x16x256xbf16, #tpu.memory_space<vmem>>, vector<1x16x128xbf16>
    %394 = vector.shape_cast %393 : vector<1x16x128xbf16> to vector<16x128xbf16>
    %395 = vector.shape_cast %391 : vector<16x128xbf16> to vector<1x16x128xbf16>
    tpu.vector_store %arg7[%392, %c0_125, %c128_126], %395 {strides = array<i32>} : memref<8x16x256xbf16, #tpu.memory_space<vmem>>, vector<1x16x128xbf16>,
    %c2_i32_127 = arith.constant 2 : i32
    %c7_i32_128 = arith.constant 7 : i32
    %396 = arith.subi %c7_i32_128, %c2_i32_127 : i32
    %397 = arith.index_cast %396 : i32 to index
    %c0_129 = arith.constant 0 : index
    %c0_130 = arith.constant 0 : index
    %398 = vector.load %arg8[%397, %c0_129, %c0_130] : memref<8x16x512xf32, #tpu.memory_space<vmem>>, vector<1x16x512xf32>
    %399 = vector.shape_cast %398 : vector<1x16x512xf32> to vector<16x512xf32>
    %400 = arith.truncf %390 : vector<16x128xf32> to vector<16x128xbf16>
    %c0_131 = arith.constant 0 : index
    %c0_132 = arith.constant 0 : index
    %401 = vector.load %arg5[%c0_131, %c0_132] : memref<128x512xbf16, #tpu.memory_space<vmem>>, vector<128x512xbf16>
    %cst_133 = arith.constant dense<0.000000e+00> : vector<16x512xf32>
    %402 = tpu.matmul %400, %401, %cst_133 {dimension_numbers = #tpu.dot_dimension_numbers<[1], [0], [0], [1], [0, 0, 1, 1], [], []>} : vector<16x128xbf16>, vector<128x512xbf16>, vector<16x512xf32> -> vector<16x512xf32>
    %403 = arith.addf %399, %402 : vector<16x512xf32>
    %404 = vector.extract_strided_slice %403 {offsets = [0, 0], sizes = [16, 128], strides = [1, 1]} : vector<16x512xf32> to vector<16x128xf32>
    %405 = arith.negf %404 : vector<16x128xf32>
    %406 = math.exp %405 : vector<16x128xf32>
    %cst_134 = arith.constant 1.000000e+00 : f32
    %407 = vector.broadcast %cst_134 : f32 to vector<16x128xf32>
    %408 = arith.addf %407, %406 : vector<16x128xf32>
    %409 = arith.divf %407, %408 : vector<16x128xf32>
    %410 = vector.extract_strided_slice %403 {offsets = [0, 128], sizes = [16, 128], strides = [1, 1]} : vector<16x512xf32> to vector<16x128xf32>
    %411 = arith.negf %410 : vector<16x128xf32>
    %412 = math.exp %411 : vector<16x128xf32>
    %cst_135 = arith.constant 1.000000e+00 : f32
    %413 = vector.broadcast %cst_135 : f32 to vector<16x128xf32>
    %414 = arith.addf %413, %412 : vector<16x128xf32>
    %415 = arith.divf %413, %414 : vector<16x128xf32>
    %416 = vector.extract_strided_slice %403 {offsets = [0, 256], sizes = [16, 128], strides = [1, 1]} : vector<16x512xf32> to vector<16x128xf32>
    %417 = math.tanh %416 : vector<16x128xf32>
    %418 = vector.extract_strided_slice %403 {offsets = [0, 384], sizes = [16, 128], strides = [1, 1]} : vector<16x512xf32> to vector<16x128xf32>
    %419 = arith.negf %418 : vector<16x128xf32>
    %420 = math.exp %419 : vector<16x128xf32>
    %cst_136 = arith.constant 1.000000e+00 : f32
    %421 = vector.broadcast %cst_136 : f32 to vector<16x128xf32>
    %422 = arith.addf %421, %420 : vector<16x128xf32>
    %423 = arith.divf %421, %422 : vector<16x128xf32>
    %424 = arith.mulf %415, %388 : vector<16x128xf32>
    %425 = arith.mulf %409, %417 : vector<16x128xf32>
    %426 = arith.addf %424, %425 : vector<16x128xf32>
    %427 = math.tanh %426 : vector<16x128xf32>
    %428 = arith.mulf %423, %427 : vector<16x128xf32>
    %429 = arith.truncf %428 : vector<16x128xf32> to vector<16x128xbf16>
    %430 = arith.index_cast %396 : i32 to index
    %c0_137 = arith.constant 0 : index
    %c128_138 = arith.constant 128 : index
    %431 = vector.load %arg7[%430, %c0_137, %c128_138] : memref<8x16x256xbf16, #tpu.memory_space<vmem>>, vector<1x16x128xbf16>
    %432 = vector.shape_cast %431 : vector<1x16x128xbf16> to vector<16x128xbf16>
    %433 = vector.shape_cast %429 : vector<16x128xbf16> to vector<1x16x128xbf16>
    tpu.vector_store %arg7[%430, %c0_137, %c128_138], %433 {strides = array<i32>} : memref<8x16x256xbf16, #tpu.memory_space<vmem>>, vector<1x16x128xbf16>,
    %c3_i32_139 = arith.constant 3 : i32
    %c7_i32_140 = arith.constant 7 : i32
    %434 = arith.subi %c7_i32_140, %c3_i32_139 : i32
    %435 = arith.index_cast %434 : i32 to index
    %c0_141 = arith.constant 0 : index
    %c0_142 = arith.constant 0 : index
    %436 = vector.load %arg8[%435, %c0_141, %c0_142] : memref<8x16x512xf32, #tpu.memory_space<vmem>>, vector<1x16x512xf32>
    %437 = vector.shape_cast %436 : vector<1x16x512xf32> to vector<16x512xf32>
    %438 = arith.truncf %428 : vector<16x128xf32> to vector<16x128xbf16>
    %c0_143 = arith.constant 0 : index
    %c0_144 = arith.constant 0 : index
    %439 = vector.load %arg5[%c0_143, %c0_144] : memref<128x512xbf16, #tpu.memory_space<vmem>>, vector<128x512xbf16>
    %cst_145 = arith.constant dense<0.000000e+00> : vector<16x512xf32>
    %440 = tpu.matmul %438, %439, %cst_145 {dimension_numbers = #tpu.dot_dimension_numbers<[1], [0], [0], [1], [0, 0, 1, 1], [], []>} : vector<16x128xbf16>, vector<128x512xbf16>, vector<16x512xf32> -> vector<16x512xf32>
    %441 = arith.addf %437, %440 : vector<16x512xf32>
    %442 = vector.extract_strided_slice %441 {offsets = [0, 0], sizes = [16, 128], strides = [1, 1]} : vector<16x512xf32> to vector<16x128xf32>
    %443 = arith.negf %442 : vector<16x128xf32>
    %444 = math.exp %443 : vector<16x128xf32>
    %cst_146 = arith.constant 1.000000e+00 : f32
    %445 = vector.broadcast %cst_146 : f32 to vector<16x128xf32>
    %446 = arith.addf %445, %444 : vector<16x128xf32>
    %447 = arith.divf %445, %446 : vector<16x128xf32>
    %448 = vector.extract_strided_slice %441 {offsets = [0, 128], sizes = [16, 128], strides = [1, 1]} : vector<16x512xf32> to vector<16x128xf32>
    %449 = arith.negf %448 : vector<16x128xf32>
    %450 = math.exp %449 : vector<16x128xf32>
    %cst_147 = arith.constant 1.000000e+00 : f32
    %451 = vector.broadcast %cst_147 : f32 to vector<16x128xf32>
    %452 = arith.addf %451, %450 : vector<16x128xf32>
    %453 = arith.divf %451, %452 : vector<16x128xf32>
    %454 = vector.extract_strided_slice %441 {offsets = [0, 256], sizes = [16, 128], strides = [1, 1]} : vector<16x512xf32> to vector<16x128xf32>
    %455 = math.tanh %454 : vector<16x128xf32>
    %456 = vector.extract_strided_slice %441 {offsets = [0, 384], sizes = [16, 128], strides = [1, 1]} : vector<16x512xf32> to vector<16x128xf32>
    %457 = arith.negf %456 : vector<16x128xf32>
    %458 = math.exp %457 : vector<16x128xf32>
    %cst_148 = arith.constant 1.000000e+00 : f32
    %459 = vector.broadcast %cst_148 : f32 to vector<16x128xf32>
    %460 = arith.addf %459, %458 : vector<16x128xf32>
    %461 = arith.divf %459, %460 : vector<16x128xf32>
    %462 = arith.mulf %453, %426 : vector<16x128xf32>
    %463 = arith.mulf %447, %455 : vector<16x128xf32>
    %464 = arith.addf %462, %463 : vector<16x128xf32>
    %465 = math.tanh %464 : vector<16x128xf32>
    %466 = arith.mulf %461, %465 : vector<16x128xf32>
    %467 = arith.truncf %466 : vector<16x128xf32> to vector<16x128xbf16>
    %468 = arith.index_cast %434 : i32 to index
    %c0_149 = arith.constant 0 : index
    %c128_150 = arith.constant 128 : index
    %469 = vector.load %arg7[%468, %c0_149, %c128_150] : memref<8x16x256xbf16, #tpu.memory_space<vmem>>, vector<1x16x128xbf16>
    %470 = vector.shape_cast %469 : vector<1x16x128xbf16> to vector<16x128xbf16>
    %471 = vector.shape_cast %467 : vector<16x128xbf16> to vector<1x16x128xbf16>
    tpu.vector_store %arg7[%468, %c0_149, %c128_150], %471 {strides = array<i32>} : memref<8x16x256xbf16, #tpu.memory_space<vmem>>, vector<1x16x128xbf16>,
    %c4_i32_151 = arith.constant 4 : i32
    %c7_i32_152 = arith.constant 7 : i32
    %472 = arith.subi %c7_i32_152, %c4_i32_151 : i32
    %473 = arith.index_cast %472 : i32 to index
    %c0_153 = arith.constant 0 : index
    %c0_154 = arith.constant 0 : index
    %474 = vector.load %arg8[%473, %c0_153, %c0_154] : memref<8x16x512xf32, #tpu.memory_space<vmem>>, vector<1x16x512xf32>
    %475 = vector.shape_cast %474 : vector<1x16x512xf32> to vector<16x512xf32>
    %476 = arith.truncf %466 : vector<16x128xf32> to vector<16x128xbf16>
    %c0_155 = arith.constant 0 : index
    %c0_156 = arith.constant 0 : index
    %477 = vector.load %arg5[%c0_155, %c0_156] : memref<128x512xbf16, #tpu.memory_space<vmem>>, vector<128x512xbf16>
    %cst_157 = arith.constant dense<0.000000e+00> : vector<16x512xf32>
    %478 = tpu.matmul %476, %477, %cst_157 {dimension_numbers = #tpu.dot_dimension_numbers<[1], [0], [0], [1], [0, 0, 1, 1], [], []>} : vector<16x128xbf16>, vector<128x512xbf16>, vector<16x512xf32> -> vector<16x512xf32>
    %479 = arith.addf %475, %478 : vector<16x512xf32>
    %480 = vector.extract_strided_slice %479 {offsets = [0, 0], sizes = [16, 128], strides = [1, 1]} : vector<16x512xf32> to vector<16x128xf32>
    %481 = arith.negf %480 : vector<16x128xf32>
    %482 = math.exp %481 : vector<16x128xf32>
    %cst_158 = arith.constant 1.000000e+00 : f32
    %483 = vector.broadcast %cst_158 : f32 to vector<16x128xf32>
    %484 = arith.addf %483, %482 : vector<16x128xf32>
    %485 = arith.divf %483, %484 : vector<16x128xf32>
    %486 = vector.extract_strided_slice %479 {offsets = [0, 128], sizes = [16, 128], strides = [1, 1]} : vector<16x512xf32> to vector<16x128xf32>
    %487 = arith.negf %486 : vector<16x128xf32>
    %488 = math.exp %487 : vector<16x128xf32>
    %cst_159 = arith.constant 1.000000e+00 : f32
    %489 = vector.broadcast %cst_159 : f32 to vector<16x128xf32>
    %490 = arith.addf %489, %488 : vector<16x128xf32>
    %491 = arith.divf %489, %490 : vector<16x128xf32>
    %492 = vector.extract_strided_slice %479 {offsets = [0, 256], sizes = [16, 128], strides = [1, 1]} : vector<16x512xf32> to vector<16x128xf32>
    %493 = math.tanh %492 : vector<16x128xf32>
    %494 = vector.extract_strided_slice %479 {offsets = [0, 384], sizes = [16, 128], strides = [1, 1]} : vector<16x512xf32> to vector<16x128xf32>
    %495 = arith.negf %494 : vector<16x128xf32>
    %496 = math.exp %495 : vector<16x128xf32>
    %cst_160 = arith.constant 1.000000e+00 : f32
    %497 = vector.broadcast %cst_160 : f32 to vector<16x128xf32>
    %498 = arith.addf %497, %496 : vector<16x128xf32>
    %499 = arith.divf %497, %498 : vector<16x128xf32>
    %500 = arith.mulf %491, %464 : vector<16x128xf32>
    %501 = arith.mulf %485, %493 : vector<16x128xf32>
    %502 = arith.addf %500, %501 : vector<16x128xf32>
    %503 = math.tanh %502 : vector<16x128xf32>
    %504 = arith.mulf %499, %503 : vector<16x128xf32>
    %505 = arith.truncf %504 : vector<16x128xf32> to vector<16x128xbf16>
    %506 = arith.index_cast %472 : i32 to index
    %c0_161 = arith.constant 0 : index
    %c128_162 = arith.constant 128 : index
    %507 = vector.load %arg7[%506, %c0_161, %c128_162] : memref<8x16x256xbf16, #tpu.memory_space<vmem>>, vector<1x16x128xbf16>
    %508 = vector.shape_cast %507 : vector<1x16x128xbf16> to vector<16x128xbf16>
    %509 = vector.shape_cast %505 : vector<16x128xbf16> to vector<1x16x128xbf16>
    tpu.vector_store %arg7[%506, %c0_161, %c128_162], %509 {strides = array<i32>} : memref<8x16x256xbf16, #tpu.memory_space<vmem>>, vector<1x16x128xbf16>,
    %c5_i32_163 = arith.constant 5 : i32
    %c7_i32_164 = arith.constant 7 : i32
    %510 = arith.subi %c7_i32_164, %c5_i32_163 : i32
    %511 = arith.index_cast %510 : i32 to index
    %c0_165 = arith.constant 0 : index
    %c0_166 = arith.constant 0 : index
    %512 = vector.load %arg8[%511, %c0_165, %c0_166] : memref<8x16x512xf32, #tpu.memory_space<vmem>>, vector<1x16x512xf32>
    %513 = vector.shape_cast %512 : vector<1x16x512xf32> to vector<16x512xf32>
    %514 = arith.truncf %504 : vector<16x128xf32> to vector<16x128xbf16>
    %c0_167 = arith.constant 0 : index
    %c0_168 = arith.constant 0 : index
    %515 = vector.load %arg5[%c0_167, %c0_168] : memref<128x512xbf16, #tpu.memory_space<vmem>>, vector<128x512xbf16>
    %cst_169 = arith.constant dense<0.000000e+00> : vector<16x512xf32>
    %516 = tpu.matmul %514, %515, %cst_169 {dimension_numbers = #tpu.dot_dimension_numbers<[1], [0], [0], [1], [0, 0, 1, 1], [], []>} : vector<16x128xbf16>, vector<128x512xbf16>, vector<16x512xf32> -> vector<16x512xf32>
    %517 = arith.addf %513, %516 : vector<16x512xf32>
    %518 = vector.extract_strided_slice %517 {offsets = [0, 0], sizes = [16, 128], strides = [1, 1]} : vector<16x512xf32> to vector<16x128xf32>
    %519 = arith.negf %518 : vector<16x128xf32>
    %520 = math.exp %519 : vector<16x128xf32>
    %cst_170 = arith.constant 1.000000e+00 : f32
    %521 = vector.broadcast %cst_170 : f32 to vector<16x128xf32>
    %522 = arith.addf %521, %520 : vector<16x128xf32>
    %523 = arith.divf %521, %522 : vector<16x128xf32>
    %524 = vector.extract_strided_slice %517 {offsets = [0, 128], sizes = [16, 128], strides = [1, 1]} : vector<16x512xf32> to vector<16x128xf32>
    %525 = arith.negf %524 : vector<16x128xf32>
    %526 = math.exp %525 : vector<16x128xf32>
    %cst_171 = arith.constant 1.000000e+00 : f32
    %527 = vector.broadcast %cst_171 : f32 to vector<16x128xf32>
    %528 = arith.addf %527, %526 : vector<16x128xf32>
    %529 = arith.divf %527, %528 : vector<16x128xf32>
    %530 = vector.extract_strided_slice %517 {offsets = [0, 256], sizes = [16, 128], strides = [1, 1]} : vector<16x512xf32> to vector<16x128xf32>
    %531 = math.tanh %530 : vector<16x128xf32>
    %532 = vector.extract_strided_slice %517 {offsets = [0, 384], sizes = [16, 128], strides = [1, 1]} : vector<16x512xf32> to vector<16x128xf32>
    %533 = arith.negf %532 : vector<16x128xf32>
    %534 = math.exp %533 : vector<16x128xf32>
    %cst_172 = arith.constant 1.000000e+00 : f32
    %535 = vector.broadcast %cst_172 : f32 to vector<16x128xf32>
    %536 = arith.addf %535, %534 : vector<16x128xf32>
    %537 = arith.divf %535, %536 : vector<16x128xf32>
    %538 = arith.mulf %529, %502 : vector<16x128xf32>
    %539 = arith.mulf %523, %531 : vector<16x128xf32>
    %540 = arith.addf %538, %539 : vector<16x128xf32>
    %541 = math.tanh %540 : vector<16x128xf32>
    %542 = arith.mulf %537, %541 : vector<16x128xf32>
    %543 = arith.truncf %542 : vector<16x128xf32> to vector<16x128xbf16>
    %544 = arith.index_cast %510 : i32 to index
    %c0_173 = arith.constant 0 : index
    %c128_174 = arith.constant 128 : index
    %545 = vector.load %arg7[%544, %c0_173, %c128_174] : memref<8x16x256xbf16, #tpu.memory_space<vmem>>, vector<1x16x128xbf16>
    %546 = vector.shape_cast %545 : vector<1x16x128xbf16> to vector<16x128xbf16>
    %547 = vector.shape_cast %543 : vector<16x128xbf16> to vector<1x16x128xbf16>
    tpu.vector_store %arg7[%544, %c0_173, %c128_174], %547 {strides = array<i32>} : memref<8x16x256xbf16, #tpu.memory_space<vmem>>, vector<1x16x128xbf16>,
    %c6_i32_175 = arith.constant 6 : i32
    %c7_i32_176 = arith.constant 7 : i32
    %548 = arith.subi %c7_i32_176, %c6_i32_175 : i32
    %549 = arith.index_cast %548 : i32 to index
    %c0_177 = arith.constant 0 : index
    %c0_178 = arith.constant 0 : index
    %550 = vector.load %arg8[%549, %c0_177, %c0_178] : memref<8x16x512xf32, #tpu.memory_space<vmem>>, vector<1x16x512xf32>
    %551 = vector.shape_cast %550 : vector<1x16x512xf32> to vector<16x512xf32>
    %552 = arith.truncf %542 : vector<16x128xf32> to vector<16x128xbf16>
    %c0_179 = arith.constant 0 : index
    %c0_180 = arith.constant 0 : index
    %553 = vector.load %arg5[%c0_179, %c0_180] : memref<128x512xbf16, #tpu.memory_space<vmem>>, vector<128x512xbf16>
    %cst_181 = arith.constant dense<0.000000e+00> : vector<16x512xf32>
    %554 = tpu.matmul %552, %553, %cst_181 {dimension_numbers = #tpu.dot_dimension_numbers<[1], [0], [0], [1], [0, 0, 1, 1], [], []>} : vector<16x128xbf16>, vector<128x512xbf16>, vector<16x512xf32> -> vector<16x512xf32>
    %555 = arith.addf %551, %554 : vector<16x512xf32>
    %556 = vector.extract_strided_slice %555 {offsets = [0, 0], sizes = [16, 128], strides = [1, 1]} : vector<16x512xf32> to vector<16x128xf32>
    %557 = arith.negf %556 : vector<16x128xf32>
    %558 = math.exp %557 : vector<16x128xf32>
    %cst_182 = arith.constant 1.000000e+00 : f32
    %559 = vector.broadcast %cst_182 : f32 to vector<16x128xf32>
    %560 = arith.addf %559, %558 : vector<16x128xf32>
    %561 = arith.divf %559, %560 : vector<16x128xf32>
    %562 = vector.extract_strided_slice %555 {offsets = [0, 128], sizes = [16, 128], strides = [1, 1]} : vector<16x512xf32> to vector<16x128xf32>
    %563 = arith.negf %562 : vector<16x128xf32>
    %564 = math.exp %563 : vector<16x128xf32>
    %cst_183 = arith.constant 1.000000e+00 : f32
    %565 = vector.broadcast %cst_183 : f32 to vector<16x128xf32>
    %566 = arith.addf %565, %564 : vector<16x128xf32>
    %567 = arith.divf %565, %566 : vector<16x128xf32>
    %568 = vector.extract_strided_slice %555 {offsets = [0, 256], sizes = [16, 128], strides = [1, 1]} : vector<16x512xf32> to vector<16x128xf32>
    %569 = math.tanh %568 : vector<16x128xf32>
    %570 = vector.extract_strided_slice %555 {offsets = [0, 384], sizes = [16, 128], strides = [1, 1]} : vector<16x512xf32> to vector<16x128xf32>
    %571 = arith.negf %570 : vector<16x128xf32>
    %572 = math.exp %571 : vector<16x128xf32>
    %cst_184 = arith.constant 1.000000e+00 : f32
    %573 = vector.broadcast %cst_184 : f32 to vector<16x128xf32>
    %574 = arith.addf %573, %572 : vector<16x128xf32>
    %575 = arith.divf %573, %574 : vector<16x128xf32>
    %576 = arith.mulf %567, %540 : vector<16x128xf32>
    %577 = arith.mulf %561, %569 : vector<16x128xf32>
    %578 = arith.addf %576, %577 : vector<16x128xf32>
    %579 = math.tanh %578 : vector<16x128xf32>
    %580 = arith.mulf %575, %579 : vector<16x128xf32>
    %581 = arith.truncf %580 : vector<16x128xf32> to vector<16x128xbf16>
    %582 = arith.index_cast %548 : i32 to index
    %c0_185 = arith.constant 0 : index
    %c128_186 = arith.constant 128 : index
    %583 = vector.load %arg7[%582, %c0_185, %c128_186] : memref<8x16x256xbf16, #tpu.memory_space<vmem>>, vector<1x16x128xbf16>
    %584 = vector.shape_cast %583 : vector<1x16x128xbf16> to vector<16x128xbf16>
    %585 = vector.shape_cast %581 : vector<16x128xbf16> to vector<1x16x128xbf16>
    tpu.vector_store %arg7[%582, %c0_185, %c128_186], %585 {strides = array<i32>} : memref<8x16x256xbf16, #tpu.memory_space<vmem>>, vector<1x16x128xbf16>,
    %c7_i32_187 = arith.constant 7 : i32
    %c7_i32_188 = arith.constant 7 : i32
    %586 = arith.subi %c7_i32_188, %c7_i32_187 : i32
    %587 = arith.index_cast %586 : i32 to index
    %c0_189 = arith.constant 0 : index
    %c0_190 = arith.constant 0 : index
    %588 = vector.load %arg8[%587, %c0_189, %c0_190] : memref<8x16x512xf32, #tpu.memory_space<vmem>>, vector<1x16x512xf32>
    %589 = vector.shape_cast %588 : vector<1x16x512xf32> to vector<16x512xf32>
    %590 = arith.truncf %580 : vector<16x128xf32> to vector<16x128xbf16>
    %c0_191 = arith.constant 0 : index
    %c0_192 = arith.constant 0 : index
    %591 = vector.load %arg5[%c0_191, %c0_192] : memref<128x512xbf16, #tpu.memory_space<vmem>>, vector<128x512xbf16>
    %cst_193 = arith.constant dense<0.000000e+00> : vector<16x512xf32>
    %592 = tpu.matmul %590, %591, %cst_193 {dimension_numbers = #tpu.dot_dimension_numbers<[1], [0], [0], [1], [0, 0, 1, 1], [], []>} : vector<16x128xbf16>, vector<128x512xbf16>, vector<16x512xf32> -> vector<16x512xf32>
    %593 = arith.addf %589, %592 : vector<16x512xf32>
    %594 = vector.extract_strided_slice %593 {offsets = [0, 0], sizes = [16, 128], strides = [1, 1]} : vector<16x512xf32> to vector<16x128xf32>
    %595 = arith.negf %594 : vector<16x128xf32>
    %596 = math.exp %595 : vector<16x128xf32>
    %cst_194 = arith.constant 1.000000e+00 : f32
    %597 = vector.broadcast %cst_194 : f32 to vector<16x128xf32>
    %598 = arith.addf %597, %596 : vector<16x128xf32>
    %599 = arith.divf %597, %598 : vector<16x128xf32>
    %600 = vector.extract_strided_slice %593 {offsets = [0, 128], sizes = [16, 128], strides = [1, 1]} : vector<16x512xf32> to vector<16x128xf32>
    %601 = arith.negf %600 : vector<16x128xf32>
    %602 = math.exp %601 : vector<16x128xf32>
    %cst_195 = arith.constant 1.000000e+00 : f32
    %603 = vector.broadcast %cst_195 : f32 to vector<16x128xf32>
    %604 = arith.addf %603, %602 : vector<16x128xf32>
    %605 = arith.divf %603, %604 : vector<16x128xf32>
    %606 = vector.extract_strided_slice %593 {offsets = [0, 256], sizes = [16, 128], strides = [1, 1]} : vector<16x512xf32> to vector<16x128xf32>
    %607 = math.tanh %606 : vector<16x128xf32>
    %608 = vector.extract_strided_slice %593 {offsets = [0, 384], sizes = [16, 128], strides = [1, 1]} : vector<16x512xf32> to vector<16x128xf32>
    %609 = arith.negf %608 : vector<16x128xf32>
    %610 = math.exp %609 : vector<16x128xf32>
    %cst_196 = arith.constant 1.000000e+00 : f32
    %611 = vector.broadcast %cst_196 : f32 to vector<16x128xf32>
    %612 = arith.addf %611, %610 : vector<16x128xf32>
    %613 = arith.divf %611, %612 : vector<16x128xf32>
    %614 = arith.mulf %605, %578 : vector<16x128xf32>
    %615 = arith.mulf %599, %607 : vector<16x128xf32>
    %616 = arith.addf %614, %615 : vector<16x128xf32>
    %617 = math.tanh %616 : vector<16x128xf32>
    %618 = arith.mulf %613, %617 : vector<16x128xf32>
    %619 = arith.truncf %618 : vector<16x128xf32> to vector<16x128xbf16>
    %620 = arith.index_cast %586 : i32 to index
    %c0_197 = arith.constant 0 : index
    %c128_198 = arith.constant 128 : index
    %621 = vector.load %arg7[%620, %c0_197, %c128_198] : memref<8x16x256xbf16, #tpu.memory_space<vmem>>, vector<1x16x128xbf16>
    %622 = vector.shape_cast %621 : vector<1x16x128xbf16> to vector<16x128xbf16>
    %623 = vector.shape_cast %619 : vector<16x128xbf16> to vector<1x16x128xbf16>
    tpu.vector_store %arg7[%620, %c0_197, %c128_198], %623 {strides = array<i32>} : memref<8x16x256xbf16, #tpu.memory_space<vmem>>, vector<1x16x128xbf16>,
    %c8_i32_199 = arith.constant 8 : i32
    return
  }
}

</mosaic_0001>

<llo_original>
// kernel: lstm_classifier_forward.3
$region0: #{lstm_classifier_forward.3}
  #allocation0 [shape = 'u32[]', space=smem, size = 0x4, offset = 0x4, fixed_abs, tag = 'smem constant byte address 0x4 - core index']
  #allocation1 [shape = 'u32[144,128]{1,0:T(1,128)}', space=vmem, size = 0x12000, scoped, tag = 'internal scratch']
  #allocation2 [shape = 'f32[8,16,512]{2,1,0:T(8,128)}', space=vmem, size = 0x40000, scoped, tag = 'scratch operand']
  %s0 = inlined_call_operand.vmem [shape: bf16[8,16,256], index: 0, kind: input, shape index: {}]
  %s1 = inlined_call_operand.vmem [shape: bf16[256,512], index: 1, kind: input, shape index: {}]
  %s2 = inlined_call_operand.vmem [shape: bf16[128,512], index: 2, kind: input, shape index: {}]
  %s3 = inlined_call_operand.vmem [shape: f32[1,512], index: 3, kind: input, shape index: {}]
  %s4 = inlined_call_operand.vmem [shape: bf16[256,512], index: 4, kind: input, shape index: {}]
  %s5 = inlined_call_operand.vmem [shape: bf16[128,512], index: 5, kind: input, shape index: {}]
  %s6 = inlined_call_operand.vmem [shape: f32[1,512], index: 6, kind: input, shape index: {}]
  %s7 = inlined_call_operand.vmem [shape: f32[128,128], index: 7, kind: input, shape index: {}]
  %s8 = inlined_call_operand.hbm [shape: f32[128,128], index: 8, kind: input, shape index: {}]
  %s9 = inlined_call_operand.vmem [shape: f32[1,128], index: 9, kind: input, shape index: {}]
  %s10 = inlined_call_operand.hbm [shape: f32[128,128], index: 10, kind: input, shape index: {}]
  %s11 = inlined_call_operand.vmem [shape: f32[1,128], index: 11, kind: input, shape index: {}]
  %s12 = inlined_call_operand.vmem [shape: f32[16,128], index: 12, kind: output, shape index: {}]
  %s13 = sld [smem:[#allocation0]]
  $region66: #{lstm_classifier_forward.3} parent=0
    _
  %s15 = ssub.s32 1, %s13
  %s16 = scalar_select 0, %s15, %s13
  $region1: #{lstm_classifier_forward.3} parent=0
    #allocation3 [shape = 'u8[65536]{0}', space=vmem, size = 0x10000, scoped, tag = 'input window, operand 8, single buffered']
    #allocation4 [shape = 's32[1]{0}', space=sflag, size = 0x4, scoped, tag = 'scoped memory for lstm_classifier_forward.3']
    #allocation5 [shape = 'u8[65536]{0}', space=vmem, size = 0x10000, scoped, tag = 'input window, operand 10, single buffered']
    #allocation6 [shape = 's32[1]{0}', space=sflag, size = 0x4, scoped, tag = 'scoped memory for lstm_classifier_forward.3']
    %17 = vsyncpa [#allocation4], 0
    %18 = vsyncpa [#allocation6], 0
    // Predicated region
    $region2: #{lstm_classifier_forward.3} parent=1 // pred_check
      _
    $region3: #{lstm_classifier_forward.3} parent=1 // pred_check_branch
      %20 = sbr.rel (0) target = $region5
    $region4: #{lstm_classifier_forward.3} parent=1 // pred_region
      _
    $region5: #{lstm_classifier_forward.3} parent=1 // pred_fallthru
      _
    // Predicated region
    $region6: #{lstm_classifier_forward.3} parent=1 // pred_check
      _
    $region7: #{lstm_classifier_forward.3} parent=1 // pred_check_branch
      %22 = sbr.rel (0) target = $region9
    $region8: #{lstm_classifier_forward.3} parent=1 // pred_region
      _
    $region9: #{lstm_classifier_forward.3} parent=1 // pred_fallthru
      _
    // Predicated region
    $region10: #{lstm_classifier_forward.3} parent=1 // pred_check
      _
    $region11: #{lstm_classifier_forward.3} parent=1 // pred_check_branch
      %24 = sbr.rel (0) target = $region13
    $region12: #{lstm_classifier_forward.3} parent=1 // pred_region
      _
    $region13: #{lstm_classifier_forward.3} parent=1 // pred_fallthru
      _
    // Predicated region
    $region14: #{lstm_classifier_forward.3} parent=1 // pred_check
      _
    $region15: #{lstm_classifier_forward.3} parent=1 // pred_check_branch
      %26 = sbr.rel (0) target = $region17
    $region16: #{lstm_classifier_forward.3} parent=1 // pred_region
      _
    $region17: #{lstm_classifier_forward.3} parent=1 // pred_fallthru
      _
    // Predicated region
    $region18: #{lstm_classifier_forward.3} parent=1 // pred_check
      _
    $region19: #{lstm_classifier_forward.3} parent=1 // pred_check_branch
      %28 = sbr.rel (0) target = $region21
    $region20: #{lstm_classifier_forward.3} parent=1 // pred_region
      _
    $region21: #{lstm_classifier_forward.3} parent=1 // pred_fallthru
      _
    // Predicated region
    $region22: #{lstm_classifier_forward.3} parent=1 // pred_check
      _
    $region23: #{lstm_classifier_forward.3} parent=1 // pred_check_branch
      %30 = sbr.rel (0) target = $region25
    $region24: #{lstm_classifier_forward.3} parent=1 // pred_region
      _
    $region25: #{lstm_classifier_forward.3} parent=1 // pred_fallthru
      _
    // Predicated region
    $region26: #{lstm_classifier_forward.3} parent=1 // pred_check
      _
    $region27: #{lstm_classifier_forward.3} parent=1 // pred_check_branch
      %32 = sbr.rel (0) target = $region29
    $region28: #{lstm_classifier_forward.3} parent=1 // pred_region
      _
    $region29: #{lstm_classifier_forward.3} parent=1 // pred_fallthru
      _
    // Predicated region
    $region30: #{lstm_classifier_forward.3} parent=1 // pred_check
      _
    $region31: #{lstm_classifier_forward.3} parent=1 // pred_check_branch
      %34 = sbr.rel (0) target = $region33
    $region32: #{lstm_classifier_forward.3} parent=1 // pred_region
      _
    $region33: #{lstm_classifier_forward.3} parent=1 // pred_fallthru
      _
    // Predicated region
    $region34: #{lstm_classifier_forward.3} parent=1 // pred_check
      _
    $region35: #{lstm_classifier_forward.3} parent=1 // pred_check_branch
      %36 = sbr.rel (0) target = $region37
    $region36: #{lstm_classifier_forward.3} parent=1 // pred_region
      %s38 = ssub.s32 2048, 2048
      %39 = vsyncadd [#allocation4], %s38
      %s40 = sshll.u32 [#allocation3], 4
      %s41 = int_to_ptr.vmem [resolvable:$true] %s40
      %46 = dma.hbm_to_vmem [thread:$0]  %s8, 2048, %s41, [#allocation4], 128, 128, 8
    $region37: #{lstm_classifier_forward.3} parent=1 // pred_fallthru
      _
    // Predicated region
    $region38: #{lstm_classifier_forward.3} parent=1 // pred_check
      _
    $region39: #{lstm_classifier_forward.3} parent=1 // pred_check_branch
      %48 = sbr.rel (0) target = $region41
    $region40: #{lstm_classifier_forward.3} parent=1 // pred_region
      _
    $region41: #{lstm_classifier_forward.3} parent=1 // pred_fallthru
      _
    // Predicated region
    $region42: #{lstm_classifier_forward.3} parent=1 // pred_check
      _
    $region43: #{lstm_classifier_forward.3} parent=1 // pred_check_branch
      %50 = sbr.rel (0) target = $region45
    $region44: #{lstm_classifier_forward.3} parent=1 // pred_region
      %s52 = ssub.s32 2048, 2048
      %53 = vsyncadd [#allocation6], %s52
      %s54 = sshll.u32 [#allocation5], 4
      %s55 = int_to_ptr.vmem [resolvable:$true] %s54
      %60 = dma.hbm_to_vmem [thread:$0]  %s10, 2048, %s55, [#allocation6], 128, 128, 8
    $region45: #{lstm_classifier_forward.3} parent=1 // pred_fallthru
      _
    // Predicated region
    $region46: #{lstm_classifier_forward.3} parent=1 // pred_check
      _
    $region47: #{lstm_classifier_forward.3} parent=1 // pred_check_branch
      %62 = sbr.rel (0) target = $region49
    $region48: #{lstm_classifier_forward.3} parent=1 // pred_region
      _
    $region49: #{lstm_classifier_forward.3} parent=1 // pred_fallthru
      _
    // Predicated region
    $region50: #{lstm_classifier_forward.3} parent=1 // pred_check
      _
    $region51: #{lstm_classifier_forward.3} parent=1 // pred_check_branch
      %64 = sbr.rel (0) target = $region53
    $region52: #{lstm_classifier_forward.3} parent=1 // pred_region
      %65 = dma.done [#allocation4], 2048
    $region53: #{lstm_classifier_forward.3} parent=1 // pred_fallthru
      _
    // Predicated region
    $region54: #{lstm_classifier_forward.3} parent=1 // pred_check
      _
    $region55: #{lstm_classifier_forward.3} parent=1 // pred_check_branch
      %67 = sbr.rel (0) target = $region57
    $region56: #{lstm_classifier_forward.3} parent=1 // pred_region
      %68 = dma.done [#allocation6], 2048
    $region57: #{lstm_classifier_forward.3} parent=1 // pred_fallthru
      _
    %v70 = vld [vmem:[%s0] sm:$0xff]
    %v71 = vld [vmem:[%s0 + $0x8] sm:$0xff]
    %v72 = vld [vmem:[%s0 + $0x10] sm:$0xff]
    %v73 = vld [vmem:[%s0 + $0x18] sm:$0xff]
    %v74 = vld [vmem:[%s0 + $0x20] sm:$0xff]
    %v75 = vld [vmem:[%s0 + $0x28] sm:$0xff]
    %v76 = vld [vmem:[%s0 + $0x30] sm:$0xff]
    %v77 = vld [vmem:[%s0 + $0x38] sm:$0xff]
    %v78 = vld [vmem:[%s0 + $0x40] sm:$0xff]
    %v79 = vld [vmem:[%s0 + $0x48] sm:$0xff]
    %v80 = vld [vmem:[%s0 + $0x50] sm:$0xff]
    %v81 = vld [vmem:[%s0 + $0x58] sm:$0xff]
    %v82 = vld [vmem:[%s0 + $0x60] sm:$0xff]
    %v83 = vld [vmem:[%s0 + $0x68] sm:$0xff]
    %v84 = vld [vmem:[%s0 + $0x70] sm:$0xff]
    %v85 = vld [vmem:[%s0 + $0x78] sm:$0xff]
    %v86 = vld [vmem:[%s1] sm:$0xff]
    %v87 = vld [vmem:[%s1 + $0x8] sm:$0xff]
    %v88 = vld [vmem:[%s1 + $0x10] sm:$0xff]
    %v89 = vld [vmem:[%s1 + $0x18] sm:$0xff]
    %v90 = vld [vmem:[%s1 + $0x20] sm:$0xff]
    %v91 = vld [vmem:[%s1 + $0x28] sm:$0xff]
    %v92 = vld [vmem:[%s1 + $0x30] sm:$0xff]
    %v93 = vld [vmem:[%s1 + $0x38] sm:$0xff]
    %v94 = vld [vmem:[%s1 + $0x40] sm:$0xff]
    %v95 = vld [vmem:[%s1 + $0x48] sm:$0xff]
    %v96 = vld [vmem:[%s1 + $0x50] sm:$0xff]
    %v97 = vld [vmem:[%s1 + $0x58] sm:$0xff]
    %v98 = vld [vmem:[%s1 + $0x60] sm:$0xff]
    %v99 = vld [vmem:[%s1 + $0x68] sm:$0xff]
    %v100 = vld [vmem:[%s1 + $0x70] sm:$0xff]
    %v101 = vld [vmem:[%s1 + $0x78] sm:$0xff]
    %v102 = vld [vmem:[%s1 + $0x80] sm:$0xff]
    %v103 = vld [vmem:[%s1 + $0x88] sm:$0xff]
    %v104 = vld [vmem:[%s1 + $0x90] sm:$0xff]
    %v105 = vld [vmem:[%s1 + $0x98] sm:$0xff]
    %v106 = vld [vmem:[%s1 + $0xa0] sm:$0xff]
    %v107 = vld [vmem:[%s1 + $0xa8] sm:$0xff]
    %v108 = vld [vmem:[%s1 + $0xb0] sm:$0xff]
    %v109 = vld [vmem:[%s1 + $0xb8] sm:$0xff]
    %v110 = vld [vmem:[%s1 + $0xc0] sm:$0xff]
    %v111 = vld [vmem:[%s1 + $0xc8] sm:$0xff]
    %v112 = vld [vmem:[%s1 + $0xd0] sm:$0xff]
    %v113 = vld [vmem:[%s1 + $0xd8] sm:$0xff]
    %v114 = vld [vmem:[%s1 + $0xe0] sm:$0xff]
    %v115 = vld [vmem:[%s1 + $0xe8] sm:$0xff]
    %v116 = vld [vmem:[%s1 + $0xf0] sm:$0xff]
    %v117 = vld [vmem:[%s1 + $0xf8] sm:$0xff]
    %v118 = vld [vmem:[%s1 + $0x100] sm:$0xff]
    %v119 = vld [vmem:[%s1 + $0x108] sm:$0xff]
    %v120 = vld [vmem:[%s1 + $0x110] sm:$0xff]
    %v121 = vld [vmem:[%s1 + $0x118] sm:$0xff]
    %v122 = vld [vmem:[%s1 + $0x120] sm:$0xff]
    %v123 = vld [vmem:[%s1 + $0x128] sm:$0xff]
    %v124 = vld [vmem:[%s1 + $0x130] sm:$0xff]
    %v125 = vld [vmem:[%s1 + $0x138] sm:$0xff]
    %v126 = vld [vmem:[%s1 + $0x140] sm:$0xff]
    %v127 = vld [vmem:[%s1 + $0x148] sm:$0xff]
    %v128 = vld [vmem:[%s1 + $0x150] sm:$0xff]
    %v129 = vld [vmem:[%s1 + $0x158] sm:$0xff]
    %v130 = vld [vmem:[%s1 + $0x160] sm:$0xff]
    %v131 = vld [vmem:[%s1 + $0x168] sm:$0xff]
    %v132 = vld [vmem:[%s1 + $0x170] sm:$0xff]
    %v133 = vld [vmem:[%s1 + $0x178] sm:$0xff]
    %v134 = vld [vmem:[%s1 + $0x180] sm:$0xff]
    %v135 = vld [vmem:[%s1 + $0x188] sm:$0xff]
    %v136 = vld [vmem:[%s1 + $0x190] sm:$0xff]
    %v137 = vld [vmem:[%s1 + $0x198] sm:$0xff]
    %v138 = vld [vmem:[%s1 + $0x1a0] sm:$0xff]
    %v139 = vld [vmem:[%s1 + $0x1a8] sm:$0xff]
    %v140 = vld [vmem:[%s1 + $0x1b0] sm:$0xff]
    %v141 = vld [vmem:[%s1 + $0x1b8] sm:$0xff]
    %v142 = vld [vmem:[%s1 + $0x1c0] sm:$0xff]
    %v143 = vld [vmem:[%s1 + $0x1c8] sm:$0xff]
    %v144 = vld [vmem:[%s1 + $0x1d0] sm:$0xff]
    %v145 = vld [vmem:[%s1 + $0x1d8] sm:$0xff]
    %v146 = vld [vmem:[%s1 + $0x1e0] sm:$0xff]
    %v147 = vld [vmem:[%s1 + $0x1e8] sm:$0xff]
    %v148 = vld [vmem:[%s1 + $0x1f0] sm:$0xff]
    %v149 = vld [vmem:[%s1 + $0x1f8] sm:$0xff]
    %v150 = vld [vmem:[%s3] sm:$0xf]
    %v152 = vlaneseq
    %v153 = vshrl.u32 %v152, 7
    %v154 = vsub.s32 0, %v153
    %v155 = vrot.slane %v150, %v154
    %v156 = vlaneseq
    %v157 = vshrl.u32 %v156, 7
    %v158 = vsub.s32 1, %v157
    %v159 = vrot.slane %v150, %v158
    %v160 = vlaneseq
    %v161 = vshrl.u32 %v160, 7
    %v162 = vsub.s32 2, %v161
    %v163 = vrot.slane %v150, %v162
    %v164 = vlaneseq
    %v165 = vshrl.u32 %v164, 7
    %v166 = vsub.s32 3, %v165
    %v167 = vrot.slane %v150, %v166
    %v188 = vunpack.c.l.b16 %v70
    %v189 = vunpack.c.h.b16 %v70
    %v190 = vunpack.c.l.b16 %v71
    %v191 = vunpack.c.h.b16 %v71
    %v192 = vunpack.c.l.b16 %v72
    %v193 = vunpack.c.h.b16 %v72
    %v194 = vunpack.c.l.b16 %v73
    %v195 = vunpack.c.h.b16 %v73
    %v196 = vunpack.c.l.b16 %v74
    %v197 = vunpack.c.h.b16 %v74
    %v198 = vunpack.c.l.b16 %v75
    %v199 = vunpack.c.h.b16 %v75
    %v200 = vunpack.c.l.b16 %v76
    %v201 = vunpack.c.h.b16 %v76
    %v202 = vunpack.c.l.b16 %v77
    %v203 = vunpack.c.h.b16 %v77
    %v204 = vunpack.c.l.b16 %v78
    %v205 = vunpack.c.h.b16 %v78
    %v206 = vunpack.c.l.b16 %v79
    %v207 = vunpack.c.h.b16 %v79
    %v208 = vunpack.c.l.b16 %v80
    %v209 = vunpack.c.h.b16 %v80
    %v210 = vunpack.c.l.b16 %v81
    %v211 = vunpack.c.h.b16 %v81
    %v212 = vunpack.c.l.b16 %v82
    %v213 = vunpack.c.h.b16 %v82
    %v214 = vunpack.c.l.b16 %v83
    %v215 = vunpack.c.h.b16 %v83
    %v216 = vunpack.c.l.b16 %v84
    %v217 = vunpack.c.h.b16 %v84
    %v218 = vunpack.c.l.b16 %v85
    %v219 = vunpack.c.h.b16 %v85
    %v220 = vpack.c.b16 %v190, %v188
    %v221 = vpack.c.b16 %v191, %v189
    %v222 = vpack.c.b16 %v194, %v192
    %v223 = vpack.c.b16 %v195, %v193
    %v224 = vpack.c.b16 %v198, %v196
    %v225 = vpack.c.b16 %v199, %v197
    %v226 = vpack.c.b16 %v202, %v200
    %v227 = vpack.c.b16 %v203, %v201
    %v228 = vpack.c.b16 %v206, %v204
    %v229 = vpack.c.b16 %v207, %v205
    %v230 = vpack.c.b16 %v210, %v208
    %v231 = vpack.c.b16 %v211, %v209
    %v232 = vpack.c.b16 %v214, %v212
    %v233 = vpack.c.b16 %v215, %v213
    %v234 = vpack.c.b16 %v218, %v216
    %v235 = vpack.c.b16 %v219, %v217
    %v316 = vunpack.c.l.b16 %v86
    %v317 = vunpack.c.h.b16 %v86
    %v318 = vunpack.c.l.b16 %v87
    %v319 = vunpack.c.h.b16 %v87
    %v320 = vunpack.c.l.b16 %v88
    %v321 = vunpack.c.h.b16 %v88
    %v322 = vunpack.c.l.b16 %v89
    %v323 = vunpack.c.h.b16 %v89
    %v324 = vunpack.c.l.b16 %v90
    %v325 = vunpack.c.h.b16 %v90
    %v326 = vunpack.c.l.b16 %v91
    %v327 = vunpack.c.h.b16 %v91
    %v328 = vunpack.c.l.b16 %v92
    %v329 = vunpack.c.h.b16 %v92
    %v330 = vunpack.c.l.b16 %v93
    %v331 = vunpack.c.h.b16 %v93
    %v332 = vunpack.c.l.b16 %v94
    %v333 = vunpack.c.h.b16 %v94
    %v334 = vunpack.c.l.b16 %v95
    %v335 = vunpack.c.h.b16 %v95
    %v336 = vunpack.c.l.b16 %v96
    %v337 = vunpack.c.h.b16 %v96
    %v338 = vunpack.c.l.b16 %v97
    %v339 = vunpack.c.h.b16 %v97
    %v340 = vunpack.c.l.b16 %v98
    %v341 = vunpack.c.h.b16 %v98
    %v342 = vunpack.c.l.b16 %v99
    %v343 = vunpack.c.h.b16 %v99
    %v344 = vunpack.c.l.b16 %v100
    %v345 = vunpack.c.h.b16 %v100
    %v346 = vunpack.c.l.b16 %v101
    %v347 = vunpack.c.h.b16 %v101
    %v348 = vunpack.c.l.b16 %v102
    %v349 = vunpack.c.h.b16 %v102
    %v350 = vunpack.c.l.b16 %v103
    %v351 = vunpack.c.h.b16 %v103
    %v352 = vunpack.c.l.b16 %v104
    %v353 = vunpack.c.h.b16 %v104
    %v354 = vunpack.c.l.b16 %v105
    %v355 = vunpack.c.h.b16 %v105
    %v356 = vunpack.c.l.b16 %v106
    %v357 = vunpack.c.h.b16 %v106
    %v358 = vunpack.c.l.b16 %v107
    %v359 = vunpack.c.h.b16 %v107
    %v360 = vunpack.c.l.b16 %v108
    %v361 = vunpack.c.h.b16 %v108
    %v362 = vunpack.c.l.b16 %v109
    %v363 = vunpack.c.h.b16 %v109
    %v364 = vunpack.c.l.b16 %v110
    %v365 = vunpack.c.h.b16 %v110
    %v366 = vunpack.c.l.b16 %v111
    %v367 = vunpack.c.h.b16 %v111
    %v368 = vunpack.c.l.b16 %v112
    %v369 = vunpack.c.h.b16 %v112
    %v370 = vunpack.c.l.b16 %v113
    %v371 = vunpack.c.h.b16 %v113
    %v372 = vunpack.c.l.b16 %v114
    %v373 = vunpack.c.h.b16 %v114
    %v374 = vunpack.c.l.b16 %v115
    %v375 = vunpack.c.h.b16 %v115
    %v376 = vunpack.c.l.b16 %v116
    %v377 = vunpack.c.h.b16 %v116
    %v378 = vunpack.c.l.b16 %v117
    %v379 = vunpack.c.h.b16 %v117
    %v380 = vunpack.c.l.b16 %v118
    %v381 = vunpack.c.h.b16 %v118
    %v382 = vunpack.c.l.b16 %v119
    %v383 = vunpack.c.h.b16 %v119
    %v384 = vunpack.c.l.b16 %v120
    %v385 = vunpack.c.h.b16 %v120
    %v386 = vunpack.c.l.b16 %v121
    %v387 = vunpack.c.h.b16 %v121
    %v388 = vunpack.c.l.b16 %v122
    %v389 = vunpack.c.h.b16 %v122
    %v390 = vunpack.c.l.b16 %v123
    %v391 = vunpack.c.h.b16 %v123
    %v392 = vunpack.c.l.b16 %v124
    %v393 = vunpack.c.h.b16 %v124
    %v394 = vunpack.c.l.b16 %v125
    %v395 = vunpack.c.h.b16 %v125
    %v396 = vunpack.c.l.b16 %v126
    %v397 = vunpack.c.h.b16 %v126
    %v398 = vunpack.c.l.b16 %v127
    %v399 = vunpack.c.h.b16 %v127
    %v400 = vunpack.c.l.b16 %v128
    %v401 = vunpack.c.h.b16 %v128
    %v402 = vunpack.c.l.b16 %v129
    %v403 = vunpack.c.h.b16 %v129
    %v404 = vunpack.c.l.b16 %v130
    %v405 = vunpack.c.h.b16 %v130
    %v406 = vunpack.c.l.b16 %v131
    %v407 = vunpack.c.h.b16 %v131
    %v408 = vunpack.c.l.b16 %v132
    %v409 = vunpack.c.h.b16 %v132
    %v410 = vunpack.c.l.b16 %v133
    %v411 = vunpack.c.h.b16 %v133
    %v412 = vunpack.c.l.b16 %v134
    %v413 = vunpack.c.h.b16 %v134
    %v414 = vunpack.c.l.b16 %v135
    %v415 = vunpack.c.h.b16 %v135
    %v416 = vunpack.c.l.b16 %v136
    %v417 = vunpack.c.h.b16 %v136
    %v418 = vunpack.c.l.b16 %v137
    %v419 = vunpack.c.h.b16 %v137
    %v420 = vunpack.c.l.b16 %v138
    %v421 = vunpack.c.h.b16 %v138
    %v422 = vunpack.c.l.b16 %v139
    %v423 = vunpack.c.h.b16 %v139
    %v424 = vunpack.c.l.b16 %v140
    %v425 = vunpack.c.h.b16 %v140
    %v426 = vunpack.c.l.b16 %v141
    %v427 = vunpack.c.h.b16 %v141
    %v428 = vunpack.c.l.b16 %v142
    %v429 = vunpack.c.h.b16 %v142
    %v430 = vunpack.c.l.b16 %v143
    %v431 = vunpack.c.h.b16 %v143
    %v432 = vunpack.c.l.b16 %v144
    %v433 = vunpack.c.h.b16 %v144
    %v434 = vunpack.c.l.b16 %v145
    %v435 = vunpack.c.h.b16 %v145
    %v436 = vunpack.c.l.b16 %v146
    %v437 = vunpack.c.h.b16 %v146
    %v438 = vunpack.c.l.b16 %v147
    %v439 = vunpack.c.h.b16 %v147
    %v440 = vunpack.c.l.b16 %v148
    %v441 = vunpack.c.h.b16 %v148
    %v442 = vunpack.c.l.b16 %v149
    %v443 = vunpack.c.h.b16 %v149
    %v444 = vpack.c.b16 %v320, %v316
    %v445 = vpack.c.b16 %v321, %v317
    %v446 = vpack.c.b16 %v322, %v318
    %v447 = vpack.c.b16 %v323, %v319
    %v448 = vpack.c.b16 %v328, %v324
    %v449 = vpack.c.b16 %v329, %v325
    %v450 = vpack.c.b16 %v330, %v326
    %v451 = vpack.c.b16 %v331, %v327
    %v452 = vpack.c.b16 %v336, %v332
    %v453 = vpack.c.b16 %v337, %v333
    %v454 = vpack.c.b16 %v338, %v334
    %v455 = vpack.c.b16 %v339, %v335
    %v456 = vpack.c.b16 %v344, %v340
    %v457 = vpack.c.b16 %v345, %v341
    %v458 = vpack.c.b16 %v346, %v342
    %v459 = vpack.c.b16 %v347, %v343
    %v460 = vpack.c.b16 %v352, %v348
    %v461 = vpack.c.b16 %v353, %v349
    %v462 = vpack.c.b16 %v354, %v350
    %v463 = vpack.c.b16 %v355, %v351
    %v464 = vpack.c.b16 %v360, %v356
    %v465 = vpack.c.b16 %v361, %v357
    %v466 = vpack.c.b16 %v362, %v358
    %v467 = vpack.c.b16 %v363, %v359
    %v468 = vpack.c.b16 %v368, %v364
    %v469 = vpack.c.b16 %v369, %v365
    %v470 = vpack.c.b16 %v370, %v366
    %v471 = vpack.c.b16 %v371, %v367
    %v472 = vpack.c.b16 %v376, %v372
    %v473 = vpack.c.b16 %v377, %v373
    %v474 = vpack.c.b16 %v378, %v374
    %v475 = vpack.c.b16 %v379, %v375
    %v476 = vpack.c.b16 %v384, %v380
    %v477 = vpack.c.b16 %v385, %v381
    %v478 = vpack.c.b16 %v386, %v382
    %v479 = vpack.c.b16 %v387, %v383
    %v480 = vpack.c.b16 %v392, %v388
    %v481 = vpack.c.b16 %v393, %v389
    %v482 = vpack.c.b16 %v394, %v390
    %v483 = vpack.c.b16 %v395, %v391
    %v484 = vpack.c.b16 %v400, %v396
    %v485 = vpack.c.b16 %v401, %v397
    %v486 = vpack.c.b16 %v402, %v398
    %v487 = vpack.c.b16 %v403, %v399
    %v488 = vpack.c.b16 %v408, %v404
    %v489 = vpack.c.b16 %v409, %v405
    %v490 = vpack.c.b16 %v410, %v406
    %v491 = vpack.c.b16 %v411, %v407
    %v492 = vpack.c.b16 %v416, %v412
    %v493 = vpack.c.b16 %v417, %v413
    %v494 = vpack.c.b16 %v418, %v414
    %v495 = vpack.c.b16 %v419, %v415
    %v496 = vpack.c.b16 %v424, %v420
    %v497 = vpack.c.b16 %v425, %v421
    %v498 = vpack.c.b16 %v426, %v422
    %v499 = vpack.c.b16 %v427, %v423
    %v500 = vpack.c.b16 %v432, %v428
    %v501 = vpack.c.b16 %v433, %v429
    %v502 = vpack.c.b16 %v434, %v430
    %v503 = vpack.c.b16 %v435, %v431
    %v504 = vpack.c.b16 %v440, %v436
    %v505 = vpack.c.b16 %v441, %v437
    %v506 = vpack.c.b16 %v442, %v438
    %v507 = vpack.c.b16 %v443, %v439
    %572 = vmatprep.subr.bf16.mxu0 %v445
    %573 = vmatpush1.bf16.msra.mxu0 %v444
    %574 = vmatprep.subr.bf16.mxu0 %v449
    %575 = vmatpush1.bf16.msra.mxu0 %v448
    %576 = vmatprep.subr.bf16.mxu0 %v453
    %577 = vmatpush1.bf16.msra.mxu0 %v452
    %578 = vmatprep.subr.bf16.mxu0 %v457
    %579 = vmatpush1.bf16.msra.mxu0 %v456
    %580 = vmatprep.subr.bf16.mxu0 %v461
    %581 = vmatpush1.bf16.msra.mxu0 %v460
    %582 = vmatprep.subr.bf16.mxu0 %v465
    %583 = vmatpush1.bf16.msra.mxu0 %v464
    %584 = vmatprep.subr.bf16.mxu0 %v469
    %585 = vmatpush1.bf16.msra.mxu0 %v468
    %586 = vmatprep.subr.bf16.mxu0 %v473
    %587 = vmatpush1.bf16.msra.mxu0 %v472
    %588 = vmatprep.subr.bf16.mxu0 %v477
    %589 = vmatpush1.bf16.msra.mxu0 %v476
    %590 = vmatprep.subr.bf16.mxu0 %v481
    %591 = vmatpush1.bf16.msra.mxu0 %v480
    %592 = vmatprep.subr.bf16.mxu0 %v485
    %593 = vmatpush1.bf16.msra.mxu0 %v484
    %594 = vmatprep.subr.bf16.mxu0 %v489
    %595 = vmatpush1.bf16.msra.mxu0 %v488
    %596 = vmatprep.subr.bf16.mxu0 %v493
    %597 = vmatpush1.bf16.msra.mxu0 %v492
    %598 = vmatprep.subr.bf16.mxu0 %v497
    %599 = vmatpush1.bf16.msra.mxu0 %v496
    %600 = vmatprep.subr.bf16.mxu0 %v501
    %601 = vmatpush1.bf16.msra.mxu0 %v500
    %602 = vmatprep.subr.bf16.mxu0 %v505
    %603 = vmatpush1.bf16.msra.mxu0 %v504
    %604 = vmatprep.mubr.bf16.mxu0 %v221
    %605 = vmatmul.mubr.bf16.gmra.mrb[0].mxu0 %v220
    %v606 = vpop.f32.mrb[0].mxu0
    %v607 = vadd.f32 %v155, %v606
    %v608 = vpop.f32.mrb[0].mxu0
    %v609 = vadd.f32 %v159, %v608
    %v610 = vpop.f32.mrb[0].mxu0
    %v611 = vadd.f32 %v155, %v610
    %v612 = vpop.f32.mrb[0].mxu0
    %v613 = vadd.f32 %v159, %v612
    %614 = vmatprep.mubr.bf16.mxu0 %v223
    %615 = vmatmul.mubr.bf16.gmra.mrb[0].mxu0 %v222
    %v616 = vpop.f32.mrb[0].mxu0
    %v617 = vadd.f32 %v155, %v616
    %v618 = vpop.f32.mrb[0].mxu0
    %v619 = vadd.f32 %v159, %v618
    %v620 = vpop.f32.mrb[0].mxu0
    %v621 = vadd.f32 %v155, %v620
    %v622 = vpop.f32.mrb[0].mxu0
    %v623 = vadd.f32 %v159, %v622
    %624 = vmatprep.mubr.bf16.mxu0 %v225
    %625 = vmatmul.mubr.bf16.gmra.mrb[0].mxu0 %v224
    %v626 = vpop.f32.mrb[0].mxu0
    %v627 = vadd.f32 %v155, %v626
    %v628 = vpop.f32.mrb[0].mxu0
    %v629 = vadd.f32 %v159, %v628
    %v630 = vpop.f32.mrb[0].mxu0
    %v631 = vadd.f32 %v155, %v630
    %v632 = vpop.f32.mrb[0].mxu0
    %v633 = vadd.f32 %v159, %v632
    %634 = vmatprep.mubr.bf16.mxu0 %v227
    %635 = vmatmul.mubr.bf16.gmra.mrb[0].mxu0 %v226
    %v636 = vpop.f32.mrb[0].mxu0
    %v637 = vadd.f32 %v155, %v636
    %v638 = vpop.f32.mrb[0].mxu0
    %v639 = vadd.f32 %v159, %v638
    %v640 = vpop.f32.mrb[0].mxu0
    %v641 = vadd.f32 %v155, %v640
    %v642 = vpop.f32.mrb[0].mxu0
    %v643 = vadd.f32 %v159, %v642
    %644 = vmatprep.mubr.bf16.mxu0 %v229
    %645 = vmatmul.mubr.bf16.gmra.mrb[0].mxu0 %v228
    %v646 = vpop.f32.mrb[0].mxu0
    %v647 = vadd.f32 %v155, %v646
    %v648 = vpop.f32.mrb[0].mxu0
    %v649 = vadd.f32 %v159, %v648
    %v650 = vpop.f32.mrb[0].mxu0
    %v651 = vadd.f32 %v155, %v650
    %v652 = vpop.f32.mrb[0].mxu0
    %v653 = vadd.f32 %v159, %v652
    %654 = vmatprep.mubr.bf16.mxu0 %v231
    %655 = vmatmul.mubr.bf16.gmra.mrb[0].mxu0 %v230
    %v656 = vpop.f32.mrb[0].mxu0
    %v657 = vadd.f32 %v155, %v656
    %v658 = vpop.f32.mrb[0].mxu0
    %v659 = vadd.f32 %v159, %v658
    %v660 = vpop.f32.mrb[0].mxu0
    %v661 = vadd.f32 %v155, %v660
    %v662 = vpop.f32.mrb[0].mxu0
    %v663 = vadd.f32 %v159, %v662
    %664 = vmatprep.mubr.bf16.mxu0 %v233
    %665 = vmatmul.mubr.bf16.gmra.mrb[0].mxu0 %v232
    %v666 = vpop.f32.mrb[0].mxu0
    %v667 = vadd.f32 %v155, %v666
    %v668 = vpop.f32.mrb[0].mxu0
    %v669 = vadd.f32 %v159, %v668
    %v670 = vpop.f32.mrb[0].mxu0
    %v671 = vadd.f32 %v155, %v670
    %v672 = vpop.f32.mrb[0].mxu0
    %v673 = vadd.f32 %v159, %v672
    %674 = vmatprep.mubr.bf16.mxu0 %v235
    %675 = vmatmul.mubr.bf16.gmra.mrb[0].mxu0 %v234
    %v676 = vpop.f32.mrb[0].mxu0
    %v677 = vadd.f32 %v155, %v676
    %v678 = vpop.f32.mrb[0].mxu0
    %v679 = vadd.f32 %v159, %v678
    %v680 = vpop.f32.mrb[0].mxu0
    %v681 = vadd.f32 %v155, %v680
    %v682 = vpop.f32.mrb[0].mxu0
    %v683 = vadd.f32 %v159, %v682
    %684 = vdwg.mxu0
    %685 = vmatprep.subr.bf16.mxu0 %v447
    %686 = vmatpush1.bf16.msra.mxu0 %v446
    %687 = vmatprep.subr.bf16.mxu0 %v451
    %688 = vmatpush1.bf16.msra.mxu0 %v450
    %689 = vmatprep.subr.bf16.mxu0 %v455
    %690 = vmatpush1.bf16.msra.mxu0 %v454
    %691 = vmatprep.subr.bf16.mxu0 %v459
    %692 = vmatpush1.bf16.msra.mxu0 %v458
    %693 = vmatprep.subr.bf16.mxu0 %v463
    %694 = vmatpush1.bf16.msra.mxu0 %v462
    %695 = vmatprep.subr.bf16.mxu0 %v467
    %696 = vmatpush1.bf16.msra.mxu0 %v466
    %697 = vmatprep.subr.bf16.mxu0 %v471
    %698 = vmatpush1.bf16.msra.mxu0 %v470
    %699 = vmatprep.subr.bf16.mxu0 %v475
    %700 = vmatpush1.bf16.msra.mxu0 %v474
    %701 = vmatprep.subr.bf16.mxu0 %v479
    %702 = vmatpush1.bf16.msra.mxu0 %v478
    %703 = vmatprep.subr.bf16.mxu0 %v483
    %704 = vmatpush1.bf16.msra.mxu0 %v482
    %705 = vmatprep.subr.bf16.mxu0 %v487
    %706 = vmatpush1.bf16.msra.mxu0 %v486
    %707 = vmatprep.subr.bf16.mxu0 %v491
    %708 = vmatpush1.bf16.msra.mxu0 %v490
    %709 = vmatprep.subr.bf16.mxu0 %v495
    %710 = vmatpush1.bf16.msra.mxu0 %v494
    %711 = vmatprep.subr.bf16.mxu0 %v499
    %712 = vmatpush1.bf16.msra.mxu0 %v498
    %713 = vmatprep.subr.bf16.mxu0 %v503
    %714 = vmatpush1.bf16.msra.mxu0 %v502
    %715 = vmatprep.subr.bf16.mxu0 %v507
    %716 = vmatpush1.bf16.msra.mxu0 %v506
    %717 = vmatprep.mubr.bf16.mxu0 %v221
    %718 = vmatmul.mubr.bf16.gmra.mrb[0].mxu0 %v220
    %v719 = vpop.f32.mrb[0].mxu0
    %v720 = vadd.f32 %v163, %v719
    %v721 = vpop.f32.mrb[0].mxu0
    %v722 = vadd.f32 %v167, %v721
    %v723 = vpop.f32.mrb[0].mxu0
    %v724 = vadd.f32 %v163, %v723
    %v725 = vpop.f32.mrb[0].mxu0
    %v726 = vadd.f32 %v167, %v725
    %727 = vmatprep.mubr.bf16.mxu0 %v223
    %728 = vmatmul.mubr.bf16.gmra.mrb[0].mxu0 %v222
    %v729 = vpop.f32.mrb[0].mxu0
    %v730 = vadd.f32 %v163, %v729
    %v731 = vpop.f32.mrb[0].mxu0
    %v732 = vadd.f32 %v167, %v731
    %v733 = vpop.f32.mrb[0].mxu0
    %v734 = vadd.f32 %v163, %v733
    %v735 = vpop.f32.mrb[0].mxu0
    %v736 = vadd.f32 %v167, %v735
    %737 = vmatprep.mubr.bf16.mxu0 %v225
    %738 = vmatmul.mubr.bf16.gmra.mrb[0].mxu0 %v224
    %v739 = vpop.f32.mrb[0].mxu0
    %v740 = vadd.f32 %v163, %v739
    %v741 = vpop.f32.mrb[0].mxu0
    %v742 = vadd.f32 %v167, %v741
    %v743 = vpop.f32.mrb[0].mxu0
    %v744 = vadd.f32 %v163, %v743
    %v745 = vpop.f32.mrb[0].mxu0
    %v746 = vadd.f32 %v167, %v745
    %747 = vmatprep.mubr.bf16.mxu0 %v227
    %748 = vmatmul.mubr.bf16.gmra.mrb[0].mxu0 %v226
    %v749 = vpop.f32.mrb[0].mxu0
    %v750 = vadd.f32 %v163, %v749
    %v751 = vpop.f32.mrb[0].mxu0
    %v752 = vadd.f32 %v167, %v751
    %v753 = vpop.f32.mrb[0].mxu0
    %v754 = vadd.f32 %v163, %v753
    %v755 = vpop.f32.mrb[0].mxu0
    %v756 = vadd.f32 %v167, %v755
    %757 = vmatprep.mubr.bf16.mxu0 %v229
    %758 = vmatmul.mubr.bf16.gmra.mrb[0].mxu0 %v228
    %v759 = vpop.f32.mrb[0].mxu0
    %v760 = vadd.f32 %v163, %v759
    %v761 = vpop.f32.mrb[0].mxu0
    %v762 = vadd.f32 %v167, %v761
    %v763 = vpop.f32.mrb[0].mxu0
    %v764 = vadd.f32 %v163, %v763
    %v765 = vpop.f32.mrb[0].mxu0
    %v766 = vadd.f32 %v167, %v765
    %767 = vmatprep.mubr.bf16.mxu0 %v231
    %768 = vmatmul.mubr.bf16.gmra.mrb[0].mxu0 %v230
    %v769 = vpop.f32.mrb[0].mxu0
    %v770 = vadd.f32 %v163, %v769
    %v771 = vpop.f32.mrb[0].mxu0
    %v772 = vadd.f32 %v167, %v771
    %v773 = vpop.f32.mrb[0].mxu0
    %v774 = vadd.f32 %v163, %v773
    %v775 = vpop.f32.mrb[0].mxu0
    %v776 = vadd.f32 %v167, %v775
    %777 = vmatprep.mubr.bf16.mxu0 %v233
    %778 = vmatmul.mubr.bf16.gmra.mrb[0].mxu0 %v232
    %v779 = vpop.f32.mrb[0].mxu0
    %v780 = vadd.f32 %v163, %v779
    %v781 = vpop.f32.mrb[0].mxu0
    %v782 = vadd.f32 %v167, %v781
    %v783 = vpop.f32.mrb[0].mxu0
    %v784 = vadd.f32 %v163, %v783
    %v785 = vpop.f32.mrb[0].mxu0
    %v786 = vadd.f32 %v167, %v785
    %787 = vmatprep.mubr.bf16.mxu0 %v235
    %788 = vmatmul.mubr.bf16.gmra.mrb[0].mxu0 %v234
    %v789 = vpop.f32.mrb[0].mxu0
    %v790 = vadd.f32 %v163, %v789
    %v791 = vpop.f32.mrb[0].mxu0
    %v792 = vadd.f32 %v167, %v791
    %v793 = vpop.f32.mrb[0].mxu0
    %v794 = vadd.f32 %v163, %v793
    %v795 = vpop.f32.mrb[0].mxu0
    %v796 = vadd.f32 %v167, %v795
    %797 = vdwg.mxu0
    %798 = vst [vmem:[#allocation2] sm:$0xff] %v607
    %799 = vst [vmem:[#allocation2 + $0x8] sm:$0xff] %v609
    %800 = vst [vmem:[#allocation2 + $0x10] sm:$0xff] %v720
    %801 = vst [vmem:[#allocation2 + $0x18] sm:$0xff] %v722
    %802 = vst [vmem:[#allocation2 + $0x20] sm:$0xff] %v611
    %803 = vst [vmem:[#allocation2 + $0x28] sm:$0xff] %v613
    %804 = vst [vmem:[#allocation2 + $0x30] sm:$0xff] %v724
    %805 = vst [vmem:[#allocation2 + $0x38] sm:$0xff] %v726
    %806 = vst [vmem:[#allocation2 + $0x40] sm:$0xff] %v617
    %807 = vst [vmem:[#allocation2 + $0x48] sm:$0xff] %v619
    %808 = vst [vmem:[#allocation2 + $0x50] sm:$0xff] %v730
    %809 = vst [vmem:[#allocation2 + $0x58] sm:$0xff] %v732
    %810 = vst [vmem:[#allocation2 + $0x60] sm:$0xff] %v621
    %811 = vst [vmem:[#allocation2 + $0x68] sm:$0xff] %v623
    %812 = vst [vmem:[#allocation2 + $0x70] sm:$0xff] %v734
    %813 = vst [vmem:[#allocation2 + $0x78] sm:$0xff] %v736
    %814 = vst [vmem:[#allocation2 + $0x80] sm:$0xff] %v627
    %815 = vst [vmem:[#allocation2 + $0x88] sm:$0xff] %v629
    %816 = vst [vmem:[#allocation2 + $0x90] sm:$0xff] %v740
    %817 = vst [vmem:[#allocation2 + $0x98] sm:$0xff] %v742
    %818 = vst [vmem:[#allocation2 + $0xa0] sm:$0xff] %v631
    %819 = vst [vmem:[#allocation2 + $0xa8] sm:$0xff] %v633
    %820 = vst [vmem:[#allocation2 + $0xb0] sm:$0xff] %v744
    %821 = vst [vmem:[#allocation2 + $0xb8] sm:$0xff] %v746
    %822 = vst [vmem:[#allocation2 + $0xc0] sm:$0xff] %v637
    %823 = vst [vmem:[#allocation2 + $0xc8] sm:$0xff] %v639
    %824 = vst [vmem:[#allocation2 + $0xd0] sm:$0xff] %v750
    %825 = vst [vmem:[#allocation2 + $0xd8] sm:$0xff] %v752
    %826 = vst [vmem:[#allocation2 + $0xe0] sm:$0xff] %v641
    %827 = vst [vmem:[#allocation2 + $0xe8] sm:$0xff] %v643
    %828 = vst [vmem:[#allocation2 + $0xf0] sm:$0xff] %v754
    %829 = vst [vmem:[#allocation2 + $0xf8] sm:$0xff] %v756
    %830 = vst [vmem:[#allocation2 + $0x100] sm:$0xff] %v647
    %831 = vst [vmem:[#allocation2 + $0x108] sm:$0xff] %v649
    %832 = vst [vmem:[#allocation2 + $0x110] sm:$0xff] %v760
    %833 = vst [vmem:[#allocation2 + $0x118] sm:$0xff] %v762
    %834 = vst [vmem:[#allocation2 + $0x120] sm:$0xff] %v651
    %835 = vst [vmem:[#allocation2 + $0x128] sm:$0xff] %v653
    %836 = vst [vmem:[#allocation2 + $0x130] sm:$0xff] %v764
    %837 = vst [vmem:[#allocation2 + $0x138] sm:$0xff] %v766
    %838 = vst [vmem:[#allocation2 + $0x140] sm:$0xff] %v657
    %839 = vst [vmem:[#allocation2 + $0x148] sm:$0xff] %v659
    %840 = vst [vmem:[#allocation2 + $0x150] sm:$0xff] %v770
    %841 = vst [vmem:[#allocation2 + $0x158] sm:$0xff] %v772
    %842 = vst [vmem:[#allocation2 + $0x160] sm:$0xff] %v661
    %843 = vst [vmem:[#allocation2 + $0x168] sm:$0xff] %v663
    %844 = vst [vmem:[#allocation2 + $0x170] sm:$0xff] %v774
    %845 = vst [vmem:[#allocation2 + $0x178] sm:$0xff] %v776
    %846 = vst [vmem:[#allocation2 + $0x180] sm:$0xff] %v667
    %847 = vst [vmem:[#allocation2 + $0x188] sm:$0xff] %v669
    %848 = vst [vmem:[#allocation2 + $0x190] sm:$0xff] %v780
    %849 = vst [vmem:[#allocation2 + $0x198] sm:$0xff] %v782
    %850 = vst [vmem:[#allocation2 + $0x1a0] sm:$0xff] %v671
    %851 = vst [vmem:[#allocation2 + $0x1a8] sm:$0xff] %v673
    %852 = vst [vmem:[#allocation2 + $0x1b0] sm:$0xff] %v784
    %853 = vst [vmem:[#allocation2 + $0x1b8] sm:$0xff] %v786
    %854 = vst [vmem:[#allocation2 + $0x1c0] sm:$0xff] %v677
    %855 = vst [vmem:[#allocation2 + $0x1c8] sm:$0xff] %v679
    %856 = vst [vmem:[#allocation2 + $0x1d0] sm:$0xff] %v790
    %857 = vst [vmem:[#allocation2 + $0x1d8] sm:$0xff] %v792
    %858 = vst [vmem:[#allocation2 + $0x1e0] sm:$0xff] %v681
    %859 = vst [vmem:[#allocation2 + $0x1e8] sm:$0xff] %v683
    %860 = vst [vmem:[#allocation2 + $0x1f0] sm:$0xff] %v794
    %861 = vst [vmem:[#allocation2 + $0x1f8] sm:$0xff] %v796
    %v862 = vld [vmem:[#allocation2] sm:$0xff]
    %v863 = vld [vmem:[#allocation2 + $0x8] sm:$0xff]
    %v864 = vld [vmem:[#allocation2 + $0x10] sm:$0xff]
    %v865 = vld [vmem:[#allocation2 + $0x18] sm:$0xff]
    %v866 = vld [vmem:[#allocation2 + $0x20] sm:$0xff]
    %v867 = vld [vmem:[#allocation2 + $0x28] sm:$0xff]
    %v868 = vld [vmem:[#allocation2 + $0x30] sm:$0xff]
    %v869 = vld [vmem:[#allocation2 + $0x38] sm:$0xff]
    %v870 = vld [vmem:[%s2] sm:$0xff]
    %v871 = vld [vmem:[%s2 + $0x8] sm:$0xff]
    %v872 = vld [vmem:[%s2 + $0x10] sm:$0xff]
    %v873 = vld [vmem:[%s2 + $0x18] sm:$0xff]
    %v874 = vld [vmem:[%s2 + $0x20] sm:$0xff]
    %v875 = vld [vmem:[%s2 + $0x28] sm:$0xff]
    %v876 = vld [vmem:[%s2 + $0x30] sm:$0xff]
    %v877 = vld [vmem:[%s2 + $0x38] sm:$0xff]
    %v878 = vld [vmem:[%s2 + $0x40] sm:$0xff]
    %v879 = vld [vmem:[%s2 + $0x48] sm:$0xff]
    %v880 = vld [vmem:[%s2 + $0x50] sm:$0xff]
    %v881 = vld [vmem:[%s2 + $0x58] sm:$0xff]
    %v882 = vld [vmem:[%s2 + $0x60] sm:$0xff]
    %v883 = vld [vmem:[%s2 + $0x68] sm:$0xff]
    %v884 = vld [vmem:[%s2 + $0x70] sm:$0xff]
    %v885 = vld [vmem:[%s2 + $0x78] sm:$0xff]
    %v886 = vld [vmem:[%s2 + $0x80] sm:$0xff]
    %v887 = vld [vmem:[%s2 + $0x88] sm:$0xff]
    %v888 = vld [vmem:[%s2 + $0x90] sm:$0xff]
    %v889 = vld [vmem:[%s2 + $0x98] sm:$0xff]
    %v890 = vld [vmem:[%s2 + $0xa0] sm:$0xff]
    %v891 = vld [vmem:[%s2 + $0xa8] sm:$0xff]
    %v892 = vld [vmem:[%s2 + $0xb0] sm:$0xff]
    %v893 = vld [vmem:[%s2 + $0xb8] sm:$0xff]
    %v894 = vld [vmem:[%s2 + $0xc0] sm:$0xff]
    %v895 = vld [vmem:[%s2 + $0xc8] sm:$0xff]
    %v896 = vld [vmem:[%s2 + $0xd0] sm:$0xff]
    %v897 = vld [vmem:[%s2 + $0xd8] sm:$0xff]
    %v898 = vld [vmem:[%s2 + $0xe0] sm:$0xff]
    %v899 = vld [vmem:[%s2 + $0xe8] sm:$0xff]
    %v900 = vld [vmem:[%s2 + $0xf0] sm:$0xff]
    %v901 = vld [vmem:[%s2 + $0xf8] sm:$0xff]
    %v934 = vunpack.c.l.b16 %v870
    %v935 = vunpack.c.h.b16 %v870
    %v936 = vunpack.c.l.b16 %v871
    %v937 = vunpack.c.h.b16 %v871
    %v938 = vunpack.c.l.b16 %v872
    %v939 = vunpack.c.h.b16 %v872
    %v940 = vunpack.c.l.b16 %v873
    %v941 = vunpack.c.h.b16 %v873
    %v942 = vunpack.c.l.b16 %v874
    %v943 = vunpack.c.h.b16 %v874
    %v944 = vunpack.c.l.b16 %v875
    %v945 = vunpack.c.h.b16 %v875
    %v946 = vunpack.c.l.b16 %v876
    %v947 = vunpack.c.h.b16 %v876
    %v948 = vunpack.c.l.b16 %v877
    %v949 = vunpack.c.h.b16 %v877
    %v950 = vunpack.c.l.b16 %v878
    %v951 = vunpack.c.h.b16 %v878
    %v952 = vunpack.c.l.b16 %v879
    %v953 = vunpack.c.h.b16 %v879
    %v954 = vunpack.c.l.b16 %v880
    %v955 = vunpack.c.h.b16 %v880
    %v956 = vunpack.c.l.b16 %v881
    %v957 = vunpack.c.h.b16 %v881
    %v958 = vunpack.c.l.b16 %v882
    %v959 = vunpack.c.h.b16 %v882
    %v960 = vunpack.c.l.b16 %v883
    %v961 = vunpack.c.h.b16 %v883
    %v962 = vunpack.c.l.b16 %v884
    %v963 = vunpack.c.h.b16 %v884
    %v964 = vunpack.c.l.b16 %v885
    %v965 = vunpack.c.h.b16 %v885
    %v966 = vunpack.c.l.b16 %v886
    %v967 = vunpack.c.h.b16 %v886
    %v968 = vunpack.c.l.b16 %v887
    %v969 = vunpack.c.h.b16 %v887
    %v970 = vunpack.c.l.b16 %v888
    %v971 = vunpack.c.h.b16 %v888
    %v972 = vunpack.c.l.b16 %v889
    %v973 = vunpack.c.h.b16 %v889
    %v974 = vunpack.c.l.b16 %v890
    %v975 = vunpack.c.h.b16 %v890
    %v976 = vunpack.c.l.b16 %v891
    %v977 = vunpack.c.h.b16 %v891
    %v978 = vunpack.c.l.b16 %v892
    %v979 = vunpack.c.h.b16 %v892
    %v980 = vunpack.c.l.b16 %v893
    %v981 = vunpack.c.h.b16 %v893
    %v982 = vunpack.c.l.b16 %v894
    %v983 = vunpack.c.h.b16 %v894
    %v984 = vunpack.c.l.b16 %v895
    %v985 = vunpack.c.h.b16 %v895
    %v986 = vunpack.c.l.b16 %v896
    %v987 = vunpack.c.h.b16 %v896
    %v988 = vunpack.c.l.b16 %v897
    %v989 = vunpack.c.h.b16 %v897
    %v990 = vunpack.c.l.b16 %v898
    %v991 = vunpack.c.h.b16 %v898
    %v992 = vunpack.c.l.b16 %v899
    %v993 = vunpack.c.h.b16 %v899
    %v994 = vunpack.c.l.b16 %v900
    %v995 = vunpack.c.h.b16 %v900
    %v996 = vunpack.c.l.b16 %v901
    %v997 = vunpack.c.h.b16 %v901
    %v998 = vpack.c.b16 %v938, %v934
    %v999 = vpack.c.b16 %v939, %v935
    %v1000 = vpack.c.b16 %v940, %v936
    %v1001 = vpack.c.b16 %v941, %v937
    %v1002 = vpack.c.b16 %v946, %v942
    %v1003 = vpack.c.b16 %v947, %v943
    %v1004 = vpack.c.b16 %v948, %v944
    %v1005 = vpack.c.b16 %v949, %v945
    %v1006 = vpack.c.b16 %v954, %v950
    %v1007 = vpack.c.b16 %v955, %v951
    %v1008 = vpack.c.b16 %v956, %v952
    %v1009 = vpack.c.b16 %v957, %v953
    %v1010 = vpack.c.b16 %v962, %v958
    %v1011 = vpack.c.b16 %v963, %v959
    %v1012 = vpack.c.b16 %v964, %v960
    %v1013 = vpack.c.b16 %v965, %v961
    %v1014 = vpack.c.b16 %v970, %v966
    %v1015 = vpack.c.b16 %v971, %v967
    %v1016 = vpack.c.b16 %v972, %v968
    %v1017 = vpack.c.b16 %v973, %v969
    %v1018 = vpack.c.b16 %v978, %v974
    %v1019 = vpack.c.b16 %v979, %v975
    %v1020 = vpack.c.b16 %v980, %v976
    %v1021 = vpack.c.b16 %v981, %v977
    %v1022 = vpack.c.b16 %v986, %v982
    %v1023 = vpack.c.b16 %v987, %v983
    %v1024 = vpack.c.b16 %v988, %v984
    %v1025 = vpack.c.b16 %v989, %v985
    %v1026 = vpack.c.b16 %v994, %v990
    %v1027 = vpack.c.b16 %v995, %v991
    %v1028 = vpack.c.b16 %v996, %v992
    %v1029 = vpack.c.b16 %v997, %v993
    %1062 = vmatprep.subr.bf16.mxu0 %v999
    %1063 = vmatpush1.bf16.msra.mxu0 %v998
    %1064 = vmatprep.subr.bf16.mxu0 %v1003
    %1065 = vmatpush1.bf16.msra.mxu0 %v1002
    %1066 = vmatprep.subr.bf16.mxu0 %v1007
    %1067 = vmatpush1.bf16.msra.mxu0 %v1006
    %1068 = vmatprep.subr.bf16.mxu0 %v1011
    %1069 = vmatpush1.bf16.msra.mxu0 %v1010
    %1070 = vmatprep.subr.bf16.mxu0 %v1015
    %1071 = vmatpush1.bf16.msra.mxu0 %v1014
    %1072 = vmatprep.subr.bf16.mxu0 %v1019
    %1073 = vmatpush1.bf16.msra.mxu0 %v1018
    %1074 = vmatprep.subr.bf16.mxu0 %v1023
    %1075 = vmatpush1.bf16.msra.mxu0 %v1022
    %1076 = vmatprep.subr.bf16.mxu0 %v1027
    %1077 = vmatpush1.bf16.msra.mxu0 %v1026
    %1078 = vmatprep.subr.bf16.mxu0 0
    %1079 = vmatpush1.bf16.msra.mxu0 0
    %1080 = vmatprep.subr.bf16.mxu0 0
    %1081 = vmatpush1.bf16.msra.mxu0 0
    %1082 = vmatprep.subr.bf16.mxu0 0
    %1083 = vmatpush1.bf16.msra.mxu0 0
    %1084 = vmatprep.subr.bf16.mxu0 0
    %1085 = vmatpush1.bf16.msra.mxu0 0
    %1086 = vmatprep.subr.bf16.mxu0 0
    %1087 = vmatpush1.bf16.msra.mxu0 0
    %1088 = vmatprep.subr.bf16.mxu0 0
    %1089 = vmatpush1.bf16.msra.mxu0 0
    %1090 = vmatprep.subr.bf16.mxu0 0
    %1091 = vmatpush1.bf16.msra.mxu0 0
    %1092 = vmatprep.subr.bf16.mxu0 0
    %1093 = vmatpush1.bf16.msra.mxu0 0
    %1094 = vmatprep.mubr.bf16.mxu0 0
    %1095 = vmatmul.mubr.bf16.gmra.mrb[0].mxu0 0
    %v1096 = vpop.f32.mrb[0].mxu0
    %v1097 = vadd.f32 0.0, %v1096
    %v1098 = vpop.f32.mrb[0].mxu0
    %v1099 = vadd.f32 0.0, %v1098
    %v1100 = vpop.f32.mrb[0].mxu0
    %v1101 = vadd.f32 0.0, %v1100
    %v1102 = vpop.f32.mrb[0].mxu0
    %v1103 = vadd.f32 0.0, %v1102
    %1104 = vdwg.mxu0
    %1105 = vmatprep.subr.bf16.mxu0 %v1001
    %1106 = vmatpush1.bf16.msra.mxu0 %v1000
    %1107 = vmatprep.subr.bf16.mxu0 %v1005
    %1108 = vmatpush1.bf16.msra.mxu0 %v1004
    %1109 = vmatprep.subr.bf16.mxu0 %v1009
    %1110 = vmatpush1.bf16.msra.mxu0 %v1008
    %1111 = vmatprep.subr.bf16.mxu0 %v1013
    %1112 = vmatpush1.bf16.msra.mxu0 %v1012
    %1113 = vmatprep.subr.bf16.mxu0 %v1017
    %1114 = vmatpush1.bf16.msra.mxu0 %v1016
    %1115 = vmatprep.subr.bf16.mxu0 %v1021
    %1116 = vmatpush1.bf16.msra.mxu0 %v1020
    %1117 = vmatprep.subr.bf16.mxu0 %v1025
    %1118 = vmatpush1.bf16.msra.mxu0 %v1024
    %1119 = vmatprep.subr.bf16.mxu0 %v1029
    %1120 = vmatpush1.bf16.msra.mxu0 %v1028
    %1121 = vmatprep.subr.bf16.mxu0 0
    %1122 = vmatpush1.bf16.msra.mxu0 0
    %1123 = vmatprep.subr.bf16.mxu0 0
    %1124 = vmatpush1.bf16.msra.mxu0 0
    %1125 = vmatprep.subr.bf16.mxu0 0
    %1126 = vmatpush1.bf16.msra.mxu0 0
    %1127 = vmatprep.subr.bf16.mxu0 0
    %1128 = vmatpush1.bf16.msra.mxu0 0
    %1129 = vmatprep.subr.bf16.mxu0 0
    %1130 = vmatpush1.bf16.msra.mxu0 0
    %1131 = vmatprep.subr.bf16.mxu0 0
    %1132 = vmatpush1.bf16.msra.mxu0 0
    %1133 = vmatprep.subr.bf16.mxu0 0
    %1134 = vmatpush1.bf16.msra.mxu0 0
    %1135 = vmatprep.subr.bf16.mxu0 0
    %1136 = vmatpush1.bf16.msra.mxu0 0
    %1137 = vmatprep.mubr.bf16.mxu0 0
    %1138 = vmatmul.mubr.bf16.gmra.mrb[0].mxu0 0
    %v1139 = vpop.f32.mrb[0].mxu0
    %v1140 = vadd.f32 0.0, %v1139
    %v1141 = vpop.f32.mrb[0].mxu0
    %v1142 = vadd.f32 0.0, %v1141
    %v1143 = vpop.f32.mrb[0].mxu0
    %v1144 = vadd.f32 0.0, %v1143
    %v1145 = vpop.f32.mrb[0].mxu0
    %v1146 = vadd.f32 0.0, %v1145
    %1147 = vdwg.mxu0
    %v1148 = vadd.f32 %v862, %v1097
    %v1149 = vadd.f32 %v863, %v1099
    %v1150 = vadd.f32 %v864, %v1140
    %v1151 = vadd.f32 %v865, %v1142
    %v1152 = vadd.f32 %v866, %v1101
    %v1153 = vadd.f32 %v867, %v1103
    %v1154 = vadd.f32 %v868, %v1144
    %v1155 = vadd.f32 %v869, %v1146
    %v1156 = vxor.u32 %v1148, 2147483648
    %v1157 = vxor.u32 %v1152, 2147483648
    %v1158 = vmul.f32 %v1156, 1.442695
    %v1159 = vpow.pop %v1158
    %v1160 = vmul.f32 %v1157, 1.442695
    %v1161 = vpow.pop %v1160
    %v1162 = vadd.f32 %v1159, 1.0
    %v1163 = vadd.f32 %v1161, 1.0
    %v1164 = vrcp.pop %v1162
    %v1165 = vmul.f32 1.0, %v1164
    %v1166 = vrcp.pop %v1163
    %v1167 = vmul.f32 1.0, %v1166
    %v1168 = vxor.u32 %v1149, 2147483648
    %v1169 = vxor.u32 %v1153, 2147483648
    %v1170 = vmul.f32 %v1168, 1.442695
    %v1171 = vpow.pop %v1170
    %v1172 = vmul.f32 %v1169, 1.442695
    %v1173 = vpow.pop %v1172
    %v1174 = vadd.f32 %v1171, 1.0
    %v1175 = vadd.f32 %v1173, 1.0
    %v1176 = vrcp.pop %v1174
    %v1177 = vmul.f32 1.0, %v1176
    %v1178 = vrcp.pop %v1175
    %v1179 = vmul.f32 1.0, %v1178
    %v1180 = vtanh.pop %v1150
    %v1181 = vtanh.pop %v1154
    %v1182 = vxor.u32 %v1151, 2147483648
    %v1183 = vxor.u32 %v1155, 2147483648
    %v1184 = vmul.f32 %v1182, 1.442695
    %v1185 = vpow.pop %v1184
    %v1186 = vmul.f32 %v1183, 1.442695
    %v1187 = vpow.pop %v1186
    %v1188 = vadd.f32 %v1185, 1.0
    %v1189 = vadd.f32 %v1187, 1.0
    %v1190 = vrcp.pop %v1188
    %v1191 = vmul.f32 1.0, %v1190
    %v1192 = vrcp.pop %v1189
    %v1193 = vmul.f32 1.0, %v1192
    %v1194 = vmul.f32 %v1177, 0.0
    %v1195 = vmul.f32 %v1179, 0.0
    %v1196 = vmul.f32 %v1165, %v1180
    %v1197 = vmul.f32 %v1167, %v1181
    %v1198 = vadd.f32 %v1194, %v1196
    %v1199 = vadd.f32 %v1195, %v1197
    %v1200 = vtanh.pop %v1198
    %v1201 = vtanh.pop %v1199
    %v1202 = vmul.f32 %v1191, %v1200
    %v1203 = vmul.f32 %v1193, %v1201
    %s1204 = scalar_lea.vmem [#allocation2], 64
    %v1205 = vld [vmem:[%s1204] sm:$0xff]
    %v1206 = vld [vmem:[%s1204 + $0x8] sm:$0xff]
    %v1207 = vld [vmem:[%s1204 + $0x10] sm:$0xff]
    %v1208 = vld [vmem:[%s1204 + $0x18] sm:$0xff]
    %v1209 = vld [vmem:[%s1204 + $0x20] sm:$0xff]
    %v1210 = vld [vmem:[%s1204 + $0x28] sm:$0xff]
    %v1211 = vld [vmem:[%s1204 + $0x30] sm:$0xff]
    %v1212 = vld [vmem:[%s1204 + $0x38] sm:$0xff]
    %v1213 = vpack.c.bf16 %v1203, %v1202
    %1214 = vmatprep.subr.bf16.mxu0 %v999
    %1215 = vmatpush1.bf16.msra.mxu0 %v998
    %1216 = vmatprep.subr.bf16.mxu0 %v1003
    %1217 = vmatpush1.bf16.msra.mxu0 %v1002
    %1218 = vmatprep.subr.bf16.mxu0 %v1007
    %1219 = vmatpush1.bf16.msra.mxu0 %v1006
    %1220 = vmatprep.subr.bf16.mxu0 %v1011
    %1221 = vmatpush1.bf16.msra.mxu0 %v1010
    %1222 = vmatprep.subr.bf16.mxu0 %v1015
    %1223 = vmatpush1.bf16.msra.mxu0 %v1014
    %1224 = vmatprep.subr.bf16.mxu0 %v1019
    %1225 = vmatpush1.bf16.msra.mxu0 %v1018
    %1226 = vmatprep.subr.bf16.mxu0 %v1023
    %1227 = vmatpush1.bf16.msra.mxu0 %v1022
    %1228 = vmatprep.subr.bf16.mxu0 %v1027
    %1229 = vmatpush1.bf16.msra.mxu0 %v1026
    %1230 = vmatprep.subr.bf16.mxu0 0
    %1231 = vmatpush1.bf16.msra.mxu0 0
    %1232 = vmatprep.subr.bf16.mxu0 0
    %1233 = vmatpush1.bf16.msra.mxu0 0
    %1234 = vmatprep.subr.bf16.mxu0 0
    %1235 = vmatpush1.bf16.msra.mxu0 0
    %1236 = vmatprep.subr.bf16.mxu0 0
    %1237 = vmatpush1.bf16.msra.mxu0 0
    %1238 = vmatprep.subr.bf16.mxu0 0
    %1239 = vmatpush1.bf16.msra.mxu0 0
    %1240 = vmatprep.subr.bf16.mxu0 0
    %1241 = vmatpush1.bf16.msra.mxu0 0
    %1242 = vmatprep.subr.bf16.mxu0 0
    %1243 = vmatpush1.bf16.msra.mxu0 0
    %1244 = vmatprep.subr.bf16.mxu0 0
    %1245 = vmatpush1.bf16.msra.mxu0 0
    %1246 = vmatprep.mubr.bf16.mxu0 0
    %1247 = vmatmul.mubr.bf16.gmra.mrb[0].mxu0 %v1213
    %v1248 = vpop.f32.mrb[0].mxu0
    %v1249 = vadd.f32 0.0, %v1248
    %v1250 = vpop.f32.mrb[0].mxu0
    %v1251 = vadd.f32 0.0, %v1250
    %v1252 = vpop.f32.mrb[0].mxu0
    %v1253 = vadd.f32 0.0, %v1252
    %v1254 = vpop.f32.mrb[0].mxu0
    %v1255 = vadd.f32 0.0, %v1254
    %1256 = vdwg.mxu0
    %1257 = vmatprep.subr.bf16.mxu0 %v1001
    %1258 = vmatpush1.bf16.msra.mxu0 %v1000
    %1259 = vmatprep.subr.bf16.mxu0 %v1005
    %1260 = vmatpush1.bf16.msra.mxu0 %v1004
    %1261 = vmatprep.subr.bf16.mxu0 %v1009
    %1262 = vmatpush1.bf16.msra.mxu0 %v1008
    %1263 = vmatprep.subr.bf16.mxu0 %v1013
    %1264 = vmatpush1.bf16.msra.mxu0 %v1012
    %1265 = vmatprep.subr.bf16.mxu0 %v1017
    %1266 = vmatpush1.bf16.msra.mxu0 %v1016
    %1267 = vmatprep.subr.bf16.mxu0 %v1021
    %1268 = vmatpush1.bf16.msra.mxu0 %v1020
    %1269 = vmatprep.subr.bf16.mxu0 %v1025
    %1270 = vmatpush1.bf16.msra.mxu0 %v1024
    %1271 = vmatprep.subr.bf16.mxu0 %v1029
    %1272 = vmatpush1.bf16.msra.mxu0 %v1028
    %1273 = vmatprep.subr.bf16.mxu0 0
    %1274 = vmatpush1.bf16.msra.mxu0 0
    %1275 = vmatprep.subr.bf16.mxu0 0
    %1276 = vmatpush1.bf16.msra.mxu0 0
    %1277 = vmatprep.subr.bf16.mxu0 0
    %1278 = vmatpush1.bf16.msra.mxu0 0
    %1279 = vmatprep.subr.bf16.mxu0 0
    %1280 = vmatpush1.bf16.msra.mxu0 0
    %1281 = vmatprep.subr.bf16.mxu0 0
    %1282 = vmatpush1.bf16.msra.mxu0 0
    %1283 = vmatprep.subr.bf16.mxu0 0
    %1284 = vmatpush1.bf16.msra.mxu0 0
    %1285 = vmatprep.subr.bf16.mxu0 0
    %1286 = vmatpush1.bf16.msra.mxu0 0
    %1287 = vmatprep.subr.bf16.mxu0 0
    %1288 = vmatpush1.bf16.msra.mxu0 0
    %1289 = vmatprep.mubr.bf16.mxu0 0
    %1290 = vmatmul.mubr.bf16.gmra.mrb[0].mxu0 %v1213
    %v1291 = vpop.f32.mrb[0].mxu0
    %v1292 = vadd.f32 0.0, %v1291
    %v1293 = vpop.f32.mrb[0].mxu0
    %v1294 = vadd.f32 0.0, %v1293
    %v1295 = vpop.f32.mrb[0].mxu0
    %v1296 = vadd.f32 0.0, %v1295
    %v1297 = vpop.f32.mrb[0].mxu0
    %v1298 = vadd.f32 0.0, %v1297
    %1299 = vdwg.mxu0
    %v1300 = vadd.f32 %v1205, %v1249
    %v1301 = vadd.f32 %v1206, %v1251
    %v1302 = vadd.f32 %v1207, %v1292
    %v1303 = vadd.f32 %v1208, %v1294
    %v1304 = vadd.f32 %v1209, %v1253
    %v1305 = vadd.f32 %v1210, %v1255
    %v1306 = vadd.f32 %v1211, %v1296
    %v1307 = vadd.f32 %v1212, %v1298
    %v1308 = vxor.u32 %v1300, 2147483648
    %v1309 = vxor.u32 %v1304, 2147483648
    %v1310 = vmul.f32 %v1308, 1.442695
    %v1311 = vpow.pop %v1310
    %v1312 = vmul.f32 %v1309, 1.442695
    %v1313 = vpow.pop %v1312
    %v1314 = vadd.f32 %v1311, 1.0
    %v1315 = vadd.f32 %v1313, 1.0
    %v1316 = vrcp.pop %v1314
    %v1317 = vmul.f32 1.0, %v1316
    %v1318 = vrcp.pop %v1315
    %v1319 = vmul.f32 1.0, %v1318
    %v1320 = vxor.u32 %v1301, 2147483648
    %v1321 = vxor.u32 %v1305, 2147483648
    %v1322 = vmul.f32 %v1320, 1.442695
    %v1323 = vpow.pop %v1322
    %v1324 = vmul.f32 %v1321, 1.442695
    %v1325 = vpow.pop %v1324
    %v1326 = vadd.f32 %v1323, 1.0
    %v1327 = vadd.f32 %v1325, 1.0
    %v1328 = vrcp.pop %v1326
    %v1329 = vmul.f32 1.0, %v1328
    %v1330 = vrcp.pop %v1327
    %v1331 = vmul.f32 1.0, %v1330
    %v1332 = vtanh.pop %v1302
    %v1333 = vtanh.pop %v1306
    %v1334 = vxor.u32 %v1303, 2147483648
    %v1335 = vxor.u32 %v1307, 2147483648
    %v1336 = vmul.f32 %v1334, 1.442695
    %v1337 = vpow.pop %v1336
    %v1338 = vmul.f32 %v1335, 1.442695
    %v1339 = vpow.pop %v1338
    %v1340 = vadd.f32 %v1337, 1.0
    %v1341 = vadd.f32 %v1339, 1.0
    %v1342 = vrcp.pop %v1340
    %v1343 = vmul.f32 1.0, %v1342
    %v1344 = vrcp.pop %v1341
    %v1345 = vmul.f32 1.0, %v1344
    %v1346 = vmul.f32 %v1329, %v1198
    %v1347 = vmul.f32 %v1331, %v1199
    %v1348 = vmul.f32 %v1317, %v1332
    %v1349 = vmul.f32 %v1319, %v1333
    %v1350 = vadd.f32 %v1346, %v1348
    %v1351 = vadd.f32 %v1347, %v1349
    %v1352 = vtanh.pop %v1350
    %v1353 = vtanh.pop %v1351
    %v1354 = vmul.f32 %v1343, %v1352
    %v1355 = vmul.f32 %v1345, %v1353
    %s1356 = scalar_lea.vmem [#allocation2], 128
    %v1357 = vld [vmem:[%s1356] sm:$0xff]
    %v1358 = vld [vmem:[%s1356 + $0x8] sm:$0xff]
    %v1359 = vld [vmem:[%s1356 + $0x10] sm:$0xff]
    %v1360 = vld [vmem:[%s1356 + $0x18] sm:$0xff]
    %v1361 = vld [vmem:[%s1356 + $0x20] sm:$0xff]
    %v1362 = vld [vmem:[%s1356 + $0x28] sm:$0xff]
    %v1363 = vld [vmem:[%s1356 + $0x30] sm:$0xff]
    %v1364 = vld [vmem:[%s1356 + $0x38] sm:$0xff]
    %v1365 = vpack.c.bf16 %v1355, %v1354
    %1366 = vmatprep.subr.bf16.mxu0 %v999
    %1367 = vmatpush1.bf16.msra.mxu0 %v998
    %1368 = vmatprep.subr.bf16.mxu0 %v1003
    %1369 = vmatpush1.bf16.msra.mxu0 %v1002
    %1370 = vmatprep.subr.bf16.mxu0 %v1007
    %1371 = vmatpush1.bf16.msra.mxu0 %v1006
    %1372 = vmatprep.subr.bf16.mxu0 %v1011
    %1373 = vmatpush1.bf16.msra.mxu0 %v1010
    %1374 = vmatprep.subr.bf16.mxu0 %v1015
    %1375 = vmatpush1.bf16.msra.mxu0 %v1014
    %1376 = vmatprep.subr.bf16.mxu0 %v1019
    %1377 = vmatpush1.bf16.msra.mxu0 %v1018
    %1378 = vmatprep.subr.bf16.mxu0 %v1023
    %1379 = vmatpush1.bf16.msra.mxu0 %v1022
    %1380 = vmatprep.subr.bf16.mxu0 %v1027
    %1381 = vmatpush1.bf16.msra.mxu0 %v1026
    %1382 = vmatprep.subr.bf16.mxu0 0
    %1383 = vmatpush1.bf16.msra.mxu0 0
    %1384 = vmatprep.subr.bf16.mxu0 0
    %1385 = vmatpush1.bf16.msra.mxu0 0
    %1386 = vmatprep.subr.bf16.mxu0 0
    %1387 = vmatpush1.bf16.msra.mxu0 0
    %1388 = vmatprep.subr.bf16.mxu0 0
    %1389 = vmatpush1.bf16.msra.mxu0 0
    %1390 = vmatprep.subr.bf16.mxu0 0
    %1391 = vmatpush1.bf16.msra.mxu0 0
    %1392 = vmatprep.subr.bf16.mxu0 0
    %1393 = vmatpush1.bf16.msra.mxu0 0
    %1394 = vmatprep.subr.bf16.mxu0 0
    %1395 = vmatpush1.bf16.msra.mxu0 0
    %1396 = vmatprep.subr.bf16.mxu0 0
    %1397 = vmatpush1.bf16.msra.mxu0 0
    %1398 = vmatprep.mubr.bf16.mxu0 0
    %1399 = vmatmul.mubr.bf16.gmra.mrb[0].mxu0 %v1365
    %v1400 = vpop.f32.mrb[0].mxu0
    %v1401 = vadd.f32 0.0, %v1400
    %v1402 = vpop.f32.mrb[0].mxu0
    %v1403 = vadd.f32 0.0, %v1402
    %v1404 = vpop.f32.mrb[0].mxu0
    %v1405 = vadd.f32 0.0, %v1404
    %v1406 = vpop.f32.mrb[0].mxu0
    %v1407 = vadd.f32 0.0, %v1406
    %1408 = vdwg.mxu0
    %1409 = vmatprep.subr.bf16.mxu0 %v1001
    %1410 = vmatpush1.bf16.msra.mxu0 %v1000
    %1411 = vmatprep.subr.bf16.mxu0 %v1005
    %1412 = vmatpush1.bf16.msra.mxu0 %v1004
    %1413 = vmatprep.subr.bf16.mxu0 %v1009
    %1414 = vmatpush1.bf16.msra.mxu0 %v1008
    %1415 = vmatprep.subr.bf16.mxu0 %v1013
    %1416 = vmatpush1.bf16.msra.mxu0 %v1012
    %1417 = vmatprep.subr.bf16.mxu0 %v1017
    %1418 = vmatpush1.bf16.msra.mxu0 %v1016
    %1419 = vmatprep.subr.bf16.mxu0 %v1021
    %1420 = vmatpush1.bf16.msra.mxu0 %v1020
    %1421 = vmatprep.subr.bf16.mxu0 %v1025
    %1422 = vmatpush1.bf16.msra.mxu0 %v1024
    %1423 = vmatprep.subr.bf16.mxu0 %v1029
    %1424 = vmatpush1.bf16.msra.mxu0 %v1028
    %1425 = vmatprep.subr.bf16.mxu0 0
    %1426 = vmatpush1.bf16.msra.mxu0 0
    %1427 = vmatprep.subr.bf16.mxu0 0
    %1428 = vmatpush1.bf16.msra.mxu0 0
    %1429 = vmatprep.subr.bf16.mxu0 0
    %1430 = vmatpush1.bf16.msra.mxu0 0
    %1431 = vmatprep.subr.bf16.mxu0 0
    %1432 = vmatpush1.bf16.msra.mxu0 0
    %1433 = vmatprep.subr.bf16.mxu0 0
    %1434 = vmatpush1.bf16.msra.mxu0 0
    %1435 = vmatprep.subr.bf16.mxu0 0
    %1436 = vmatpush1.bf16.msra.mxu0 0
    %1437 = vmatprep.subr.bf16.mxu0 0
    %1438 = vmatpush1.bf16.msra.mxu0 0
    %1439 = vmatprep.subr.bf16.mxu0 0
    %1440 = vmatpush1.bf16.msra.mxu0 0
    %1441 = vmatprep.mubr.bf16.mxu0 0
    %1442 = vmatmul.mubr.bf16.gmra.mrb[0].mxu0 %v1365
    %v1443 = vpop.f32.mrb[0].mxu0
    %v1444 = vadd.f32 0.0, %v1443
    %v1445 = vpop.f32.mrb[0].mxu0
    %v1446 = vadd.f32 0.0, %v1445
    %v1447 = vpop.f32.mrb[0].mxu0
    %v1448 = vadd.f32 0.0, %v1447
    %v1449 = vpop.f32.mrb[0].mxu0
    %v1450 = vadd.f32 0.0, %v1449
    %1451 = vdwg.mxu0
    %v1452 = vadd.f32 %v1357, %v1401
    %v1453 = vadd.f32 %v1358, %v1403
    %v1454 = vadd.f32 %v1359, %v1444
    %v1455 = vadd.f32 %v1360, %v1446
    %v1456 = vadd.f32 %v1361, %v1405
    %v1457 = vadd.f32 %v1362, %v1407
    %v1458 = vadd.f32 %v1363, %v1448
    %v1459 = vadd.f32 %v1364, %v1450
    %v1460 = vxor.u32 %v1452, 2147483648
    %v1461 = vxor.u32 %v1456, 2147483648
    %v1462 = vmul.f32 %v1460, 1.442695
    %v1463 = vpow.pop %v1462
    %v1464 = vmul.f32 %v1461, 1.442695
    %v1465 = vpow.pop %v1464
    %v1466 = vadd.f32 %v1463, 1.0
    %v1467 = vadd.f32 %v1465, 1.0
    %v1468 = vrcp.pop %v1466
    %v1469 = vmul.f32 1.0, %v1468
    %v1470 = vrcp.pop %v1467
    %v1471 = vmul.f32 1.0, %v1470
    %v1472 = vxor.u32 %v1453, 2147483648
    %v1473 = vxor.u32 %v1457, 2147483648
    %v1474 = vmul.f32 %v1472, 1.442695
    %v1475 = vpow.pop %v1474
    %v1476 = vmul.f32 %v1473, 1.442695
    %v1477 = vpow.pop %v1476
    %v1478 = vadd.f32 %v1475, 1.0
    %v1479 = vadd.f32 %v1477, 1.0
    %v1480 = vrcp.pop %v1478
    %v1481 = vmul.f32 1.0, %v1480
    %v1482 = vrcp.pop %v1479
    %v1483 = vmul.f32 1.0, %v1482
    %v1484 = vtanh.pop %v1454
    %v1485 = vtanh.pop %v1458
    %v1486 = vxor.u32 %v1455, 2147483648
    %v1487 = vxor.u32 %v1459, 2147483648
    %v1488 = vmul.f32 %v1486, 1.442695
    %v1489 = vpow.pop %v1488
    %v1490 = vmul.f32 %v1487, 1.442695
    %v1491 = vpow.pop %v1490
    %v1492 = vadd.f32 %v1489, 1.0
    %v1493 = vadd.f32 %v1491, 1.0
    %v1494 = vrcp.pop %v1492
    %v1495 = vmul.f32 1.0, %v1494
    %v1496 = vrcp.pop %v1493
    %v1497 = vmul.f32 1.0, %v1496
    %v1498 = vmul.f32 %v1481, %v1350
    %v1499 = vmul.f32 %v1483, %v1351
    %v1500 = vmul.f32 %v1469, %v1484
    %v1501 = vmul.f32 %v1471, %v1485
    %v1502 = vadd.f32 %v1498, %v1500
    %v1503 = vadd.f32 %v1499, %v1501
    %v1504 = vtanh.pop %v1502
    %v1505 = vtanh.pop %v1503
    %v1506 = vmul.f32 %v1495, %v1504
    %v1507 = vmul.f32 %v1497, %v1505
    %s1508 = scalar_lea.vmem [#allocation2], 192
    %v1509 = vld [vmem:[%s1508] sm:$0xff]
    %v1510 = vld [vmem:[%s1508 + $0x8] sm:$0xff]
    %v1511 = vld [vmem:[%s1508 + $0x10] sm:$0xff]
    %v1512 = vld [vmem:[%s1508 + $0x18] sm:$0xff]
    %v1513 = vld [vmem:[%s1508 + $0x20] sm:$0xff]
    %v1514 = vld [vmem:[%s1508 + $0x28] sm:$0xff]
    %v1515 = vld [vmem:[%s1508 + $0x30] sm:$0xff]
    %v1516 = vld [vmem:[%s1508 + $0x38] sm:$0xff]
    %v1517 = vpack.c.bf16 %v1507, %v1506
    %1518 = vmatprep.subr.bf16.mxu0 %v999
    %1519 = vmatpush1.bf16.msra.mxu0 %v998
    %1520 = vmatprep.subr.bf16.mxu0 %v1003
    %1521 = vmatpush1.bf16.msra.mxu0 %v1002
    %1522 = vmatprep.subr.bf16.mxu0 %v1007
    %1523 = vmatpush1.bf16.msra.mxu0 %v1006
    %1524 = vmatprep.subr.bf16.mxu0 %v1011
    %1525 = vmatpush1.bf16.msra.mxu0 %v1010
    %1526 = vmatprep.subr.bf16.mxu0 %v1015
    %1527 = vmatpush1.bf16.msra.mxu0 %v1014
    %1528 = vmatprep.subr.bf16.mxu0 %v1019
    %1529 = vmatpush1.bf16.msra.mxu0 %v1018
    %1530 = vmatprep.subr.bf16.mxu0 %v1023
    %1531 = vmatpush1.bf16.msra.mxu0 %v1022
    %1532 = vmatprep.subr.bf16.mxu0 %v1027
    %1533 = vmatpush1.bf16.msra.mxu0 %v1026
    %1534 = vmatprep.subr.bf16.mxu0 0
    %1535 = vmatpush1.bf16.msra.mxu0 0
    %1536 = vmatprep.subr.bf16.mxu0 0
    %1537 = vmatpush1.bf16.msra.mxu0 0
    %1538 = vmatprep.subr.bf16.mxu0 0
    %1539 = vmatpush1.bf16.msra.mxu0 0
    %1540 = vmatprep.subr.bf16.mxu0 0
    %1541 = vmatpush1.bf16.msra.mxu0 0
    %1542 = vmatprep.subr.bf16.mxu0 0
    %1543 = vmatpush1.bf16.msra.mxu0 0
    %1544 = vmatprep.subr.bf16.mxu0 0
    %1545 = vmatpush1.bf16.msra.mxu0 0
    %1546 = vmatprep.subr.bf16.mxu0 0
    %1547 = vmatpush1.bf16.msra.mxu0 0
    %1548 = vmatprep.subr.bf16.mxu0 0
    %1549 = vmatpush1.bf16.msra.mxu0 0
    %1550 = vmatprep.mubr.bf16.mxu0 0
    %1551 = vmatmul.mubr.bf16.gmra.mrb[0].mxu0 %v1517
    %v1552 = vpop.f32.mrb[0].mxu0
    %v1553 = vadd.f32 0.0, %v1552
    %v1554 = vpop.f32.mrb[0].mxu0
    %v1555 = vadd.f32 0.0, %v1554
    %v1556 = vpop.f32.mrb[0].mxu0
    %v1557 = vadd.f32 0.0, %v1556
    %v1558 = vpop.f32.mrb[0].mxu0
    %v1559 = vadd.f32 0.0, %v1558
    %1560 = vdwg.mxu0
    %1561 = vmatprep.subr.bf16.mxu0 %v1001
    %1562 = vmatpush1.bf16.msra.mxu0 %v1000
    %1563 = vmatprep.subr.bf16.mxu0 %v1005
    %1564 = vmatpush1.bf16.msra.mxu0 %v1004
    %1565 = vmatprep.subr.bf16.mxu0 %v1009
    %1566 = vmatpush1.bf16.msra.mxu0 %v1008
    %1567 = vmatprep.subr.bf16.mxu0 %v1013
    %1568 = vmatpush1.bf16.msra.mxu0 %v1012
    %1569 = vmatprep.subr.bf16.mxu0 %v1017
    %1570 = vmatpush1.bf16.msra.mxu0 %v1016
    %1571 = vmatprep.subr.bf16.mxu0 %v1021
    %1572 = vmatpush1.bf16.msra.mxu0 %v1020
    %1573 = vmatprep.subr.bf16.mxu0 %v1025
    %1574 = vmatpush1.bf16.msra.mxu0 %v1024
    %1575 = vmatprep.subr.bf16.mxu0 %v1029
    %1576 = vmatpush1.bf16.msra.mxu0 %v1028
    %1577 = vmatprep.subr.bf16.mxu0 0
    %1578 = vmatpush1.bf16.msra.mxu0 0
    %1579 = vmatprep.subr.bf16.mxu0 0
    %1580 = vmatpush1.bf16.msra.mxu0 0
    %1581 = vmatprep.subr.bf16.mxu0 0
    %1582 = vmatpush1.bf16.msra.mxu0 0
    %1583 = vmatprep.subr.bf16.mxu0 0
    %1584 = vmatpush1.bf16.msra.mxu0 0
    %1585 = vmatprep.subr.bf16.mxu0 0
    %1586 = vmatpush1.bf16.msra.mxu0 0
    %1587 = vmatprep.subr.bf16.mxu0 0
    %1588 = vmatpush1.bf16.msra.mxu0 0
    %1589 = vmatprep.subr.bf16.mxu0 0
    %1590 = vmatpush1.bf16.msra.mxu0 0
    %1591 = vmatprep.subr.bf16.mxu0 0
    %1592 = vmatpush1.bf16.msra.mxu0 0
    %1593 = vmatprep.mubr.bf16.mxu0 0
    %1594 = vmatmul.mubr.bf16.gmra.mrb[0].mxu0 %v1517
    %v1595 = vpop.f32.mrb[0].mxu0
    %v1596 = vadd.f32 0.0, %v1595
    %v1597 = vpop.f32.mrb[0].mxu0
    %v1598 = vadd.f32 0.0, %v1597
    %v1599 = vpop.f32.mrb[0].mxu0
    %v1600 = vadd.f32 0.0, %v1599
    %v1601 = vpop.f32.mrb[0].mxu0
    %v1602 = vadd.f32 0.0, %v1601
    %1603 = vdwg.mxu0
    %v1604 = vadd.f32 %v1509, %v1553
    %v1605 = vadd.f32 %v1510, %v1555
    %v1606 = vadd.f32 %v1511, %v1596
    %v1607 = vadd.f32 %v1512, %v1598
    %v1608 = vadd.f32 %v1513, %v1557
    %v1609 = vadd.f32 %v1514, %v1559
    %v1610 = vadd.f32 %v1515, %v1600
    %v1611 = vadd.f32 %v1516, %v1602
    %v1612 = vxor.u32 %v1604, 2147483648
    %v1613 = vxor.u32 %v1608, 2147483648
    %v1614 = vmul.f32 %v1612, 1.442695
    %v1615 = vpow.pop %v1614
    %v1616 = vmul.f32 %v1613, 1.442695
    %v1617 = vpow.pop %v1616
    %v1618 = vadd.f32 %v1615, 1.0
    %v1619 = vadd.f32 %v1617, 1.0
    %v1620 = vrcp.pop %v1618
    %v1621 = vmul.f32 1.0, %v1620
    %v1622 = vrcp.pop %v1619
    %v1623 = vmul.f32 1.0, %v1622
    %v1624 = vxor.u32 %v1605, 2147483648
    %v1625 = vxor.u32 %v1609, 2147483648
    %v1626 = vmul.f32 %v1624, 1.442695
    %v1627 = vpow.pop %v1626
    %v1628 = vmul.f32 %v1625, 1.442695
    %v1629 = vpow.pop %v1628
    %v1630 = vadd.f32 %v1627, 1.0
    %v1631 = vadd.f32 %v1629, 1.0
    %v1632 = vrcp.pop %v1630
    %v1633 = vmul.f32 1.0, %v1632
    %v1634 = vrcp.pop %v1631
    %v1635 = vmul.f32 1.0, %v1634
    %v1636 = vtanh.pop %v1606
    %v1637 = vtanh.pop %v1610
    %v1638 = vxor.u32 %v1607, 2147483648
    %v1639 = vxor.u32 %v1611, 2147483648
    %v1640 = vmul.f32 %v1638, 1.442695
    %v1641 = vpow.pop %v1640
    %v1642 = vmul.f32 %v1639, 1.442695
    %v1643 = vpow.pop %v1642
    %v1644 = vadd.f32 %v1641, 1.0
    %v1645 = vadd.f32 %v1643, 1.0
    %v1646 = vrcp.pop %v1644
    %v1647 = vmul.f32 1.0, %v1646
    %v1648 = vrcp.pop %v1645
    %v1649 = vmul.f32 1.0, %v1648
    %v1650 = vmul.f32 %v1633, %v1502
    %v1651 = vmul.f32 %v1635, %v1503
    %v1652 = vmul.f32 %v1621, %v1636
    %v1653 = vmul.f32 %v1623, %v1637
    %v1654 = vadd.f32 %v1650, %v1652
    %v1655 = vadd.f32 %v1651, %v1653
    %v1656 = vtanh.pop %v1654
    %v1657 = vtanh.pop %v1655
    %v1658 = vmul.f32 %v1647, %v1656
    %v1659 = vmul.f32 %v1649, %v1657
    %s1660 = scalar_lea.vmem [#allocation2], 256
    %v1661 = vld [vmem:[%s1660] sm:$0xff]
    %v1662 = vld [vmem:[%s1660 + $0x8] sm:$0xff]
    %v1663 = vld [vmem:[%s1660 + $0x10] sm:$0xff]
    %v1664 = vld [vmem:[%s1660 + $0x18] sm:$0xff]
    %v1665 = vld [vmem:[%s1660 + $0x20] sm:$0xff]
    %v1666 = vld [vmem:[%s1660 + $0x28] sm:$0xff]
    %v1667 = vld [vmem:[%s1660 + $0x30] sm:$0xff]
    %v1668 = vld [vmem:[%s1660 + $0x38] sm:$0xff]
    %v1669 = vpack.c.bf16 %v1659, %v1658
    %1670 = vmatprep.subr.bf16.mxu0 %v999
    %1671 = vmatpush1.bf16.msra.mxu0 %v998
    %1672 = vmatprep.subr.bf16.mxu0 %v1003
    %1673 = vmatpush1.bf16.msra.mxu0 %v1002
    %1674 = vmatprep.subr.bf16.mxu0 %v1007
    %1675 = vmatpush1.bf16.msra.mxu0 %v1006
    %1676 = vmatprep.subr.bf16.mxu0 %v1011
    %1677 = vmatpush1.bf16.msra.mxu0 %v1010
    %1678 = vmatprep.subr.bf16.mxu0 %v1015
    %1679 = vmatpush1.bf16.msra.mxu0 %v1014
    %1680 = vmatprep.subr.bf16.mxu0 %v1019
    %1681 = vmatpush1.bf16.msra.mxu0 %v1018
    %1682 = vmatprep.subr.bf16.mxu0 %v1023
    %1683 = vmatpush1.bf16.msra.mxu0 %v1022
    %1684 = vmatprep.subr.bf16.mxu0 %v1027
    %1685 = vmatpush1.bf16.msra.mxu0 %v1026
    %1686 = vmatprep.subr.bf16.mxu0 0
    %1687 = vmatpush1.bf16.msra.mxu0 0
    %1688 = vmatprep.subr.bf16.mxu0 0
    %1689 = vmatpush1.bf16.msra.mxu0 0
    %1690 = vmatprep.subr.bf16.mxu0 0
    %1691 = vmatpush1.bf16.msra.mxu0 0
    %1692 = vmatprep.subr.bf16.mxu0 0
    %1693 = vmatpush1.bf16.msra.mxu0 0
    %1694 = vmatprep.subr.bf16.mxu0 0
    %1695 = vmatpush1.bf16.msra.mxu0 0
    %1696 = vmatprep.subr.bf16.mxu0 0
    %1697 = vmatpush1.bf16.msra.mxu0 0
    %1698 = vmatprep.subr.bf16.mxu0 0
    %1699 = vmatpush1.bf16.msra.mxu0 0
    %1700 = vmatprep.subr.bf16.mxu0 0
    %1701 = vmatpush1.bf16.msra.mxu0 0
    %1702 = vmatprep.mubr.bf16.mxu0 0
    %1703 = vmatmul.mubr.bf16.gmra.mrb[0].mxu0 %v1669
    %v1704 = vpop.f32.mrb[0].mxu0
    %v1705 = vadd.f32 0.0, %v1704
    %v1706 = vpop.f32.mrb[0].mxu0
    %v1707 = vadd.f32 0.0, %v1706
    %v1708 = vpop.f32.mrb[0].mxu0
    %v1709 = vadd.f32 0.0, %v1708
    %v1710 = vpop.f32.mrb[0].mxu0
    %v1711 = vadd.f32 0.0, %v1710
    %1712 = vdwg.mxu0
    %1713 = vmatprep.subr.bf16.mxu0 %v1001
    %1714 = vmatpush1.bf16.msra.mxu0 %v1000
    %1715 = vmatprep.subr.bf16.mxu0 %v1005
    %1716 = vmatpush1.bf16.msra.mxu0 %v1004
    %1717 = vmatprep.subr.bf16.mxu0 %v1009
    %1718 = vmatpush1.bf16.msra.mxu0 %v1008
    %1719 = vmatprep.subr.bf16.mxu0 %v1013
    %1720 = vmatpush1.bf16.msra.mxu0 %v1012
    %1721 = vmatprep.subr.bf16.mxu0 %v1017
    %1722 = vmatpush1.bf16.msra.mxu0 %v1016
    %1723 = vmatprep.subr.bf16.mxu0 %v1021
    %1724 = vmatpush1.bf16.msra.mxu0 %v1020
    %1725 = vmatprep.subr.bf16.mxu0 %v1025
    %1726 = vmatpush1.bf16.msra.mxu0 %v1024
    %1727 = vmatprep.subr.bf16.mxu0 %v1029
    %1728 = vmatpush1.bf16.msra.mxu0 %v1028
    %1729 = vmatprep.subr.bf16.mxu0 0
    %1730 = vmatpush1.bf16.msra.mxu0 0
    %1731 = vmatprep.subr.bf16.mxu0 0
    %1732 = vmatpush1.bf16.msra.mxu0 0
    %1733 = vmatprep.subr.bf16.mxu0 0
    %1734 = vmatpush1.bf16.msra.mxu0 0
    %1735 = vmatprep.subr.bf16.mxu0 0
    %1736 = vmatpush1.bf16.msra.mxu0 0
    %1737 = vmatprep.subr.bf16.mxu0 0
    %1738 = vmatpush1.bf16.msra.mxu0 0
    %1739 = vmatprep.subr.bf16.mxu0 0
    %1740 = vmatpush1.bf16.msra.mxu0 0
    %1741 = vmatprep.subr.bf16.mxu0 0
    %1742 = vmatpush1.bf16.msra.mxu0 0
    %1743 = vmatprep.subr.bf16.mxu0 0
    %1744 = vmatpush1.bf16.msra.mxu0 0
    %1745 = vmatprep.mubr.bf16.mxu0 0
    %1746 = vmatmul.mubr.bf16.gmra.mrb[0].mxu0 %v1669
    %v1747 = vpop.f32.mrb[0].mxu0
    %v1748 = vadd.f32 0.0, %v1747
    %v1749 = vpop.f32.mrb[0].mxu0
    %v1750 = vadd.f32 0.0, %v1749
    %v1751 = vpop.f32.mrb[0].mxu0
    %v1752 = vadd.f32 0.0, %v1751
    %v1753 = vpop.f32.mrb[0].mxu0
    %v1754 = vadd.f32 0.0, %v1753
    %1755 = vdwg.mxu0
    %v1756 = vadd.f32 %v1661, %v1705
    %v1757 = vadd.f32 %v1662, %v1707
    %v1758 = vadd.f32 %v1663, %v1748
    %v1759 = vadd.f32 %v1664, %v1750
    %v1760 = vadd.f32 %v1665, %v1709
    %v1761 = vadd.f32 %v1666, %v1711
    %v1762 = vadd.f32 %v1667, %v1752
    %v1763 = vadd.f32 %v1668, %v1754
    %v1764 = vxor.u32 %v1756, 2147483648
    %v1765 = vxor.u32 %v1760, 2147483648
    %v1766 = vmul.f32 %v1764, 1.442695
    %v1767 = vpow.pop %v1766
    %v1768 = vmul.f32 %v1765, 1.442695
    %v1769 = vpow.pop %v1768
    %v1770 = vadd.f32 %v1767, 1.0
    %v1771 = vadd.f32 %v1769, 1.0
    %v1772 = vrcp.pop %v1770
    %v1773 = vmul.f32 1.0, %v1772
    %v1774 = vrcp.pop %v1771
    %v1775 = vmul.f32 1.0, %v1774
    %v1776 = vxor.u32 %v1757, 2147483648
    %v1777 = vxor.u32 %v1761, 2147483648
    %v1778 = vmul.f32 %v1776, 1.442695
    %v1779 = vpow.pop %v1778
    %v1780 = vmul.f32 %v1777, 1.442695
    %v1781 = vpow.pop %v1780
    %v1782 = vadd.f32 %v1779, 1.0
    %v1783 = vadd.f32 %v1781, 1.0
    %v1784 = vrcp.pop %v1782
    %v1785 = vmul.f32 1.0, %v1784
    %v1786 = vrcp.pop %v1783
    %v1787 = vmul.f32 1.0, %v1786
    %v1788 = vtanh.pop %v1758
    %v1789 = vtanh.pop %v1762
    %v1790 = vxor.u32 %v1759, 2147483648
    %v1791 = vxor.u32 %v1763, 2147483648
    %v1792 = vmul.f32 %v1790, 1.442695
    %v1793 = vpow.pop %v1792
    %v1794 = vmul.f32 %v1791, 1.442695
    %v1795 = vpow.pop %v1794
    %v1796 = vadd.f32 %v1793, 1.0
    %v1797 = vadd.f32 %v1795, 1.0
    %v1798 = vrcp.pop %v1796
    %v1799 = vmul.f32 1.0, %v1798
    %v1800 = vrcp.pop %v1797
    %v1801 = vmul.f32 1.0, %v1800
    %v1802 = vmul.f32 %v1785, %v1654
    %v1803 = vmul.f32 %v1787, %v1655
    %v1804 = vmul.f32 %v1773, %v1788
    %v1805 = vmul.f32 %v1775, %v1789
    %v1806 = vadd.f32 %v1802, %v1804
    %v1807 = vadd.f32 %v1803, %v1805
    %v1808 = vtanh.pop %v1806
    %v1809 = vtanh.pop %v1807
    %v1810 = vmul.f32 %v1799, %v1808
    %v1811 = vmul.f32 %v1801, %v1809
    %s1812 = scalar_lea.vmem [#allocation2], 320
    %v1813 = vld [vmem:[%s1812] sm:$0xff]
    %v1814 = vld [vmem:[%s1812 + $0x8] sm:$0xff]
    %v1815 = vld [vmem:[%s1812 + $0x10] sm:$0xff]
    %v1816 = vld [vmem:[%s1812 + $0x18] sm:$0xff]
    %v1817 = vld [vmem:[%s1812 + $0x20] sm:$0xff]
    %v1818 = vld [vmem:[%s1812 + $0x28] sm:$0xff]
    %v1819 = vld [vmem:[%s1812 + $0x30] sm:$0xff]
    %v1820 = vld [vmem:[%s1812 + $0x38] sm:$0xff]
    %v1821 = vpack.c.bf16 %v1811, %v1810
    %1822 = vmatprep.subr.bf16.mxu0 %v999
    %1823 = vmatpush1.bf16.msra.mxu0 %v998
    %1824 = vmatprep.subr.bf16.mxu0 %v1003
    %1825 = vmatpush1.bf16.msra.mxu0 %v1002
    %1826 = vmatprep.subr.bf16.mxu0 %v1007
    %1827 = vmatpush1.bf16.msra.mxu0 %v1006
    %1828 = vmatprep.subr.bf16.mxu0 %v1011
    %1829 = vmatpush1.bf16.msra.mxu0 %v1010
    %1830 = vmatprep.subr.bf16.mxu0 %v1015
    %1831 = vmatpush1.bf16.msra.mxu0 %v1014
    %1832 = vmatprep.subr.bf16.mxu0 %v1019
    %1833 = vmatpush1.bf16.msra.mxu0 %v1018
    %1834 = vmatprep.subr.bf16.mxu0 %v1023
    %1835 = vmatpush1.bf16.msra.mxu0 %v1022
    %1836 = vmatprep.subr.bf16.mxu0 %v1027
    %1837 = vmatpush1.bf16.msra.mxu0 %v1026
    %1838 = vmatprep.subr.bf16.mxu0 0
    %1839 = vmatpush1.bf16.msra.mxu0 0
    %1840 = vmatprep.subr.bf16.mxu0 0
    %1841 = vmatpush1.bf16.msra.mxu0 0
    %1842 = vmatprep.subr.bf16.mxu0 0
    %1843 = vmatpush1.bf16.msra.mxu0 0
    %1844 = vmatprep.subr.bf16.mxu0 0
    %1845 = vmatpush1.bf16.msra.mxu0 0
    %1846 = vmatprep.subr.bf16.mxu0 0
    %1847 = vmatpush1.bf16.msra.mxu0 0
    %1848 = vmatprep.subr.bf16.mxu0 0
    %1849 = vmatpush1.bf16.msra.mxu0 0
    %1850 = vmatprep.subr.bf16.mxu0 0
    %1851 = vmatpush1.bf16.msra.mxu0 0
    %1852 = vmatprep.subr.bf16.mxu0 0
    %1853 = vmatpush1.bf16.msra.mxu0 0
    %1854 = vmatprep.mubr.bf16.mxu0 0
    %1855 = vmatmul.mubr.bf16.gmra.mrb[0].mxu0 %v1821
    %v1856 = vpop.f32.mrb[0].mxu0
    %v1857 = vadd.f32 0.0, %v1856
    %v1858 = vpop.f32.mrb[0].mxu0
    %v1859 = vadd.f32 0.0, %v1858
    %v1860 = vpop.f32.mrb[0].mxu0
    %v1861 = vadd.f32 0.0, %v1860
    %v1862 = vpop.f32.mrb[0].mxu0
    %v1863 = vadd.f32 0.0, %v1862
    %1864 = vdwg.mxu0
    %1865 = vmatprep.subr.bf16.mxu0 %v1001
    %1866 = vmatpush1.bf16.msra.mxu0 %v1000
    %1867 = vmatprep.subr.bf16.mxu0 %v1005
    %1868 = vmatpush1.bf16.msra.mxu0 %v1004
    %1869 = vmatprep.subr.bf16.mxu0 %v1009
    %1870 = vmatpush1.bf16.msra.mxu0 %v1008
    %1871 = vmatprep.subr.bf16.mxu0 %v1013
    %1872 = vmatpush1.bf16.msra.mxu0 %v1012
    %1873 = vmatprep.subr.bf16.mxu0 %v1017
    %1874 = vmatpush1.bf16.msra.mxu0 %v1016
    %1875 = vmatprep.subr.bf16.mxu0 %v1021
    %1876 = vmatpush1.bf16.msra.mxu0 %v1020
    %1877 = vmatprep.subr.bf16.mxu0 %v1025
    %1878 = vmatpush1.bf16.msra.mxu0 %v1024
    %1879 = vmatprep.subr.bf16.mxu0 %v1029
    %1880 = vmatpush1.bf16.msra.mxu0 %v1028
    %1881 = vmatprep.subr.bf16.mxu0 0
    %1882 = vmatpush1.bf16.msra.mxu0 0
    %1883 = vmatprep.subr.bf16.mxu0 0
    %1884 = vmatpush1.bf16.msra.mxu0 0
    %1885 = vmatprep.subr.bf16.mxu0 0
    %1886 = vmatpush1.bf16.msra.mxu0 0
    %1887 = vmatprep.subr.bf16.mxu0 0
    %1888 = vmatpush1.bf16.msra.mxu0 0
    %1889 = vmatprep.subr.bf16.mxu0 0
    %1890 = vmatpush1.bf16.msra.mxu0 0
    %1891 = vmatprep.subr.bf16.mxu0 0
    %1892 = vmatpush1.bf16.msra.mxu0 0
    %1893 = vmatprep.subr.bf16.mxu0 0
    %1894 = vmatpush1.bf16.msra.mxu0 0
    %1895 = vmatprep.subr.bf16.mxu0 0
    %1896 = vmatpush1.bf16.msra.mxu0 0
    %1897 = vmatprep.mubr.bf16.mxu0 0
    %1898 = vmatmul.mubr.bf16.gmra.mrb[0].mxu0 %v1821
    %v1899 = vpop.f32.mrb[0].mxu0
    %v1900 = vadd.f32 0.0, %v1899
    %v1901 = vpop.f32.mrb[0].mxu0
    %v1902 = vadd.f32 0.0, %v1901
    %v1903 = vpop.f32.mrb[0].mxu0
    %v1904 = vadd.f32 0.0, %v1903
    %v1905 = vpop.f32.mrb[0].mxu0
    %v1906 = vadd.f32 0.0, %v1905
    %1907 = vdwg.mxu0
    %v1908 = vadd.f32 %v1813, %v1857
    %v1909 = vadd.f32 %v1814, %v1859
    %v1910 = vadd.f32 %v1815, %v1900
    %v1911 = vadd.f32 %v1816, %v1902
    %v1912 = vadd.f32 %v1817, %v1861
    %v1913 = vadd.f32 %v1818, %v1863
    %v1914 = vadd.f32 %v1819, %v1904
    %v1915 = vadd.f32 %v1820, %v1906
    %v1916 = vxor.u32 %v1908, 2147483648
    %v1917 = vxor.u32 %v1912, 2147483648
    %v1918 = vmul.f32 %v1916, 1.442695
    %v1919 = vpow.pop %v1918
    %v1920 = vmul.f32 %v1917, 1.442695
    %v1921 = vpow.pop %v1920
    %v1922 = vadd.f32 %v1919, 1.0
    %v1923 = vadd.f32 %v1921, 1.0
    %v1924 = vrcp.pop %v1922
    %v1925 = vmul.f32 1.0, %v1924
    %v1926 = vrcp.pop %v1923
    %v1927 = vmul.f32 1.0, %v1926
    %v1928 = vxor.u32 %v1909, 2147483648
    %v1929 = vxor.u32 %v1913, 2147483648
    %v1930 = vmul.f32 %v1928, 1.442695
    %v1931 = vpow.pop %v1930
    %v1932 = vmul.f32 %v1929, 1.442695
    %v1933 = vpow.pop %v1932
    %v1934 = vadd.f32 %v1931, 1.0
    %v1935 = vadd.f32 %v1933, 1.0
    %v1936 = vrcp.pop %v1934
    %v1937 = vmul.f32 1.0, %v1936
    %v1938 = vrcp.pop %v1935
    %v1939 = vmul.f32 1.0, %v1938
    %v1940 = vtanh.pop %v1910
    %v1941 = vtanh.pop %v1914
    %v1942 = vxor.u32 %v1911, 2147483648
    %v1943 = vxor.u32 %v1915, 2147483648
    %v1944 = vmul.f32 %v1942, 1.442695
    %v1945 = vpow.pop %v1944
    %v1946 = vmul.f32 %v1943, 1.442695
    %v1947 = vpow.pop %v1946
    %v1948 = vadd.f32 %v1945, 1.0
    %v1949 = vadd.f32 %v1947, 1.0
    %v1950 = vrcp.pop %v1948
    %v1951 = vmul.f32 1.0, %v1950
    %v1952 = vrcp.pop %v1949
    %v1953 = vmul.f32 1.0, %v1952
    %v1954 = vmul.f32 %v1937, %v1806
    %v1955 = vmul.f32 %v1939, %v1807
    %v1956 = vmul.f32 %v1925, %v1940
    %v1957 = vmul.f32 %v1927, %v1941
    %v1958 = vadd.f32 %v1954, %v1956
    %v1959 = vadd.f32 %v1955, %v1957
    %v1960 = vtanh.pop %v1958
    %v1961 = vtanh.pop %v1959
    %v1962 = vmul.f32 %v1951, %v1960
    %v1963 = vmul.f32 %v1953, %v1961
    %s1964 = scalar_lea.vmem [#allocation2], 384
    %v1965 = vld [vmem:[%s1964] sm:$0xff]
    %v1966 = vld [vmem:[%s1964 + $0x8] sm:$0xff]
    %v1967 = vld [vmem:[%s1964 + $0x10] sm:$0xff]
    %v1968 = vld [vmem:[%s1964 + $0x18] sm:$0xff]
    %v1969 = vld [vmem:[%s1964 + $0x20] sm:$0xff]
    %v1970 = vld [vmem:[%s1964 + $0x28] sm:$0xff]
    %v1971 = vld [vmem:[%s1964 + $0x30] sm:$0xff]
    %v1972 = vld [vmem:[%s1964 + $0x38] sm:$0xff]
    %v1973 = vpack.c.bf16 %v1963, %v1962
    %1974 = vmatprep.subr.bf16.mxu0 %v999
    %1975 = vmatpush1.bf16.msra.mxu0 %v998
    %1976 = vmatprep.subr.bf16.mxu0 %v1003
    %1977 = vmatpush1.bf16.msra.mxu0 %v1002
    %1978 = vmatprep.subr.bf16.mxu0 %v1007
    %1979 = vmatpush1.bf16.msra.mxu0 %v1006
    %1980 = vmatprep.subr.bf16.mxu0 %v1011
    %1981 = vmatpush1.bf16.msra.mxu0 %v1010
    %1982 = vmatprep.subr.bf16.mxu0 %v1015
    %1983 = vmatpush1.bf16.msra.mxu0 %v1014
    %1984 = vmatprep.subr.bf16.mxu0 %v1019
    %1985 = vmatpush1.bf16.msra.mxu0 %v1018
    %1986 = vmatprep.subr.bf16.mxu0 %v1023
    %1987 = vmatpush1.bf16.msra.mxu0 %v1022
    %1988 = vmatprep.subr.bf16.mxu0 %v1027
    %1989 = vmatpush1.bf16.msra.mxu0 %v1026
    %1990 = vmatprep.subr.bf16.mxu0 0
    %1991 = vmatpush1.bf16.msra.mxu0 0
    %1992 = vmatprep.subr.bf16.mxu0 0
    %1993 = vmatpush1.bf16.msra.mxu0 0
    %1994 = vmatprep.subr.bf16.mxu0 0
    %1995 = vmatpush1.bf16.msra.mxu0 0
    %1996 = vmatprep.subr.bf16.mxu0 0
    %1997 = vmatpush1.bf16.msra.mxu0 0
    %1998 = vmatprep.subr.bf16.mxu0 0
    %1999 = vmatpush1.bf16.msra.mxu0 0
    %2000 = vmatprep.subr.bf16.mxu0 0
    %2001 = vmatpush1.bf16.msra.mxu0 0
    %2002 = vmatprep.subr.bf16.mxu0 0
    %2003 = vmatpush1.bf16.msra.mxu0 0
    %2004 = vmatprep.subr.bf16.mxu0 0
    %2005 = vmatpush1.bf16.msra.mxu0 0
    %2006 = vmatprep.mubr.bf16.mxu0 0
    %2007 = vmatmul.mubr.bf16.gmra.mrb[0].mxu0 %v1973
    %v2008 = vpop.f32.mrb[0].mxu0
    %v2009 = vadd.f32 0.0, %v2008
    %v2010 = vpop.f32.mrb[0].mxu0
    %v2011 = vadd.f32 0.0, %v2010
    %v2012 = vpop.f32.mrb[0].mxu0
    %v2013 = vadd.f32 0.0, %v2012
    %v2014 = vpop.f32.mrb[0].mxu0
    %v2015 = vadd.f32 0.0, %v2014
    %2016 = vdwg.mxu0
    %2017 = vmatprep.subr.bf16.mxu0 %v1001
    %2018 = vmatpush1.bf16.msra.mxu0 %v1000
    %2019 = vmatprep.subr.bf16.mxu0 %v1005
    %2020 = vmatpush1.bf16.msra.mxu0 %v1004
    %2021 = vmatprep.subr.bf16.mxu0 %v1009
    %2022 = vmatpush1.bf16.msra.mxu0 %v1008
    %2023 = vmatprep.subr.bf16.mxu0 %v1013
    %2024 = vmatpush1.bf16.msra.mxu0 %v1012
    %2025 = vmatprep.subr.bf16.mxu0 %v1017
    %2026 = vmatpush1.bf16.msra.mxu0 %v1016
    %2027 = vmatprep.subr.bf16.mxu0 %v1021
    %2028 = vmatpush1.bf16.msra.mxu0 %v1020
    %2029 = vmatprep.subr.bf16.mxu0 %v1025
    %2030 = vmatpush1.bf16.msra.mxu0 %v1024
    %2031 = vmatprep.subr.bf16.mxu0 %v1029
    %2032 = vmatpush1.bf16.msra.mxu0 %v1028
    %2033 = vmatprep.subr.bf16.mxu0 0
    %2034 = vmatpush1.bf16.msra.mxu0 0
    %2035 = vmatprep.subr.bf16.mxu0 0
    %2036 = vmatpush1.bf16.msra.mxu0 0
    %2037 = vmatprep.subr.bf16.mxu0 0
    %2038 = vmatpush1.bf16.msra.mxu0 0
    %2039 = vmatprep.subr.bf16.mxu0 0
    %2040 = vmatpush1.bf16.msra.mxu0 0
    %2041 = vmatprep.subr.bf16.mxu0 0
    %2042 = vmatpush1.bf16.msra.mxu0 0
    %2043 = vmatprep.subr.bf16.mxu0 0
    %2044 = vmatpush1.bf16.msra.mxu0 0
    %2045 = vmatprep.subr.bf16.mxu0 0
    %2046 = vmatpush1.bf16.msra.mxu0 0
    %2047 = vmatprep.subr.bf16.mxu0 0
    %2048 = vmatpush1.bf16.msra.mxu0 0
    %2049 = vmatprep.mubr.bf16.mxu0 0
    %2050 = vmatmul.mubr.bf16.gmra.mrb[0].mxu0 %v1973
    %v2051 = vpop.f32.mrb[0].mxu0
    %v2052 = vadd.f32 0.0, %v2051
    %v2053 = vpop.f32.mrb[0].mxu0
    %v2054 = vadd.f32 0.0, %v2053
    %v2055 = vpop.f32.mrb[0].mxu0
    %v2056 = vadd.f32 0.0, %v2055
    %v2057 = vpop.f32.mrb[0].mxu0
    %v2058 = vadd.f32 0.0, %v2057
    %2059 = vdwg.mxu0
    %v2060 = vadd.f32 %v1965, %v2009
    %v2061 = vadd.f32 %v1966, %v2011
    %v2062 = vadd.f32 %v1967, %v2052
    %v2063 = vadd.f32 %v1968, %v2054
    %v2064 = vadd.f32 %v1969, %v2013
    %v2065 = vadd.f32 %v1970, %v2015
    %v2066 = vadd.f32 %v1971, %v2056
    %v2067 = vadd.f32 %v1972, %v2058
    %v2068 = vxor.u32 %v2060, 2147483648
    %v2069 = vxor.u32 %v2064, 2147483648
    %v2070 = vmul.f32 %v2068, 1.442695
    %v2071 = vpow.pop %v2070
    %v2072 = vmul.f32 %v2069, 1.442695
    %v2073 = vpow.pop %v2072
    %v2074 = vadd.f32 %v2071, 1.0
    %v2075 = vadd.f32 %v2073, 1.0
    %v2076 = vrcp.pop %v2074
    %v2077 = vmul.f32 1.0, %v2076
    %v2078 = vrcp.pop %v2075
    %v2079 = vmul.f32 1.0, %v2078
    %v2080 = vxor.u32 %v2061, 2147483648
    %v2081 = vxor.u32 %v2065, 2147483648
    %v2082 = vmul.f32 %v2080, 1.442695
    %v2083 = vpow.pop %v2082
    %v2084 = vmul.f32 %v2081, 1.442695
    %v2085 = vpow.pop %v2084
    %v2086 = vadd.f32 %v2083, 1.0
    %v2087 = vadd.f32 %v2085, 1.0
    %v2088 = vrcp.pop %v2086
    %v2089 = vmul.f32 1.0, %v2088
    %v2090 = vrcp.pop %v2087
    %v2091 = vmul.f32 1.0, %v2090
    %v2092 = vtanh.pop %v2062
    %v2093 = vtanh.pop %v2066
    %v2094 = vxor.u32 %v2063, 2147483648
    %v2095 = vxor.u32 %v2067, 2147483648
    %v2096 = vmul.f32 %v2094, 1.442695
    %v2097 = vpow.pop %v2096
    %v2098 = vmul.f32 %v2095, 1.442695
    %v2099 = vpow.pop %v2098
    %v2100 = vadd.f32 %v2097, 1.0
    %v2101 = vadd.f32 %v2099, 1.0
    %v2102 = vrcp.pop %v2100
    %v2103 = vmul.f32 1.0, %v2102
    %v2104 = vrcp.pop %v2101
    %v2105 = vmul.f32 1.0, %v2104
    %v2106 = vmul.f32 %v2089, %v1958
    %v2107 = vmul.f32 %v2091, %v1959
    %v2108 = vmul.f32 %v2077, %v2092
    %v2109 = vmul.f32 %v2079, %v2093
    %v2110 = vadd.f32 %v2106, %v2108
    %v2111 = vadd.f32 %v2107, %v2109
    %v2112 = vtanh.pop %v2110
    %v2113 = vtanh.pop %v2111
    %v2114 = vmul.f32 %v2103, %v2112
    %v2115 = vmul.f32 %v2105, %v2113
    %s2116 = scalar_lea.vmem [#allocation2], 448
    %v2117 = vld [vmem:[%s2116] sm:$0xff]
    %v2118 = vld [vmem:[%s2116 + $0x8] sm:$0xff]
    %v2119 = vld [vmem:[%s2116 + $0x10] sm:$0xff]
    %v2120 = vld [vmem:[%s2116 + $0x18] sm:$0xff]
    %v2121 = vld [vmem:[%s2116 + $0x20] sm:$0xff]
    %v2122 = vld [vmem:[%s2116 + $0x28] sm:$0xff]
    %v2123 = vld [vmem:[%s2116 + $0x30] sm:$0xff]
    %v2124 = vld [vmem:[%s2116 + $0x38] sm:$0xff]
    %v2125 = vpack.c.bf16 %v2115, %v2114
    %2126 = vmatprep.subr.bf16.mxu0 %v999
    %2127 = vmatpush1.bf16.msra.mxu0 %v998
    %2128 = vmatprep.subr.bf16.mxu0 %v1003
    %2129 = vmatpush1.bf16.msra.mxu0 %v1002
    %2130 = vmatprep.subr.bf16.mxu0 %v1007
    %2131 = vmatpush1.bf16.msra.mxu0 %v1006
    %2132 = vmatprep.subr.bf16.mxu0 %v1011
    %2133 = vmatpush1.bf16.msra.mxu0 %v1010
    %2134 = vmatprep.subr.bf16.mxu0 %v1015
    %2135 = vmatpush1.bf16.msra.mxu0 %v1014
    %2136 = vmatprep.subr.bf16.mxu0 %v1019
    %2137 = vmatpush1.bf16.msra.mxu0 %v1018
    %2138 = vmatprep.subr.bf16.mxu0 %v1023
    %2139 = vmatpush1.bf16.msra.mxu0 %v1022
    %2140 = vmatprep.subr.bf16.mxu0 %v1027
    %2141 = vmatpush1.bf16.msra.mxu0 %v1026
    %2142 = vmatprep.subr.bf16.mxu0 0
    %2143 = vmatpush1.bf16.msra.mxu0 0
    %2144 = vmatprep.subr.bf16.mxu0 0
    %2145 = vmatpush1.bf16.msra.mxu0 0
    %2146 = vmatprep.subr.bf16.mxu0 0
    %2147 = vmatpush1.bf16.msra.mxu0 0
    %2148 = vmatprep.subr.bf16.mxu0 0
    %2149 = vmatpush1.bf16.msra.mxu0 0
    %2150 = vmatprep.subr.bf16.mxu0 0
    %2151 = vmatpush1.bf16.msra.mxu0 0
    %2152 = vmatprep.subr.bf16.mxu0 0
    %2153 = vmatpush1.bf16.msra.mxu0 0
    %2154 = vmatprep.subr.bf16.mxu0 0
    %2155 = vmatpush1.bf16.msra.mxu0 0
    %2156 = vmatprep.subr.bf16.mxu0 0
    %2157 = vmatpush1.bf16.msra.mxu0 0
    %2158 = vmatprep.mubr.bf16.mxu0 0
    %2159 = vmatmul.mubr.bf16.gmra.mrb[0].mxu0 %v2125
    %v2160 = vpop.f32.mrb[0].mxu0
    %v2161 = vadd.f32 0.0, %v2160
    %v2162 = vpop.f32.mrb[0].mxu0
    %v2163 = vadd.f32 0.0, %v2162
    %v2164 = vpop.f32.mrb[0].mxu0
    %v2165 = vadd.f32 0.0, %v2164
    %v2166 = vpop.f32.mrb[0].mxu0
    %v2167 = vadd.f32 0.0, %v2166
    %2168 = vdwg.mxu0
    %2169 = vmatprep.subr.bf16.mxu0 %v1001
    %2170 = vmatpush1.bf16.msra.mxu0 %v1000
    %2171 = vmatprep.subr.bf16.mxu0 %v1005
    %2172 = vmatpush1.bf16.msra.mxu0 %v1004
    %2173 = vmatprep.subr.bf16.mxu0 %v1009
    %2174 = vmatpush1.bf16.msra.mxu0 %v1008
    %2175 = vmatprep.subr.bf16.mxu0 %v1013
    %2176 = vmatpush1.bf16.msra.mxu0 %v1012
    %2177 = vmatprep.subr.bf16.mxu0 %v1017
    %2178 = vmatpush1.bf16.msra.mxu0 %v1016
    %2179 = vmatprep.subr.bf16.mxu0 %v1021
    %2180 = vmatpush1.bf16.msra.mxu0 %v1020
    %2181 = vmatprep.subr.bf16.mxu0 %v1025
    %2182 = vmatpush1.bf16.msra.mxu0 %v1024
    %2183 = vmatprep.subr.bf16.mxu0 %v1029
    %2184 = vmatpush1.bf16.msra.mxu0 %v1028
    %2185 = vmatprep.subr.bf16.mxu0 0
    %2186 = vmatpush1.bf16.msra.mxu0 0
    %2187 = vmatprep.subr.bf16.mxu0 0
    %2188 = vmatpush1.bf16.msra.mxu0 0
    %2189 = vmatprep.subr.bf16.mxu0 0
    %2190 = vmatpush1.bf16.msra.mxu0 0
    %2191 = vmatprep.subr.bf16.mxu0 0
    %2192 = vmatpush1.bf16.msra.mxu0 0
    %2193 = vmatprep.subr.bf16.mxu0 0
    %2194 = vmatpush1.bf16.msra.mxu0 0
    %2195 = vmatprep.subr.bf16.mxu0 0
    %2196 = vmatpush1.bf16.msra.mxu0 0
    %2197 = vmatprep.subr.bf16.mxu0 0
    %2198 = vmatpush1.bf16.msra.mxu0 0
    %2199 = vmatprep.subr.bf16.mxu0 0
    %2200 = vmatpush1.bf16.msra.mxu0 0
    %2201 = vmatprep.mubr.bf16.mxu0 0
    %2202 = vmatmul.mubr.bf16.gmra.mrb[0].mxu0 %v2125
    %v2203 = vpop.f32.mrb[0].mxu0
    %v2204 = vadd.f32 0.0, %v2203
    %v2205 = vpop.f32.mrb[0].mxu0
    %v2206 = vadd.f32 0.0, %v2205
    %v2207 = vpop.f32.mrb[0].mxu0
    %v2208 = vadd.f32 0.0, %v2207
    %v2209 = vpop.f32.mrb[0].mxu0
    %v2210 = vadd.f32 0.0, %v2209
    %2211 = vdwg.mxu0
    %v2212 = vadd.f32 %v2117, %v2161
    %v2213 = vadd.f32 %v2118, %v2163
    %v2214 = vadd.f32 %v2119, %v2204
    %v2215 = vadd.f32 %v2120, %v2206
    %v2216 = vadd.f32 %v2121, %v2165
    %v2217 = vadd.f32 %v2122, %v2167
    %v2218 = vadd.f32 %v2123, %v2208
    %v2219 = vadd.f32 %v2124, %v2210
    %v2220 = vxor.u32 %v2212, 2147483648
    %v2221 = vxor.u32 %v2216, 2147483648
    %v2222 = vmul.f32 %v2220, 1.442695
    %v2223 = vpow.pop %v2222
    %v2224 = vmul.f32 %v2221, 1.442695
    %v2225 = vpow.pop %v2224
    %v2226 = vadd.f32 %v2223, 1.0
    %v2227 = vadd.f32 %v2225, 1.0
    %v2228 = vrcp.pop %v2226
    %v2229 = vmul.f32 1.0, %v2228
    %v2230 = vrcp.pop %v2227
    %v2231 = vmul.f32 1.0, %v2230
    %v2232 = vxor.u32 %v2213, 2147483648
    %v2233 = vxor.u32 %v2217, 2147483648
    %v2234 = vmul.f32 %v2232, 1.442695
    %v2235 = vpow.pop %v2234
    %v2236 = vmul.f32 %v2233, 1.442695
    %v2237 = vpow.pop %v2236
    %v2238 = vadd.f32 %v2235, 1.0
    %v2239 = vadd.f32 %v2237, 1.0
    %v2240 = vrcp.pop %v2238
    %v2241 = vmul.f32 1.0, %v2240
    %v2242 = vrcp.pop %v2239
    %v2243 = vmul.f32 1.0, %v2242
    %v2244 = vtanh.pop %v2214
    %v2245 = vtanh.pop %v2218
    %v2246 = vxor.u32 %v2215, 2147483648
    %v2247 = vxor.u32 %v2219, 2147483648
    %v2248 = vmul.f32 %v2246, 1.442695
    %v2249 = vpow.pop %v2248
    %v2250 = vmul.f32 %v2247, 1.442695
    %v2251 = vpow.pop %v2250
    %v2252 = vadd.f32 %v2249, 1.0
    %v2253 = vadd.f32 %v2251, 1.0
    %v2254 = vrcp.pop %v2252
    %v2255 = vmul.f32 1.0, %v2254
    %v2256 = vrcp.pop %v2253
    %v2257 = vmul.f32 1.0, %v2256
    %v2258 = vmul.f32 %v2241, %v2110
    %v2259 = vmul.f32 %v2243, %v2111
    %v2260 = vmul.f32 %v2229, %v2244
    %v2261 = vmul.f32 %v2231, %v2245
    %v2262 = vadd.f32 %v2258, %v2260
    %v2263 = vadd.f32 %v2259, %v2261
    %v2264 = vtanh.pop %v2262
    %v2265 = vtanh.pop %v2263
    %v2266 = vmul.f32 %v2255, %v2264
    %v2267 = vmul.f32 %v2257, %v2265
    %s2268 = scalar_lea.vmem %s0, 112
    %v2269 = vld [vmem:[%s2268] sm:$0xff]
    %v2270 = vld [vmem:[%s2268 + $0x8] sm:$0xff]
    %v2271 = vld [vmem:[%s4] sm:$0xff]
    %v2272 = vld [vmem:[%s4 + $0x8] sm:$0xff]
    %v2273 = vld [vmem:[%s4 + $0x10] sm:$0xff]
    %v2274 = vld [vmem:[%s4 + $0x18] sm:$0xff]
    %v2275 = vld [vmem:[%s4 + $0x20] sm:$0xff]
    %v2276 = vld [vmem:[%s4 + $0x28] sm:$0xff]
    %v2277 = vld [vmem:[%s4 + $0x30] sm:$0xff]
    %v2278 = vld [vmem:[%s4 + $0x38] sm:$0xff]
    %v2279 = vld [vmem:[%s4 + $0x40] sm:$0xff]
    %v2280 = vld [vmem:[%s4 + $0x48] sm:$0xff]
    %v2281 = vld [vmem:[%s4 + $0x50] sm:$0xff]
    %v2282 = vld [vmem:[%s4 + $0x58] sm:$0xff]
    %v2283 = vld [vmem:[%s4 + $0x60] sm:$0xff]
    %v2284 = vld [vmem:[%s4 + $0x68] sm:$0xff]
    %v2285 = vld [vmem:[%s4 + $0x70] sm:$0xff]
    %v2286 = vld [vmem:[%s4 + $0x78] sm:$0xff]
    %v2287 = vld [vmem:[%s4 + $0x80] sm:$0xff]
    %v2288 = vld [vmem:[%s4 + $0x88] sm:$0xff]
    %v2289 = vld [vmem:[%s4 + $0x90] sm:$0xff]
    %v2290 = vld [vmem:[%s4 + $0x98] sm:$0xff]
    %v2291 = vld [vmem:[%s4 + $0xa0] sm:$0xff]
    %v2292 = vld [vmem:[%s4 + $0xa8] sm:$0xff]
    %v2293 = vld [vmem:[%s4 + $0xb0] sm:$0xff]
    %v2294 = vld [vmem:[%s4 + $0xb8] sm:$0xff]
    %v2295 = vld [vmem:[%s4 + $0xc0] sm:$0xff]
    %v2296 = vld [vmem:[%s4 + $0xc8] sm:$0xff]
    %v2297 = vld [vmem:[%s4 + $0xd0] sm:$0xff]
    %v2298 = vld [vmem:[%s4 + $0xd8] sm:$0xff]
    %v2299 = vld [vmem:[%s4 + $0xe0] sm:$0xff]
    %v2300 = vld [vmem:[%s4 + $0xe8] sm:$0xff]
    %v2301 = vld [vmem:[%s4 + $0xf0] sm:$0xff]
    %v2302 = vld [vmem:[%s4 + $0xf8] sm:$0xff]
    %v2303 = vld [vmem:[%s4 + $0x100] sm:$0xff]
    %v2304 = vld [vmem:[%s4 + $0x108] sm:$0xff]
    %v2305 = vld [vmem:[%s4 + $0x110] sm:$0xff]
    %v2306 = vld [vmem:[%s4 + $0x118] sm:$0xff]
    %v2307 = vld [vmem:[%s4 + $0x120] sm:$0xff]
    %v2308 = vld [vmem:[%s4 + $0x128] sm:$0xff]
    %v2309 = vld [vmem:[%s4 + $0x130] sm:$0xff]
    %v2310 = vld [vmem:[%s4 + $0x138] sm:$0xff]
    %v2311 = vld [vmem:[%s4 + $0x140] sm:$0xff]
    %v2312 = vld [vmem:[%s4 + $0x148] sm:$0xff]
    %v2313 = vld [vmem:[%s4 + $0x150] sm:$0xff]
    %v2314 = vld [vmem:[%s4 + $0x158] sm:$0xff]
    %v2315 = vld [vmem:[%s4 + $0x160] sm:$0xff]
    %v2316 = vld [vmem:[%s4 + $0x168] sm:$0xff]
    %v2317 = vld [vmem:[%s4 + $0x170] sm:$0xff]
    %v2318 = vld [vmem:[%s4 + $0x178] sm:$0xff]
    %v2319 = vld [vmem:[%s4 + $0x180] sm:$0xff]
    %v2320 = vld [vmem:[%s4 + $0x188] sm:$0xff]
    %v2321 = vld [vmem:[%s4 + $0x190] sm:$0xff]
    %v2322 = vld [vmem:[%s4 + $0x198] sm:$0xff]
    %v2323 = vld [vmem:[%s4 + $0x1a0] sm:$0xff]
    %v2324 = vld [vmem:[%s4 + $0x1a8] sm:$0xff]
    %v2325 = vld [vmem:[%s4 + $0x1b0] sm:$0xff]
    %v2326 = vld [vmem:[%s4 + $0x1b8] sm:$0xff]
    %v2327 = vld [vmem:[%s4 + $0x1c0] sm:$0xff]
    %v2328 = vld [vmem:[%s4 + $0x1c8] sm:$0xff]
    %v2329 = vld [vmem:[%s4 + $0x1d0] sm:$0xff]
    %v2330 = vld [vmem:[%s4 + $0x1d8] sm:$0xff]
    %v2331 = vld [vmem:[%s4 + $0x1e0] sm:$0xff]
    %v2332 = vld [vmem:[%s4 + $0x1e8] sm:$0xff]
    %v2333 = vld [vmem:[%s4 + $0x1f0] sm:$0xff]
    %v2334 = vld [vmem:[%s4 + $0x1f8] sm:$0xff]
    %v2335 = vld [vmem:[%s6] sm:$0xf]
    %v2337 = vlaneseq
    %v2338 = vshrl.u32 %v2337, 7
    %v2339 = vsub.s32 0, %v2338
    %v2340 = vrot.slane %v2335, %v2339
    %v2341 = vlaneseq
    %v2342 = vshrl.u32 %v2341, 7
    %v2343 = vsub.s32 2, %v2342
    %v2344 = vrot.slane %v2335, %v2343
    %v2345 = vlaneseq
    %v2346 = vshrl.u32 %v2345, 7
    %v2347 = vsub.s32 3, %v2346
    %v2348 = vrot.slane %v2335, %v2347
    %v2354 = vunpack.c.l.b16 %v2269
    %v2355 = vunpack.c.h.b16 %v2269
    %v2356 = vunpack.c.l.b16 %v2270
    %v2357 = vunpack.c.h.b16 %v2270
    %v2358 = vpack.c.b16 %v2356, %v2354
    %v2359 = vpack.c.b16 %v2357, %v2355
    %v2426 = vunpack.c.l.b16 %v2271
    %v2427 = vunpack.c.h.b16 %v2271
    %v2428 = vunpack.c.l.b16 %v2272
    %v2429 = vunpack.c.h.b16 %v2272
    %v2430 = vunpack.c.l.b16 %v2273
    %v2431 = vunpack.c.h.b16 %v2273
    %v2432 = vunpack.c.l.b16 %v2274
    %v2433 = vunpack.c.h.b16 %v2274
    %v2434 = vunpack.c.l.b16 %v2275
    %v2435 = vunpack.c.h.b16 %v2275
    %v2436 = vunpack.c.l.b16 %v2276
    %v2437 = vunpack.c.h.b16 %v2276
    %v2438 = vunpack.c.l.b16 %v2277
    %v2439 = vunpack.c.h.b16 %v2277
    %v2440 = vunpack.c.l.b16 %v2278
    %v2441 = vunpack.c.h.b16 %v2278
    %v2442 = vunpack.c.l.b16 %v2279
    %v2443 = vunpack.c.h.b16 %v2279
    %v2444 = vunpack.c.l.b16 %v2280
    %v2445 = vunpack.c.h.b16 %v2280
    %v2446 = vunpack.c.l.b16 %v2281
    %v2447 = vunpack.c.h.b16 %v2281
    %v2448 = vunpack.c.l.b16 %v2282
    %v2449 = vunpack.c.h.b16 %v2282
    %v2450 = vunpack.c.l.b16 %v2283
    %v2451 = vunpack.c.h.b16 %v2283
    %v2452 = vunpack.c.l.b16 %v2284
    %v2453 = vunpack.c.h.b16 %v2284
    %v2454 = vunpack.c.l.b16 %v2285
    %v2455 = vunpack.c.h.b16 %v2285
    %v2456 = vunpack.c.l.b16 %v2286
    %v2457 = vunpack.c.h.b16 %v2286
    %v2458 = vunpack.c.l.b16 %v2287
    %v2459 = vunpack.c.h.b16 %v2287
    %v2460 = vunpack.c.l.b16 %v2288
    %v2461 = vunpack.c.h.b16 %v2288
    %v2462 = vunpack.c.l.b16 %v2289
    %v2463 = vunpack.c.h.b16 %v2289
    %v2464 = vunpack.c.l.b16 %v2290
    %v2465 = vunpack.c.h.b16 %v2290
    %v2466 = vunpack.c.l.b16 %v2291
    %v2467 = vunpack.c.h.b16 %v2291
    %v2468 = vunpack.c.l.b16 %v2292
    %v2469 = vunpack.c.h.b16 %v2292
    %v2470 = vunpack.c.l.b16 %v2293
    %v2471 = vunpack.c.h.b16 %v2293
    %v2472 = vunpack.c.l.b16 %v2294
    %v2473 = vunpack.c.h.b16 %v2294
    %v2474 = vunpack.c.l.b16 %v2295
    %v2475 = vunpack.c.h.b16 %v2295
    %v2476 = vunpack.c.l.b16 %v2296
    %v2477 = vunpack.c.h.b16 %v2296
    %v2478 = vunpack.c.l.b16 %v2297
    %v2479 = vunpack.c.h.b16 %v2297
    %v2480 = vunpack.c.l.b16 %v2298
    %v2481 = vunpack.c.h.b16 %v2298
    %v2482 = vunpack.c.l.b16 %v2299
    %v2483 = vunpack.c.h.b16 %v2299
    %v2484 = vunpack.c.l.b16 %v2300
    %v2485 = vunpack.c.h.b16 %v2300
    %v2486 = vunpack.c.l.b16 %v2301
    %v2487 = vunpack.c.h.b16 %v2301
    %v2488 = vunpack.c.l.b16 %v2302
    %v2489 = vunpack.c.h.b16 %v2302
    %v2490 = vunpack.c.l.b16 %v2303
    %v2491 = vunpack.c.h.b16 %v2303
    %v2492 = vunpack.c.l.b16 %v2304
    %v2493 = vunpack.c.h.b16 %v2304
    %v2494 = vunpack.c.l.b16 %v2305
    %v2495 = vunpack.c.h.b16 %v2305
    %v2496 = vunpack.c.l.b16 %v2306
    %v2497 = vunpack.c.h.b16 %v2306
    %v2498 = vunpack.c.l.b16 %v2307
    %v2499 = vunpack.c.h.b16 %v2307
    %v2500 = vunpack.c.l.b16 %v2308
    %v2501 = vunpack.c.h.b16 %v2308
    %v2502 = vunpack.c.l.b16 %v2309
    %v2503 = vunpack.c.h.b16 %v2309
    %v2504 = vunpack.c.l.b16 %v2310
    %v2505 = vunpack.c.h.b16 %v2310
    %v2506 = vunpack.c.l.b16 %v2311
    %v2507 = vunpack.c.h.b16 %v2311
    %v2508 = vunpack.c.l.b16 %v2312
    %v2509 = vunpack.c.h.b16 %v2312
    %v2510 = vunpack.c.l.b16 %v2313
    %v2511 = vunpack.c.h.b16 %v2313
    %v2512 = vunpack.c.l.b16 %v2314
    %v2513 = vunpack.c.h.b16 %v2314
    %v2514 = vunpack.c.l.b16 %v2315
    %v2515 = vunpack.c.h.b16 %v2315
    %v2516 = vunpack.c.l.b16 %v2316
    %v2517 = vunpack.c.h.b16 %v2316
    %v2518 = vunpack.c.l.b16 %v2317
    %v2519 = vunpack.c.h.b16 %v2317
    %v2520 = vunpack.c.l.b16 %v2318
    %v2521 = vunpack.c.h.b16 %v2318
    %v2522 = vunpack.c.l.b16 %v2319
    %v2523 = vunpack.c.h.b16 %v2319
    %v2524 = vunpack.c.l.b16 %v2320
    %v2525 = vunpack.c.h.b16 %v2320
    %v2526 = vunpack.c.l.b16 %v2321
    %v2527 = vunpack.c.h.b16 %v2321
    %v2528 = vunpack.c.l.b16 %v2322
    %v2529 = vunpack.c.h.b16 %v2322
    %v2530 = vunpack.c.l.b16 %v2323
    %v2531 = vunpack.c.h.b16 %v2323
    %v2532 = vunpack.c.l.b16 %v2324
    %v2533 = vunpack.c.h.b16 %v2324
    %v2534 = vunpack.c.l.b16 %v2325
    %v2535 = vunpack.c.h.b16 %v2325
    %v2536 = vunpack.c.l.b16 %v2326
    %v2537 = vunpack.c.h.b16 %v2326
    %v2538 = vunpack.c.l.b16 %v2327
    %v2539 = vunpack.c.h.b16 %v2327
    %v2540 = vunpack.c.l.b16 %v2328
    %v2541 = vunpack.c.h.b16 %v2328
    %v2542 = vunpack.c.l.b16 %v2329
    %v2543 = vunpack.c.h.b16 %v2329
    %v2544 = vunpack.c.l.b16 %v2330
    %v2545 = vunpack.c.h.b16 %v2330
    %v2546 = vunpack.c.l.b16 %v2331
    %v2547 = vunpack.c.h.b16 %v2331
    %v2548 = vunpack.c.l.b16 %v2332
    %v2549 = vunpack.c.h.b16 %v2332
    %v2550 = vunpack.c.l.b16 %v2333
    %v2551 = vunpack.c.h.b16 %v2333
    %v2552 = vunpack.c.l.b16 %v2334
    %v2553 = vunpack.c.h.b16 %v2334
    %v2554 = vpack.c.b16 %v2430, %v2426
    %v2555 = vpack.c.b16 %v2431, %v2427
    %v2556 = vpack.c.b16 %v2432, %v2428
    %v2557 = vpack.c.b16 %v2433, %v2429
    %v2558 = vpack.c.b16 %v2438, %v2434
    %v2559 = vpack.c.b16 %v2439, %v2435
    %v2560 = vpack.c.b16 %v2440, %v2436
    %v2561 = vpack.c.b16 %v2441, %v2437
    %v2562 = vpack.c.b16 %v2446, %v2442
    %v2563 = vpack.c.b16 %v2447, %v2443
    %v2564 = vpack.c.b16 %v2448, %v2444
    %v2565 = vpack.c.b16 %v2449, %v2445
    %v2566 = vpack.c.b16 %v2454, %v2450
    %v2567 = vpack.c.b16 %v2455, %v2451
    %v2568 = vpack.c.b16 %v2456, %v2452
    %v2569 = vpack.c.b16 %v2457, %v2453
    %v2570 = vpack.c.b16 %v2462, %v2458
    %v2571 = vpack.c.b16 %v2463, %v2459
    %v2572 = vpack.c.b16 %v2464, %v2460
    %v2573 = vpack.c.b16 %v2465, %v2461
    %v2574 = vpack.c.b16 %v2470, %v2466
    %v2575 = vpack.c.b16 %v2471, %v2467
    %v2576 = vpack.c.b16 %v2472, %v2468
    %v2577 = vpack.c.b16 %v2473, %v2469
    %v2578 = vpack.c.b16 %v2478, %v2474
    %v2579 = vpack.c.b16 %v2479, %v2475
    %v2580 = vpack.c.b16 %v2480, %v2476
    %v2581 = vpack.c.b16 %v2481, %v2477
    %v2582 = vpack.c.b16 %v2486, %v2482
    %v2583 = vpack.c.b16 %v2487, %v2483
    %v2584 = vpack.c.b16 %v2488, %v2484
    %v2585 = vpack.c.b16 %v2489, %v2485
    %v2586 = vpack.c.b16 %v2494, %v2490
    %v2587 = vpack.c.b16 %v2495, %v2491
    %v2588 = vpack.c.b16 %v2496, %v2492
    %v2589 = vpack.c.b16 %v2497, %v2493
    %v2590 = vpack.c.b16 %v2502, %v2498
    %v2591 = vpack.c.b16 %v2503, %v2499
    %v2592 = vpack.c.b16 %v2504, %v2500
    %v2593 = vpack.c.b16 %v2505, %v2501
    %v2594 = vpack.c.b16 %v2510, %v2506
    %v2595 = vpack.c.b16 %v2511, %v2507
    %v2596 = vpack.c.b16 %v2512, %v2508
    %v2597 = vpack.c.b16 %v2513, %v2509
    %v2598 = vpack.c.b16 %v2518, %v2514
    %v2599 = vpack.c.b16 %v2519, %v2515
    %v2600 = vpack.c.b16 %v2520, %v2516
    %v2601 = vpack.c.b16 %v2521, %v2517
    %v2602 = vpack.c.b16 %v2526, %v2522
    %v2603 = vpack.c.b16 %v2527, %v2523
    %v2604 = vpack.c.b16 %v2528, %v2524
    %v2605 = vpack.c.b16 %v2529, %v2525
    %v2606 = vpack.c.b16 %v2534, %v2530
    %v2607 = vpack.c.b16 %v2535, %v2531
    %v2608 = vpack.c.b16 %v2536, %v2532
    %v2609 = vpack.c.b16 %v2537, %v2533
    %v2610 = vpack.c.b16 %v2542, %v2538
    %v2611 = vpack.c.b16 %v2543, %v2539
    %v2612 = vpack.c.b16 %v2544, %v2540
    %v2613 = vpack.c.b16 %v2545, %v2541
    %v2614 = vpack.c.b16 %v2550, %v2546
    %v2615 = vpack.c.b16 %v2551, %v2547
    %v2616 = vpack.c.b16 %v2552, %v2548
    %v2617 = vpack.c.b16 %v2553, %v2549
    %2682 = vmatprep.subr.bf16.mxu0 %v2555
    %2683 = vmatpush1.bf16.msra.mxu0 %v2554
    %2684 = vmatprep.subr.bf16.mxu0 %v2559
    %2685 = vmatpush1.bf16.msra.mxu0 %v2558
    %2686 = vmatprep.subr.bf16.mxu0 %v2563
    %2687 = vmatpush1.bf16.msra.mxu0 %v2562
    %2688 = vmatprep.subr.bf16.mxu0 %v2567
    %2689 = vmatpush1.bf16.msra.mxu0 %v2566
    %2690 = vmatprep.subr.bf16.mxu0 %v2571
    %2691 = vmatpush1.bf16.msra.mxu0 %v2570
    %2692 = vmatprep.subr.bf16.mxu0 %v2575
    %2693 = vmatpush1.bf16.msra.mxu0 %v2574
    %2694 = vmatprep.subr.bf16.mxu0 %v2579
    %2695 = vmatpush1.bf16.msra.mxu0 %v2578
    %2696 = vmatprep.subr.bf16.mxu0 %v2583
    %2697 = vmatpush1.bf16.msra.mxu0 %v2582
    %2698 = vmatprep.subr.bf16.mxu0 %v2587
    %2699 = vmatpush1.bf16.msra.mxu0 %v2586
    %2700 = vmatprep.subr.bf16.mxu0 %v2591
    %2701 = vmatpush1.bf16.msra.mxu0 %v2590
    %2702 = vmatprep.subr.bf16.mxu0 %v2595
    %2703 = vmatpush1.bf16.msra.mxu0 %v2594
    %2704 = vmatprep.subr.bf16.mxu0 %v2599
    %2705 = vmatpush1.bf16.msra.mxu0 %v2598
    %2706 = vmatprep.subr.bf16.mxu0 %v2603
    %2707 = vmatpush1.bf16.msra.mxu0 %v2602
    %2708 = vmatprep.subr.bf16.mxu0 %v2607
    %2709 = vmatpush1.bf16.msra.mxu0 %v2606
    %2710 = vmatprep.subr.bf16.mxu0 %v2611
    %2711 = vmatpush1.bf16.msra.mxu0 %v2610
    %2712 = vmatprep.subr.bf16.mxu0 %v2615
    %2713 = vmatpush1.bf16.msra.mxu0 %v2614
    %2714 = vmatprep.mubr.bf16.mxu0 %v2359
    %2715 = vmatmul.mubr.bf16.gmra.mrb[0].mxu0 %v2358
    %v2716 = vpop.f32.mrb[0].mxu0
    %v2717 = vadd.f32 %v2340, %v2716
    %v2718 = vpop.f32.mrb[0].mxu0
    %v2719 = vpop.f32.mrb[0].mxu0
    %v2720 = vadd.f32 %v2340, %v2719
    %v2721 = vpop.f32.mrb[0].mxu0
    %2722 = vdwg.mxu0
    %2723 = vmatprep.subr.bf16.mxu0 %v2557
    %2724 = vmatpush1.bf16.msra.mxu0 %v2556
    %2725 = vmatprep.subr.bf16.mxu0 %v2561
    %2726 = vmatpush1.bf16.msra.mxu0 %v2560
    %2727 = vmatprep.subr.bf16.mxu0 %v2565
    %2728 = vmatpush1.bf16.msra.mxu0 %v2564
    %2729 = vmatprep.subr.bf16.mxu0 %v2569
    %2730 = vmatpush1.bf16.msra.mxu0 %v2568
    %2731 = vmatprep.subr.bf16.mxu0 %v2573
    %2732 = vmatpush1.bf16.msra.mxu0 %v2572
    %2733 = vmatprep.subr.bf16.mxu0 %v2577
    %2734 = vmatpush1.bf16.msra.mxu0 %v2576
    %2735 = vmatprep.subr.bf16.mxu0 %v2581
    %2736 = vmatpush1.bf16.msra.mxu0 %v2580
    %2737 = vmatprep.subr.bf16.mxu0 %v2585
    %2738 = vmatpush1.bf16.msra.mxu0 %v2584
    %2739 = vmatprep.subr.bf16.mxu0 %v2589
    %2740 = vmatpush1.bf16.msra.mxu0 %v2588
    %2741 = vmatprep.subr.bf16.mxu0 %v2593
    %2742 = vmatpush1.bf16.msra.mxu0 %v2592
    %2743 = vmatprep.subr.bf16.mxu0 %v2597
    %2744 = vmatpush1.bf16.msra.mxu0 %v2596
    %2745 = vmatprep.subr.bf16.mxu0 %v2601
    %2746 = vmatpush1.bf16.msra.mxu0 %v2600
    %2747 = vmatprep.subr.bf16.mxu0 %v2605
    %2748 = vmatpush1.bf16.msra.mxu0 %v2604
    %2749 = vmatprep.subr.bf16.mxu0 %v2609
    %2750 = vmatpush1.bf16.msra.mxu0 %v2608
    %2751 = vmatprep.subr.bf16.mxu0 %v2613
    %2752 = vmatpush1.bf16.msra.mxu0 %v2612
    %2753 = vmatprep.subr.bf16.mxu0 %v2617
    %2754 = vmatpush1.bf16.msra.mxu0 %v2616
    %2755 = vmatprep.mubr.bf16.mxu0 %v2359
    %2756 = vmatmul.mubr.bf16.gmra.mrb[0].mxu0 %v2358
    %v2757 = vpop.f32.mrb[0].mxu0
    %v2758 = vadd.f32 %v2344, %v2757
    %v2759 = vpop.f32.mrb[0].mxu0
    %v2760 = vadd.f32 %v2348, %v2759
    %v2761 = vpop.f32.mrb[0].mxu0
    %v2762 = vadd.f32 %v2344, %v2761
    %v2763 = vpop.f32.mrb[0].mxu0
    %v2764 = vadd.f32 %v2348, %v2763
    %2765 = vdwg.mxu0
    %v2766 = vxor.u32 %v2717, 2147483648
    %v2767 = vxor.u32 %v2720, 2147483648
    %v2768 = vmul.f32 %v2766, 1.442695
    %v2769 = vpow.pop %v2768
    %v2770 = vmul.f32 %v2767, 1.442695
    %v2771 = vpow.pop %v2770
    %v2772 = vadd.f32 %v2769, 1.0
    %v2773 = vadd.f32 %v2771, 1.0
    %v2774 = vrcp.pop %v2772
    %v2775 = vmul.f32 1.0, %v2774
    %v2776 = vrcp.pop %v2773
    %v2777 = vmul.f32 1.0, %v2776
    %v2778 = vtanh.pop %v2758
    %v2779 = vtanh.pop %v2762
    %v2780 = vxor.u32 %v2760, 2147483648
    %v2781 = vxor.u32 %v2764, 2147483648
    %v2782 = vmul.f32 %v2780, 1.442695
    %v2783 = vpow.pop %v2782
    %v2784 = vmul.f32 %v2781, 1.442695
    %v2785 = vpow.pop %v2784
    %v2786 = vadd.f32 %v2783, 1.0
    %v2787 = vadd.f32 %v2785, 1.0
    %v2788 = vrcp.pop %v2786
    %v2789 = vmul.f32 1.0, %v2788
    %v2790 = vrcp.pop %v2787
    %v2791 = vmul.f32 1.0, %v2790
    %v2792 = vmul.f32 %v2775, %v2778
    %v2793 = vmul.f32 %v2777, %v2779
    %v2794 = vtanh.pop %v2792
    %v2795 = vtanh.pop %v2793
    %v2796 = vmul.f32 %v2789, %v2794
    %v2797 = vmul.f32 %v2791, %v2795
    %v2798 = vld [vmem:[%s7] sm:$0xff]
    %v2799 = vld [vmem:[%s7 + $0x8] sm:$0xff]
    %v2800 = vld [vmem:[%s7 + $0x10] sm:$0xff]
    %v2801 = vld [vmem:[%s7 + $0x18] sm:$0xff]
    %v2802 = vld [vmem:[%s7 + $0x20] sm:$0xff]
    %v2803 = vld [vmem:[%s7 + $0x28] sm:$0xff]
    %v2804 = vld [vmem:[%s7 + $0x30] sm:$0xff]
    %v2805 = vld [vmem:[%s7 + $0x38] sm:$0xff]
    %v2806 = vld [vmem:[%s7 + $0x40] sm:$0xff]
    %v2807 = vld [vmem:[%s7 + $0x48] sm:$0xff]
    %v2808 = vld [vmem:[%s7 + $0x50] sm:$0xff]
    %v2809 = vld [vmem:[%s7 + $0x58] sm:$0xff]
    %v2810 = vld [vmem:[%s7 + $0x60] sm:$0xff]
    %v2811 = vld [vmem:[%s7 + $0x68] sm:$0xff]
    %v2812 = vld [vmem:[%s7 + $0x70] sm:$0xff]
    %v2813 = vld [vmem:[%s7 + $0x78] sm:$0xff]
    %v2814 = vld [vmem:[#allocation3] sm:$0xff]
    %v2815 = vld [vmem:[#allocation3 + $0x8] sm:$0xff]
    %v2816 = vld [vmem:[#allocation3 + $0x10] sm:$0xff]
    %v2817 = vld [vmem:[#allocation3 + $0x18] sm:$0xff]
    %v2818 = vld [vmem:[#allocation3 + $0x20] sm:$0xff]
    %v2819 = vld [vmem:[#allocation3 + $0x28] sm:$0xff]
    %v2820 = vld [vmem:[#allocation3 + $0x30] sm:$0xff]
    %v2821 = vld [vmem:[#allocation3 + $0x38] sm:$0xff]
    %v2822 = vld [vmem:[#allocation3 + $0x40] sm:$0xff]
    %v2823 = vld [vmem:[#allocation3 + $0x48] sm:$0xff]
    %v2824 = vld [vmem:[#allocation3 + $0x50] sm:$0xff]
    %v2825 = vld [vmem:[#allocation3 + $0x58] sm:$0xff]
    %v2826 = vld [vmem:[#allocation3 + $0x60] sm:$0xff]
    %v2827 = vld [vmem:[#allocation3 + $0x68] sm:$0xff]
    %v2828 = vld [vmem:[#allocation3 + $0x70] sm:$0xff]
    %v2829 = vld [vmem:[#allocation3 + $0x78] sm:$0xff]
    %2830 = vmatprep.subr.mxu0 0.0
    %2831 = vmatpush1.msra.mxu0 %v2814
    %2832 = vmatprep.subr.mxu0 0.0
    %2833 = vmatpush1.msra.mxu0 %v2815
    %2834 = vmatprep.subr.mxu0 0.0
    %2835 = vmatpush1.msra.mxu0 %v2816
    %2836 = vmatprep.subr.mxu0 0.0
    %2837 = vmatpush1.msra.mxu0 %v2817
    %2838 = vmatprep.subr.mxu0 0.0
    %2839 = vmatpush1.msra.mxu0 %v2818
    %2840 = vmatprep.subr.mxu0 0.0
    %2841 = vmatpush1.msra.mxu0 %v2819
    %2842 = vmatprep.subr.mxu0 0.0
    %2843 = vmatpush1.msra.mxu0 %v2820
    %2844 = vmatprep.subr.mxu0 0.0
    %2845 = vmatpush1.msra.mxu0 %v2821
    %2846 = vmatprep.subr.mxu0 0.0
    %2847 = vmatpush1.msra.mxu0 %v2822
    %2848 = vmatprep.subr.mxu0 0.0
    %2849 = vmatpush1.msra.mxu0 %v2823
    %2850 = vmatprep.subr.mxu0 0.0
    %2851 = vmatpush1.msra.mxu0 %v2824
    %2852 = vmatprep.subr.mxu0 0.0
    %2853 = vmatpush1.msra.mxu0 %v2825
    %2854 = vmatprep.subr.mxu0 0.0
    %2855 = vmatpush1.msra.mxu0 %v2826
    %2856 = vmatprep.subr.mxu0 0.0
    %2857 = vmatpush1.msra.mxu0 %v2827
    %2858 = vmatprep.subr.mxu0 0.0
    %2859 = vmatpush1.msra.mxu0 %v2828
    %2860 = vmatprep.subr.mxu0 0.0
    %2861 = vmatpush1.msra.mxu0 %v2829
    %2862 = vmatprep.subr.mxu0 0.0
    %2863 = vmatpush1.msra.mxu0 0.0
    %2864 = vmatprep.subr.mxu0 0.0
    %2865 = vmatpush1.msra.mxu0 0.0
    %2866 = vmatprep.subr.mxu0 0.0
    %2867 = vmatpush1.msra.mxu0 0.0
    %2868 = vmatprep.subr.mxu0 0.0
    %2869 = vmatpush1.msra.mxu0 0.0
    %2870 = vmatprep.subr.mxu0 0.0
    %2871 = vmatpush1.msra.mxu0 0.0
    %2872 = vmatprep.subr.mxu0 0.0
    %2873 = vmatpush1.msra.mxu0 0.0
    %2874 = vmatprep.subr.mxu0 0.0
    %2875 = vmatpush1.msra.mxu0 0.0
    %2876 = vmatprep.subr.mxu0 0.0
    %2877 = vmatpush1.msra.mxu0 0.0
    %2878 = vmatprep.subr.mxu0 0.0
    %2879 = vmatpush1.msra.mxu0 0.0
    %2880 = vmatprep.subr.mxu0 0.0
    %2881 = vmatpush1.msra.mxu0 0.0
    %2882 = vmatprep.subr.mxu0 0.0
    %2883 = vmatpush1.msra.mxu0 0.0
    %2884 = vmatprep.subr.mxu0 0.0
    %2885 = vmatpush1.msra.mxu0 0.0
    %2886 = vmatprep.subr.mxu0 0.0
    %2887 = vmatpush1.msra.mxu0 0.0
    %2888 = vmatprep.subr.mxu0 0.0
    %2889 = vmatpush1.msra.mxu0 0.0
    %2890 = vmatprep.subr.mxu0 0.0
    %2891 = vmatpush1.msra.mxu0 0.0
    %2892 = vmatprep.subr.mxu0 0.0
    %2893 = vmatpush1.msra.mxu0 0.0
    %2894 = vmatprep.mubr.f32.mxu0 0.0
    %2895 = vmatmul.mubr.f32.gmra.mrb[0].mxu0 %v2796
    %v2896 = vpop.f32.mrb[0].mxu0
    %v2897 = vadd.f32 0.0, %v2896
    %v2898 = vpop.f32.mrb[0].mxu0
    %2899 = vmatprep.mubr.f32.mxu0 0.0
    %2900 = vmatmul.mubr.f32.gmra.mrb[0].mxu0 %v2797
    %v2901 = vpop.f32.mrb[0].mxu0
    %v2902 = vadd.f32 0.0, %v2901
    %v2903 = vpop.f32.mrb[0].mxu0
    %2904 = vdwg.mxu0
    %2905 = vmatprep.subr.mxu0 0.0
    %2906 = vmatpush1.msra.mxu0 %v2798
    %2907 = vmatprep.subr.mxu0 0.0
    %2908 = vmatpush1.msra.mxu0 %v2799
    %2909 = vmatprep.subr.mxu0 0.0
    %2910 = vmatpush1.msra.mxu0 %v2800
    %2911 = vmatprep.subr.mxu0 0.0
    %2912 = vmatpush1.msra.mxu0 %v2801
    %2913 = vmatprep.subr.mxu0 0.0
    %2914 = vmatpush1.msra.mxu0 %v2802
    %2915 = vmatprep.subr.mxu0 0.0
    %2916 = vmatpush1.msra.mxu0 %v2803
    %2917 = vmatprep.subr.mxu0 0.0
    %2918 = vmatpush1.msra.mxu0 %v2804
    %2919 = vmatprep.subr.mxu0 0.0
    %2920 = vmatpush1.msra.mxu0 %v2805
    %2921 = vmatprep.subr.mxu0 0.0
    %2922 = vmatpush1.msra.mxu0 %v2806
    %2923 = vmatprep.subr.mxu0 0.0
    %2924 = vmatpush1.msra.mxu0 %v2807
    %2925 = vmatprep.subr.mxu0 0.0
    %2926 = vmatpush1.msra.mxu0 %v2808
    %2927 = vmatprep.subr.mxu0 0.0
    %2928 = vmatpush1.msra.mxu0 %v2809
    %2929 = vmatprep.subr.mxu0 0.0
    %2930 = vmatpush1.msra.mxu0 %v2810
    %2931 = vmatprep.subr.mxu0 0.0
    %2932 = vmatpush1.msra.mxu0 %v2811
    %2933 = vmatprep.subr.mxu0 0.0
    %2934 = vmatpush1.msra.mxu0 %v2812
    %2935 = vmatprep.subr.mxu0 0.0
    %2936 = vmatpush1.msra.mxu0 %v2813
    %2937 = vmatprep.subr.mxu0 0.0
    %2938 = vmatpush1.msra.mxu0 0.0
    %2939 = vmatprep.subr.mxu0 0.0
    %2940 = vmatpush1.msra.mxu0 0.0
    %2941 = vmatprep.subr.mxu0 0.0
    %2942 = vmatpush1.msra.mxu0 0.0
    %2943 = vmatprep.subr.mxu0 0.0
    %2944 = vmatpush1.msra.mxu0 0.0
    %2945 = vmatprep.subr.mxu0 0.0
    %2946 = vmatpush1.msra.mxu0 0.0
    %2947 = vmatprep.subr.mxu0 0.0
    %2948 = vmatpush1.msra.mxu0 0.0
    %2949 = vmatprep.subr.mxu0 0.0
    %2950 = vmatpush1.msra.mxu0 0.0
    %2951 = vmatprep.subr.mxu0 0.0
    %2952 = vmatpush1.msra.mxu0 0.0
    %2953 = vmatprep.subr.mxu0 0.0
    %2954 = vmatpush1.msra.mxu0 0.0
    %2955 = vmatprep.subr.mxu0 0.0
    %2956 = vmatpush1.msra.mxu0 0.0
    %2957 = vmatprep.subr.mxu0 0.0
    %2958 = vmatpush1.msra.mxu0 0.0
    %2959 = vmatprep.subr.mxu0 0.0
    %2960 = vmatpush1.msra.mxu0 0.0
    %2961 = vmatprep.subr.mxu0 0.0
    %2962 = vmatpush1.msra.mxu0 0.0
    %2963 = vmatprep.subr.mxu0 0.0
    %2964 = vmatpush1.msra.mxu0 0.0
    %2965 = vmatprep.subr.mxu0 0.0
    %2966 = vmatpush1.msra.mxu0 0.0
    %2967 = vmatprep.subr.mxu0 0.0
    %2968 = vmatpush1.msra.mxu0 0.0
    %2969 = vmatprep.mubr.f32.mxu0 0.0
    %2970 = vmatmul.mubr.f32.gmra.mrb[0].mxu0 %v2266
    %v2971 = vpop.f32.mrb[0].mxu0
    %v2972 = vadd.f32 %v2897, %v2971
    %v2973 = vpop.f32.mrb[0].mxu0
    %2974 = vmatprep.mubr.f32.mxu0 0.0
    %2975 = vmatmul.mubr.f32.gmra.mrb[0].mxu0 %v2267
    %v2976 = vpop.f32.mrb[0].mxu0
    %v2977 = vadd.f32 %v2902, %v2976
    %v2978 = vpop.f32.mrb[0].mxu0
    %2979 = vdwg.mxu0
    %v2980 = vld [vmem:[%s9] sm:$0x1]
    %v2982 = vlaneseq
    %v2983 = vshrl.u32 %v2982, 7
    %v2984 = vsub.s32 0, %v2983
    %v2985 = vrot.slane %v2980, %v2984
    %v2987 = vadd.f32 %v2972, %v2985
    %v2988 = vadd.f32 %v2977, %v2985
    %v2989 = vmax.f32 %v2987, 0.0
    %v2990 = vmax.f32 %v2988, 0.0
    %v2991 = vld [vmem:[#allocation5] sm:$0xff]
    %v2992 = vld [vmem:[#allocation5 + $0x8] sm:$0xff]
    %v2993 = vld [vmem:[#allocation5 + $0x10] sm:$0xff]
    %v2994 = vld [vmem:[#allocation5 + $0x18] sm:$0xff]
    %v2995 = vld [vmem:[#allocation5 + $0x20] sm:$0xff]
    %v2996 = vld [vmem:[#allocation5 + $0x28] sm:$0xff]
    %v2997 = vld [vmem:[#allocation5 + $0x30] sm:$0xff]
    %v2998 = vld [vmem:[#allocation5 + $0x38] sm:$0xff]
    %v2999 = vld [vmem:[#allocation5 + $0x40] sm:$0xff]
    %v3000 = vld [vmem:[#allocation5 + $0x48] sm:$0xff]
    %v3001 = vld [vmem:[#allocation5 + $0x50] sm:$0xff]
    %v3002 = vld [vmem:[#allocation5 + $0x58] sm:$0xff]
    %v3003 = vld [vmem:[#allocation5 + $0x60] sm:$0xff]
    %v3004 = vld [vmem:[#allocation5 + $0x68] sm:$0xff]
    %v3005 = vld [vmem:[#allocation5 + $0x70] sm:$0xff]
    %v3006 = vld [vmem:[#allocation5 + $0x78] sm:$0xff]
    %v3007 = vld [vmem:[%s11] sm:$0x1]
    %v3009 = vlaneseq
    %v3010 = vshrl.u32 %v3009, 7
    %v3011 = vsub.s32 0, %v3010
    %v3012 = vrot.slane %v3007, %v3011
    %3014 = vmatprep.subr.mxu0 0.0
    %3015 = vmatpush1.msra.mxu0 %v2991
    %3016 = vmatprep.subr.mxu0 0.0
    %3017 = vmatpush1.msra.mxu0 %v2992
    %3018 = vmatprep.subr.mxu0 0.0
    %3019 = vmatpush1.msra.mxu0 %v2993
    %3020 = vmatprep.subr.mxu0 0.0
    %3021 = vmatpush1.msra.mxu0 %v2994
    %3022 = vmatprep.subr.mxu0 0.0
    %3023 = vmatpush1.msra.mxu0 %v2995
    %3024 = vmatprep.subr.mxu0 0.0
    %3025 = vmatpush1.msra.mxu0 %v2996
    %3026 = vmatprep.subr.mxu0 0.0
    %3027 = vmatpush1.msra.mxu0 %v2997
    %3028 = vmatprep.subr.mxu0 0.0
    %3029 = vmatpush1.msra.mxu0 %v2998
    %3030 = vmatprep.subr.mxu0 0.0
    %3031 = vmatpush1.msra.mxu0 %v2999
    %3032 = vmatprep.subr.mxu0 0.0
    %3033 = vmatpush1.msra.mxu0 %v3000
    %3034 = vmatprep.subr.mxu0 0.0
    %3035 = vmatpush1.msra.mxu0 %v3001
    %3036 = vmatprep.subr.mxu0 0.0
    %3037 = vmatpush1.msra.mxu0 %v3002
    %3038 = vmatprep.subr.mxu0 0.0
    %3039 = vmatpush1.msra.mxu0 %v3003
    %3040 = vmatprep.subr.mxu0 0.0
    %3041 = vmatpush1.msra.mxu0 %v3004
    %3042 = vmatprep.subr.mxu0 0.0
    %3043 = vmatpush1.msra.mxu0 %v3005
    %3044 = vmatprep.subr.mxu0 0.0
    %3045 = vmatpush1.msra.mxu0 %v3006
    %3046 = vmatprep.subr.mxu0 0.0
    %3047 = vmatpush1.msra.mxu0 0.0
    %3048 = vmatprep.subr.mxu0 0.0
    %3049 = vmatpush1.msra.mxu0 0.0
    %3050 = vmatprep.subr.mxu0 0.0
    %3051 = vmatpush1.msra.mxu0 0.0
    %3052 = vmatprep.subr.mxu0 0.0
    %3053 = vmatpush1.msra.mxu0 0.0
    %3054 = vmatprep.subr.mxu0 0.0
    %3055 = vmatpush1.msra.mxu0 0.0
    %3056 = vmatprep.subr.mxu0 0.0
    %3057 = vmatpush1.msra.mxu0 0.0
    %3058 = vmatprep.subr.mxu0 0.0
    %3059 = vmatpush1.msra.mxu0 0.0
    %3060 = vmatprep.subr.mxu0 0.0
    %3061 = vmatpush1.msra.mxu0 0.0
    %3062 = vmatprep.subr.mxu0 0.0
    %3063 = vmatpush1.msra.mxu0 0.0
    %3064 = vmatprep.subr.mxu0 0.0
    %3065 = vmatpush1.msra.mxu0 0.0
    %3066 = vmatprep.subr.mxu0 0.0
    %3067 = vmatpush1.msra.mxu0 0.0
    %3068 = vmatprep.subr.mxu0 0.0
    %3069 = vmatpush1.msra.mxu0 0.0
    %3070 = vmatprep.subr.mxu0 0.0
    %3071 = vmatpush1.msra.mxu0 0.0
    %3072 = vmatprep.subr.mxu0 0.0
    %3073 = vmatpush1.msra.mxu0 0.0
    %3074 = vmatprep.subr.mxu0 0.0
    %3075 = vmatpush1.msra.mxu0 0.0
    %3076 = vmatprep.subr.mxu0 0.0
    %3077 = vmatpush1.msra.mxu0 0.0
    %3078 = vmatprep.mubr.f32.mxu0 0.0
    %3079 = vmatmul.mubr.f32.gmra.mrb[0].mxu0 %v2989
    %v3080 = vpop.f32.mrb[0].mxu0
    %v3081 = vadd.f32 %v3012, %v3080
    %v3082 = vpop.f32.mrb[0].mxu0
    %3083 = vmatprep.mubr.f32.mxu0 0.0
    %3084 = vmatmul.mubr.f32.gmra.mrb[0].mxu0 %v2990
    %v3085 = vpop.f32.mrb[0].mxu0
    %v3086 = vadd.f32 %v3012, %v3085
    %v3087 = vpop.f32.mrb[0].mxu0
    %3088 = vdwg.mxu0
    %v3089 = vlaneseq
    %v3090 = vand.u32 %v3089, 127
    %vm3091 = vcmp.lt.s32.totalorder %v3090, 5
    %v3092 = vsel %vm3091, %v3081, -1e+30
    %v3093 = vsel %vm3091, %v3086, -1e+30
    %3094 = vmax.xlane.f32.xlu0 %v3092
    %v3095 = vpop.xlane.xlu0 %3094
    %3096 = vmax.xlane.f32.xlu0 %v3093
    %v3097 = vpop.xlane.xlu0 %3096
    %v3098 = vsub.f32 %v3092, %v3095
    %v3099 = vsub.f32 %v3093, %v3097
    %v3100 = vmul.f32 %v3098, 1.442695
    %v3101 = vpow.pop %v3100
    %v3102 = vmul.f32 %v3099, 1.442695
    %v3103 = vpow.pop %v3102
    %3104 = vadd.xlane.f32.xlu0 %v3101
    %v3105 = vpop.xlane.xlu0 %3104
    %3106 = vadd.xlane.f32.xlu0 %v3103
    %v3107 = vpop.xlane.xlu0 %3106
    %v3108 = vlog2.pop %v3105
    %v3109 = vmul.f32 %v3108, 0.6931472
    %v3110 = vlog2.pop %v3107
    %v3111 = vmul.f32 %v3110, 0.6931472
    %v3112 = vadd.f32 %v3109, %v3095
    %v3113 = vadd.f32 %v3111, %v3097
    %v3114 = vsub.f32 %v3092, %v3112
    %v3115 = vsub.f32 %v3093, %v3113
    %3116 = vst [vmem:[%s12] sm:$0xff] %v3114
    %3117 = vst [vmem:[%s12 + $0x8] sm:$0xff] %v3115
    // Predicated region
    $region58: #{lstm_classifier_forward.3} parent=1 // pred_check
      _
    $region59: #{lstm_classifier_forward.3} parent=1 // pred_check_branch
      %3119 = sbr.rel (0) target = $region61
    $region60: #{lstm_classifier_forward.3} parent=1 // pred_region
      _
    $region61: #{lstm_classifier_forward.3} parent=1 // pred_fallthru
      _
    // Predicated region
    $region62: #{lstm_classifier_forward.3} parent=1 // pred_check
      _
    $region63: #{lstm_classifier_forward.3} parent=1 // pred_check_branch
      %3121 = sbr.rel (0) target = $region65
    $region64: #{lstm_classifier_forward.3} parent=1 // pred_region
      _
    $region65: #{lstm_classifier_forward.3} parent=1 // pred_fallthru
      _
    %3122 = vsyncpa [#allocation4], 1
    %3123 = vsyncpa [#allocation6], 1

// kernel: lstm_classifier_forward.2
$region0: #{lstm_classifier_forward.2}
  #allocation0 [shape = 'u32[]', space=smem, size = 0x4, offset = 0x4, fixed_abs, tag = 'smem constant byte address 0x4 - core index']
  #allocation1 [shape = 'u32[144,128]{1,0:T(1,128)}', space=vmem, size = 0x12000, scoped, tag = 'internal scratch']
  #allocation2 [shape = 'f32[8,16,512]{2,1,0:T(8,128)}', space=vmem, size = 0x40000, scoped, tag = 'scratch operand']
  %s0 = inlined_call_operand.vmem [shape: f32[8,16,128], index: 0, kind: input, shape index: {}]
  %s1 = inlined_call_operand.vmem [shape: bf16[128,512], index: 1, kind: input, shape index: {}]
  %s2 = inlined_call_operand.vmem [shape: bf16[128,512], index: 2, kind: input, shape index: {}]
  %s3 = inlined_call_operand.vmem [shape: f32[1,512], index: 3, kind: input, shape index: {}]
  %s4 = inlined_call_operand.vmem [shape: bf16[128,512], index: 4, kind: input, shape index: {}]
  %s5 = inlined_call_operand.vmem [shape: bf16[128,512], index: 5, kind: input, shape index: {}]
  %s6 = inlined_call_operand.vmem [shape: f32[1,512], index: 6, kind: input, shape index: {}]
  %s7 = inlined_call_operand.vmem [shape: bf16[8,16,256], index: 7, kind: output, shape index: {}]
  %s8 = sld [smem:[#allocation0]]
  $region38: #{lstm_classifier_forward.2} parent=0
    _
  %s10 = ssub.s32 1, %s8
  %s11 = scalar_select 0, %s10, %s8
  // Predicated region
  $region2: #{lstm_classifier_forward.2} parent=0 // pred_check
    _
  $region3: #{lstm_classifier_forward.2} parent=0 // pred_check_branch
    %13 = sbr.rel (0) target = $region5
  $region4: #{lstm_classifier_forward.2} parent=0 // pred_region
    _
  $region5: #{lstm_classifier_forward.2} parent=0 // pred_fallthru
    _
  // Predicated region
  $region6: #{lstm_classifier_forward.2} parent=0 // pred_check
    _
  $region7: #{lstm_classifier_forward.2} parent=0 // pred_check_branch
    %15 = sbr.rel (0) target = $region9
  $region8: #{lstm_classifier_forward.2} parent=0 // pred_region
    _
  $region9: #{lstm_classifier_forward.2} parent=0 // pred_fallthru
    _
  // Predicated region
  $region10: #{lstm_classifier_forward.2} parent=0 // pred_check
    _
  $region11: #{lstm_classifier_forward.2} parent=0 // pred_check_branch
    %17 = sbr.rel (0) target = $region13
  $region12: #{lstm_classifier_forward.2} parent=0 // pred_region
    _
  $region13: #{lstm_classifier_forward.2} parent=0 // pred_fallthru
    _
  // Predicated region
  $region14: #{lstm_classifier_forward.2} parent=0 // pred_check
    _
  $region15: #{lstm_classifier_forward.2} parent=0 // pred_check_branch
    %19 = sbr.rel (0) target = $region17
  $region16: #{lstm_classifier_forward.2} parent=0 // pred_region
    _
  $region17: #{lstm_classifier_forward.2} parent=0 // pred_fallthru
    _
  // Predicated region
  $region18: #{lstm_classifier_forward.2} parent=0 // pred_check
    _
  $region19: #{lstm_classifier_forward.2} parent=0 // pred_check_branch
    %21 = sbr.rel (0) target = $region21
  $region20: #{lstm_classifier_forward.2} parent=0 // pred_region
    _
  $region21: #{lstm_classifier_forward.2} parent=0 // pred_fallthru
    _
  // Predicated region
  $region22: #{lstm_classifier_forward.2} parent=0 // pred_check
    _
  $region23: #{lstm_classifier_forward.2} parent=0 // pred_check_branch
    %23 = sbr.rel (0) target = $region25
  $region24: #{lstm_classifier_forward.2} parent=0 // pred_region
    _
  $region25: #{lstm_classifier_forward.2} parent=0 // pred_fallthru
    _
  // Predicated region
  $region26: #{lstm_classifier_forward.2} parent=0 // pred_check
    _
  $region27: #{lstm_classifier_forward.2} parent=0 // pred_check_branch
    %25 = sbr.rel (0) target = $region29
  $region28: #{lstm_classifier_forward.2} parent=0 // pred_region
    _
  $region29: #{lstm_classifier_forward.2} parent=0 // pred_fallthru
    _
  %v27 = vld [vmem:[%s0] sm:$0xff]
  %v28 = vld [vmem:[%s0 + $0x8] sm:$0xff]
  %v29 = vld [vmem:[%s0 + $0x10] sm:$0xff]
  %v30 = vld [vmem:[%s0 + $0x18] sm:$0xff]
  %v31 = vld [vmem:[%s0 + $0x20] sm:$0xff]
  %v32 = vld [vmem:[%s0 + $0x28] sm:$0xff]
  %v33 = vld [vmem:[%s0 + $0x30] sm:$0xff]
  %v34 = vld [vmem:[%s0 + $0x38] sm:$0xff]
  %v35 = vld [vmem:[%s0 + $0x40] sm:$0xff]
  %v36 = vld [vmem:[%s0 + $0x48] sm:$0xff]
  %v37 = vld [vmem:[%s0 + $0x50] sm:$0xff]
  %v38 = vld [vmem:[%s0 + $0x58] sm:$0xff]
  %v39 = vld [vmem:[%s0 + $0x60] sm:$0xff]
  %v40 = vld [vmem:[%s0 + $0x68] sm:$0xff]
  %v41 = vld [vmem:[%s0 + $0x70] sm:$0xff]
  %v42 = vld [vmem:[%s0 + $0x78] sm:$0xff]
  %v43 = vpack.c.bf16 %v28, %v27
  %v44 = vpack.c.bf16 %v30, %v29
  %v45 = vpack.c.bf16 %v32, %v31
  %v46 = vpack.c.bf16 %v34, %v33
  %v47 = vpack.c.bf16 %v36, %v35
  %v48 = vpack.c.bf16 %v38, %v37
  %v49 = vpack.c.bf16 %v40, %v39
  %v50 = vpack.c.bf16 %v42, %v41
  %v51 = vld [vmem:[%s1] sm:$0xff]
  %v52 = vld [vmem:[%s1 + $0x8] sm:$0xff]
  %v53 = vld [vmem:[%s1 + $0x10] sm:$0xff]
  %v54 = vld [vmem:[%s1 + $0x18] sm:$0xff]
  %v55 = vld [vmem:[%s1 + $0x20] sm:$0xff]
  %v56 = vld [vmem:[%s1 + $0x28] sm:$0xff]
  %v57 = vld [vmem:[%s1 + $0x30] sm:$0xff]
  %v58 = vld [vmem:[%s1 + $0x38] sm:$0xff]
  %v59 = vld [vmem:[%s1 + $0x40] sm:$0xff]
  %v60 = vld [vmem:[%s1 + $0x48] sm:$0xff]
  %v61 = vld [vmem:[%s1 + $0x50] sm:$0xff]
  %v62 = vld [vmem:[%s1 + $0x58] sm:$0xff]
  %v63 = vld [vmem:[%s1 + $0x60] sm:$0xff]
  %v64 = vld [vmem:[%s1 + $0x68] sm:$0xff]
  %v65 = vld [vmem:[%s1 + $0x70] sm:$0xff]
  %v66 = vld [vmem:[%s1 + $0x78] sm:$0xff]
  %v67 = vld [vmem:[%s1 + $0x80] sm:$0xff]
  %v68 = vld [vmem:[%s1 + $0x88] sm:$0xff]
  %v69 = vld [vmem:[%s1 + $0x90] sm:$0xff]
  %v70 = vld [vmem:[%s1 + $0x98] sm:$0xff]
  %v71 = vld [vmem:[%s1 + $0xa0] sm:$0xff]
  %v72 = vld [vmem:[%s1 + $0xa8] sm:$0xff]
  %v73 = vld [vmem:[%s1 + $0xb0] sm:$0xff]
  %v74 = vld [vmem:[%s1 + $0xb8] sm:$0xff]
  %v75 = vld [vmem:[%s1 + $0xc0] sm:$0xff]
  %v76 = vld [vmem:[%s1 + $0xc8] sm:$0xff]
  %v77 = vld [vmem:[%s1 + $0xd0] sm:$0xff]
  %v78 = vld [vmem:[%s1 + $0xd8] sm:$0xff]
  %v79 = vld [vmem:[%s1 + $0xe0] sm:$0xff]
  %v80 = vld [vmem:[%s1 + $0xe8] sm:$0xff]
  %v81 = vld [vmem:[%s1 + $0xf0] sm:$0xff]
  %v82 = vld [vmem:[%s1 + $0xf8] sm:$0xff]
  %v83 = vld [vmem:[%s3] sm:$0xf]
  %v85 = vlaneseq
  %v86 = vshrl.u32 %v85, 7
  %v87 = vsub.s32 0, %v86
  %v88 = vrot.slane %v83, %v87
  %v89 = vlaneseq
  %v90 = vshrl.u32 %v89, 7
  %v91 = vsub.s32 1, %v90
  %v92 = vrot.slane %v83, %v91
  %v93 = vlaneseq
  %v94 = vshrl.u32 %v93, 7
  %v95 = vsub.s32 2, %v94
  %v96 = vrot.slane %v83, %v95
  %v97 = vlaneseq
  %v98 = vshrl.u32 %v97, 7
  %v99 = vsub.s32 3, %v98
  %v100 = vrot.slane %v83, %v99
  %v137 = vunpack.c.l.b16 %v51
  %v138 = vunpack.c.h.b16 %v51
  %v139 = vunpack.c.l.b16 %v52
  %v140 = vunpack.c.h.b16 %v52
  %v141 = vunpack.c.l.b16 %v53
  %v142 = vunpack.c.h.b16 %v53
  %v143 = vunpack.c.l.b16 %v54
  %v144 = vunpack.c.h.b16 %v54
  %v145 = vunpack.c.l.b16 %v55
  %v146 = vunpack.c.h.b16 %v55
  %v147 = vunpack.c.l.b16 %v56
  %v148 = vunpack.c.h.b16 %v56
  %v149 = vunpack.c.l.b16 %v57
  %v150 = vunpack.c.h.b16 %v57
  %v151 = vunpack.c.l.b16 %v58
  %v152 = vunpack.c.h.b16 %v58
  %v153 = vunpack.c.l.b16 %v59
  %v154 = vunpack.c.h.b16 %v59
  %v155 = vunpack.c.l.b16 %v60
  %v156 = vunpack.c.h.b16 %v60
  %v157 = vunpack.c.l.b16 %v61
  %v158 = vunpack.c.h.b16 %v61
  %v159 = vunpack.c.l.b16 %v62
  %v160 = vunpack.c.h.b16 %v62
  %v161 = vunpack.c.l.b16 %v63
  %v162 = vunpack.c.h.b16 %v63
  %v163 = vunpack.c.l.b16 %v64
  %v164 = vunpack.c.h.b16 %v64
  %v165 = vunpack.c.l.b16 %v65
  %v166 = vunpack.c.h.b16 %v65
  %v167 = vunpack.c.l.b16 %v66
  %v168 = vunpack.c.h.b16 %v66
  %v169 = vunpack.c.l.b16 %v67
  %v170 = vunpack.c.h.b16 %v67
  %v171 = vunpack.c.l.b16 %v68
  %v172 = vunpack.c.h.b16 %v68
  %v173 = vunpack.c.l.b16 %v69
  %v174 = vunpack.c.h.b16 %v69
  %v175 = vunpack.c.l.b16 %v70
  %v176 = vunpack.c.h.b16 %v70
  %v177 = vunpack.c.l.b16 %v71
  %v178 = vunpack.c.h.b16 %v71
  %v179 = vunpack.c.l.b16 %v72
  %v180 = vunpack.c.h.b16 %v72
  %v181 = vunpack.c.l.b16 %v73
  %v182 = vunpack.c.h.b16 %v73
  %v183 = vunpack.c.l.b16 %v74
  %v184 = vunpack.c.h.b16 %v74
  %v185 = vunpack.c.l.b16 %v75
  %v186 = vunpack.c.h.b16 %v75
  %v187 = vunpack.c.l.b16 %v76
  %v188 = vunpack.c.h.b16 %v76
  %v189 = vunpack.c.l.b16 %v77
  %v190 = vunpack.c.h.b16 %v77
  %v191 = vunpack.c.l.b16 %v78
  %v192 = vunpack.c.h.b16 %v78
  %v193 = vunpack.c.l.b16 %v79
  %v194 = vunpack.c.h.b16 %v79
  %v195 = vunpack.c.l.b16 %v80
  %v196 = vunpack.c.h.b16 %v80
  %v197 = vunpack.c.l.b16 %v81
  %v198 = vunpack.c.h.b16 %v81
  %v199 = vunpack.c.l.b16 %v82
  %v200 = vunpack.c.h.b16 %v82
  %v201 = vpack.c.b16 %v141, %v137
  %v202 = vpack.c.b16 %v142, %v138
  %v203 = vpack.c.b16 %v143, %v139
  %v204 = vpack.c.b16 %v144, %v140
  %v205 = vpack.c.b16 %v149, %v145
  %v206 = vpack.c.b16 %v150, %v146
  %v207 = vpack.c.b16 %v151, %v147
  %v208 = vpack.c.b16 %v152, %v148
  %v209 = vpack.c.b16 %v157, %v153
  %v210 = vpack.c.b16 %v158, %v154
  %v211 = vpack.c.b16 %v159, %v155
  %v212 = vpack.c.b16 %v160, %v156
  %v213 = vpack.c.b16 %v165, %v161
  %v214 = vpack.c.b16 %v166, %v162
  %v215 = vpack.c.b16 %v167, %v163
  %v216 = vpack.c.b16 %v168, %v164
  %v217 = vpack.c.b16 %v173, %v169
  %v218 = vpack.c.b16 %v174, %v170
  %v219 = vpack.c.b16 %v175, %v171
  %v220 = vpack.c.b16 %v176, %v172
  %v221 = vpack.c.b16 %v181, %v177
  %v222 = vpack.c.b16 %v182, %v178
  %v223 = vpack.c.b16 %v183, %v179
  %v224 = vpack.c.b16 %v184, %v180
  %v225 = vpack.c.b16 %v189, %v185
  %v226 = vpack.c.b16 %v190, %v186
  %v227 = vpack.c.b16 %v191, %v187
  %v228 = vpack.c.b16 %v192, %v188
  %v229 = vpack.c.b16 %v197, %v193
  %v230 = vpack.c.b16 %v198, %v194
  %v231 = vpack.c.b16 %v199, %v195
  %v232 = vpack.c.b16 %v200, %v196
  %265 = vmatprep.subr.bf16.mxu0 %v202
  %266 = vmatpush1.bf16.msra.mxu0 %v201
  %267 = vmatprep.subr.bf16.mxu0 %v206
  %268 = vmatpush1.bf16.msra.mxu0 %v205
  %269 = vmatprep.subr.bf16.mxu0 %v210
  %270 = vmatpush1.bf16.msra.mxu0 %v209
  %271 = vmatprep.subr.bf16.mxu0 %v214
  %272 = vmatpush1.bf16.msra.mxu0 %v213
  %273 = vmatprep.subr.bf16.mxu0 %v218
  %274 = vmatpush1.bf16.msra.mxu0 %v217
  %275 = vmatprep.subr.bf16.mxu0 %v222
  %276 = vmatpush1.bf16.msra.mxu0 %v221
  %277 = vmatprep.subr.bf16.mxu0 %v226
  %278 = vmatpush1.bf16.msra.mxu0 %v225
  %279 = vmatprep.subr.bf16.mxu0 %v230
  %280 = vmatpush1.bf16.msra.mxu0 %v229
  %281 = vmatprep.subr.bf16.mxu0 0
  %282 = vmatpush1.bf16.msra.mxu0 0
  %283 = vmatprep.subr.bf16.mxu0 0
  %284 = vmatpush1.bf16.msra.mxu0 0
  %285 = vmatprep.subr.bf16.mxu0 0
  %286 = vmatpush1.bf16.msra.mxu0 0
  %287 = vmatprep.subr.bf16.mxu0 0
  %288 = vmatpush1.bf16.msra.mxu0 0
  %289 = vmatprep.subr.bf16.mxu0 0
  %290 = vmatpush1.bf16.msra.mxu0 0
  %291 = vmatprep.subr.bf16.mxu0 0
  %292 = vmatpush1.bf16.msra.mxu0 0
  %293 = vmatprep.subr.bf16.mxu0 0
  %294 = vmatpush1.bf16.msra.mxu0 0
  %295 = vmatprep.subr.bf16.mxu0 0
  %296 = vmatpush1.bf16.msra.mxu0 0
  %297 = vmatprep.mubr.bf16.mxu0 0
  %298 = vmatmul.mubr.bf16.gmra.mrb[0].mxu0 %v43
  %v299 = vpop.f32.mrb[0].mxu0
  %v300 = vadd.f32 %v88, %v299
  %v301 = vpop.f32.mrb[0].mxu0
  %v302 = vadd.f32 %v92, %v301
  %v303 = vpop.f32.mrb[0].mxu0
  %v304 = vadd.f32 %v88, %v303
  %v305 = vpop.f32.mrb[0].mxu0
  %v306 = vadd.f32 %v92, %v305
  %307 = vmatprep.mubr.bf16.mxu0 0
  %308 = vmatmul.mubr.bf16.gmra.mrb[0].mxu0 %v44
  %v309 = vpop.f32.mrb[0].mxu0
  %v310 = vadd.f32 %v88, %v309
  %v311 = vpop.f32.mrb[0].mxu0
  %v312 = vadd.f32 %v92, %v311
  %v313 = vpop.f32.mrb[0].mxu0
  %v314 = vadd.f32 %v88, %v313
  %v315 = vpop.f32.mrb[0].mxu0
  %v316 = vadd.f32 %v92, %v315
  %317 = vmatprep.mubr.bf16.mxu0 0
  %318 = vmatmul.mubr.bf16.gmra.mrb[0].mxu0 %v45
  %v319 = vpop.f32.mrb[0].mxu0
  %v320 = vadd.f32 %v88, %v319
  %v321 = vpop.f32.mrb[0].mxu0
  %v322 = vadd.f32 %v92, %v321
  %v323 = vpop.f32.mrb[0].mxu0
  %v324 = vadd.f32 %v88, %v323
  %v325 = vpop.f32.mrb[0].mxu0
  %v326 = vadd.f32 %v92, %v325
  %327 = vmatprep.mubr.bf16.mxu0 0
  %328 = vmatmul.mubr.bf16.gmra.mrb[0].mxu0 %v46
  %v329 = vpop.f32.mrb[0].mxu0
  %v330 = vadd.f32 %v88, %v329
  %v331 = vpop.f32.mrb[0].mxu0
  %v332 = vadd.f32 %v92, %v331
  %v333 = vpop.f32.mrb[0].mxu0
  %v334 = vadd.f32 %v88, %v333
  %v335 = vpop.f32.mrb[0].mxu0
  %v336 = vadd.f32 %v92, %v335
  %337 = vmatprep.mubr.bf16.mxu0 0
  %338 = vmatmul.mubr.bf16.gmra.mrb[0].mxu0 %v47
  %v339 = vpop.f32.mrb[0].mxu0
  %v340 = vadd.f32 %v88, %v339
  %v341 = vpop.f32.mrb[0].mxu0
  %v342 = vadd.f32 %v92, %v341
  %v343 = vpop.f32.mrb[0].mxu0
  %v344 = vadd.f32 %v88, %v343
  %v345 = vpop.f32.mrb[0].mxu0
  %v346 = vadd.f32 %v92, %v345
  %347 = vmatprep.mubr.bf16.mxu0 0
  %348 = vmatmul.mubr.bf16.gmra.mrb[0].mxu0 %v48
  %v349 = vpop.f32.mrb[0].mxu0
  %v350 = vadd.f32 %v88, %v349
  %v351 = vpop.f32.mrb[0].mxu0
  %v352 = vadd.f32 %v92, %v351
  %v353 = vpop.f32.mrb[0].mxu0
  %v354 = vadd.f32 %v88, %v353
  %v355 = vpop.f32.mrb[0].mxu0
  %v356 = vadd.f32 %v92, %v355
  %357 = vmatprep.mubr.bf16.mxu0 0
  %358 = vmatmul.mubr.bf16.gmra.mrb[0].mxu0 %v49
  %v359 = vpop.f32.mrb[0].mxu0
  %v360 = vadd.f32 %v88, %v359
  %v361 = vpop.f32.mrb[0].mxu0
  %v362 = vadd.f32 %v92, %v361
  %v363 = vpop.f32.mrb[0].mxu0
  %v364 = vadd.f32 %v88, %v363
  %v365 = vpop.f32.mrb[0].mxu0
  %v366 = vadd.f32 %v92, %v365
  %367 = vmatprep.mubr.bf16.mxu0 0
  %368 = vmatmul.mubr.bf16.gmra.mrb[0].mxu0 %v50
  %v369 = vpop.f32.mrb[0].mxu0
  %v370 = vadd.f32 %v88, %v369
  %v371 = vpop.f32.mrb[0].mxu0
  %v372 = vadd.f32 %v92, %v371
  %v373 = vpop.f32.mrb[0].mxu0
  %v374 = vadd.f32 %v88, %v373
  %v375 = vpop.f32.mrb[0].mxu0
  %v376 = vadd.f32 %v92, %v375
  %377 = vdwg.mxu0
  %378 = vmatprep.subr.bf16.mxu0 %v204
  %379 = vmatpush1.bf16.msra.mxu0 %v203
  %380 = vmatprep.subr.bf16.mxu0 %v208
  %381 = vmatpush1.bf16.msra.mxu0 %v207
  %382 = vmatprep.subr.bf16.mxu0 %v212
  %383 = vmatpush1.bf16.msra.mxu0 %v211
  %384 = vmatprep.subr.bf16.mxu0 %v216
  %385 = vmatpush1.bf16.msra.mxu0 %v215
  %386 = vmatprep.subr.bf16.mxu0 %v220
  %387 = vmatpush1.bf16.msra.mxu0 %v219
  %388 = vmatprep.subr.bf16.mxu0 %v224
  %389 = vmatpush1.bf16.msra.mxu0 %v223
  %390 = vmatprep.subr.bf16.mxu0 %v228
  %391 = vmatpush1.bf16.msra.mxu0 %v227
  %392 = vmatprep.subr.bf16.mxu0 %v232
  %393 = vmatpush1.bf16.msra.mxu0 %v231
  %394 = vmatprep.subr.bf16.mxu0 0
  %395 = vmatpush1.bf16.msra.mxu0 0
  %396 = vmatprep.subr.bf16.mxu0 0
  %397 = vmatpush1.bf16.msra.mxu0 0
  %398 = vmatprep.subr.bf16.mxu0 0
  %399 = vmatpush1.bf16.msra.mxu0 0
  %400 = vmatprep.subr.bf16.mxu0 0
  %401 = vmatpush1.bf16.msra.mxu0 0
  %402 = vmatprep.subr.bf16.mxu0 0
  %403 = vmatpush1.bf16.msra.mxu0 0
  %404 = vmatprep.subr.bf16.mxu0 0
  %405 = vmatpush1.bf16.msra.mxu0 0
  %406 = vmatprep.subr.bf16.mxu0 0
  %407 = vmatpush1.bf16.msra.mxu0 0
  %408 = vmatprep.subr.bf16.mxu0 0
  %409 = vmatpush1.bf16.msra.mxu0 0
  %410 = vmatprep.mubr.bf16.mxu0 0
  %411 = vmatmul.mubr.bf16.gmra.mrb[0].mxu0 %v43
  %v412 = vpop.f32.mrb[0].mxu0
  %v413 = vadd.f32 %v96, %v412
  %v414 = vpop.f32.mrb[0].mxu0
  %v415 = vadd.f32 %v100, %v414
  %v416 = vpop.f32.mrb[0].mxu0
  %v417 = vadd.f32 %v96, %v416
  %v418 = vpop.f32.mrb[0].mxu0
  %v419 = vadd.f32 %v100, %v418
  %420 = vmatprep.mubr.bf16.mxu0 0
  %421 = vmatmul.mubr.bf16.gmra.mrb[0].mxu0 %v44
  %v422 = vpop.f32.mrb[0].mxu0
  %v423 = vadd.f32 %v96, %v422
  %v424 = vpop.f32.mrb[0].mxu0
  %v425 = vadd.f32 %v100, %v424
  %v426 = vpop.f32.mrb[0].mxu0
  %v427 = vadd.f32 %v96, %v426
  %v428 = vpop.f32.mrb[0].mxu0
  %v429 = vadd.f32 %v100, %v428
  %430 = vmatprep.mubr.bf16.mxu0 0
  %431 = vmatmul.mubr.bf16.gmra.mrb[0].mxu0 %v45
  %v432 = vpop.f32.mrb[0].mxu0
  %v433 = vadd.f32 %v96, %v432
  %v434 = vpop.f32.mrb[0].mxu0
  %v435 = vadd.f32 %v100, %v434
  %v436 = vpop.f32.mrb[0].mxu0
  %v437 = vadd.f32 %v96, %v436
  %v438 = vpop.f32.mrb[0].mxu0
  %v439 = vadd.f32 %v100, %v438
  %440 = vmatprep.mubr.bf16.mxu0 0
  %441 = vmatmul.mubr.bf16.gmra.mrb[0].mxu0 %v46
  %v442 = vpop.f32.mrb[0].mxu0
  %v443 = vadd.f32 %v96, %v442
  %v444 = vpop.f32.mrb[0].mxu0
  %v445 = vadd.f32 %v100, %v444
  %v446 = vpop.f32.mrb[0].mxu0
  %v447 = vadd.f32 %v96, %v446
  %v448 = vpop.f32.mrb[0].mxu0
  %v449 = vadd.f32 %v100, %v448
  %450 = vmatprep.mubr.bf16.mxu0 0
  %451 = vmatmul.mubr.bf16.gmra.mrb[0].mxu0 %v47
  %v452 = vpop.f32.mrb[0].mxu0
  %v453 = vadd.f32 %v96, %v452
  %v454 = vpop.f32.mrb[0].mxu0
  %v455 = vadd.f32 %v100, %v454
  %v456 = vpop.f32.mrb[0].mxu0
  %v457 = vadd.f32 %v96, %v456
  %v458 = vpop.f32.mrb[0].mxu0
  %v459 = vadd.f32 %v100, %v458
  %460 = vmatprep.mubr.bf16.mxu0 0
  %461 = vmatmul.mubr.bf16.gmra.mrb[0].mxu0 %v48
  %v462 = vpop.f32.mrb[0].mxu0
  %v463 = vadd.f32 %v96, %v462
  %v464 = vpop.f32.mrb[0].mxu0
  %v465 = vadd.f32 %v100, %v464
  %v466 = vpop.f32.mrb[0].mxu0
  %v467 = vadd.f32 %v96, %v466
  %v468 = vpop.f32.mrb[0].mxu0
  %v469 = vadd.f32 %v100, %v468
  %470 = vmatprep.mubr.bf16.mxu0 0
  %471 = vmatmul.mubr.bf16.gmra.mrb[0].mxu0 %v49
  %v472 = vpop.f32.mrb[0].mxu0
  %v473 = vadd.f32 %v96, %v472
  %v474 = vpop.f32.mrb[0].mxu0
  %v475 = vadd.f32 %v100, %v474
  %v476 = vpop.f32.mrb[0].mxu0
  %v477 = vadd.f32 %v96, %v476
  %v478 = vpop.f32.mrb[0].mxu0
  %v479 = vadd.f32 %v100, %v478
  %480 = vmatprep.mubr.bf16.mxu0 0
  %481 = vmatmul.mubr.bf16.gmra.mrb[0].mxu0 %v50
  %v482 = vpop.f32.mrb[0].mxu0
  %v483 = vadd.f32 %v96, %v482
  %v484 = vpop.f32.mrb[0].mxu0
  %v485 = vadd.f32 %v100, %v484
  %v486 = vpop.f32.mrb[0].mxu0
  %v487 = vadd.f32 %v96, %v486
  %v488 = vpop.f32.mrb[0].mxu0
  %v489 = vadd.f32 %v100, %v488
  %490 = vdwg.mxu0
  %491 = vst [vmem:[#allocation2] sm:$0xff] %v300
  %492 = vst [vmem:[#allocation2 + $0x8] sm:$0xff] %v302
  %493 = vst [vmem:[#allocation2 + $0x10] sm:$0xff] %v413
  %494 = vst [vmem:[#allocation2 + $0x18] sm:$0xff] %v415
  %495 = vst [vmem:[#allocation2 + $0x20] sm:$0xff] %v304
  %496 = vst [vmem:[#allocation2 + $0x28] sm:$0xff] %v306
  %497 = vst [vmem:[#allocation2 + $0x30] sm:$0xff] %v417
  %498 = vst [vmem:[#allocation2 + $0x38] sm:$0xff] %v419
  %499 = vst [vmem:[#allocation2 + $0x40] sm:$0xff] %v310
  %500 = vst [vmem:[#allocation2 + $0x48] sm:$0xff] %v312
  %501 = vst [vmem:[#allocation2 + $0x50] sm:$0xff] %v423
  %502 = vst [vmem:[#allocation2 + $0x58] sm:$0xff] %v425
  %503 = vst [vmem:[#allocation2 + $0x60] sm:$0xff] %v314
  %504 = vst [vmem:[#allocation2 + $0x68] sm:$0xff] %v316
  %505 = vst [vmem:[#allocation2 + $0x70] sm:$0xff] %v427
  %506 = vst [vmem:[#allocation2 + $0x78] sm:$0xff] %v429
  %507 = vst [vmem:[#allocation2 + $0x80] sm:$0xff] %v320
  %508 = vst [vmem:[#allocation2 + $0x88] sm:$0xff] %v322
  %509 = vst [vmem:[#allocation2 + $0x90] sm:$0xff] %v433
  %510 = vst [vmem:[#allocation2 + $0x98] sm:$0xff] %v435
  %511 = vst [vmem:[#allocation2 + $0xa0] sm:$0xff] %v324
  %512 = vst [vmem:[#allocation2 + $0xa8] sm:$0xff] %v326
  %513 = vst [vmem:[#allocation2 + $0xb0] sm:$0xff] %v437
  %514 = vst [vmem:[#allocation2 + $0xb8] sm:$0xff] %v439
  %515 = vst [vmem:[#allocation2 + $0xc0] sm:$0xff] %v330
  %516 = vst [vmem:[#allocation2 + $0xc8] sm:$0xff] %v332
  %517 = vst [vmem:[#allocation2 + $0xd0] sm:$0xff] %v443
  %518 = vst [vmem:[#allocation2 + $0xd8] sm:$0xff] %v445
  %519 = vst [vmem:[#allocation2 + $0xe0] sm:$0xff] %v334
  %520 = vst [vmem:[#allocation2 + $0xe8] sm:$0xff] %v336
  %521 = vst [vmem:[#allocation2 + $0xf0] sm:$0xff] %v447
  %522 = vst [vmem:[#allocation2 + $0xf8] sm:$0xff] %v449
  %523 = vst [vmem:[#allocation2 + $0x100] sm:$0xff] %v340
  %524 = vst [vmem:[#allocation2 + $0x108] sm:$0xff] %v342
  %525 = vst [vmem:[#allocation2 + $0x110] sm:$0xff] %v453
  %526 = vst [vmem:[#allocation2 + $0x118] sm:$0xff] %v455
  %527 = vst [vmem:[#allocation2 + $0x120] sm:$0xff] %v344
  %528 = vst [vmem:[#allocation2 + $0x128] sm:$0xff] %v346
  %529 = vst [vmem:[#allocation2 + $0x130] sm:$0xff] %v457
  %530 = vst [vmem:[#allocation2 + $0x138] sm:$0xff] %v459
  %531 = vst [vmem:[#allocation2 + $0x140] sm:$0xff] %v350
  %532 = vst [vmem:[#allocation2 + $0x148] sm:$0xff] %v352
  %533 = vst [vmem:[#allocation2 + $0x150] sm:$0xff] %v463
  %534 = vst [vmem:[#allocation2 + $0x158] sm:$0xff] %v465
  %535 = vst [vmem:[#allocation2 + $0x160] sm:$0xff] %v354
  %536 = vst [vmem:[#allocation2 + $0x168] sm:$0xff] %v356
  %537 = vst [vmem:[#allocation2 + $0x170] sm:$0xff] %v467
  %538 = vst [vmem:[#allocation2 + $0x178] sm:$0xff] %v469
  %539 = vst [vmem:[#allocation2 + $0x180] sm:$0xff] %v360
  %540 = vst [vmem:[#allocation2 + $0x188] sm:$0xff] %v362
  %541 = vst [vmem:[#allocation2 + $0x190] sm:$0xff] %v473
  %542 = vst [vmem:[#allocation2 + $0x198] sm:$0xff] %v475
  %543 = vst [vmem:[#allocation2 + $0x1a0] sm:$0xff] %v364
  %544 = vst [vmem:[#allocation2 + $0x1a8] sm:$0xff] %v366
  %545 = vst [vmem:[#allocation2 + $0x1b0] sm:$0xff] %v477
  %546 = vst [vmem:[#allocation2 + $0x1b8] sm:$0xff] %v479
  %547 = vst [vmem:[#allocation2 + $0x1c0] sm:$0xff] %v370
  %548 = vst [vmem:[#allocation2 + $0x1c8] sm:$0xff] %v372
  %549 = vst [vmem:[#allocation2 + $0x1d0] sm:$0xff] %v483
  %550 = vst [vmem:[#allocation2 + $0x1d8] sm:$0xff] %v485
  %551 = vst [vmem:[#allocation2 + $0x1e0] sm:$0xff] %v374
  %552 = vst [vmem:[#allocation2 + $0x1e8] sm:$0xff] %v376
  %553 = vst [vmem:[#allocation2 + $0x1f0] sm:$0xff] %v487
  %554 = vst [vmem:[#allocation2 + $0x1f8] sm:$0xff] %v489
  %v555 = vld [vmem:[#allocation2] sm:$0xff]
  %v556 = vld [vmem:[#allocation2 + $0x8] sm:$0xff]
  %v557 = vld [vmem:[#allocation2 + $0x10] sm:$0xff]
  %v558 = vld [vmem:[#allocation2 + $0x18] sm:$0xff]
  %v559 = vld [vmem:[#allocation2 + $0x20] sm:$0xff]
  %v560 = vld [vmem:[#allocation2 + $0x28] sm:$0xff]
  %v561 = vld [vmem:[#allocation2 + $0x30] sm:$0xff]
  %v562 = vld [vmem:[#allocation2 + $0x38] sm:$0xff]
  %v563 = vld [vmem:[%s2] sm:$0xff]
  %v564 = vld [vmem:[%s2 + $0x8] sm:$0xff]
  %v565 = vld [vmem:[%s2 + $0x10] sm:$0xff]
  %v566 = vld [vmem:[%s2 + $0x18] sm:$0xff]
  %v567 = vld [vmem:[%s2 + $0x20] sm:$0xff]
  %v568 = vld [vmem:[%s2 + $0x28] sm:$0xff]
  %v569 = vld [vmem:[%s2 + $0x30] sm:$0xff]
  %v570 = vld [vmem:[%s2 + $0x38] sm:$0xff]
  %v571 = vld [vmem:[%s2 + $0x40] sm:$0xff]
  %v572 = vld [vmem:[%s2 + $0x48] sm:$0xff]
  %v573 = vld [vmem:[%s2 + $0x50] sm:$0xff]
  %v574 = vld [vmem:[%s2 + $0x58] sm:$0xff]
  %v575 = vld [vmem:[%s2 + $0x60] sm:$0xff]
  %v576 = vld [vmem:[%s2 + $0x68] sm:$0xff]
  %v577 = vld [vmem:[%s2 + $0x70] sm:$0xff]
  %v578 = vld [vmem:[%s2 + $0x78] sm:$0xff]
  %v579 = vld [vmem:[%s2 + $0x80] sm:$0xff]
  %v580 = vld [vmem:[%s2 + $0x88] sm:$0xff]
  %v581 = vld [vmem:[%s2 + $0x90] sm:$0xff]
  %v582 = vld [vmem:[%s2 + $0x98] sm:$0xff]
  %v583 = vld [vmem:[%s2 + $0xa0] sm:$0xff]
  %v584 = vld [vmem:[%s2 + $0xa8] sm:$0xff]
  %v585 = vld [vmem:[%s2 + $0xb0] sm:$0xff]
  %v586 = vld [vmem:[%s2 + $0xb8] sm:$0xff]
  %v587 = vld [vmem:[%s2 + $0xc0] sm:$0xff]
  %v588 = vld [vmem:[%s2 + $0xc8] sm:$0xff]
  %v589 = vld [vmem:[%s2 + $0xd0] sm:$0xff]
  %v590 = vld [vmem:[%s2 + $0xd8] sm:$0xff]
  %v591 = vld [vmem:[%s2 + $0xe0] sm:$0xff]
  %v592 = vld [vmem:[%s2 + $0xe8] sm:$0xff]
  %v593 = vld [vmem:[%s2 + $0xf0] sm:$0xff]
  %v594 = vld [vmem:[%s2 + $0xf8] sm:$0xff]
  %v627 = vunpack.c.l.b16 %v563
  %v628 = vunpack.c.h.b16 %v563
  %v629 = vunpack.c.l.b16 %v564
  %v630 = vunpack.c.h.b16 %v564
  %v631 = vunpack.c.l.b16 %v565
  %v632 = vunpack.c.h.b16 %v565
  %v633 = vunpack.c.l.b16 %v566
  %v634 = vunpack.c.h.b16 %v566
  %v635 = vunpack.c.l.b16 %v567
  %v636 = vunpack.c.h.b16 %v567
  %v637 = vunpack.c.l.b16 %v568
  %v638 = vunpack.c.h.b16 %v568
  %v639 = vunpack.c.l.b16 %v569
  %v640 = vunpack.c.h.b16 %v569
  %v641 = vunpack.c.l.b16 %v570
  %v642 = vunpack.c.h.b16 %v570
  %v643 = vunpack.c.l.b16 %v571
  %v644 = vunpack.c.h.b16 %v571
  %v645 = vunpack.c.l.b16 %v572
  %v646 = vunpack.c.h.b16 %v572
  %v647 = vunpack.c.l.b16 %v573
  %v648 = vunpack.c.h.b16 %v573
  %v649 = vunpack.c.l.b16 %v574
  %v650 = vunpack.c.h.b16 %v574
  %v651 = vunpack.c.l.b16 %v575
  %v652 = vunpack.c.h.b16 %v575
  %v653 = vunpack.c.l.b16 %v576
  %v654 = vunpack.c.h.b16 %v576
  %v655 = vunpack.c.l.b16 %v577
  %v656 = vunpack.c.h.b16 %v577
  %v657 = vunpack.c.l.b16 %v578
  %v658 = vunpack.c.h.b16 %v578
  %v659 = vunpack.c.l.b16 %v579
  %v660 = vunpack.c.h.b16 %v579
  %v661 = vunpack.c.l.b16 %v580
  %v662 = vunpack.c.h.b16 %v580
  %v663 = vunpack.c.l.b16 %v581
  %v664 = vunpack.c.h.b16 %v581
  %v665 = vunpack.c.l.b16 %v582
  %v666 = vunpack.c.h.b16 %v582
  %v667 = vunpack.c.l.b16 %v583
  %v668 = vunpack.c.h.b16 %v583
  %v669 = vunpack.c.l.b16 %v584
  %v670 = vunpack.c.h.b16 %v584
  %v671 = vunpack.c.l.b16 %v585
  %v672 = vunpack.c.h.b16 %v585
  %v673 = vunpack.c.l.b16 %v586
  %v674 = vunpack.c.h.b16 %v586
  %v675 = vunpack.c.l.b16 %v587
  %v676 = vunpack.c.h.b16 %v587
  %v677 = vunpack.c.l.b16 %v588
  %v678 = vunpack.c.h.b16 %v588
  %v679 = vunpack.c.l.b16 %v589
  %v680 = vunpack.c.h.b16 %v589
  %v681 = vunpack.c.l.b16 %v590
  %v682 = vunpack.c.h.b16 %v590
  %v683 = vunpack.c.l.b16 %v591
  %v684 = vunpack.c.h.b16 %v591
  %v685 = vunpack.c.l.b16 %v592
  %v686 = vunpack.c.h.b16 %v592
  %v687 = vunpack.c.l.b16 %v593
  %v688 = vunpack.c.h.b16 %v593
  %v689 = vunpack.c.l.b16 %v594
  %v690 = vunpack.c.h.b16 %v594
  %v691 = vpack.c.b16 %v631, %v627
  %v692 = vpack.c.b16 %v632, %v628
  %v693 = vpack.c.b16 %v633, %v629
  %v694 = vpack.c.b16 %v634, %v630
  %v695 = vpack.c.b16 %v639, %v635
  %v696 = vpack.c.b16 %v640, %v636
  %v697 = vpack.c.b16 %v641, %v637
  %v698 = vpack.c.b16 %v642, %v638
  %v699 = vpack.c.b16 %v647, %v643
  %v700 = vpack.c.b16 %v648, %v644
  %v701 = vpack.c.b16 %v649, %v645
  %v702 = vpack.c.b16 %v650, %v646
  %v703 = vpack.c.b16 %v655, %v651
  %v704 = vpack.c.b16 %v656, %v652
  %v705 = vpack.c.b16 %v657, %v653
  %v706 = vpack.c.b16 %v658, %v654
  %v707 = vpack.c.b16 %v663, %v659
  %v708 = vpack.c.b16 %v664, %v660
  %v709 = vpack.c.b16 %v665, %v661
  %v710 = vpack.c.b16 %v666, %v662
  %v711 = vpack.c.b16 %v671, %v667
  %v712 = vpack.c.b16 %v672, %v668
  %v713 = vpack.c.b16 %v673, %v669
  %v714 = vpack.c.b16 %v674, %v670
  %v715 = vpack.c.b16 %v679, %v675
  %v716 = vpack.c.b16 %v680, %v676
  %v717 = vpack.c.b16 %v681, %v677
  %v718 = vpack.c.b16 %v682, %v678
  %v719 = vpack.c.b16 %v687, %v683
  %v720 = vpack.c.b16 %v688, %v684
  %v721 = vpack.c.b16 %v689, %v685
  %v722 = vpack.c.b16 %v690, %v686
  %755 = vmatprep.subr.bf16.mxu0 %v692
  %756 = vmatpush1.bf16.msra.mxu0 %v691
  %757 = vmatprep.subr.bf16.mxu0 %v696
  %758 = vmatpush1.bf16.msra.mxu0 %v695
  %759 = vmatprep.subr.bf16.mxu0 %v700
  %760 = vmatpush1.bf16.msra.mxu0 %v699
  %761 = vmatprep.subr.bf16.mxu0 %v704
  %762 = vmatpush1.bf16.msra.mxu0 %v703
  %763 = vmatprep.subr.bf16.mxu0 %v708
  %764 = vmatpush1.bf16.msra.mxu0 %v707
  %765 = vmatprep.subr.bf16.mxu0 %v712
  %766 = vmatpush1.bf16.msra.mxu0 %v711
  %767 = vmatprep.subr.bf16.mxu0 %v716
  %768 = vmatpush1.bf16.msra.mxu0 %v715
  %769 = vmatprep.subr.bf16.mxu0 %v720
  %770 = vmatpush1.bf16.msra.mxu0 %v719
  %771 = vmatprep.subr.bf16.mxu0 0
  %772 = vmatpush1.bf16.msra.mxu0 0
  %773 = vmatprep.subr.bf16.mxu0 0
  %774 = vmatpush1.bf16.msra.mxu0 0
  %775 = vmatprep.subr.bf16.mxu0 0
  %776 = vmatpush1.bf16.msra.mxu0 0
  %777 = vmatprep.subr.bf16.mxu0 0
  %778 = vmatpush1.bf16.msra.mxu0 0
  %779 = vmatprep.subr.bf16.mxu0 0
  %780 = vmatpush1.bf16.msra.mxu0 0
  %781 = vmatprep.subr.bf16.mxu0 0
  %782 = vmatpush1.bf16.msra.mxu0 0
  %783 = vmatprep.subr.bf16.mxu0 0
  %784 = vmatpush1.bf16.msra.mxu0 0
  %785 = vmatprep.subr.bf16.mxu0 0
  %786 = vmatpush1.bf16.msra.mxu0 0
  %787 = vmatprep.mubr.bf16.mxu0 0
  %788 = vmatmul.mubr.bf16.gmra.mrb[0].mxu0 0
  %v789 = vpop.f32.mrb[0].mxu0
  %v790 = vadd.f32 0.0, %v789
  %v791 = vpop.f32.mrb[0].mxu0
  %v792 = vadd.f32 0.0, %v791
  %v793 = vpop.f32.mrb[0].mxu0
  %v794 = vadd.f32 0.0, %v793
  %v795 = vpop.f32.mrb[0].mxu0
  %v796 = vadd.f32 0.0, %v795
  %797 = vdwg.mxu0
  %798 = vmatprep.subr.bf16.mxu0 %v694
  %799 = vmatpush1.bf16.msra.mxu0 %v693
  %800 = vmatprep.subr.bf16.mxu0 %v698
  %801 = vmatpush1.bf16.msra.mxu0 %v697
  %802 = vmatprep.subr.bf16.mxu0 %v702
  %803 = vmatpush1.bf16.msra.mxu0 %v701
  %804 = vmatprep.subr.bf16.mxu0 %v706
  %805 = vmatpush1.bf16.msra.mxu0 %v705
  %806 = vmatprep.subr.bf16.mxu0 %v710
  %807 = vmatpush1.bf16.msra.mxu0 %v709
  %808 = vmatprep.subr.bf16.mxu0 %v714
  %809 = vmatpush1.bf16.msra.mxu0 %v713
  %810 = vmatprep.subr.bf16.mxu0 %v718
  %811 = vmatpush1.bf16.msra.mxu0 %v717
  %812 = vmatprep.subr.bf16.mxu0 %v722
  %813 = vmatpush1.bf16.msra.mxu0 %v721
  %814 = vmatprep.subr.bf16.mxu0 0
  %815 = vmatpush1.bf16.msra.mxu0 0
  %816 = vmatprep.subr.bf16.mxu0 0
  %817 = vmatpush1.bf16.msra.mxu0 0
  %818 = vmatprep.subr.bf16.mxu0 0
  %819 = vmatpush1.bf16.msra.mxu0 0
  %820 = vmatprep.subr.bf16.mxu0 0
  %821 = vmatpush1.bf16.msra.mxu0 0
  %822 = vmatprep.subr.bf16.mxu0 0
  %823 = vmatpush1.bf16.msra.mxu0 0
  %824 = vmatprep.subr.bf16.mxu0 0
  %825 = vmatpush1.bf16.msra.mxu0 0
  %826 = vmatprep.subr.bf16.mxu0 0
  %827 = vmatpush1.bf16.msra.mxu0 0
  %828 = vmatprep.subr.bf16.mxu0 0
  %829 = vmatpush1.bf16.msra.mxu0 0
  %830 = vmatprep.mubr.bf16.mxu0 0
  %831 = vmatmul.mubr.bf16.gmra.mrb[0].mxu0 0
  %v832 = vpop.f32.mrb[0].mxu0
  %v833 = vadd.f32 0.0, %v832
  %v834 = vpop.f32.mrb[0].mxu0
  %v835 = vadd.f32 0.0, %v834
  %v836 = vpop.f32.mrb[0].mxu0
  %v837 = vadd.f32 0.0, %v836
  %v838 = vpop.f32.mrb[0].mxu0
  %v839 = vadd.f32 0.0, %v838
  %840 = vdwg.mxu0
  %v841 = vadd.f32 %v555, %v790
  %v842 = vadd.f32 %v556, %v792
  %v843 = vadd.f32 %v557, %v833
  %v844 = vadd.f32 %v558, %v835
  %v845 = vadd.f32 %v559, %v794
  %v846 = vadd.f32 %v560, %v796
  %v847 = vadd.f32 %v561, %v837
  %v848 = vadd.f32 %v562, %v839
  %v849 = vxor.u32 %v841, 2147483648
  %v850 = vxor.u32 %v845, 2147483648
  %v851 = vmul.f32 %v849, 1.442695
  %v852 = vpow.pop %v851
  %v853 = vmul.f32 %v850, 1.442695
  %v854 = vpow.pop %v853
  %v855 = vadd.f32 %v852, 1.0
  %v856 = vadd.f32 %v854, 1.0
  %v857 = vrcp.pop %v855
  %v858 = vmul.f32 1.0, %v857
  %v859 = vrcp.pop %v856
  %v860 = vmul.f32 1.0, %v859
  %v861 = vxor.u32 %v842, 2147483648
  %v862 = vxor.u32 %v846, 2147483648
  %v863 = vmul.f32 %v861, 1.442695
  %v864 = vpow.pop %v863
  %v865 = vmul.f32 %v862, 1.442695
  %v866 = vpow.pop %v865
  %v867 = vadd.f32 %v864, 1.0
  %v868 = vadd.f32 %v866, 1.0
  %v869 = vrcp.pop %v867
  %v870 = vmul.f32 1.0, %v869
  %v871 = vrcp.pop %v868
  %v872 = vmul.f32 1.0, %v871
  %v873 = vtanh.pop %v843
  %v874 = vtanh.pop %v847
  %v875 = vxor.u32 %v844, 2147483648
  %v876 = vxor.u32 %v848, 2147483648
  %v877 = vmul.f32 %v875, 1.442695
  %v878 = vpow.pop %v877
  %v879 = vmul.f32 %v876, 1.442695
  %v880 = vpow.pop %v879
  %v881 = vadd.f32 %v878, 1.0
  %v882 = vadd.f32 %v880, 1.0
  %v883 = vrcp.pop %v881
  %v884 = vmul.f32 1.0, %v883
  %v885 = vrcp.pop %v882
  %v886 = vmul.f32 1.0, %v885
  %v887 = vmul.f32 %v870, 0.0
  %v888 = vmul.f32 %v872, 0.0
  %v889 = vmul.f32 %v858, %v873
  %v890 = vmul.f32 %v860, %v874
  %v891 = vadd.f32 %v887, %v889
  %v892 = vadd.f32 %v888, %v890
  %v893 = vtanh.pop %v891
  %v894 = vtanh.pop %v892
  %v895 = vmul.f32 %v884, %v893
  %v896 = vmul.f32 %v886, %v894
  %v897 = vpack.c.bf16 %v896, %v895
  %v899 = vunpack.c.l.b16 %v897
  %v900 = vunpack.c.h.b16 %v897
  %v901 = vpack.c.b16 %v899, %v899
  %v902 = vpack.c.b16 %v900, %v900
  %905 = vst [vmem:[%s7] sm:$0xf] %v901
  %906 = vst [vmem:[%s7 + $0x8] sm:$0xf] %v902
  %s907 = scalar_lea.vmem [#allocation2], 64
  %v908 = vld [vmem:[%s907] sm:$0xff]
  %v909 = vld [vmem:[%s907 + $0x8] sm:$0xff]
  %v910 = vld [vmem:[%s907 + $0x10] sm:$0xff]
  %v911 = vld [vmem:[%s907 + $0x18] sm:$0xff]
  %v912 = vld [vmem:[%s907 + $0x20] sm:$0xff]
  %v913 = vld [vmem:[%s907 + $0x28] sm:$0xff]
  %v914 = vld [vmem:[%s907 + $0x30] sm:$0xff]
  %v915 = vld [vmem:[%s907 + $0x38] sm:$0xff]
  %v916 = vld [vmem:[%s2] sm:$0xff]
  %v917 = vld [vmem:[%s2 + $0x8] sm:$0xff]
  %v918 = vld [vmem:[%s2 + $0x10] sm:$0xff]
  %v919 = vld [vmem:[%s2 + $0x18] sm:$0xff]
  %v920 = vld [vmem:[%s2 + $0x20] sm:$0xff]
  %v921 = vld [vmem:[%s2 + $0x28] sm:$0xff]
  %v922 = vld [vmem:[%s2 + $0x30] sm:$0xff]
  %v923 = vld [vmem:[%s2 + $0x38] sm:$0xff]
  %v924 = vld [vmem:[%s2 + $0x40] sm:$0xff]
  %v925 = vld [vmem:[%s2 + $0x48] sm:$0xff]
  %v926 = vld [vmem:[%s2 + $0x50] sm:$0xff]
  %v927 = vld [vmem:[%s2 + $0x58] sm:$0xff]
  %v928 = vld [vmem:[%s2 + $0x60] sm:$0xff]
  %v929 = vld [vmem:[%s2 + $0x68] sm:$0xff]
  %v930 = vld [vmem:[%s2 + $0x70] sm:$0xff]
  %v931 = vld [vmem:[%s2 + $0x78] sm:$0xff]
  %v932 = vld [vmem:[%s2 + $0x80] sm:$0xff]
  %v933 = vld [vmem:[%s2 + $0x88] sm:$0xff]
  %v934 = vld [vmem:[%s2 + $0x90] sm:$0xff]
  %v935 = vld [vmem:[%s2 + $0x98] sm:$0xff]
  %v936 = vld [vmem:[%s2 + $0xa0] sm:$0xff]
  %v937 = vld [vmem:[%s2 + $0xa8] sm:$0xff]
  %v938 = vld [vmem:[%s2 + $0xb0] sm:$0xff]
  %v939 = vld [vmem:[%s2 + $0xb8] sm:$0xff]
  %v940 = vld [vmem:[%s2 + $0xc0] sm:$0xff]
  %v941 = vld [vmem:[%s2 + $0xc8] sm:$0xff]
  %v942 = vld [vmem:[%s2 + $0xd0] sm:$0xff]
  %v943 = vld [vmem:[%s2 + $0xd8] sm:$0xff]
  %v944 = vld [vmem:[%s2 + $0xe0] sm:$0xff]
  %v945 = vld [vmem:[%s2 + $0xe8] sm:$0xff]
  %v946 = vld [vmem:[%s2 + $0xf0] sm:$0xff]
  %v947 = vld [vmem:[%s2 + $0xf8] sm:$0xff]
  %v980 = vunpack.c.l.b16 %v916
  %v981 = vunpack.c.h.b16 %v916
  %v982 = vunpack.c.l.b16 %v917
  %v983 = vunpack.c.h.b16 %v917
  %v984 = vunpack.c.l.b16 %v918
  %v985 = vunpack.c.h.b16 %v918
  %v986 = vunpack.c.l.b16 %v919
  %v987 = vunpack.c.h.b16 %v919
  %v988 = vunpack.c.l.b16 %v920
  %v989 = vunpack.c.h.b16 %v920
  %v990 = vunpack.c.l.b16 %v921
  %v991 = vunpack.c.h.b16 %v921
  %v992 = vunpack.c.l.b16 %v922
  %v993 = vunpack.c.h.b16 %v922
  %v994 = vunpack.c.l.b16 %v923
  %v995 = vunpack.c.h.b16 %v923
  %v996 = vunpack.c.l.b16 %v924
  %v997 = vunpack.c.h.b16 %v924
  %v998 = vunpack.c.l.b16 %v925
  %v999 = vunpack.c.h.b16 %v925
  %v1000 = vunpack.c.l.b16 %v926
  %v1001 = vunpack.c.h.b16 %v926
  %v1002 = vunpack.c.l.b16 %v927
  %v1003 = vunpack.c.h.b16 %v927
  %v1004 = vunpack.c.l.b16 %v928
  %v1005 = vunpack.c.h.b16 %v928
  %v1006 = vunpack.c.l.b16 %v929
  %v1007 = vunpack.c.h.b16 %v929
  %v1008 = vunpack.c.l.b16 %v930
  %v1009 = vunpack.c.h.b16 %v930
  %v1010 = vunpack.c.l.b16 %v931
  %v1011 = vunpack.c.h.b16 %v931
  %v1012 = vunpack.c.l.b16 %v932
  %v1013 = vunpack.c.h.b16 %v932
  %v1014 = vunpack.c.l.b16 %v933
  %v1015 = vunpack.c.h.b16 %v933
  %v1016 = vunpack.c.l.b16 %v934
  %v1017 = vunpack.c.h.b16 %v934
  %v1018 = vunpack.c.l.b16 %v935
  %v1019 = vunpack.c.h.b16 %v935
  %v1020 = vunpack.c.l.b16 %v936
  %v1021 = vunpack.c.h.b16 %v936
  %v1022 = vunpack.c.l.b16 %v937
  %v1023 = vunpack.c.h.b16 %v937
  %v1024 = vunpack.c.l.b16 %v938
  %v1025 = vunpack.c.h.b16 %v938
  %v1026 = vunpack.c.l.b16 %v939
  %v1027 = vunpack.c.h.b16 %v939
  %v1028 = vunpack.c.l.b16 %v940
  %v1029 = vunpack.c.h.b16 %v940
  %v1030 = vunpack.c.l.b16 %v941
  %v1031 = vunpack.c.h.b16 %v941
  %v1032 = vunpack.c.l.b16 %v942
  %v1033 = vunpack.c.h.b16 %v942
  %v1034 = vunpack.c.l.b16 %v943
  %v1035 = vunpack.c.h.b16 %v943
  %v1036 = vunpack.c.l.b16 %v944
  %v1037 = vunpack.c.h.b16 %v944
  %v1038 = vunpack.c.l.b16 %v945
  %v1039 = vunpack.c.h.b16 %v945
  %v1040 = vunpack.c.l.b16 %v946
  %v1041 = vunpack.c.h.b16 %v946
  %v1042 = vunpack.c.l.b16 %v947
  %v1043 = vunpack.c.h.b16 %v947
  %v1044 = vpack.c.b16 %v984, %v980
  %v1045 = vpack.c.b16 %v985, %v981
  %v1046 = vpack.c.b16 %v986, %v982
  %v1047 = vpack.c.b16 %v987, %v983
  %v1048 = vpack.c.b16 %v992, %v988
  %v1049 = vpack.c.b16 %v993, %v989
  %v1050 = vpack.c.b16 %v994, %v990
  %v1051 = vpack.c.b16 %v995, %v991
  %v1052 = vpack.c.b16 %v1000, %v996
  %v1053 = vpack.c.b16 %v1001, %v997
  %v1054 = vpack.c.b16 %v1002, %v998
  %v1055 = vpack.c.b16 %v1003, %v999
  %v1056 = vpack.c.b16 %v1008, %v1004
  %v1057 = vpack.c.b16 %v1009, %v1005
  %v1058 = vpack.c.b16 %v1010, %v1006
  %v1059 = vpack.c.b16 %v1011, %v1007
  %v1060 = vpack.c.b16 %v1016, %v1012
  %v1061 = vpack.c.b16 %v1017, %v1013
  %v1062 = vpack.c.b16 %v1018, %v1014
  %v1063 = vpack.c.b16 %v1019, %v1015
  %v1064 = vpack.c.b16 %v1024, %v1020
  %v1065 = vpack.c.b16 %v1025, %v1021
  %v1066 = vpack.c.b16 %v1026, %v1022
  %v1067 = vpack.c.b16 %v1027, %v1023
  %v1068 = vpack.c.b16 %v1032, %v1028
  %v1069 = vpack.c.b16 %v1033, %v1029
  %v1070 = vpack.c.b16 %v1034, %v1030
  %v1071 = vpack.c.b16 %v1035, %v1031
  %v1072 = vpack.c.b16 %v1040, %v1036
  %v1073 = vpack.c.b16 %v1041, %v1037
  %v1074 = vpack.c.b16 %v1042, %v1038
  %v1075 = vpack.c.b16 %v1043, %v1039
  %1108 = vmatprep.subr.bf16.mxu0 %v1045
  %1109 = vmatpush1.bf16.msra.mxu0 %v1044
  %1110 = vmatprep.subr.bf16.mxu0 %v1049
  %1111 = vmatpush1.bf16.msra.mxu0 %v1048
  %1112 = vmatprep.subr.bf16.mxu0 %v1053
  %1113 = vmatpush1.bf16.msra.mxu0 %v1052
  %1114 = vmatprep.subr.bf16.mxu0 %v1057
  %1115 = vmatpush1.bf16.msra.mxu0 %v1056
  %1116 = vmatprep.subr.bf16.mxu0 %v1061
  %1117 = vmatpush1.bf16.msra.mxu0 %v1060
  %1118 = vmatprep.subr.bf16.mxu0 %v1065
  %1119 = vmatpush1.bf16.msra.mxu0 %v1064
  %1120 = vmatprep.subr.bf16.mxu0 %v1069
  %1121 = vmatpush1.bf16.msra.mxu0 %v1068
  %1122 = vmatprep.subr.bf16.mxu0 %v1073
  %1123 = vmatpush1.bf16.msra.mxu0 %v1072
  %1124 = vmatprep.subr.bf16.mxu0 0
  %1125 = vmatpush1.bf16.msra.mxu0 0
  %1126 = vmatprep.subr.bf16.mxu0 0
  %1127 = vmatpush1.bf16.msra.mxu0 0
  %1128 = vmatprep.subr.bf16.mxu0 0
  %1129 = vmatpush1.bf16.msra.mxu0 0
  %1130 = vmatprep.subr.bf16.mxu0 0
  %1131 = vmatpush1.bf16.msra.mxu0 0
  %1132 = vmatprep.subr.bf16.mxu0 0
  %1133 = vmatpush1.bf16.msra.mxu0 0
  %1134 = vmatprep.subr.bf16.mxu0 0
  %1135 = vmatpush1.bf16.msra.mxu0 0
  %1136 = vmatprep.subr.bf16.mxu0 0
  %1137 = vmatpush1.bf16.msra.mxu0 0
  %1138 = vmatprep.subr.bf16.mxu0 0
  %1139 = vmatpush1.bf16.msra.mxu0 0
  %1140 = vmatprep.mubr.bf16.mxu0 0
  %1141 = vmatmul.mubr.bf16.gmra.mrb[0].mxu0 %v897
  %v1142 = vpop.f32.mrb[0].mxu0
  %v1143 = vadd.f32 0.0, %v1142
  %v1144 = vpop.f32.mrb[0].mxu0
  %v1145 = vadd.f32 0.0, %v1144
  %v1146 = vpop.f32.mrb[0].mxu0
  %v1147 = vadd.f32 0.0, %v1146
  %v1148 = vpop.f32.mrb[0].mxu0
  %v1149 = vadd.f32 0.0, %v1148
  %1150 = vdwg.mxu0
  %1151 = vmatprep.subr.bf16.mxu0 %v1047
  %1152 = vmatpush1.bf16.msra.mxu0 %v1046
  %1153 = vmatprep.subr.bf16.mxu0 %v1051
  %1154 = vmatpush1.bf16.msra.mxu0 %v1050
  %1155 = vmatprep.subr.bf16.mxu0 %v1055
  %1156 = vmatpush1.bf16.msra.mxu0 %v1054
  %1157 = vmatprep.subr.bf16.mxu0 %v1059
  %1158 = vmatpush1.bf16.msra.mxu0 %v1058
  %1159 = vmatprep.subr.bf16.mxu0 %v1063
  %1160 = vmatpush1.bf16.msra.mxu0 %v1062
  %1161 = vmatprep.subr.bf16.mxu0 %v1067
  %1162 = vmatpush1.bf16.msra.mxu0 %v1066
  %1163 = vmatprep.subr.bf16.mxu0 %v1071
  %1164 = vmatpush1.bf16.msra.mxu0 %v1070
  %1165 = vmatprep.subr.bf16.mxu0 %v1075
  %1166 = vmatpush1.bf16.msra.mxu0 %v1074
  %1167 = vmatprep.subr.bf16.mxu0 0
  %1168 = vmatpush1.bf16.msra.mxu0 0
  %1169 = vmatprep.subr.bf16.mxu0 0
  %1170 = vmatpush1.bf16.msra.mxu0 0
  %1171 = vmatprep.subr.bf16.mxu0 0
  %1172 = vmatpush1.bf16.msra.mxu0 0
  %1173 = vmatprep.subr.bf16.mxu0 0
  %1174 = vmatpush1.bf16.msra.mxu0 0
  %1175 = vmatprep.subr.bf16.mxu0 0
  %1176 = vmatpush1.bf16.msra.mxu0 0
  %1177 = vmatprep.subr.bf16.mxu0 0
  %1178 = vmatpush1.bf16.msra.mxu0 0
  %1179 = vmatprep.subr.bf16.mxu0 0
  %1180 = vmatpush1.bf16.msra.mxu0 0
  %1181 = vmatprep.subr.bf16.mxu0 0
  %1182 = vmatpush1.bf16.msra.mxu0 0
  %1183 = vmatprep.mubr.bf16.mxu0 0
  %1184 = vmatmul.mubr.bf16.gmra.mrb[0].mxu0 %v897
  %v1185 = vpop.f32.mrb[0].mxu0
  %v1186 = vadd.f32 0.0, %v1185
  %v1187 = vpop.f32.mrb[0].mxu0
  %v1188 = vadd.f32 0.0, %v1187
  %v1189 = vpop.f32.mrb[0].mxu0
  %v1190 = vadd.f32 0.0, %v1189
  %v1191 = vpop.f32.mrb[0].mxu0
  %v1192 = vadd.f32 0.0, %v1191
  %1193 = vdwg.mxu0
  %v1194 = vadd.f32 %v908, %v1143
  %v1195 = vadd.f32 %v909, %v1145
  %v1196 = vadd.f32 %v910, %v1186
  %v1197 = vadd.f32 %v911, %v1188
  %v1198 = vadd.f32 %v912, %v1147
  %v1199 = vadd.f32 %v913, %v1149
  %v1200 = vadd.f32 %v914, %v1190
  %v1201 = vadd.f32 %v915, %v1192
  %v1202 = vxor.u32 %v1194, 2147483648
  %v1203 = vxor.u32 %v1198, 2147483648
  %v1204 = vmul.f32 %v1202, 1.442695
  %v1205 = vpow.pop %v1204
  %v1206 = vmul.f32 %v1203, 1.442695
  %v1207 = vpow.pop %v1206
  %v1208 = vadd.f32 %v1205, 1.0
  %v1209 = vadd.f32 %v1207, 1.0
  %v1210 = vrcp.pop %v1208
  %v1211 = vmul.f32 1.0, %v1210
  %v1212 = vrcp.pop %v1209
  %v1213 = vmul.f32 1.0, %v1212
  %v1214 = vxor.u32 %v1195, 2147483648
  %v1215 = vxor.u32 %v1199, 2147483648
  %v1216 = vmul.f32 %v1214, 1.442695
  %v1217 = vpow.pop %v1216
  %v1218 = vmul.f32 %v1215, 1.442695
  %v1219 = vpow.pop %v1218
  %v1220 = vadd.f32 %v1217, 1.0
  %v1221 = vadd.f32 %v1219, 1.0
  %v1222 = vrcp.pop %v1220
  %v1223 = vmul.f32 1.0, %v1222
  %v1224 = vrcp.pop %v1221
  %v1225 = vmul.f32 1.0, %v1224
  %v1226 = vtanh.pop %v1196
  %v1227 = vtanh.pop %v1200
  %v1228 = vxor.u32 %v1197, 2147483648
  %v1229 = vxor.u32 %v1201, 2147483648
  %v1230 = vmul.f32 %v1228, 1.442695
  %v1231 = vpow.pop %v1230
  %v1232 = vmul.f32 %v1229, 1.442695
  %v1233 = vpow.pop %v1232
  %v1234 = vadd.f32 %v1231, 1.0
  %v1235 = vadd.f32 %v1233, 1.0
  %v1236 = vrcp.pop %v1234
  %v1237 = vmul.f32 1.0, %v1236
  %v1238 = vrcp.pop %v1235
  %v1239 = vmul.f32 1.0, %v1238
  %v1240 = vmul.f32 %v1223, %v891
  %v1241 = vmul.f32 %v1225, %v892
  %v1242 = vmul.f32 %v1211, %v1226
  %v1243 = vmul.f32 %v1213, %v1227
  %v1244 = vadd.f32 %v1240, %v1242
  %v1245 = vadd.f32 %v1241, %v1243
  %v1246 = vtanh.pop %v1244
  %v1247 = vtanh.pop %v1245
  %v1248 = vmul.f32 %v1237, %v1246
  %v1249 = vmul.f32 %v1239, %v1247
  %v1250 = vpack.c.bf16 %v1249, %v1248
  %v1252 = vunpack.c.l.b16 %v1250
  %v1253 = vunpack.c.h.b16 %v1250
  %v1254 = vpack.c.b16 %v1252, %v1252
  %v1255 = vpack.c.b16 %v1253, %v1253
  %s1258 = scalar_lea.vmem %s7, 16
  %1259 = vst [vmem:[%s1258] sm:$0xf] %v1254
  %1260 = vst [vmem:[%s1258 + $0x8] sm:$0xf] %v1255
  %s1261 = scalar_lea.vmem [#allocation2], 128
  %v1262 = vld [vmem:[%s1261] sm:$0xff]
  %v1263 = vld [vmem:[%s1261 + $0x8] sm:$0xff]
  %v1264 = vld [vmem:[%s1261 + $0x10] sm:$0xff]
  %v1265 = vld [vmem:[%s1261 + $0x18] sm:$0xff]
  %v1266 = vld [vmem:[%s1261 + $0x20] sm:$0xff]
  %v1267 = vld [vmem:[%s1261 + $0x28] sm:$0xff]
  %v1268 = vld [vmem:[%s1261 + $0x30] sm:$0xff]
  %v1269 = vld [vmem:[%s1261 + $0x38] sm:$0xff]
  %v1270 = vld [vmem:[%s2] sm:$0xff]
  %v1271 = vld [vmem:[%s2 + $0x8] sm:$0xff]
  %v1272 = vld [vmem:[%s2 + $0x10] sm:$0xff]
  %v1273 = vld [vmem:[%s2 + $0x18] sm:$0xff]
  %v1274 = vld [vmem:[%s2 + $0x20] sm:$0xff]
  %v1275 = vld [vmem:[%s2 + $0x28] sm:$0xff]
  %v1276 = vld [vmem:[%s2 + $0x30] sm:$0xff]
  %v1277 = vld [vmem:[%s2 + $0x38] sm:$0xff]
  %v1278 = vld [vmem:[%s2 + $0x40] sm:$0xff]
  %v1279 = vld [vmem:[%s2 + $0x48] sm:$0xff]
  %v1280 = vld [vmem:[%s2 + $0x50] sm:$0xff]
  %v1281 = vld [vmem:[%s2 + $0x58] sm:$0xff]
  %v1282 = vld [vmem:[%s2 + $0x60] sm:$0xff]
  %v1283 = vld [vmem:[%s2 + $0x68] sm:$0xff]
  %v1284 = vld [vmem:[%s2 + $0x70] sm:$0xff]
  %v1285 = vld [vmem:[%s2 + $0x78] sm:$0xff]
  %v1286 = vld [vmem:[%s2 + $0x80] sm:$0xff]
  %v1287 = vld [vmem:[%s2 + $0x88] sm:$0xff]
  %v1288 = vld [vmem:[%s2 + $0x90] sm:$0xff]
  %v1289 = vld [vmem:[%s2 + $0x98] sm:$0xff]
  %v1290 = vld [vmem:[%s2 + $0xa0] sm:$0xff]
  %v1291 = vld [vmem:[%s2 + $0xa8] sm:$0xff]
  %v1292 = vld [vmem:[%s2 + $0xb0] sm:$0xff]
  %v1293 = vld [vmem:[%s2 + $0xb8] sm:$0xff]
  %v1294 = vld [vmem:[%s2 + $0xc0] sm:$0xff]
  %v1295 = vld [vmem:[%s2 + $0xc8] sm:$0xff]
  %v1296 = vld [vmem:[%s2 + $0xd0] sm:$0xff]
  %v1297 = vld [vmem:[%s2 + $0xd8] sm:$0xff]
  %v1298 = vld [vmem:[%s2 + $0xe0] sm:$0xff]
  %v1299 = vld [vmem:[%s2 + $0xe8] sm:$0xff]
  %v1300 = vld [vmem:[%s2 + $0xf0] sm:$0xff]
  %v1301 = vld [vmem:[%s2 + $0xf8] sm:$0xff]
  %v1334 = vunpack.c.l.b16 %v1270
  %v1335 = vunpack.c.h.b16 %v1270
  %v1336 = vunpack.c.l.b16 %v1271
  %v1337 = vunpack.c.h.b16 %v1271
  %v1338 = vunpack.c.l.b16 %v1272
  %v1339 = vunpack.c.h.b16 %v1272
  %v1340 = vunpack.c.l.b16 %v1273
  %v1341 = vunpack.c.h.b16 %v1273
  %v1342 = vunpack.c.l.b16 %v1274
  %v1343 = vunpack.c.h.b16 %v1274
  %v1344 = vunpack.c.l.b16 %v1275
  %v1345 = vunpack.c.h.b16 %v1275
  %v1346 = vunpack.c.l.b16 %v1276
  %v1347 = vunpack.c.h.b16 %v1276
  %v1348 = vunpack.c.l.b16 %v1277
  %v1349 = vunpack.c.h.b16 %v1277
  %v1350 = vunpack.c.l.b16 %v1278
  %v1351 = vunpack.c.h.b16 %v1278
  %v1352 = vunpack.c.l.b16 %v1279
  %v1353 = vunpack.c.h.b16 %v1279
  %v1354 = vunpack.c.l.b16 %v1280
  %v1355 = vunpack.c.h.b16 %v1280
  %v1356 = vunpack.c.l.b16 %v1281
  %v1357 = vunpack.c.h.b16 %v1281
  %v1358 = vunpack.c.l.b16 %v1282
  %v1359 = vunpack.c.h.b16 %v1282
  %v1360 = vunpack.c.l.b16 %v1283
  %v1361 = vunpack.c.h.b16 %v1283
  %v1362 = vunpack.c.l.b16 %v1284
  %v1363 = vunpack.c.h.b16 %v1284
  %v1364 = vunpack.c.l.b16 %v1285
  %v1365 = vunpack.c.h.b16 %v1285
  %v1366 = vunpack.c.l.b16 %v1286
  %v1367 = vunpack.c.h.b16 %v1286
  %v1368 = vunpack.c.l.b16 %v1287
  %v1369 = vunpack.c.h.b16 %v1287
  %v1370 = vunpack.c.l.b16 %v1288
  %v1371 = vunpack.c.h.b16 %v1288
  %v1372 = vunpack.c.l.b16 %v1289
  %v1373 = vunpack.c.h.b16 %v1289
  %v1374 = vunpack.c.l.b16 %v1290
  %v1375 = vunpack.c.h.b16 %v1290
  %v1376 = vunpack.c.l.b16 %v1291
  %v1377 = vunpack.c.h.b16 %v1291
  %v1378 = vunpack.c.l.b16 %v1292
  %v1379 = vunpack.c.h.b16 %v1292
  %v1380 = vunpack.c.l.b16 %v1293
  %v1381 = vunpack.c.h.b16 %v1293
  %v1382 = vunpack.c.l.b16 %v1294
  %v1383 = vunpack.c.h.b16 %v1294
  %v1384 = vunpack.c.l.b16 %v1295
  %v1385 = vunpack.c.h.b16 %v1295
  %v1386 = vunpack.c.l.b16 %v1296
  %v1387 = vunpack.c.h.b16 %v1296
  %v1388 = vunpack.c.l.b16 %v1297
  %v1389 = vunpack.c.h.b16 %v1297
  %v1390 = vunpack.c.l.b16 %v1298
  %v1391 = vunpack.c.h.b16 %v1298
  %v1392 = vunpack.c.l.b16 %v1299
  %v1393 = vunpack.c.h.b16 %v1299
  %v1394 = vunpack.c.l.b16 %v1300
  %v1395 = vunpack.c.h.b16 %v1300
  %v1396 = vunpack.c.l.b16 %v1301
  %v1397 = vunpack.c.h.b16 %v1301
  %v1398 = vpack.c.b16 %v1338, %v1334
  %v1399 = vpack.c.b16 %v1339, %v1335
  %v1400 = vpack.c.b16 %v1340, %v1336
  %v1401 = vpack.c.b16 %v1341, %v1337
  %v1402 = vpack.c.b16 %v1346, %v1342
  %v1403 = vpack.c.b16 %v1347, %v1343
  %v1404 = vpack.c.b16 %v1348, %v1344
  %v1405 = vpack.c.b16 %v1349, %v1345
  %v1406 = vpack.c.b16 %v1354, %v1350
  %v1407 = vpack.c.b16 %v1355, %v1351
  %v1408 = vpack.c.b16 %v1356, %v1352
  %v1409 = vpack.c.b16 %v1357, %v1353
  %v1410 = vpack.c.b16 %v1362, %v1358
  %v1411 = vpack.c.b16 %v1363, %v1359
  %v1412 = vpack.c.b16 %v1364, %v1360
  %v1413 = vpack.c.b16 %v1365, %v1361
  %v1414 = vpack.c.b16 %v1370, %v1366
  %v1415 = vpack.c.b16 %v1371, %v1367
  %v1416 = vpack.c.b16 %v1372, %v1368
  %v1417 = vpack.c.b16 %v1373, %v1369
  %v1418 = vpack.c.b16 %v1378, %v1374
  %v1419 = vpack.c.b16 %v1379, %v1375
  %v1420 = vpack.c.b16 %v1380, %v1376
  %v1421 = vpack.c.b16 %v1381, %v1377
  %v1422 = vpack.c.b16 %v1386, %v1382
  %v1423 = vpack.c.b16 %v1387, %v1383
  %v1424 = vpack.c.b16 %v1388, %v1384
  %v1425 = vpack.c.b16 %v1389, %v1385
  %v1426 = vpack.c.b16 %v1394, %v1390
  %v1427 = vpack.c.b16 %v1395, %v1391
  %v1428 = vpack.c.b16 %v1396, %v1392
  %v1429 = vpack.c.b16 %v1397, %v1393
  %1462 = vmatprep.subr.bf16.mxu0 %v1399
  %1463 = vmatpush1.bf16.msra.mxu0 %v1398
  %1464 = vmatprep.subr.bf16.mxu0 %v1403
  %1465 = vmatpush1.bf16.msra.mxu0 %v1402
  %1466 = vmatprep.subr.bf16.mxu0 %v1407
  %1467 = vmatpush1.bf16.msra.mxu0 %v1406
  %1468 = vmatprep.subr.bf16.mxu0 %v1411
  %1469 = vmatpush1.bf16.msra.mxu0 %v1410
  %1470 = vmatprep.subr.bf16.mxu0 %v1415
  %1471 = vmatpush1.bf16.msra.mxu0 %v1414
  %1472 = vmatprep.subr.bf16.mxu0 %v1419
  %1473 = vmatpush1.bf16.msra.mxu0 %v1418
  %1474 = vmatprep.subr.bf16.mxu0 %v1423
  %1475 = vmatpush1.bf16.msra.mxu0 %v1422
  %1476 = vmatprep.subr.bf16.mxu0 %v1427
  %1477 = vmatpush1.bf16.msra.mxu0 %v1426
  %1478 = vmatprep.subr.bf16.mxu0 0
  %1479 = vmatpush1.bf16.msra.mxu0 0
  %1480 = vmatprep.subr.bf16.mxu0 0
  %1481 = vmatpush1.bf16.msra.mxu0 0
  %1482 = vmatprep.subr.bf16.mxu0 0
  %1483 = vmatpush1.bf16.msra.mxu0 0
  %1484 = vmatprep.subr.bf16.mxu0 0
  %1485 = vmatpush1.bf16.msra.mxu0 0
  %1486 = vmatprep.subr.bf16.mxu0 0
  %1487 = vmatpush1.bf16.msra.mxu0 0
  %1488 = vmatprep.subr.bf16.mxu0 0
  %1489 = vmatpush1.bf16.msra.mxu0 0
  %1490 = vmatprep.subr.bf16.mxu0 0
  %1491 = vmatpush1.bf16.msra.mxu0 0
  %1492 = vmatprep.subr.bf16.mxu0 0
  %1493 = vmatpush1.bf16.msra.mxu0 0
  %1494 = vmatprep.mubr.bf16.mxu0 0
  %1495 = vmatmul.mubr.bf16.gmra.mrb[0].mxu0 %v1250
  %v1496 = vpop.f32.mrb[0].mxu0
  %v1497 = vadd.f32 0.0, %v1496
  %v1498 = vpop.f32.mrb[0].mxu0
  %v1499 = vadd.f32 0.0, %v1498
  %v1500 = vpop.f32.mrb[0].mxu0
  %v1501 = vadd.f32 0.0, %v1500
  %v1502 = vpop.f32.mrb[0].mxu0
  %v1503 = vadd.f32 0.0, %v1502
  %1504 = vdwg.mxu0
  %1505 = vmatprep.subr.bf16.mxu0 %v1401
  %1506 = vmatpush1.bf16.msra.mxu0 %v1400
  %1507 = vmatprep.subr.bf16.mxu0 %v1405
  %1508 = vmatpush1.bf16.msra.mxu0 %v1404
  %1509 = vmatprep.subr.bf16.mxu0 %v1409
  %1510 = vmatpush1.bf16.msra.mxu0 %v1408
  %1511 = vmatprep.subr.bf16.mxu0 %v1413
  %1512 = vmatpush1.bf16.msra.mxu0 %v1412
  %1513 = vmatprep.subr.bf16.mxu0 %v1417
  %1514 = vmatpush1.bf16.msra.mxu0 %v1416
  %1515 = vmatprep.subr.bf16.mxu0 %v1421
  %1516 = vmatpush1.bf16.msra.mxu0 %v1420
  %1517 = vmatprep.subr.bf16.mxu0 %v1425
  %1518 = vmatpush1.bf16.msra.mxu0 %v1424
  %1519 = vmatprep.subr.bf16.mxu0 %v1429
  %1520 = vmatpush1.bf16.msra.mxu0 %v1428
  %1521 = vmatprep.subr.bf16.mxu0 0
  %1522 = vmatpush1.bf16.msra.mxu0 0
  %1523 = vmatprep.subr.bf16.mxu0 0
  %1524 = vmatpush1.bf16.msra.mxu0 0
  %1525 = vmatprep.subr.bf16.mxu0 0
  %1526 = vmatpush1.bf16.msra.mxu0 0
  %1527 = vmatprep.subr.bf16.mxu0 0
  %1528 = vmatpush1.bf16.msra.mxu0 0
  %1529 = vmatprep.subr.bf16.mxu0 0
  %1530 = vmatpush1.bf16.msra.mxu0 0
  %1531 = vmatprep.subr.bf16.mxu0 0
  %1532 = vmatpush1.bf16.msra.mxu0 0
  %1533 = vmatprep.subr.bf16.mxu0 0
  %1534 = vmatpush1.bf16.msra.mxu0 0
  %1535 = vmatprep.subr.bf16.mxu0 0
  %1536 = vmatpush1.bf16.msra.mxu0 0
  %1537 = vmatprep.mubr.bf16.mxu0 0
  %1538 = vmatmul.mubr.bf16.gmra.mrb[0].mxu0 %v1250
  %v1539 = vpop.f32.mrb[0].mxu0
  %v1540 = vadd.f32 0.0, %v1539
  %v1541 = vpop.f32.mrb[0].mxu0
  %v1542 = vadd.f32 0.0, %v1541
  %v1543 = vpop.f32.mrb[0].mxu0
  %v1544 = vadd.f32 0.0, %v1543
  %v1545 = vpop.f32.mrb[0].mxu0
  %v1546 = vadd.f32 0.0, %v1545
  %1547 = vdwg.mxu0
  %v1548 = vadd.f32 %v1262, %v1497
  %v1549 = vadd.f32 %v1263, %v1499
  %v1550 = vadd.f32 %v1264, %v1540
  %v1551 = vadd.f32 %v1265, %v1542
  %v1552 = vadd.f32 %v1266, %v1501
  %v1553 = vadd.f32 %v1267, %v1503
  %v1554 = vadd.f32 %v1268, %v1544
  %v1555 = vadd.f32 %v1269, %v1546
  %v1556 = vxor.u32 %v1548, 2147483648
  %v1557 = vxor.u32 %v1552, 2147483648
  %v1558 = vmul.f32 %v1556, 1.442695
  %v1559 = vpow.pop %v1558
  %v1560 = vmul.f32 %v1557, 1.442695
  %v1561 = vpow.pop %v1560
  %v1562 = vadd.f32 %v1559, 1.0
  %v1563 = vadd.f32 %v1561, 1.0
  %v1564 = vrcp.pop %v1562
  %v1565 = vmul.f32 1.0, %v1564
  %v1566 = vrcp.pop %v1563
  %v1567 = vmul.f32 1.0, %v1566
  %v1568 = vxor.u32 %v1549, 2147483648
  %v1569 = vxor.u32 %v1553, 2147483648
  %v1570 = vmul.f32 %v1568, 1.442695
  %v1571 = vpow.pop %v1570
  %v1572 = vmul.f32 %v1569, 1.442695
  %v1573 = vpow.pop %v1572
  %v1574 = vadd.f32 %v1571, 1.0
  %v1575 = vadd.f32 %v1573, 1.0
  %v1576 = vrcp.pop %v1574
  %v1577 = vmul.f32 1.0, %v1576
  %v1578 = vrcp.pop %v1575
  %v1579 = vmul.f32 1.0, %v1578
  %v1580 = vtanh.pop %v1550
  %v1581 = vtanh.pop %v1554
  %v1582 = vxor.u32 %v1551, 2147483648
  %v1583 = vxor.u32 %v1555, 2147483648
  %v1584 = vmul.f32 %v1582, 1.442695
  %v1585 = vpow.pop %v1584
  %v1586 = vmul.f32 %v1583, 1.442695
  %v1587 = vpow.pop %v1586
  %v1588 = vadd.f32 %v1585, 1.0
  %v1589 = vadd.f32 %v1587, 1.0
  %v1590 = vrcp.pop %v1588
  %v1591 = vmul.f32 1.0, %v1590
  %v1592 = vrcp.pop %v1589
  %v1593 = vmul.f32 1.0, %v1592
  %v1594 = vmul.f32 %v1577, %v1244
  %v1595 = vmul.f32 %v1579, %v1245
  %v1596 = vmul.f32 %v1565, %v1580
  %v1597 = vmul.f32 %v1567, %v1581
  %v1598 = vadd.f32 %v1594, %v1596
  %v1599 = vadd.f32 %v1595, %v1597
  %v1600 = vtanh.pop %v1598
  %v1601 = vtanh.pop %v1599
  %v1602 = vmul.f32 %v1591, %v1600
  %v1603 = vmul.f32 %v1593, %v1601
  %v1604 = vpack.c.bf16 %v1603, %v1602
  %v1606 = vunpack.c.l.b16 %v1604
  %v1607 = vunpack.c.h.b16 %v1604
  %v1608 = vpack.c.b16 %v1606, %v1606
  %v1609 = vpack.c.b16 %v1607, %v1607
  %s1612 = scalar_lea.vmem %s7, 32
  %1613 = vst [vmem:[%s1612] sm:$0xf] %v1608
  %1614 = vst [vmem:[%s1612 + $0x8] sm:$0xf] %v1609
  %s1615 = scalar_lea.vmem [#allocation2], 192
  %v1616 = vld [vmem:[%s1615] sm:$0xff]
  %v1617 = vld [vmem:[%s1615 + $0x8] sm:$0xff]
  %v1618 = vld [vmem:[%s1615 + $0x10] sm:$0xff]
  %v1619 = vld [vmem:[%s1615 + $0x18] sm:$0xff]
  %v1620 = vld [vmem:[%s1615 + $0x20] sm:$0xff]
  %v1621 = vld [vmem:[%s1615 + $0x28] sm:$0xff]
  %v1622 = vld [vmem:[%s1615 + $0x30] sm:$0xff]
  %v1623 = vld [vmem:[%s1615 + $0x38] sm:$0xff]
  %v1624 = vld [vmem:[%s2] sm:$0xff]
  %v1625 = vld [vmem:[%s2 + $0x8] sm:$0xff]
  %v1626 = vld [vmem:[%s2 + $0x10] sm:$0xff]
  %v1627 = vld [vmem:[%s2 + $0x18] sm:$0xff]
  %v1628 = vld [vmem:[%s2 + $0x20] sm:$0xff]
  %v1629 = vld [vmem:[%s2 + $0x28] sm:$0xff]
  %v1630 = vld [vmem:[%s2 + $0x30] sm:$0xff]
  %v1631 = vld [vmem:[%s2 + $0x38] sm:$0xff]
  %v1632 = vld [vmem:[%s2 + $0x40] sm:$0xff]
  %v1633 = vld [vmem:[%s2 + $0x48] sm:$0xff]
  %v1634 = vld [vmem:[%s2 + $0x50] sm:$0xff]
  %v1635 = vld [vmem:[%s2 + $0x58] sm:$0xff]
  %v1636 = vld [vmem:[%s2 + $0x60] sm:$0xff]
  %v1637 = vld [vmem:[%s2 + $0x68] sm:$0xff]
  %v1638 = vld [vmem:[%s2 + $0x70] sm:$0xff]
  %v1639 = vld [vmem:[%s2 + $0x78] sm:$0xff]
  %v1640 = vld [vmem:[%s2 + $0x80] sm:$0xff]
  %v1641 = vld [vmem:[%s2 + $0x88] sm:$0xff]
  %v1642 = vld [vmem:[%s2 + $0x90] sm:$0xff]
  %v1643 = vld [vmem:[%s2 + $0x98] sm:$0xff]
  %v1644 = vld [vmem:[%s2 + $0xa0] sm:$0xff]
  %v1645 = vld [vmem:[%s2 + $0xa8] sm:$0xff]
  %v1646 = vld [vmem:[%s2 + $0xb0] sm:$0xff]
  %v1647 = vld [vmem:[%s2 + $0xb8] sm:$0xff]
  %v1648 = vld [vmem:[%s2 + $0xc0] sm:$0xff]
  %v1649 = vld [vmem:[%s2 + $0xc8] sm:$0xff]
  %v1650 = vld [vmem:[%s2 + $0xd0] sm:$0xff]
  %v1651 = vld [vmem:[%s2 + $0xd8] sm:$0xff]
  %v1652 = vld [vmem:[%s2 + $0xe0] sm:$0xff]
  %v1653 = vld [vmem:[%s2 + $0xe8] sm:$0xff]
  %v1654 = vld [vmem:[%s2 + $0xf0] sm:$0xff]
  %v1655 = vld [vmem:[%s2 + $0xf8] sm:$0xff]
  %v1688 = vunpack.c.l.b16 %v1624
  %v1689 = vunpack.c.h.b16 %v1624
  %v1690 = vunpack.c.l.b16 %v1625
  %v1691 = vunpack.c.h.b16 %v1625
  %v1692 = vunpack.c.l.b16 %v1626
  %v1693 = vunpack.c.h.b16 %v1626
  %v1694 = vunpack.c.l.b16 %v1627
  %v1695 = vunpack.c.h.b16 %v1627
  %v1696 = vunpack.c.l.b16 %v1628
  %v1697 = vunpack.c.h.b16 %v1628
  %v1698 = vunpack.c.l.b16 %v1629
  %v1699 = vunpack.c.h.b16 %v1629
  %v1700 = vunpack.c.l.b16 %v1630
  %v1701 = vunpack.c.h.b16 %v1630
  %v1702 = vunpack.c.l.b16 %v1631
  %v1703 = vunpack.c.h.b16 %v1631
  %v1704 = vunpack.c.l.b16 %v1632
  %v1705 = vunpack.c.h.b16 %v1632
  %v1706 = vunpack.c.l.b16 %v1633
  %v1707 = vunpack.c.h.b16 %v1633
  %v1708 = vunpack.c.l.b16 %v1634
  %v1709 = vunpack.c.h.b16 %v1634
  %v1710 = vunpack.c.l.b16 %v1635
  %v1711 = vunpack.c.h.b16 %v1635
  %v1712 = vunpack.c.l.b16 %v1636
  %v1713 = vunpack.c.h.b16 %v1636
  %v1714 = vunpack.c.l.b16 %v1637
  %v1715 = vunpack.c.h.b16 %v1637
  %v1716 = vunpack.c.l.b16 %v1638
  %v1717 = vunpack.c.h.b16 %v1638
  %v1718 = vunpack.c.l.b16 %v1639
  %v1719 = vunpack.c.h.b16 %v1639
  %v1720 = vunpack.c.l.b16 %v1640
  %v1721 = vunpack.c.h.b16 %v1640
  %v1722 = vunpack.c.l.b16 %v1641
  %v1723 = vunpack.c.h.b16 %v1641
  %v1724 = vunpack.c.l.b16 %v1642
  %v1725 = vunpack.c.h.b16 %v1642
  %v1726 = vunpack.c.l.b16 %v1643
  %v1727 = vunpack.c.h.b16 %v1643
  %v1728 = vunpack.c.l.b16 %v1644
  %v1729 = vunpack.c.h.b16 %v1644
  %v1730 = vunpack.c.l.b16 %v1645
  %v1731 = vunpack.c.h.b16 %v1645
  %v1732 = vunpack.c.l.b16 %v1646
  %v1733 = vunpack.c.h.b16 %v1646
  %v1734 = vunpack.c.l.b16 %v1647
  %v1735 = vunpack.c.h.b16 %v1647
  %v1736 = vunpack.c.l.b16 %v1648
  %v1737 = vunpack.c.h.b16 %v1648
  %v1738 = vunpack.c.l.b16 %v1649
  %v1739 = vunpack.c.h.b16 %v1649
  %v1740 = vunpack.c.l.b16 %v1650
  %v1741 = vunpack.c.h.b16 %v1650
  %v1742 = vunpack.c.l.b16 %v1651
  %v1743 = vunpack.c.h.b16 %v1651
  %v1744 = vunpack.c.l.b16 %v1652
  %v1745 = vunpack.c.h.b16 %v1652
  %v1746 = vunpack.c.l.b16 %v1653
  %v1747 = vunpack.c.h.b16 %v1653
  %v1748 = vunpack.c.l.b16 %v1654
  %v1749 = vunpack.c.h.b16 %v1654
  %v1750 = vunpack.c.l.b16 %v1655
  %v1751 = vunpack.c.h.b16 %v1655
  %v1752 = vpack.c.b16 %v1692, %v1688
  %v1753 = vpack.c.b16 %v1693, %v1689
  %v1754 = vpack.c.b16 %v1694, %v1690
  %v1755 = vpack.c.b16 %v1695, %v1691
  %v1756 = vpack.c.b16 %v1700, %v1696
  %v1757 = vpack.c.b16 %v1701, %v1697
  %v1758 = vpack.c.b16 %v1702, %v1698
  %v1759 = vpack.c.b16 %v1703, %v1699
  %v1760 = vpack.c.b16 %v1708, %v1704
  %v1761 = vpack.c.b16 %v1709, %v1705
  %v1762 = vpack.c.b16 %v1710, %v1706
  %v1763 = vpack.c.b16 %v1711, %v1707
  %v1764 = vpack.c.b16 %v1716, %v1712
  %v1765 = vpack.c.b16 %v1717, %v1713
  %v1766 = vpack.c.b16 %v1718, %v1714
  %v1767 = vpack.c.b16 %v1719, %v1715
  %v1768 = vpack.c.b16 %v1724, %v1720
  %v1769 = vpack.c.b16 %v1725, %v1721
  %v1770 = vpack.c.b16 %v1726, %v1722
  %v1771 = vpack.c.b16 %v1727, %v1723
  %v1772 = vpack.c.b16 %v1732, %v1728
  %v1773 = vpack.c.b16 %v1733, %v1729
  %v1774 = vpack.c.b16 %v1734, %v1730
  %v1775 = vpack.c.b16 %v1735, %v1731
  %v1776 = vpack.c.b16 %v1740, %v1736
  %v1777 = vpack.c.b16 %v1741, %v1737
  %v1778 = vpack.c.b16 %v1742, %v1738
  %v1779 = vpack.c.b16 %v1743, %v1739
  %v1780 = vpack.c.b16 %v1748, %v1744
  %v1781 = vpack.c.b16 %v1749, %v1745
  %v1782 = vpack.c.b16 %v1750, %v1746
  %v1783 = vpack.c.b16 %v1751, %v1747
  %1816 = vmatprep.subr.bf16.mxu0 %v1753
  %1817 = vmatpush1.bf16.msra.mxu0 %v1752
  %1818 = vmatprep.subr.bf16.mxu0 %v1757
  %1819 = vmatpush1.bf16.msra.mxu0 %v1756
  %1820 = vmatprep.subr.bf16.mxu0 %v1761
  %1821 = vmatpush1.bf16.msra.mxu0 %v1760
  %1822 = vmatprep.subr.bf16.mxu0 %v1765
  %1823 = vmatpush1.bf16.msra.mxu0 %v1764
  %1824 = vmatprep.subr.bf16.mxu0 %v1769
  %1825 = vmatpush1.bf16.msra.mxu0 %v1768
  %1826 = vmatprep.subr.bf16.mxu0 %v1773
  %1827 = vmatpush1.bf16.msra.mxu0 %v1772
  %1828 = vmatprep.subr.bf16.mxu0 %v1777
  %1829 = vmatpush1.bf16.msra.mxu0 %v1776
  %1830 = vmatprep.subr.bf16.mxu0 %v1781
  %1831 = vmatpush1.bf16.msra.mxu0 %v1780
  %1832 = vmatprep.subr.bf16.mxu0 0
  %1833 = vmatpush1.bf16.msra.mxu0 0
  %1834 = vmatprep.subr.bf16.mxu0 0
  %1835 = vmatpush1.bf16.msra.mxu0 0
  %1836 = vmatprep.subr.bf16.mxu0 0
  %1837 = vmatpush1.bf16.msra.mxu0 0
  %1838 = vmatprep.subr.bf16.mxu0 0
  %1839 = vmatpush1.bf16.msra.mxu0 0
  %1840 = vmatprep.subr.bf16.mxu0 0
  %1841 = vmatpush1.bf16.msra.mxu0 0
  %1842 = vmatprep.subr.bf16.mxu0 0
  %1843 = vmatpush1.bf16.msra.mxu0 0
  %1844 = vmatprep.subr.bf16.mxu0 0
  %1845 = vmatpush1.bf16.msra.mxu0 0
  %1846 = vmatprep.subr.bf16.mxu0 0
  %1847 = vmatpush1.bf16.msra.mxu0 0
  %1848 = vmatprep.mubr.bf16.mxu0 0
  %1849 = vmatmul.mubr.bf16.gmra.mrb[0].mxu0 %v1604
  %v1850 = vpop.f32.mrb[0].mxu0
  %v1851 = vadd.f32 0.0, %v1850
  %v1852 = vpop.f32.mrb[0].mxu0
  %v1853 = vadd.f32 0.0, %v1852
  %v1854 = vpop.f32.mrb[0].mxu0
  %v1855 = vadd.f32 0.0, %v1854
  %v1856 = vpop.f32.mrb[0].mxu0
  %v1857 = vadd.f32 0.0, %v1856
  %1858 = vdwg.mxu0
  %1859 = vmatprep.subr.bf16.mxu0 %v1755
  %1860 = vmatpush1.bf16.msra.mxu0 %v1754
  %1861 = vmatprep.subr.bf16.mxu0 %v1759
  %1862 = vmatpush1.bf16.msra.mxu0 %v1758
  %1863 = vmatprep.subr.bf16.mxu0 %v1763
  %1864 = vmatpush1.bf16.msra.mxu0 %v1762
  %1865 = vmatprep.subr.bf16.mxu0 %v1767
  %1866 = vmatpush1.bf16.msra.mxu0 %v1766
  %1867 = vmatprep.subr.bf16.mxu0 %v1771
  %1868 = vmatpush1.bf16.msra.mxu0 %v1770
  %1869 = vmatprep.subr.bf16.mxu0 %v1775
  %1870 = vmatpush1.bf16.msra.mxu0 %v1774
  %1871 = vmatprep.subr.bf16.mxu0 %v1779
  %1872 = vmatpush1.bf16.msra.mxu0 %v1778
  %1873 = vmatprep.subr.bf16.mxu0 %v1783
  %1874 = vmatpush1.bf16.msra.mxu0 %v1782
  %1875 = vmatprep.subr.bf16.mxu0 0
  %1876 = vmatpush1.bf16.msra.mxu0 0
  %1877 = vmatprep.subr.bf16.mxu0 0
  %1878 = vmatpush1.bf16.msra.mxu0 0
  %1879 = vmatprep.subr.bf16.mxu0 0
  %1880 = vmatpush1.bf16.msra.mxu0 0
  %1881 = vmatprep.subr.bf16.mxu0 0
  %1882 = vmatpush1.bf16.msra.mxu0 0
  %1883 = vmatprep.subr.bf16.mxu0 0
  %1884 = vmatpush1.bf16.msra.mxu0 0
  %1885 = vmatprep.subr.bf16.mxu0 0
  %1886 = vmatpush1.bf16.msra.mxu0 0
  %1887 = vmatprep.subr.bf16.mxu0 0
  %1888 = vmatpush1.bf16.msra.mxu0 0
  %1889 = vmatprep.subr.bf16.mxu0 0
  %1890 = vmatpush1.bf16.msra.mxu0 0
  %1891 = vmatprep.mubr.bf16.mxu0 0
  %1892 = vmatmul.mubr.bf16.gmra.mrb[0].mxu0 %v1604
  %v1893 = vpop.f32.mrb[0].mxu0
  %v1894 = vadd.f32 0.0, %v1893
  %v1895 = vpop.f32.mrb[0].mxu0
  %v1896 = vadd.f32 0.0, %v1895
  %v1897 = vpop.f32.mrb[0].mxu0
  %v1898 = vadd.f32 0.0, %v1897
  %v1899 = vpop.f32.mrb[0].mxu0
  %v1900 = vadd.f32 0.0, %v1899
  %1901 = vdwg.mxu0
  %v1902 = vadd.f32 %v1616, %v1851
  %v1903 = vadd.f32 %v1617, %v1853
  %v1904 = vadd.f32 %v1618, %v1894
  %v1905 = vadd.f32 %v1619, %v1896
  %v1906 = vadd.f32 %v1620, %v1855
  %v1907 = vadd.f32 %v1621, %v1857
  %v1908 = vadd.f32 %v1622, %v1898
  %v1909 = vadd.f32 %v1623, %v1900
  %v1910 = vxor.u32 %v1902, 2147483648
  %v1911 = vxor.u32 %v1906, 2147483648
  %v1912 = vmul.f32 %v1910, 1.442695
  %v1913 = vpow.pop %v1912
  %v1914 = vmul.f32 %v1911, 1.442695
  %v1915 = vpow.pop %v1914
  %v1916 = vadd.f32 %v1913, 1.0
  %v1917 = vadd.f32 %v1915, 1.0
  %v1918 = vrcp.pop %v1916
  %v1919 = vmul.f32 1.0, %v1918
  %v1920 = vrcp.pop %v1917
  %v1921 = vmul.f32 1.0, %v1920
  %v1922 = vxor.u32 %v1903, 2147483648
  %v1923 = vxor.u32 %v1907, 2147483648
  %v1924 = vmul.f32 %v1922, 1.442695
  %v1925 = vpow.pop %v1924
  %v1926 = vmul.f32 %v1923, 1.442695
  %v1927 = vpow.pop %v1926
  %v1928 = vadd.f32 %v1925, 1.0
  %v1929 = vadd.f32 %v1927, 1.0
  %v1930 = vrcp.pop %v1928
  %v1931 = vmul.f32 1.0, %v1930
  %v1932 = vrcp.pop %v1929
  %v1933 = vmul.f32 1.0, %v1932
  %v1934 = vtanh.pop %v1904
  %v1935 = vtanh.pop %v1908
  %v1936 = vxor.u32 %v1905, 2147483648
  %v1937 = vxor.u32 %v1909, 2147483648
  %v1938 = vmul.f32 %v1936, 1.442695
  %v1939 = vpow.pop %v1938
  %v1940 = vmul.f32 %v1937, 1.442695
  %v1941 = vpow.pop %v1940
  %v1942 = vadd.f32 %v1939, 1.0
  %v1943 = vadd.f32 %v1941, 1.0
  %v1944 = vrcp.pop %v1942
  %v1945 = vmul.f32 1.0, %v1944
  %v1946 = vrcp.pop %v1943
  %v1947 = vmul.f32 1.0, %v1946
  %v1948 = vmul.f32 %v1931, %v1598
  %v1949 = vmul.f32 %v1933, %v1599
  %v1950 = vmul.f32 %v1919, %v1934
  %v1951 = vmul.f32 %v1921, %v1935
  %v1952 = vadd.f32 %v1948, %v1950
  %v1953 = vadd.f32 %v1949, %v1951
  %v1954 = vtanh.pop %v1952
  %v1955 = vtanh.pop %v1953
  %v1956 = vmul.f32 %v1945, %v1954
  %v1957 = vmul.f32 %v1947, %v1955
  %v1958 = vpack.c.bf16 %v1957, %v1956
  %v1960 = vunpack.c.l.b16 %v1958
  %v1961 = vunpack.c.h.b16 %v1958
  %v1962 = vpack.c.b16 %v1960, %v1960
  %v1963 = vpack.c.b16 %v1961, %v1961
  %s1966 = scalar_lea.vmem %s7, 48
  %1967 = vst [vmem:[%s1966] sm:$0xf] %v1962
  %1968 = vst [vmem:[%s1966 + $0x8] sm:$0xf] %v1963
  %s1969 = scalar_lea.vmem [#allocation2], 256
  %v1970 = vld [vmem:[%s1969] sm:$0xff]
  %v1971 = vld [vmem:[%s1969 + $0x8] sm:$0xff]
  %v1972 = vld [vmem:[%s1969 + $0x10] sm:$0xff]
  %v1973 = vld [vmem:[%s1969 + $0x18] sm:$0xff]
  %v1974 = vld [vmem:[%s1969 + $0x20] sm:$0xff]
  %v1975 = vld [vmem:[%s1969 + $0x28] sm:$0xff]
  %v1976 = vld [vmem:[%s1969 + $0x30] sm:$0xff]
  %v1977 = vld [vmem:[%s1969 + $0x38] sm:$0xff]
  %v1978 = vld [vmem:[%s2] sm:$0xff]
  %v1979 = vld [vmem:[%s2 + $0x8] sm:$0xff]
  %v1980 = vld [vmem:[%s2 + $0x10] sm:$0xff]
  %v1981 = vld [vmem:[%s2 + $0x18] sm:$0xff]
  %v1982 = vld [vmem:[%s2 + $0x20] sm:$0xff]
  %v1983 = vld [vmem:[%s2 + $0x28] sm:$0xff]
  %v1984 = vld [vmem:[%s2 + $0x30] sm:$0xff]
  %v1985 = vld [vmem:[%s2 + $0x38] sm:$0xff]
  %v1986 = vld [vmem:[%s2 + $0x40] sm:$0xff]
  %v1987 = vld [vmem:[%s2 + $0x48] sm:$0xff]
  %v1988 = vld [vmem:[%s2 + $0x50] sm:$0xff]
  %v1989 = vld [vmem:[%s2 + $0x58] sm:$0xff]
  %v1990 = vld [vmem:[%s2 + $0x60] sm:$0xff]
  %v1991 = vld [vmem:[%s2 + $0x68] sm:$0xff]
  %v1992 = vld [vmem:[%s2 + $0x70] sm:$0xff]
  %v1993 = vld [vmem:[%s2 + $0x78] sm:$0xff]
  %v1994 = vld [vmem:[%s2 + $0x80] sm:$0xff]
  %v1995 = vld [vmem:[%s2 + $0x88] sm:$0xff]
  %v1996 = vld [vmem:[%s2 + $0x90] sm:$0xff]
  %v1997 = vld [vmem:[%s2 + $0x98] sm:$0xff]
  %v1998 = vld [vmem:[%s2 + $0xa0] sm:$0xff]
  %v1999 = vld [vmem:[%s2 + $0xa8] sm:$0xff]
  %v2000 = vld [vmem:[%s2 + $0xb0] sm:$0xff]
  %v2001 = vld [vmem:[%s2 + $0xb8] sm:$0xff]
  %v2002 = vld [vmem:[%s2 + $0xc0] sm:$0xff]
  %v2003 = vld [vmem:[%s2 + $0xc8] sm:$0xff]
  %v2004 = vld [vmem:[%s2 + $0xd0] sm:$0xff]
  %v2005 = vld [vmem:[%s2 + $0xd8] sm:$0xff]
  %v2006 = vld [vmem:[%s2 + $0xe0] sm:$0xff]
  %v2007 = vld [vmem:[%s2 + $0xe8] sm:$0xff]
  %v2008 = vld [vmem:[%s2 + $0xf0] sm:$0xff]
  %v2009 = vld [vmem:[%s2 + $0xf8] sm:$0xff]
  %v2042 = vunpack.c.l.b16 %v1978
  %v2043 = vunpack.c.h.b16 %v1978
  %v2044 = vunpack.c.l.b16 %v1979
  %v2045 = vunpack.c.h.b16 %v1979
  %v2046 = vunpack.c.l.b16 %v1980
  %v2047 = vunpack.c.h.b16 %v1980
  %v2048 = vunpack.c.l.b16 %v1981
  %v2049 = vunpack.c.h.b16 %v1981
  %v2050 = vunpack.c.l.b16 %v1982
  %v2051 = vunpack.c.h.b16 %v1982
  %v2052 = vunpack.c.l.b16 %v1983
  %v2053 = vunpack.c.h.b16 %v1983
  %v2054 = vunpack.c.l.b16 %v1984
  %v2055 = vunpack.c.h.b16 %v1984
  %v2056 = vunpack.c.l.b16 %v1985
  %v2057 = vunpack.c.h.b16 %v1985
  %v2058 = vunpack.c.l.b16 %v1986
  %v2059 = vunpack.c.h.b16 %v1986
  %v2060 = vunpack.c.l.b16 %v1987
  %v2061 = vunpack.c.h.b16 %v1987
  %v2062 = vunpack.c.l.b16 %v1988
  %v2063 = vunpack.c.h.b16 %v1988
  %v2064 = vunpack.c.l.b16 %v1989
  %v2065 = vunpack.c.h.b16 %v1989
  %v2066 = vunpack.c.l.b16 %v1990
  %v2067 = vunpack.c.h.b16 %v1990
  %v2068 = vunpack.c.l.b16 %v1991
  %v2069 = vunpack.c.h.b16 %v1991
  %v2070 = vunpack.c.l.b16 %v1992
  %v2071 = vunpack.c.h.b16 %v1992
  %v2072 = vunpack.c.l.b16 %v1993
  %v2073 = vunpack.c.h.b16 %v1993
  %v2074 = vunpack.c.l.b16 %v1994
  %v2075 = vunpack.c.h.b16 %v1994
  %v2076 = vunpack.c.l.b16 %v1995
  %v2077 = vunpack.c.h.b16 %v1995
  %v2078 = vunpack.c.l.b16 %v1996
  %v2079 = vunpack.c.h.b16 %v1996
  %v2080 = vunpack.c.l.b16 %v1997
  %v2081 = vunpack.c.h.b16 %v1997
  %v2082 = vunpack.c.l.b16 %v1998
  %v2083 = vunpack.c.h.b16 %v1998
  %v2084 = vunpack.c.l.b16 %v1999
  %v2085 = vunpack.c.h.b16 %v1999
  %v2086 = vunpack.c.l.b16 %v2000
  %v2087 = vunpack.c.h.b16 %v2000
  %v2088 = vunpack.c.l.b16 %v2001
  %v2089 = vunpack.c.h.b16 %v2001
  %v2090 = vunpack.c.l.b16 %v2002
  %v2091 = vunpack.c.h.b16 %v2002
  %v2092 = vunpack.c.l.b16 %v2003
  %v2093 = vunpack.c.h.b16 %v2003
  %v2094 = vunpack.c.l.b16 %v2004
  %v2095 = vunpack.c.h.b16 %v2004
  %v2096 = vunpack.c.l.b16 %v2005
  %v2097 = vunpack.c.h.b16 %v2005
  %v2098 = vunpack.c.l.b16 %v2006
  %v2099 = vunpack.c.h.b16 %v2006
  %v2100 = vunpack.c.l.b16 %v2007
  %v2101 = vunpack.c.h.b16 %v2007
  %v2102 = vunpack.c.l.b16 %v2008
  %v2103 = vunpack.c.h.b16 %v2008
  %v2104 = vunpack.c.l.b16 %v2009
  %v2105 = vunpack.c.h.b16 %v2009
  %v2106 = vpack.c.b16 %v2046, %v2042
  %v2107 = vpack.c.b16 %v2047, %v2043
  %v2108 = vpack.c.b16 %v2048, %v2044
  %v2109 = vpack.c.b16 %v2049, %v2045
  %v2110 = vpack.c.b16 %v2054, %v2050
  %v2111 = vpack.c.b16 %v2055, %v2051
  %v2112 = vpack.c.b16 %v2056, %v2052
  %v2113 = vpack.c.b16 %v2057, %v2053
  %v2114 = vpack.c.b16 %v2062, %v2058
  %v2115 = vpack.c.b16 %v2063, %v2059
  %v2116 = vpack.c.b16 %v2064, %v2060
  %v2117 = vpack.c.b16 %v2065, %v2061
  %v2118 = vpack.c.b16 %v2070, %v2066
  %v2119 = vpack.c.b16 %v2071, %v2067
  %v2120 = vpack.c.b16 %v2072, %v2068
  %v2121 = vpack.c.b16 %v2073, %v2069
  %v2122 = vpack.c.b16 %v2078, %v2074
  %v2123 = vpack.c.b16 %v2079, %v2075
  %v2124 = vpack.c.b16 %v2080, %v2076
  %v2125 = vpack.c.b16 %v2081, %v2077
  %v2126 = vpack.c.b16 %v2086, %v2082
  %v2127 = vpack.c.b16 %v2087, %v2083
  %v2128 = vpack.c.b16 %v2088, %v2084
  %v2129 = vpack.c.b16 %v2089, %v2085
  %v2130 = vpack.c.b16 %v2094, %v2090
  %v2131 = vpack.c.b16 %v2095, %v2091
  %v2132 = vpack.c.b16 %v2096, %v2092
  %v2133 = vpack.c.b16 %v2097, %v2093
  %v2134 = vpack.c.b16 %v2102, %v2098
  %v2135 = vpack.c.b16 %v2103, %v2099
  %v2136 = vpack.c.b16 %v2104, %v2100
  %v2137 = vpack.c.b16 %v2105, %v2101
  %2170 = vmatprep.subr.bf16.mxu0 %v2107
  %2171 = vmatpush1.bf16.msra.mxu0 %v2106
  %2172 = vmatprep.subr.bf16.mxu0 %v2111
  %2173 = vmatpush1.bf16.msra.mxu0 %v2110
  %2174 = vmatprep.subr.bf16.mxu0 %v2115
  %2175 = vmatpush1.bf16.msra.mxu0 %v2114
  %2176 = vmatprep.subr.bf16.mxu0 %v2119
  %2177 = vmatpush1.bf16.msra.mxu0 %v2118
  %2178 = vmatprep.subr.bf16.mxu0 %v2123
  %2179 = vmatpush1.bf16.msra.mxu0 %v2122
  %2180 = vmatprep.subr.bf16.mxu0 %v2127
  %2181 = vmatpush1.bf16.msra.mxu0 %v2126
  %2182 = vmatprep.subr.bf16.mxu0 %v2131
  %2183 = vmatpush1.bf16.msra.mxu0 %v2130
  %2184 = vmatprep.subr.bf16.mxu0 %v2135
  %2185 = vmatpush1.bf16.msra.mxu0 %v2134
  %2186 = vmatprep.subr.bf16.mxu0 0
  %2187 = vmatpush1.bf16.msra.mxu0 0
  %2188 = vmatprep.subr.bf16.mxu0 0
  %2189 = vmatpush1.bf16.msra.mxu0 0
  %2190 = vmatprep.subr.bf16.mxu0 0
  %2191 = vmatpush1.bf16.msra.mxu0 0
  %2192 = vmatprep.subr.bf16.mxu0 0
  %2193 = vmatpush1.bf16.msra.mxu0 0
  %2194 = vmatprep.subr.bf16.mxu0 0
  %2195 = vmatpush1.bf16.msra.mxu0 0
  %2196 = vmatprep.subr.bf16.mxu0 0
  %2197 = vmatpush1.bf16.msra.mxu0 0
  %2198 = vmatprep.subr.bf16.mxu0 0
  %2199 = vmatpush1.bf16.msra.mxu0 0
  %2200 = vmatprep.subr.bf16.mxu0 0
  %2201 = vmatpush1.bf16.msra.mxu0 0
  %2202 = vmatprep.mubr.bf16.mxu0 0
  %2203 = vmatmul.mubr.bf16.gmra.mrb[0].mxu0 %v1958
  %v2204 = vpop.f32.mrb[0].mxu0
  %v2205 = vadd.f32 0.0, %v2204
  %v2206 = vpop.f32.mrb[0].mxu0
  %v2207 = vadd.f32 0.0, %v2206
  %v2208 = vpop.f32.mrb[0].mxu0
  %v2209 = vadd.f32 0.0, %v2208
  %v2210 = vpop.f32.mrb[0].mxu0
  %v2211 = vadd.f32 0.0, %v2210
  %2212 = vdwg.mxu0
  %2213 = vmatprep.subr.bf16.mxu0 %v2109
  %2214 = vmatpush1.bf16.msra.mxu0 %v2108
  %2215 = vmatprep.subr.bf16.mxu0 %v2113
  %2216 = vmatpush1.bf16.msra.mxu0 %v2112
  %2217 = vmatprep.subr.bf16.mxu0 %v2117
  %2218 = vmatpush1.bf16.msra.mxu0 %v2116
  %2219 = vmatprep.subr.bf16.mxu0 %v2121
  %2220 = vmatpush1.bf16.msra.mxu0 %v2120
  %2221 = vmatprep.subr.bf16.mxu0 %v2125
  %2222 = vmatpush1.bf16.msra.mxu0 %v2124
  %2223 = vmatprep.subr.bf16.mxu0 %v2129
  %2224 = vmatpush1.bf16.msra.mxu0 %v2128
  %2225 = vmatprep.subr.bf16.mxu0 %v2133
  %2226 = vmatpush1.bf16.msra.mxu0 %v2132
  %2227 = vmatprep.subr.bf16.mxu0 %v2137
  %2228 = vmatpush1.bf16.msra.mxu0 %v2136
  %2229 = vmatprep.subr.bf16.mxu0 0
  %2230 = vmatpush1.bf16.msra.mxu0 0
  %2231 = vmatprep.subr.bf16.mxu0 0
  %2232 = vmatpush1.bf16.msra.mxu0 0
  %2233 = vmatprep.subr.bf16.mxu0 0
  %2234 = vmatpush1.bf16.msra.mxu0 0
  %2235 = vmatprep.subr.bf16.mxu0 0
  %2236 = vmatpush1.bf16.msra.mxu0 0
  %2237 = vmatprep.subr.bf16.mxu0 0
  %2238 = vmatpush1.bf16.msra.mxu0 0
  %2239 = vmatprep.subr.bf16.mxu0 0
  %2240 = vmatpush1.bf16.msra.mxu0 0
  %2241 = vmatprep.subr.bf16.mxu0 0
  %2242 = vmatpush1.bf16.msra.mxu0 0
  %2243 = vmatprep.subr.bf16.mxu0 0
  %2244 = vmatpush1.bf16.msra.mxu0 0
  %2245 = vmatprep.mubr.bf16.mxu0 0
  %2246 = vmatmul.mubr.bf16.gmra.mrb[0].mxu0 %v1958
  %v2247 = vpop.f32.mrb[0].mxu0
  %v2248 = vadd.f32 0.0, %v2247
  %v2249 = vpop.f32.mrb[0].mxu0
  %v2250 = vadd.f32 0.0, %v2249
  %v2251 = vpop.f32.mrb[0].mxu0
  %v2252 = vadd.f32 0.0, %v2251
  %v2253 = vpop.f32.mrb[0].mxu0
  %v2254 = vadd.f32 0.0, %v2253
  %2255 = vdwg.mxu0
  %v2256 = vadd.f32 %v1970, %v2205
  %v2257 = vadd.f32 %v1971, %v2207
  %v2258 = vadd.f32 %v1972, %v2248
  %v2259 = vadd.f32 %v1973, %v2250
  %v2260 = vadd.f32 %v1974, %v2209
  %v2261 = vadd.f32 %v1975, %v2211
  %v2262 = vadd.f32 %v1976, %v2252
  %v2263 = vadd.f32 %v1977, %v2254
  %v2264 = vxor.u32 %v2256, 2147483648
  %v2265 = vxor.u32 %v2260, 2147483648
  %v2266 = vmul.f32 %v2264, 1.442695
  %v2267 = vpow.pop %v2266
  %v2268 = vmul.f32 %v2265, 1.442695
  %v2269 = vpow.pop %v2268
  %v2270 = vadd.f32 %v2267, 1.0
  %v2271 = vadd.f32 %v2269, 1.0
  %v2272 = vrcp.pop %v2270
  %v2273 = vmul.f32 1.0, %v2272
  %v2274 = vrcp.pop %v2271
  %v2275 = vmul.f32 1.0, %v2274
  %v2276 = vxor.u32 %v2257, 2147483648
  %v2277 = vxor.u32 %v2261, 2147483648
  %v2278 = vmul.f32 %v2276, 1.442695
  %v2279 = vpow.pop %v2278
  %v2280 = vmul.f32 %v2277, 1.442695
  %v2281 = vpow.pop %v2280
  %v2282 = vadd.f32 %v2279, 1.0
  %v2283 = vadd.f32 %v2281, 1.0
  %v2284 = vrcp.pop %v2282
  %v2285 = vmul.f32 1.0, %v2284
  %v2286 = vrcp.pop %v2283
  %v2287 = vmul.f32 1.0, %v2286
  %v2288 = vtanh.pop %v2258
  %v2289 = vtanh.pop %v2262
  %v2290 = vxor.u32 %v2259, 2147483648
  %v2291 = vxor.u32 %v2263, 2147483648
  %v2292 = vmul.f32 %v2290, 1.442695
  %v2293 = vpow.pop %v2292
  %v2294 = vmul.f32 %v2291, 1.442695
  %v2295 = vpow.pop %v2294
  %v2296 = vadd.f32 %v2293, 1.0
  %v2297 = vadd.f32 %v2295, 1.0
  %v2298 = vrcp.pop %v2296
  %v2299 = vmul.f32 1.0, %v2298
  %v2300 = vrcp.pop %v2297
  %v2301 = vmul.f32 1.0, %v2300
  %v2302 = vmul.f32 %v2285, %v1952
  %v2303 = vmul.f32 %v2287, %v1953
  %v2304 = vmul.f32 %v2273, %v2288
  %v2305 = vmul.f32 %v2275, %v2289
  %v2306 = vadd.f32 %v2302, %v2304
  %v2307 = vadd.f32 %v2303, %v2305
  %v2308 = vtanh.pop %v2306
  %v2309 = vtanh.pop %v2307
  %v2310 = vmul.f32 %v2299, %v2308
  %v2311 = vmul.f32 %v2301, %v2309
  %v2312 = vpack.c.bf16 %v2311, %v2310
  %v2314 = vunpack.c.l.b16 %v2312
  %v2315 = vunpack.c.h.b16 %v2312
  %v2316 = vpack.c.b16 %v2314, %v2314
  %v2317 = vpack.c.b16 %v2315, %v2315
  %s2320 = scalar_lea.vmem %s7, 64
  %2321 = vst [vmem:[%s2320] sm:$0xf] %v2316
  %2322 = vst [vmem:[%s2320 + $0x8] sm:$0xf] %v2317
  %s2323 = scalar_lea.vmem [#allocation2], 320
  %v2324 = vld [vmem:[%s2323] sm:$0xff]
  %v2325 = vld [vmem:[%s2323 + $0x8] sm:$0xff]
  %v2326 = vld [vmem:[%s2323 + $0x10] sm:$0xff]
  %v2327 = vld [vmem:[%s2323 + $0x18] sm:$0xff]
  %v2328 = vld [vmem:[%s2323 + $0x20] sm:$0xff]
  %v2329 = vld [vmem:[%s2323 + $0x28] sm:$0xff]
  %v2330 = vld [vmem:[%s2323 + $0x30] sm:$0xff]
  %v2331 = vld [vmem:[%s2323 + $0x38] sm:$0xff]
  %v2332 = vld [vmem:[%s2] sm:$0xff]
  %v2333 = vld [vmem:[%s2 + $0x8] sm:$0xff]
  %v2334 = vld [vmem:[%s2 + $0x10] sm:$0xff]
  %v2335 = vld [vmem:[%s2 + $0x18] sm:$0xff]
  %v2336 = vld [vmem:[%s2 + $0x20] sm:$0xff]
  %v2337 = vld [vmem:[%s2 + $0x28] sm:$0xff]
  %v2338 = vld [vmem:[%s2 + $0x30] sm:$0xff]
  %v2339 = vld [vmem:[%s2 + $0x38] sm:$0xff]
  %v2340 = vld [vmem:[%s2 + $0x40] sm:$0xff]
  %v2341 = vld [vmem:[%s2 + $0x48] sm:$0xff]
  %v2342 = vld [vmem:[%s2 + $0x50] sm:$0xff]
  %v2343 = vld [vmem:[%s2 + $0x58] sm:$0xff]
  %v2344 = vld [vmem:[%s2 + $0x60] sm:$0xff]
  %v2345 = vld [vmem:[%s2 + $0x68] sm:$0xff]
  %v2346 = vld [vmem:[%s2 + $0x70] sm:$0xff]
  %v2347 = vld [vmem:[%s2 + $0x78] sm:$0xff]
  %v2348 = vld [vmem:[%s2 + $0x80] sm:$0xff]
  %v2349 = vld [vmem:[%s2 + $0x88] sm:$0xff]
  %v2350 = vld [vmem:[%s2 + $0x90] sm:$0xff]
  %v2351 = vld [vmem:[%s2 + $0x98] sm:$0xff]
  %v2352 = vld [vmem:[%s2 + $0xa0] sm:$0xff]
  %v2353 = vld [vmem:[%s2 + $0xa8] sm:$0xff]
  %v2354 = vld [vmem:[%s2 + $0xb0] sm:$0xff]
  %v2355 = vld [vmem:[%s2 + $0xb8] sm:$0xff]
  %v2356 = vld [vmem:[%s2 + $0xc0] sm:$0xff]
  %v2357 = vld [vmem:[%s2 + $0xc8] sm:$0xff]
  %v2358 = vld [vmem:[%s2 + $0xd0] sm:$0xff]
  %v2359 = vld [vmem:[%s2 + $0xd8] sm:$0xff]
  %v2360 = vld [vmem:[%s2 + $0xe0] sm:$0xff]
  %v2361 = vld [vmem:[%s2 + $0xe8] sm:$0xff]
  %v2362 = vld [vmem:[%s2 + $0xf0] sm:$0xff]
  %v2363 = vld [vmem:[%s2 + $0xf8] sm:$0xff]
  %v2396 = vunpack.c.l.b16 %v2332
  %v2397 = vunpack.c.h.b16 %v2332
  %v2398 = vunpack.c.l.b16 %v2333
  %v2399 = vunpack.c.h.b16 %v2333
  %v2400 = vunpack.c.l.b16 %v2334
  %v2401 = vunpack.c.h.b16 %v2334
  %v2402 = vunpack.c.l.b16 %v2335
  %v2403 = vunpack.c.h.b16 %v2335
  %v2404 = vunpack.c.l.b16 %v2336
  %v2405 = vunpack.c.h.b16 %v2336
  %v2406 = vunpack.c.l.b16 %v2337
  %v2407 = vunpack.c.h.b16 %v2337
  %v2408 = vunpack.c.l.b16 %v2338
  %v2409 = vunpack.c.h.b16 %v2338
  %v2410 = vunpack.c.l.b16 %v2339
  %v2411 = vunpack.c.h.b16 %v2339
  %v2412 = vunpack.c.l.b16 %v2340
  %v2413 = vunpack.c.h.b16 %v2340
  %v2414 = vunpack.c.l.b16 %v2341
  %v2415 = vunpack.c.h.b16 %v2341
  %v2416 = vunpack.c.l.b16 %v2342
  %v2417 = vunpack.c.h.b16 %v2342
  %v2418 = vunpack.c.l.b16 %v2343
  %v2419 = vunpack.c.h.b16 %v2343
  %v2420 = vunpack.c.l.b16 %v2344
  %v2421 = vunpack.c.h.b16 %v2344
  %v2422 = vunpack.c.l.b16 %v2345
  %v2423 = vunpack.c.h.b16 %v2345
  %v2424 = vunpack.c.l.b16 %v2346
  %v2425 = vunpack.c.h.b16 %v2346
  %v2426 = vunpack.c.l.b16 %v2347
  %v2427 = vunpack.c.h.b16 %v2347
  %v2428 = vunpack.c.l.b16 %v2348
  %v2429 = vunpack.c.h.b16 %v2348
  %v2430 = vunpack.c.l.b16 %v2349
  %v2431 = vunpack.c.h.b16 %v2349
  %v2432 = vunpack.c.l.b16 %v2350
  %v2433 = vunpack.c.h.b16 %v2350
  %v2434 = vunpack.c.l.b16 %v2351
  %v2435 = vunpack.c.h.b16 %v2351
  %v2436 = vunpack.c.l.b16 %v2352
  %v2437 = vunpack.c.h.b16 %v2352
  %v2438 = vunpack.c.l.b16 %v2353
  %v2439 = vunpack.c.h.b16 %v2353
  %v2440 = vunpack.c.l.b16 %v2354
  %v2441 = vunpack.c.h.b16 %v2354
  %v2442 = vunpack.c.l.b16 %v2355
  %v2443 = vunpack.c.h.b16 %v2355
  %v2444 = vunpack.c.l.b16 %v2356
  %v2445 = vunpack.c.h.b16 %v2356
  %v2446 = vunpack.c.l.b16 %v2357
  %v2447 = vunpack.c.h.b16 %v2357
  %v2448 = vunpack.c.l.b16 %v2358
  %v2449 = vunpack.c.h.b16 %v2358
  %v2450 = vunpack.c.l.b16 %v2359
  %v2451 = vunpack.c.h.b16 %v2359
  %v2452 = vunpack.c.l.b16 %v2360
  %v2453 = vunpack.c.h.b16 %v2360
  %v2454 = vunpack.c.l.b16 %v2361
  %v2455 = vunpack.c.h.b16 %v2361
  %v2456 = vunpack.c.l.b16 %v2362
  %v2457 = vunpack.c.h.b16 %v2362
  %v2458 = vunpack.c.l.b16 %v2363
  %v2459 = vunpack.c.h.b16 %v2363
  %v2460 = vpack.c.b16 %v2400, %v2396
  %v2461 = vpack.c.b16 %v2401, %v2397
  %v2462 = vpack.c.b16 %v2402, %v2398
  %v2463 = vpack.c.b16 %v2403, %v2399
  %v2464 = vpack.c.b16 %v2408, %v2404
  %v2465 = vpack.c.b16 %v2409, %v2405
  %v2466 = vpack.c.b16 %v2410, %v2406
  %v2467 = vpack.c.b16 %v2411, %v2407
  %v2468 = vpack.c.b16 %v2416, %v2412
  %v2469 = vpack.c.b16 %v2417, %v2413
  %v2470 = vpack.c.b16 %v2418, %v2414
  %v2471 = vpack.c.b16 %v2419, %v2415
  %v2472 = vpack.c.b16 %v2424, %v2420
  %v2473 = vpack.c.b16 %v2425, %v2421
  %v2474 = vpack.c.b16 %v2426, %v2422
  %v2475 = vpack.c.b16 %v2427, %v2423
  %v2476 = vpack.c.b16 %v2432, %v2428
  %v2477 = vpack.c.b16 %v2433, %v2429
  %v2478 = vpack.c.b16 %v2434, %v2430
  %v2479 = vpack.c.b16 %v2435, %v2431
  %v2480 = vpack.c.b16 %v2440, %v2436
  %v2481 = vpack.c.b16 %v2441, %v2437
  %v2482 = vpack.c.b16 %v2442, %v2438
  %v2483 = vpack.c.b16 %v2443, %v2439
  %v2484 = vpack.c.b16 %v2448, %v2444
  %v2485 = vpack.c.b16 %v2449, %v2445
  %v2486 = vpack.c.b16 %v2450, %v2446
  %v2487 = vpack.c.b16 %v2451, %v2447
  %v2488 = vpack.c.b16 %v2456, %v2452
  %v2489 = vpack.c.b16 %v2457, %v2453
  %v2490 = vpack.c.b16 %v2458, %v2454
  %v2491 = vpack.c.b16 %v2459, %v2455
  %2524 = vmatprep.subr.bf16.mxu0 %v2461
  %2525 = vmatpush1.bf16.msra.mxu0 %v2460
  %2526 = vmatprep.subr.bf16.mxu0 %v2465
  %2527 = vmatpush1.bf16.msra.mxu0 %v2464
  %2528 = vmatprep.subr.bf16.mxu0 %v2469
  %2529 = vmatpush1.bf16.msra.mxu0 %v2468
  %2530 = vmatprep.subr.bf16.mxu0 %v2473
  %2531 = vmatpush1.bf16.msra.mxu0 %v2472
  %2532 = vmatprep.subr.bf16.mxu0 %v2477
  %2533 = vmatpush1.bf16.msra.mxu0 %v2476
  %2534 = vmatprep.subr.bf16.mxu0 %v2481
  %2535 = vmatpush1.bf16.msra.mxu0 %v2480
  %2536 = vmatprep.subr.bf16.mxu0 %v2485
  %2537 = vmatpush1.bf16.msra.mxu0 %v2484
  %2538 = vmatprep.subr.bf16.mxu0 %v2489
  %2539 = vmatpush1.bf16.msra.mxu0 %v2488
  %2540 = vmatprep.subr.bf16.mxu0 0
  %2541 = vmatpush1.bf16.msra.mxu0 0
  %2542 = vmatprep.subr.bf16.mxu0 0
  %2543 = vmatpush1.bf16.msra.mxu0 0
  %2544 = vmatprep.subr.bf16.mxu0 0
  %2545 = vmatpush1.bf16.msra.mxu0 0
  %2546 = vmatprep.subr.bf16.mxu0 0
  %2547 = vmatpush1.bf16.msra.mxu0 0
  %2548 = vmatprep.subr.bf16.mxu0 0
  %2549 = vmatpush1.bf16.msra.mxu0 0
  %2550 = vmatprep.subr.bf16.mxu0 0
  %2551 = vmatpush1.bf16.msra.mxu0 0
  %2552 = vmatprep.subr.bf16.mxu0 0
  %2553 = vmatpush1.bf16.msra.mxu0 0
  %2554 = vmatprep.subr.bf16.mxu0 0
  %2555 = vmatpush1.bf16.msra.mxu0 0
  %2556 = vmatprep.mubr.bf16.mxu0 0
  %2557 = vmatmul.mubr.bf16.gmra.mrb[0].mxu0 %v2312
  %v2558 = vpop.f32.mrb[0].mxu0
  %v2559 = vadd.f32 0.0, %v2558
  %v2560 = vpop.f32.mrb[0].mxu0
  %v2561 = vadd.f32 0.0, %v2560
  %v2562 = vpop.f32.mrb[0].mxu0
  %v2563 = vadd.f32 0.0, %v2562
  %v2564 = vpop.f32.mrb[0].mxu0
  %v2565 = vadd.f32 0.0, %v2564
  %2566 = vdwg.mxu0
  %2567 = vmatprep.subr.bf16.mxu0 %v2463
  %2568 = vmatpush1.bf16.msra.mxu0 %v2462
  %2569 = vmatprep.subr.bf16.mxu0 %v2467
  %2570 = vmatpush1.bf16.msra.mxu0 %v2466
  %2571 = vmatprep.subr.bf16.mxu0 %v2471
  %2572 = vmatpush1.bf16.msra.mxu0 %v2470
  %2573 = vmatprep.subr.bf16.mxu0 %v2475
  %2574 = vmatpush1.bf16.msra.mxu0 %v2474
  %2575 = vmatprep.subr.bf16.mxu0 %v2479
  %2576 = vmatpush1.bf16.msra.mxu0 %v2478
  %2577 = vmatprep.subr.bf16.mxu0 %v2483
  %2578 = vmatpush1.bf16.msra.mxu0 %v2482
  %2579 = vmatprep.subr.bf16.mxu0 %v2487
  %2580 = vmatpush1.bf16.msra.mxu0 %v2486
  %2581 = vmatprep.subr.bf16.mxu0 %v2491
  %2582 = vmatpush1.bf16.msra.mxu0 %v2490
  %2583 = vmatprep.subr.bf16.mxu0 0
  %2584 = vmatpush1.bf16.msra.mxu0 0
  %2585 = vmatprep.subr.bf16.mxu0 0
  %2586 = vmatpush1.bf16.msra.mxu0 0
  %2587 = vmatprep.subr.bf16.mxu0 0
  %2588 = vmatpush1.bf16.msra.mxu0 0
  %2589 = vmatprep.subr.bf16.mxu0 0
  %2590 = vmatpush1.bf16.msra.mxu0 0
  %2591 = vmatprep.subr.bf16.mxu0 0
  %2592 = vmatpush1.bf16.msra.mxu0 0
  %2593 = vmatprep.subr.bf16.mxu0 0
  %2594 = vmatpush1.bf16.msra.mxu0 0
  %2595 = vmatprep.subr.bf16.mxu0 0
  %2596 = vmatpush1.bf16.msra.mxu0 0
  %2597 = vmatprep.subr.bf16.mxu0 0
  %2598 = vmatpush1.bf16.msra.mxu0 0
  %2599 = vmatprep.mubr.bf16.mxu0 0
  %2600 = vmatmul.mubr.bf16.gmra.mrb[0].mxu0 %v2312
  %v2601 = vpop.f32.mrb[0].mxu0
  %v2602 = vadd.f32 0.0, %v2601
  %v2603 = vpop.f32.mrb[0].mxu0
  %v2604 = vadd.f32 0.0, %v2603
  %v2605 = vpop.f32.mrb[0].mxu0
  %v2606 = vadd.f32 0.0, %v2605
  %v2607 = vpop.f32.mrb[0].mxu0
  %v2608 = vadd.f32 0.0, %v2607
  %2609 = vdwg.mxu0
  %v2610 = vadd.f32 %v2324, %v2559
  %v2611 = vadd.f32 %v2325, %v2561
  %v2612 = vadd.f32 %v2326, %v2602
  %v2613 = vadd.f32 %v2327, %v2604
  %v2614 = vadd.f32 %v2328, %v2563
  %v2615 = vadd.f32 %v2329, %v2565
  %v2616 = vadd.f32 %v2330, %v2606
  %v2617 = vadd.f32 %v2331, %v2608
  %v2618 = vxor.u32 %v2610, 2147483648
  %v2619 = vxor.u32 %v2614, 2147483648
  %v2620 = vmul.f32 %v2618, 1.442695
  %v2621 = vpow.pop %v2620
  %v2622 = vmul.f32 %v2619, 1.442695
  %v2623 = vpow.pop %v2622
  %v2624 = vadd.f32 %v2621, 1.0
  %v2625 = vadd.f32 %v2623, 1.0
  %v2626 = vrcp.pop %v2624
  %v2627 = vmul.f32 1.0, %v2626
  %v2628 = vrcp.pop %v2625
  %v2629 = vmul.f32 1.0, %v2628
  %v2630 = vxor.u32 %v2611, 2147483648
  %v2631 = vxor.u32 %v2615, 2147483648
  %v2632 = vmul.f32 %v2630, 1.442695
  %v2633 = vpow.pop %v2632
  %v2634 = vmul.f32 %v2631, 1.442695
  %v2635 = vpow.pop %v2634
  %v2636 = vadd.f32 %v2633, 1.0
  %v2637 = vadd.f32 %v2635, 1.0
  %v2638 = vrcp.pop %v2636
  %v2639 = vmul.f32 1.0, %v2638
  %v2640 = vrcp.pop %v2637
  %v2641 = vmul.f32 1.0, %v2640
  %v2642 = vtanh.pop %v2612
  %v2643 = vtanh.pop %v2616
  %v2644 = vxor.u32 %v2613, 2147483648
  %v2645 = vxor.u32 %v2617, 2147483648
  %v2646 = vmul.f32 %v2644, 1.442695
  %v2647 = vpow.pop %v2646
  %v2648 = vmul.f32 %v2645, 1.442695
  %v2649 = vpow.pop %v2648
  %v2650 = vadd.f32 %v2647, 1.0
  %v2651 = vadd.f32 %v2649, 1.0
  %v2652 = vrcp.pop %v2650
  %v2653 = vmul.f32 1.0, %v2652
  %v2654 = vrcp.pop %v2651
  %v2655 = vmul.f32 1.0, %v2654
  %v2656 = vmul.f32 %v2639, %v2306
  %v2657 = vmul.f32 %v2641, %v2307
  %v2658 = vmul.f32 %v2627, %v2642
  %v2659 = vmul.f32 %v2629, %v2643
  %v2660 = vadd.f32 %v2656, %v2658
  %v2661 = vadd.f32 %v2657, %v2659
  %v2662 = vtanh.pop %v2660
  %v2663 = vtanh.pop %v2661
  %v2664 = vmul.f32 %v2653, %v2662
  %v2665 = vmul.f32 %v2655, %v2663
  %v2666 = vpack.c.bf16 %v2665, %v2664
  %v2668 = vunpack.c.l.b16 %v2666
  %v2669 = vunpack.c.h.b16 %v2666
  %v2670 = vpack.c.b16 %v2668, %v2668
  %v2671 = vpack.c.b16 %v2669, %v2669
  %s2674 = scalar_lea.vmem %s7, 80
  %2675 = vst [vmem:[%s2674] sm:$0xf] %v2670
  %2676 = vst [vmem:[%s2674 + $0x8] sm:$0xf] %v2671
  %s2677 = scalar_lea.vmem [#allocation2], 384
  %v2678 = vld [vmem:[%s2677] sm:$0xff]
  %v2679 = vld [vmem:[%s2677 + $0x8] sm:$0xff]
  %v2680 = vld [vmem:[%s2677 + $0x10] sm:$0xff]
  %v2681 = vld [vmem:[%s2677 + $0x18] sm:$0xff]
  %v2682 = vld [vmem:[%s2677 + $0x20] sm:$0xff]
  %v2683 = vld [vmem:[%s2677 + $0x28] sm:$0xff]
  %v2684 = vld [vmem:[%s2677 + $0x30] sm:$0xff]
  %v2685 = vld [vmem:[%s2677 + $0x38] sm:$0xff]
  %v2686 = vld [vmem:[%s2] sm:$0xff]
  %v2687 = vld [vmem:[%s2 + $0x8] sm:$0xff]
  %v2688 = vld [vmem:[%s2 + $0x10] sm:$0xff]
  %v2689 = vld [vmem:[%s2 + $0x18] sm:$0xff]
  %v2690 = vld [vmem:[%s2 + $0x20] sm:$0xff]
  %v2691 = vld [vmem:[%s2 + $0x28] sm:$0xff]
  %v2692 = vld [vmem:[%s2 + $0x30] sm:$0xff]
  %v2693 = vld [vmem:[%s2 + $0x38] sm:$0xff]
  %v2694 = vld [vmem:[%s2 + $0x40] sm:$0xff]
  %v2695 = vld [vmem:[%s2 + $0x48] sm:$0xff]
  %v2696 = vld [vmem:[%s2 + $0x50] sm:$0xff]
  %v2697 = vld [vmem:[%s2 + $0x58] sm:$0xff]
  %v2698 = vld [vmem:[%s2 + $0x60] sm:$0xff]
  %v2699 = vld [vmem:[%s2 + $0x68] sm:$0xff]
  %v2700 = vld [vmem:[%s2 + $0x70] sm:$0xff]
  %v2701 = vld [vmem:[%s2 + $0x78] sm:$0xff]
  %v2702 = vld [vmem:[%s2 + $0x80] sm:$0xff]
  %v2703 = vld [vmem:[%s2 + $0x88] sm:$0xff]
  %v2704 = vld [vmem:[%s2 + $0x90] sm:$0xff]
  %v2705 = vld [vmem:[%s2 + $0x98] sm:$0xff]
  %v2706 = vld [vmem:[%s2 + $0xa0] sm:$0xff]
  %v2707 = vld [vmem:[%s2 + $0xa8] sm:$0xff]
  %v2708 = vld [vmem:[%s2 + $0xb0] sm:$0xff]
  %v2709 = vld [vmem:[%s2 + $0xb8] sm:$0xff]
  %v2710 = vld [vmem:[%s2 + $0xc0] sm:$0xff]
  %v2711 = vld [vmem:[%s2 + $0xc8] sm:$0xff]
  %v2712 = vld [vmem:[%s2 + $0xd0] sm:$0xff]
  %v2713 = vld [vmem:[%s2 + $0xd8] sm:$0xff]
  %v2714 = vld [vmem:[%s2 + $0xe0] sm:$0xff]
  %v2715 = vld [vmem:[%s2 + $0xe8] sm:$0xff]
  %v2716 = vld [vmem:[%s2 + $0xf0] sm:$0xff]
  %v2717 = vld [vmem:[%s2 + $0xf8] sm:$0xff]
  %v2750 = vunpack.c.l.b16 %v2686
  %v2751 = vunpack.c.h.b16 %v2686
  %v2752 = vunpack.c.l.b16 %v2687
  %v2753 = vunpack.c.h.b16 %v2687
  %v2754 = vunpack.c.l.b16 %v2688
  %v2755 = vunpack.c.h.b16 %v2688
  %v2756 = vunpack.c.l.b16 %v2689
  %v2757 = vunpack.c.h.b16 %v2689
  %v2758 = vunpack.c.l.b16 %v2690
  %v2759 = vunpack.c.h.b16 %v2690
  %v2760 = vunpack.c.l.b16 %v2691
  %v2761 = vunpack.c.h.b16 %v2691
  %v2762 = vunpack.c.l.b16 %v2692
  %v2763 = vunpack.c.h.b16 %v2692
  %v2764 = vunpack.c.l.b16 %v2693
  %v2765 = vunpack.c.h.b16 %v2693
  %v2766 = vunpack.c.l.b16 %v2694
  %v2767 = vunpack.c.h.b16 %v2694
  %v2768 = vunpack.c.l.b16 %v2695
  %v2769 = vunpack.c.h.b16 %v2695
  %v2770 = vunpack.c.l.b16 %v2696
  %v2771 = vunpack.c.h.b16 %v2696
  %v2772 = vunpack.c.l.b16 %v2697
  %v2773 = vunpack.c.h.b16 %v2697
  %v2774 = vunpack.c.l.b16 %v2698
  %v2775 = vunpack.c.h.b16 %v2698
  %v2776 = vunpack.c.l.b16 %v2699
  %v2777 = vunpack.c.h.b16 %v2699
  %v2778 = vunpack.c.l.b16 %v2700
  %v2779 = vunpack.c.h.b16 %v2700
  %v2780 = vunpack.c.l.b16 %v2701
  %v2781 = vunpack.c.h.b16 %v2701
  %v2782 = vunpack.c.l.b16 %v2702
  %v2783 = vunpack.c.h.b16 %v2702
  %v2784 = vunpack.c.l.b16 %v2703
  %v2785 = vunpack.c.h.b16 %v2703
  %v2786 = vunpack.c.l.b16 %v2704
  %v2787 = vunpack.c.h.b16 %v2704
  %v2788 = vunpack.c.l.b16 %v2705
  %v2789 = vunpack.c.h.b16 %v2705
  %v2790 = vunpack.c.l.b16 %v2706
  %v2791 = vunpack.c.h.b16 %v2706
  %v2792 = vunpack.c.l.b16 %v2707
  %v2793 = vunpack.c.h.b16 %v2707
  %v2794 = vunpack.c.l.b16 %v2708
  %v2795 = vunpack.c.h.b16 %v2708
  %v2796 = vunpack.c.l.b16 %v2709
  %v2797 = vunpack.c.h.b16 %v2709
  %v2798 = vunpack.c.l.b16 %v2710
  %v2799 = vunpack.c.h.b16 %v2710
  %v2800 = vunpack.c.l.b16 %v2711
  %v2801 = vunpack.c.h.b16 %v2711
  %v2802 = vunpack.c.l.b16 %v2712
  %v2803 = vunpack.c.h.b16 %v2712
  %v2804 = vunpack.c.l.b16 %v2713
  %v2805 = vunpack.c.h.b16 %v2713
  %v2806 = vunpack.c.l.b16 %v2714
  %v2807 = vunpack.c.h.b16 %v2714
  %v2808 = vunpack.c.l.b16 %v2715
  %v2809 = vunpack.c.h.b16 %v2715
  %v2810 = vunpack.c.l.b16 %v2716
  %v2811 = vunpack.c.h.b16 %v2716
  %v2812 = vunpack.c.l.b16 %v2717
  %v2813 = vunpack.c.h.b16 %v2717
  %v2814 = vpack.c.b16 %v2754, %v2750
  %v2815 = vpack.c.b16 %v2755, %v2751
  %v2816 = vpack.c.b16 %v2756, %v2752
  %v2817 = vpack.c.b16 %v2757, %v2753
  %v2818 = vpack.c.b16 %v2762, %v2758
  %v2819 = vpack.c.b16 %v2763, %v2759
  %v2820 = vpack.c.b16 %v2764, %v2760
  %v2821 = vpack.c.b16 %v2765, %v2761
  %v2822 = vpack.c.b16 %v2770, %v2766
  %v2823 = vpack.c.b16 %v2771, %v2767
  %v2824 = vpack.c.b16 %v2772, %v2768
  %v2825 = vpack.c.b16 %v2773, %v2769
  %v2826 = vpack.c.b16 %v2778, %v2774
  %v2827 = vpack.c.b16 %v2779, %v2775
  %v2828 = vpack.c.b16 %v2780, %v2776
  %v2829 = vpack.c.b16 %v2781, %v2777
  %v2830 = vpack.c.b16 %v2786, %v2782
  %v2831 = vpack.c.b16 %v2787, %v2783
  %v2832 = vpack.c.b16 %v2788, %v2784
  %v2833 = vpack.c.b16 %v2789, %v2785
  %v2834 = vpack.c.b16 %v2794, %v2790
  %v2835 = vpack.c.b16 %v2795, %v2791
  %v2836 = vpack.c.b16 %v2796, %v2792
  %v2837 = vpack.c.b16 %v2797, %v2793
  %v2838 = vpack.c.b16 %v2802, %v2798
  %v2839 = vpack.c.b16 %v2803, %v2799
  %v2840 = vpack.c.b16 %v2804, %v2800
  %v2841 = vpack.c.b16 %v2805, %v2801
  %v2842 = vpack.c.b16 %v2810, %v2806
  %v2843 = vpack.c.b16 %v2811, %v2807
  %v2844 = vpack.c.b16 %v2812, %v2808
  %v2845 = vpack.c.b16 %v2813, %v2809
  %2878 = vmatprep.subr.bf16.mxu0 %v2815
  %2879 = vmatpush1.bf16.msra.mxu0 %v2814
  %2880 = vmatprep.subr.bf16.mxu0 %v2819
  %2881 = vmatpush1.bf16.msra.mxu0 %v2818
  %2882 = vmatprep.subr.bf16.mxu0 %v2823
  %2883 = vmatpush1.bf16.msra.mxu0 %v2822
  %2884 = vmatprep.subr.bf16.mxu0 %v2827
  %2885 = vmatpush1.bf16.msra.mxu0 %v2826
  %2886 = vmatprep.subr.bf16.mxu0 %v2831
  %2887 = vmatpush1.bf16.msra.mxu0 %v2830
  %2888 = vmatprep.subr.bf16.mxu0 %v2835
  %2889 = vmatpush1.bf16.msra.mxu0 %v2834
  %2890 = vmatprep.subr.bf16.mxu0 %v2839
  %2891 = vmatpush1.bf16.msra.mxu0 %v2838
  %2892 = vmatprep.subr.bf16.mxu0 %v2843
  %2893 = vmatpush1.bf16.msra.mxu0 %v2842
  %2894 = vmatprep.subr.bf16.mxu0 0
  %2895 = vmatpush1.bf16.msra.mxu0 0
  %2896 = vmatprep.subr.bf16.mxu0 0
  %2897 = vmatpush1.bf16.msra.mxu0 0
  %2898 = vmatprep.subr.bf16.mxu0 0
  %2899 = vmatpush1.bf16.msra.mxu0 0
  %2900 = vmatprep.subr.bf16.mxu0 0
  %2901 = vmatpush1.bf16.msra.mxu0 0
  %2902 = vmatprep.subr.bf16.mxu0 0
  %2903 = vmatpush1.bf16.msra.mxu0 0
  %2904 = vmatprep.subr.bf16.mxu0 0
  %2905 = vmatpush1.bf16.msra.mxu0 0
  %2906 = vmatprep.subr.bf16.mxu0 0
  %2907 = vmatpush1.bf16.msra.mxu0 0
  %2908 = vmatprep.subr.bf16.mxu0 0
  %2909 = vmatpush1.bf16.msra.mxu0 0
  %2910 = vmatprep.mubr.bf16.mxu0 0
  %2911 = vmatmul.mubr.bf16.gmra.mrb[0].mxu0 %v2666
  %v2912 = vpop.f32.mrb[0].mxu0
  %v2913 = vadd.f32 0.0, %v2912
  %v2914 = vpop.f32.mrb[0].mxu0
  %v2915 = vadd.f32 0.0, %v2914
  %v2916 = vpop.f32.mrb[0].mxu0
  %v2917 = vadd.f32 0.0, %v2916
  %v2918 = vpop.f32.mrb[0].mxu0
  %v2919 = vadd.f32 0.0, %v2918
  %2920 = vdwg.mxu0
  %2921 = vmatprep.subr.bf16.mxu0 %v2817
  %2922 = vmatpush1.bf16.msra.mxu0 %v2816
  %2923 = vmatprep.subr.bf16.mxu0 %v2821
  %2924 = vmatpush1.bf16.msra.mxu0 %v2820
  %2925 = vmatprep.subr.bf16.mxu0 %v2825
  %2926 = vmatpush1.bf16.msra.mxu0 %v2824
  %2927 = vmatprep.subr.bf16.mxu0 %v2829
  %2928 = vmatpush1.bf16.msra.mxu0 %v2828
  %2929 = vmatprep.subr.bf16.mxu0 %v2833
  %2930 = vmatpush1.bf16.msra.mxu0 %v2832
  %2931 = vmatprep.subr.bf16.mxu0 %v2837
  %2932 = vmatpush1.bf16.msra.mxu0 %v2836
  %2933 = vmatprep.subr.bf16.mxu0 %v2841
  %2934 = vmatpush1.bf16.msra.mxu0 %v2840
  %2935 = vmatprep.subr.bf16.mxu0 %v2845
  %2936 = vmatpush1.bf16.msra.mxu0 %v2844
  %2937 = vmatprep.subr.bf16.mxu0 0
  %2938 = vmatpush1.bf16.msra.mxu0 0
  %2939 = vmatprep.subr.bf16.mxu0 0
  %2940 = vmatpush1.bf16.msra.mxu0 0
  %2941 = vmatprep.subr.bf16.mxu0 0
  %2942 = vmatpush1.bf16.msra.mxu0 0
  %2943 = vmatprep.subr.bf16.mxu0 0
  %2944 = vmatpush1.bf16.msra.mxu0 0
  %2945 = vmatprep.subr.bf16.mxu0 0
  %2946 = vmatpush1.bf16.msra.mxu0 0
  %2947 = vmatprep.subr.bf16.mxu0 0
  %2948 = vmatpush1.bf16.msra.mxu0 0
  %2949 = vmatprep.subr.bf16.mxu0 0
  %2950 = vmatpush1.bf16.msra.mxu0 0
  %2951 = vmatprep.subr.bf16.mxu0 0
  %2952 = vmatpush1.bf16.msra.mxu0 0
  %2953 = vmatprep.mubr.bf16.mxu0 0
  %2954 = vmatmul.mubr.bf16.gmra.mrb[0].mxu0 %v2666
  %v2955 = vpop.f32.mrb[0].mxu0
  %v2956 = vadd.f32 0.0, %v2955
  %v2957 = vpop.f32.mrb[0].mxu0
  %v2958 = vadd.f32 0.0, %v2957
  %v2959 = vpop.f32.mrb[0].mxu0
  %v2960 = vadd.f32 0.0, %v2959
  %v2961 = vpop.f32.mrb[0].mxu0
  %v2962 = vadd.f32 0.0, %v2961
  %2963 = vdwg.mxu0
  %v2964 = vadd.f32 %v2678, %v2913
  %v2965 = vadd.f32 %v2679, %v2915
  %v2966 = vadd.f32 %v2680, %v2956
  %v2967 = vadd.f32 %v2681, %v2958
  %v2968 = vadd.f32 %v2682, %v2917
  %v2969 = vadd.f32 %v2683, %v2919
  %v2970 = vadd.f32 %v2684, %v2960
  %v2971 = vadd.f32 %v2685, %v2962
  %v2972 = vxor.u32 %v2964, 2147483648
  %v2973 = vxor.u32 %v2968, 2147483648
  %v2974 = vmul.f32 %v2972, 1.442695
  %v2975 = vpow.pop %v2974
  %v2976 = vmul.f32 %v2973, 1.442695
  %v2977 = vpow.pop %v2976
  %v2978 = vadd.f32 %v2975, 1.0
  %v2979 = vadd.f32 %v2977, 1.0
  %v2980 = vrcp.pop %v2978
  %v2981 = vmul.f32 1.0, %v2980
  %v2982 = vrcp.pop %v2979
  %v2983 = vmul.f32 1.0, %v2982
  %v2984 = vxor.u32 %v2965, 2147483648
  %v2985 = vxor.u32 %v2969, 2147483648
  %v2986 = vmul.f32 %v2984, 1.442695
  %v2987 = vpow.pop %v2986
  %v2988 = vmul.f32 %v2985, 1.442695
  %v2989 = vpow.pop %v2988
  %v2990 = vadd.f32 %v2987, 1.0
  %v2991 = vadd.f32 %v2989, 1.0
  %v2992 = vrcp.pop %v2990
  %v2993 = vmul.f32 1.0, %v2992
  %v2994 = vrcp.pop %v2991
  %v2995 = vmul.f32 1.0, %v2994
  %v2996 = vtanh.pop %v2966
  %v2997 = vtanh.pop %v2970
  %v2998 = vxor.u32 %v2967, 2147483648
  %v2999 = vxor.u32 %v2971, 2147483648
  %v3000 = vmul.f32 %v2998, 1.442695
  %v3001 = vpow.pop %v3000
  %v3002 = vmul.f32 %v2999, 1.442695
  %v3003 = vpow.pop %v3002
  %v3004 = vadd.f32 %v3001, 1.0
  %v3005 = vadd.f32 %v3003, 1.0
  %v3006 = vrcp.pop %v3004
  %v3007 = vmul.f32 1.0, %v3006
  %v3008 = vrcp.pop %v3005
  %v3009 = vmul.f32 1.0, %v3008
  %v3010 = vmul.f32 %v2993, %v2660
  %v3011 = vmul.f32 %v2995, %v2661
  %v3012 = vmul.f32 %v2981, %v2996
  %v3013 = vmul.f32 %v2983, %v2997
  %v3014 = vadd.f32 %v3010, %v3012
  %v3015 = vadd.f32 %v3011, %v3013
  %v3016 = vtanh.pop %v3014
  %v3017 = vtanh.pop %v3015
  %v3018 = vmul.f32 %v3007, %v3016
  %v3019 = vmul.f32 %v3009, %v3017
  %v3020 = vpack.c.bf16 %v3019, %v3018
  %v3022 = vunpack.c.l.b16 %v3020
  %v3023 = vunpack.c.h.b16 %v3020
  %v3024 = vpack.c.b16 %v3022, %v3022
  %v3025 = vpack.c.b16 %v3023, %v3023
  %s3028 = scalar_lea.vmem %s7, 96
  %3029 = vst [vmem:[%s3028] sm:$0xf] %v3024
  %3030 = vst [vmem:[%s3028 + $0x8] sm:$0xf] %v3025
  %s3031 = scalar_lea.vmem [#allocation2], 448
  %v3032 = vld [vmem:[%s3031] sm:$0xff]
  %v3033 = vld [vmem:[%s3031 + $0x8] sm:$0xff]
  %v3034 = vld [vmem:[%s3031 + $0x10] sm:$0xff]
  %v3035 = vld [vmem:[%s3031 + $0x18] sm:$0xff]
  %v3036 = vld [vmem:[%s3031 + $0x20] sm:$0xff]
  %v3037 = vld [vmem:[%s3031 + $0x28] sm:$0xff]
  %v3038 = vld [vmem:[%s3031 + $0x30] sm:$0xff]
  %v3039 = vld [vmem:[%s3031 + $0x38] sm:$0xff]
  %v3040 = vld [vmem:[%s2] sm:$0xff]
  %v3041 = vld [vmem:[%s2 + $0x8] sm:$0xff]
  %v3042 = vld [vmem:[%s2 + $0x10] sm:$0xff]
  %v3043 = vld [vmem:[%s2 + $0x18] sm:$0xff]
  %v3044 = vld [vmem:[%s2 + $0x20] sm:$0xff]
  %v3045 = vld [vmem:[%s2 + $0x28] sm:$0xff]
  %v3046 = vld [vmem:[%s2 + $0x30] sm:$0xff]
  %v3047 = vld [vmem:[%s2 + $0x38] sm:$0xff]
  %v3048 = vld [vmem:[%s2 + $0x40] sm:$0xff]
  %v3049 = vld [vmem:[%s2 + $0x48] sm:$0xff]
  %v3050 = vld [vmem:[%s2 + $0x50] sm:$0xff]
  %v3051 = vld [vmem:[%s2 + $0x58] sm:$0xff]
  %v3052 = vld [vmem:[%s2 + $0x60] sm:$0xff]
  %v3053 = vld [vmem:[%s2 + $0x68] sm:$0xff]
  %v3054 = vld [vmem:[%s2 + $0x70] sm:$0xff]
  %v3055 = vld [vmem:[%s2 + $0x78] sm:$0xff]
  %v3056 = vld [vmem:[%s2 + $0x80] sm:$0xff]
  %v3057 = vld [vmem:[%s2 + $0x88] sm:$0xff]
  %v3058 = vld [vmem:[%s2 + $0x90] sm:$0xff]
  %v3059 = vld [vmem:[%s2 + $0x98] sm:$0xff]
  %v3060 = vld [vmem:[%s2 + $0xa0] sm:$0xff]
  %v3061 = vld [vmem:[%s2 + $0xa8] sm:$0xff]
  %v3062 = vld [vmem:[%s2 + $0xb0] sm:$0xff]
  %v3063 = vld [vmem:[%s2 + $0xb8] sm:$0xff]
  %v3064 = vld [vmem:[%s2 + $0xc0] sm:$0xff]
  %v3065 = vld [vmem:[%s2 + $0xc8] sm:$0xff]
  %v3066 = vld [vmem:[%s2 + $0xd0] sm:$0xff]
  %v3067 = vld [vmem:[%s2 + $0xd8] sm:$0xff]
  %v3068 = vld [vmem:[%s2 + $0xe0] sm:$0xff]
  %v3069 = vld [vmem:[%s2 + $0xe8] sm:$0xff]
  %v3070 = vld [vmem:[%s2 + $0xf0] sm:$0xff]
  %v3071 = vld [vmem:[%s2 + $0xf8] sm:$0xff]
  %v3104 = vunpack.c.l.b16 %v3040
  %v3105 = vunpack.c.h.b16 %v3040
  %v3106 = vunpack.c.l.b16 %v3041
  %v3107 = vunpack.c.h.b16 %v3041
  %v3108 = vunpack.c.l.b16 %v3042
  %v3109 = vunpack.c.h.b16 %v3042
  %v3110 = vunpack.c.l.b16 %v3043
  %v3111 = vunpack.c.h.b16 %v3043
  %v3112 = vunpack.c.l.b16 %v3044
  %v3113 = vunpack.c.h.b16 %v3044
  %v3114 = vunpack.c.l.b16 %v3045
  %v3115 = vunpack.c.h.b16 %v3045
  %v3116 = vunpack.c.l.b16 %v3046
  %v3117 = vunpack.c.h.b16 %v3046
  %v3118 = vunpack.c.l.b16 %v3047
  %v3119 = vunpack.c.h.b16 %v3047
  %v3120 = vunpack.c.l.b16 %v3048
  %v3121 = vunpack.c.h.b16 %v3048
  %v3122 = vunpack.c.l.b16 %v3049
  %v3123 = vunpack.c.h.b16 %v3049
  %v3124 = vunpack.c.l.b16 %v3050
  %v3125 = vunpack.c.h.b16 %v3050
  %v3126 = vunpack.c.l.b16 %v3051
  %v3127 = vunpack.c.h.b16 %v3051
  %v3128 = vunpack.c.l.b16 %v3052
  %v3129 = vunpack.c.h.b16 %v3052
  %v3130 = vunpack.c.l.b16 %v3053
  %v3131 = vunpack.c.h.b16 %v3053
  %v3132 = vunpack.c.l.b16 %v3054
  %v3133 = vunpack.c.h.b16 %v3054
  %v3134 = vunpack.c.l.b16 %v3055
  %v3135 = vunpack.c.h.b16 %v3055
  %v3136 = vunpack.c.l.b16 %v3056
  %v3137 = vunpack.c.h.b16 %v3056
  %v3138 = vunpack.c.l.b16 %v3057
  %v3139 = vunpack.c.h.b16 %v3057
  %v3140 = vunpack.c.l.b16 %v3058
  %v3141 = vunpack.c.h.b16 %v3058
  %v3142 = vunpack.c.l.b16 %v3059
  %v3143 = vunpack.c.h.b16 %v3059
  %v3144 = vunpack.c.l.b16 %v3060
  %v3145 = vunpack.c.h.b16 %v3060
  %v3146 = vunpack.c.l.b16 %v3061
  %v3147 = vunpack.c.h.b16 %v3061
  %v3148 = vunpack.c.l.b16 %v3062
  %v3149 = vunpack.c.h.b16 %v3062
  %v3150 = vunpack.c.l.b16 %v3063
  %v3151 = vunpack.c.h.b16 %v3063
  %v3152 = vunpack.c.l.b16 %v3064
  %v3153 = vunpack.c.h.b16 %v3064
  %v3154 = vunpack.c.l.b16 %v3065
  %v3155 = vunpack.c.h.b16 %v3065
  %v3156 = vunpack.c.l.b16 %v3066
  %v3157 = vunpack.c.h.b16 %v3066
  %v3158 = vunpack.c.l.b16 %v3067
  %v3159 = vunpack.c.h.b16 %v3067
  %v3160 = vunpack.c.l.b16 %v3068
  %v3161 = vunpack.c.h.b16 %v3068
  %v3162 = vunpack.c.l.b16 %v3069
  %v3163 = vunpack.c.h.b16 %v3069
  %v3164 = vunpack.c.l.b16 %v3070
  %v3165 = vunpack.c.h.b16 %v3070
  %v3166 = vunpack.c.l.b16 %v3071
  %v3167 = vunpack.c.h.b16 %v3071
  %v3168 = vpack.c.b16 %v3108, %v3104
  %v3169 = vpack.c.b16 %v3109, %v3105
  %v3170 = vpack.c.b16 %v3110, %v3106
  %v3171 = vpack.c.b16 %v3111, %v3107
  %v3172 = vpack.c.b16 %v3116, %v3112
  %v3173 = vpack.c.b16 %v3117, %v3113
  %v3174 = vpack.c.b16 %v3118, %v3114
  %v3175 = vpack.c.b16 %v3119, %v3115
  %v3176 = vpack.c.b16 %v3124, %v3120
  %v3177 = vpack.c.b16 %v3125, %v3121
  %v3178 = vpack.c.b16 %v3126, %v3122
  %v3179 = vpack.c.b16 %v3127, %v3123
  %v3180 = vpack.c.b16 %v3132, %v3128
  %v3181 = vpack.c.b16 %v3133, %v3129
  %v3182 = vpack.c.b16 %v3134, %v3130
  %v3183 = vpack.c.b16 %v3135, %v3131
  %v3184 = vpack.c.b16 %v3140, %v3136
  %v3185 = vpack.c.b16 %v3141, %v3137
  %v3186 = vpack.c.b16 %v3142, %v3138
  %v3187 = vpack.c.b16 %v3143, %v3139
  %v3188 = vpack.c.b16 %v3148, %v3144
  %v3189 = vpack.c.b16 %v3149, %v3145
  %v3190 = vpack.c.b16 %v3150, %v3146
  %v3191 = vpack.c.b16 %v3151, %v3147
  %v3192 = vpack.c.b16 %v3156, %v3152
  %v3193 = vpack.c.b16 %v3157, %v3153
  %v3194 = vpack.c.b16 %v3158, %v3154
  %v3195 = vpack.c.b16 %v3159, %v3155
  %v3196 = vpack.c.b16 %v3164, %v3160
  %v3197 = vpack.c.b16 %v3165, %v3161
  %v3198 = vpack.c.b16 %v3166, %v3162
  %v3199 = vpack.c.b16 %v3167, %v3163
  %3232 = vmatprep.subr.bf16.mxu0 %v3169
  %3233 = vmatpush1.bf16.msra.mxu0 %v3168
  %3234 = vmatprep.subr.bf16.mxu0 %v3173
  %3235 = vmatpush1.bf16.msra.mxu0 %v3172
  %3236 = vmatprep.subr.bf16.mxu0 %v3177
  %3237 = vmatpush1.bf16.msra.mxu0 %v3176
  %3238 = vmatprep.subr.bf16.mxu0 %v3181
  %3239 = vmatpush1.bf16.msra.mxu0 %v3180
  %3240 = vmatprep.subr.bf16.mxu0 %v3185
  %3241 = vmatpush1.bf16.msra.mxu0 %v3184
  %3242 = vmatprep.subr.bf16.mxu0 %v3189
  %3243 = vmatpush1.bf16.msra.mxu0 %v3188
  %3244 = vmatprep.subr.bf16.mxu0 %v3193
  %3245 = vmatpush1.bf16.msra.mxu0 %v3192
  %3246 = vmatprep.subr.bf16.mxu0 %v3197
  %3247 = vmatpush1.bf16.msra.mxu0 %v3196
  %3248 = vmatprep.subr.bf16.mxu0 0
  %3249 = vmatpush1.bf16.msra.mxu0 0
  %3250 = vmatprep.subr.bf16.mxu0 0
  %3251 = vmatpush1.bf16.msra.mxu0 0
  %3252 = vmatprep.subr.bf16.mxu0 0
  %3253 = vmatpush1.bf16.msra.mxu0 0
  %3254 = vmatprep.subr.bf16.mxu0 0
  %3255 = vmatpush1.bf16.msra.mxu0 0
  %3256 = vmatprep.subr.bf16.mxu0 0
  %3257 = vmatpush1.bf16.msra.mxu0 0
  %3258 = vmatprep.subr.bf16.mxu0 0
  %3259 = vmatpush1.bf16.msra.mxu0 0
  %3260 = vmatprep.subr.bf16.mxu0 0
  %3261 = vmatpush1.bf16.msra.mxu0 0
  %3262 = vmatprep.subr.bf16.mxu0 0
  %3263 = vmatpush1.bf16.msra.mxu0 0
  %3264 = vmatprep.mubr.bf16.mxu0 0
  %3265 = vmatmul.mubr.bf16.gmra.mrb[0].mxu0 %v3020
  %v3266 = vpop.f32.mrb[0].mxu0
  %v3267 = vadd.f32 0.0, %v3266
  %v3268 = vpop.f32.mrb[0].mxu0
  %v3269 = vadd.f32 0.0, %v3268
  %v3270 = vpop.f32.mrb[0].mxu0
  %v3271 = vadd.f32 0.0, %v3270
  %v3272 = vpop.f32.mrb[0].mxu0
  %v3273 = vadd.f32 0.0, %v3272
  %3274 = vdwg.mxu0
  %3275 = vmatprep.subr.bf16.mxu0 %v3171
  %3276 = vmatpush1.bf16.msra.mxu0 %v3170
  %3277 = vmatprep.subr.bf16.mxu0 %v3175
  %3278 = vmatpush1.bf16.msra.mxu0 %v3174
  %3279 = vmatprep.subr.bf16.mxu0 %v3179
  %3280 = vmatpush1.bf16.msra.mxu0 %v3178
  %3281 = vmatprep.subr.bf16.mxu0 %v3183
  %3282 = vmatpush1.bf16.msra.mxu0 %v3182
  %3283 = vmatprep.subr.bf16.mxu0 %v3187
  %3284 = vmatpush1.bf16.msra.mxu0 %v3186
  %3285 = vmatprep.subr.bf16.mxu0 %v3191
  %3286 = vmatpush1.bf16.msra.mxu0 %v3190
  %3287 = vmatprep.subr.bf16.mxu0 %v3195
  %3288 = vmatpush1.bf16.msra.mxu0 %v3194
  %3289 = vmatprep.subr.bf16.mxu0 %v3199
  %3290 = vmatpush1.bf16.msra.mxu0 %v3198
  %3291 = vmatprep.subr.bf16.mxu0 0
  %3292 = vmatpush1.bf16.msra.mxu0 0
  %3293 = vmatprep.subr.bf16.mxu0 0
  %3294 = vmatpush1.bf16.msra.mxu0 0
  %3295 = vmatprep.subr.bf16.mxu0 0
  %3296 = vmatpush1.bf16.msra.mxu0 0
  %3297 = vmatprep.subr.bf16.mxu0 0
  %3298 = vmatpush1.bf16.msra.mxu0 0
  %3299 = vmatprep.subr.bf16.mxu0 0
  %3300 = vmatpush1.bf16.msra.mxu0 0
  %3301 = vmatprep.subr.bf16.mxu0 0
  %3302 = vmatpush1.bf16.msra.mxu0 0
  %3303 = vmatprep.subr.bf16.mxu0 0
  %3304 = vmatpush1.bf16.msra.mxu0 0
  %3305 = vmatprep.subr.bf16.mxu0 0
  %3306 = vmatpush1.bf16.msra.mxu0 0
  %3307 = vmatprep.mubr.bf16.mxu0 0
  %3308 = vmatmul.mubr.bf16.gmra.mrb[0].mxu0 %v3020
  %v3309 = vpop.f32.mrb[0].mxu0
  %v3310 = vadd.f32 0.0, %v3309
  %v3311 = vpop.f32.mrb[0].mxu0
  %v3312 = vadd.f32 0.0, %v3311
  %v3313 = vpop.f32.mrb[0].mxu0
  %v3314 = vadd.f32 0.0, %v3313
  %v3315 = vpop.f32.mrb[0].mxu0
  %v3316 = vadd.f32 0.0, %v3315
  %3317 = vdwg.mxu0
  %v3318 = vadd.f32 %v3032, %v3267
  %v3319 = vadd.f32 %v3033, %v3269
  %v3320 = vadd.f32 %v3034, %v3310
  %v3321 = vadd.f32 %v3035, %v3312
  %v3322 = vadd.f32 %v3036, %v3271
  %v3323 = vadd.f32 %v3037, %v3273
  %v3324 = vadd.f32 %v3038, %v3314
  %v3325 = vadd.f32 %v3039, %v3316
  %v3326 = vxor.u32 %v3318, 2147483648
  %v3327 = vxor.u32 %v3322, 2147483648
  %v3328 = vmul.f32 %v3326, 1.442695
  %v3329 = vpow.pop %v3328
  %v3330 = vmul.f32 %v3327, 1.442695
  %v3331 = vpow.pop %v3330
  %v3332 = vadd.f32 %v3329, 1.0
  %v3333 = vadd.f32 %v3331, 1.0
  %v3334 = vrcp.pop %v3332
  %v3335 = vmul.f32 1.0, %v3334
  %v3336 = vrcp.pop %v3333
  %v3337 = vmul.f32 1.0, %v3336
  %v3338 = vxor.u32 %v3319, 2147483648
  %v3339 = vxor.u32 %v3323, 2147483648
  %v3340 = vmul.f32 %v3338, 1.442695
  %v3341 = vpow.pop %v3340
  %v3342 = vmul.f32 %v3339, 1.442695
  %v3343 = vpow.pop %v3342
  %v3344 = vadd.f32 %v3341, 1.0
  %v3345 = vadd.f32 %v3343, 1.0
  %v3346 = vrcp.pop %v3344
  %v3347 = vmul.f32 1.0, %v3346
  %v3348 = vrcp.pop %v3345
  %v3349 = vmul.f32 1.0, %v3348
  %v3350 = vtanh.pop %v3320
  %v3351 = vtanh.pop %v3324
  %v3352 = vxor.u32 %v3321, 2147483648
  %v3353 = vxor.u32 %v3325, 2147483648
  %v3354 = vmul.f32 %v3352, 1.442695
  %v3355 = vpow.pop %v3354
  %v3356 = vmul.f32 %v3353, 1.442695
  %v3357 = vpow.pop %v3356
  %v3358 = vadd.f32 %v3355, 1.0
  %v3359 = vadd.f32 %v3357, 1.0
  %v3360 = vrcp.pop %v3358
  %v3361 = vmul.f32 1.0, %v3360
  %v3362 = vrcp.pop %v3359
  %v3363 = vmul.f32 1.0, %v3362
  %v3364 = vmul.f32 %v3347, %v3014
  %v3365 = vmul.f32 %v3349, %v3015
  %v3366 = vmul.f32 %v3335, %v3350
  %v3367 = vmul.f32 %v3337, %v3351
  %v3368 = vadd.f32 %v3364, %v3366
  %v3369 = vadd.f32 %v3365, %v3367
  %v3370 = vtanh.pop %v3368
  %v3371 = vtanh.pop %v3369
  %v3372 = vmul.f32 %v3361, %v3370
  %v3373 = vmul.f32 %v3363, %v3371
  %v3374 = vpack.c.bf16 %v3373, %v3372
  %v3376 = vunpack.c.l.b16 %v3374
  %v3377 = vunpack.c.h.b16 %v3374
  %v3378 = vpack.c.b16 %v3376, %v3376
  %v3379 = vpack.c.b16 %v3377, %v3377
  %s3382 = scalar_lea.vmem %s7, 112
  %3383 = vst [vmem:[%s3382] sm:$0xf] %v3378
  %3384 = vst [vmem:[%s3382 + $0x8] sm:$0xf] %v3379
  %v3385 = vld [vmem:[%s0] sm:$0xff]
  %v3386 = vld [vmem:[%s0 + $0x8] sm:$0xff]
  %v3387 = vld [vmem:[%s0 + $0x10] sm:$0xff]
  %v3388 = vld [vmem:[%s0 + $0x18] sm:$0xff]
  %v3389 = vld [vmem:[%s0 + $0x20] sm:$0xff]
  %v3390 = vld [vmem:[%s0 + $0x28] sm:$0xff]
  %v3391 = vld [vmem:[%s0 + $0x30] sm:$0xff]
  %v3392 = vld [vmem:[%s0 + $0x38] sm:$0xff]
  %v3393 = vld [vmem:[%s0 + $0x40] sm:$0xff]
  %v3394 = vld [vmem:[%s0 + $0x48] sm:$0xff]
  %v3395 = vld [vmem:[%s0 + $0x50] sm:$0xff]
  %v3396 = vld [vmem:[%s0 + $0x58] sm:$0xff]
  %v3397 = vld [vmem:[%s0 + $0x60] sm:$0xff]
  %v3398 = vld [vmem:[%s0 + $0x68] sm:$0xff]
  %v3399 = vld [vmem:[%s0 + $0x70] sm:$0xff]
  %v3400 = vld [vmem:[%s0 + $0x78] sm:$0xff]
  %v3401 = vpack.c.bf16 %v3386, %v3385
  %v3402 = vpack.c.bf16 %v3388, %v3387
  %v3403 = vpack.c.bf16 %v3390, %v3389
  %v3404 = vpack.c.bf16 %v3392, %v3391
  %v3405 = vpack.c.bf16 %v3394, %v3393
  %v3406 = vpack.c.bf16 %v3396, %v3395
  %v3407 = vpack.c.bf16 %v3398, %v3397
  %v3408 = vpack.c.bf16 %v3400, %v3399
  %v3409 = vld [vmem:[%s4] sm:$0xff]
  %v3410 = vld [vmem:[%s4 + $0x8] sm:$0xff]
  %v3411 = vld [vmem:[%s4 + $0x10] sm:$0xff]
  %v3412 = vld [vmem:[%s4 + $0x18] sm:$0xff]
  %v3413 = vld [vmem:[%s4 + $0x20] sm:$0xff]
  %v3414 = vld [vmem:[%s4 + $0x28] sm:$0xff]
  %v3415 = vld [vmem:[%s4 + $0x30] sm:$0xff]
  %v3416 = vld [vmem:[%s4 + $0x38] sm:$0xff]
  %v3417 = vld [vmem:[%s4 + $0x40] sm:$0xff]
  %v3418 = vld [vmem:[%s4 + $0x48] sm:$0xff]
  %v3419 = vld [vmem:[%s4 + $0x50] sm:$0xff]
  %v3420 = vld [vmem:[%s4 + $0x58] sm:$0xff]
  %v3421 = vld [vmem:[%s4 + $0x60] sm:$0xff]
  %v3422 = vld [vmem:[%s4 + $0x68] sm:$0xff]
  %v3423 = vld [vmem:[%s4 + $0x70] sm:$0xff]
  %v3424 = vld [vmem:[%s4 + $0x78] sm:$0xff]
  %v3425 = vld [vmem:[%s4 + $0x80] sm:$0xff]
  %v3426 = vld [vmem:[%s4 + $0x88] sm:$0xff]
  %v3427 = vld [vmem:[%s4 + $0x90] sm:$0xff]
  %v3428 = vld [vmem:[%s4 + $0x98] sm:$0xff]
  %v3429 = vld [vmem:[%s4 + $0xa0] sm:$0xff]
  %v3430 = vld [vmem:[%s4 + $0xa8] sm:$0xff]
  %v3431 = vld [vmem:[%s4 + $0xb0] sm:$0xff]
  %v3432 = vld [vmem:[%s4 + $0xb8] sm:$0xff]
  %v3433 = vld [vmem:[%s4 + $0xc0] sm:$0xff]
  %v3434 = vld [vmem:[%s4 + $0xc8] sm:$0xff]
  %v3435 = vld [vmem:[%s4 + $0xd0] sm:$0xff]
  %v3436 = vld [vmem:[%s4 + $0xd8] sm:$0xff]
  %v3437 = vld [vmem:[%s4 + $0xe0] sm:$0xff]
  %v3438 = vld [vmem:[%s4 + $0xe8] sm:$0xff]
  %v3439 = vld [vmem:[%s4 + $0xf0] sm:$0xff]
  %v3440 = vld [vmem:[%s4 + $0xf8] sm:$0xff]
  %v3441 = vld [vmem:[%s6] sm:$0xf]
  %v3443 = vlaneseq
  %v3444 = vshrl.u32 %v3443, 7
  %v3445 = vsub.s32 0, %v3444
  %v3446 = vrot.slane %v3441, %v3445
  %v3447 = vlaneseq
  %v3448 = vshrl.u32 %v3447, 7
  %v3449 = vsub.s32 1, %v3448
  %v3450 = vrot.slane %v3441, %v3449
  %v3451 = vlaneseq
  %v3452 = vshrl.u32 %v3451, 7
  %v3453 = vsub.s32 2, %v3452
  %v3454 = vrot.slane %v3441, %v3453
  %v3455 = vlaneseq
  %v3456 = vshrl.u32 %v3455, 7
  %v3457 = vsub.s32 3, %v3456
  %v3458 = vrot.slane %v3441, %v3457
  %v3495 = vunpack.c.l.b16 %v3409
  %v3496 = vunpack.c.h.b16 %v3409
  %v3497 = vunpack.c.l.b16 %v3410
  %v3498 = vunpack.c.h.b16 %v3410
  %v3499 = vunpack.c.l.b16 %v3411
  %v3500 = vunpack.c.h.b16 %v3411
  %v3501 = vunpack.c.l.b16 %v3412
  %v3502 = vunpack.c.h.b16 %v3412
  %v3503 = vunpack.c.l.b16 %v3413
  %v3504 = vunpack.c.h.b16 %v3413
  %v3505 = vunpack.c.l.b16 %v3414
  %v3506 = vunpack.c.h.b16 %v3414
  %v3507 = vunpack.c.l.b16 %v3415
  %v3508 = vunpack.c.h.b16 %v3415
  %v3509 = vunpack.c.l.b16 %v3416
  %v3510 = vunpack.c.h.b16 %v3416
  %v3511 = vunpack.c.l.b16 %v3417
  %v3512 = vunpack.c.h.b16 %v3417
  %v3513 = vunpack.c.l.b16 %v3418
  %v3514 = vunpack.c.h.b16 %v3418
  %v3515 = vunpack.c.l.b16 %v3419
  %v3516 = vunpack.c.h.b16 %v3419
  %v3517 = vunpack.c.l.b16 %v3420
  %v3518 = vunpack.c.h.b16 %v3420
  %v3519 = vunpack.c.l.b16 %v3421
  %v3520 = vunpack.c.h.b16 %v3421
  %v3521 = vunpack.c.l.b16 %v3422
  %v3522 = vunpack.c.h.b16 %v3422
  %v3523 = vunpack.c.l.b16 %v3423
  %v3524 = vunpack.c.h.b16 %v3423
  %v3525 = vunpack.c.l.b16 %v3424
  %v3526 = vunpack.c.h.b16 %v3424
  %v3527 = vunpack.c.l.b16 %v3425
  %v3528 = vunpack.c.h.b16 %v3425
  %v3529 = vunpack.c.l.b16 %v3426
  %v3530 = vunpack.c.h.b16 %v3426
  %v3531 = vunpack.c.l.b16 %v3427
  %v3532 = vunpack.c.h.b16 %v3427
  %v3533 = vunpack.c.l.b16 %v3428
  %v3534 = vunpack.c.h.b16 %v3428
  %v3535 = vunpack.c.l.b16 %v3429
  %v3536 = vunpack.c.h.b16 %v3429
  %v3537 = vunpack.c.l.b16 %v3430
  %v3538 = vunpack.c.h.b16 %v3430
  %v3539 = vunpack.c.l.b16 %v3431
  %v3540 = vunpack.c.h.b16 %v3431
  %v3541 = vunpack.c.l.b16 %v3432
  %v3542 = vunpack.c.h.b16 %v3432
  %v3543 = vunpack.c.l.b16 %v3433
  %v3544 = vunpack.c.h.b16 %v3433
  %v3545 = vunpack.c.l.b16 %v3434
  %v3546 = vunpack.c.h.b16 %v3434
  %v3547 = vunpack.c.l.b16 %v3435
  %v3548 = vunpack.c.h.b16 %v3435
  %v3549 = vunpack.c.l.b16 %v3436
  %v3550 = vunpack.c.h.b16 %v3436
  %v3551 = vunpack.c.l.b16 %v3437
  %v3552 = vunpack.c.h.b16 %v3437
  %v3553 = vunpack.c.l.b16 %v3438
  %v3554 = vunpack.c.h.b16 %v3438
  %v3555 = vunpack.c.l.b16 %v3439
  %v3556 = vunpack.c.h.b16 %v3439
  %v3557 = vunpack.c.l.b16 %v3440
  %v3558 = vunpack.c.h.b16 %v3440
  %v3559 = vpack.c.b16 %v3499, %v3495
  %v3560 = vpack.c.b16 %v3500, %v3496
  %v3561 = vpack.c.b16 %v3501, %v3497
  %v3562 = vpack.c.b16 %v3502, %v3498
  %v3563 = vpack.c.b16 %v3507, %v3503
  %v3564 = vpack.c.b16 %v3508, %v3504
  %v3565 = vpack.c.b16 %v3509, %v3505
  %v3566 = vpack.c.b16 %v3510, %v3506
  %v3567 = vpack.c.b16 %v3515, %v3511
  %v3568 = vpack.c.b16 %v3516, %v3512
  %v3569 = vpack.c.b16 %v3517, %v3513
  %v3570 = vpack.c.b16 %v3518, %v3514
  %v3571 = vpack.c.b16 %v3523, %v3519
  %v3572 = vpack.c.b16 %v3524, %v3520
  %v3573 = vpack.c.b16 %v3525, %v3521
  %v3574 = vpack.c.b16 %v3526, %v3522
  %v3575 = vpack.c.b16 %v3531, %v3527
  %v3576 = vpack.c.b16 %v3532, %v3528
  %v3577 = vpack.c.b16 %v3533, %v3529
  %v3578 = vpack.c.b16 %v3534, %v3530
  %v3579 = vpack.c.b16 %v3539, %v3535
  %v3580 = vpack.c.b16 %v3540, %v3536
  %v3581 = vpack.c.b16 %v3541, %v3537
  %v3582 = vpack.c.b16 %v3542, %v3538
  %v3583 = vpack.c.b16 %v3547, %v3543
  %v3584 = vpack.c.b16 %v3548, %v3544
  %v3585 = vpack.c.b16 %v3549, %v3545
  %v3586 = vpack.c.b16 %v3550, %v3546
  %v3587 = vpack.c.b16 %v3555, %v3551
  %v3588 = vpack.c.b16 %v3556, %v3552
  %v3589 = vpack.c.b16 %v3557, %v3553
  %v3590 = vpack.c.b16 %v3558, %v3554
  %3623 = vmatprep.subr.bf16.mxu0 %v3560
  %3624 = vmatpush1.bf16.msra.mxu0 %v3559
  %3625 = vmatprep.subr.bf16.mxu0 %v3564
  %3626 = vmatpush1.bf16.msra.mxu0 %v3563
  %3627 = vmatprep.subr.bf16.mxu0 %v3568
  %3628 = vmatpush1.bf16.msra.mxu0 %v3567
  %3629 = vmatprep.subr.bf16.mxu0 %v3572
  %3630 = vmatpush1.bf16.msra.mxu0 %v3571
  %3631 = vmatprep.subr.bf16.mxu0 %v3576
  %3632 = vmatpush1.bf16.msra.mxu0 %v3575
  %3633 = vmatprep.subr.bf16.mxu0 %v3580
  %3634 = vmatpush1.bf16.msra.mxu0 %v3579
  %3635 = vmatprep.subr.bf16.mxu0 %v3584
  %3636 = vmatpush1.bf16.msra.mxu0 %v3583
  %3637 = vmatprep.subr.bf16.mxu0 %v3588
  %3638 = vmatpush1.bf16.msra.mxu0 %v3587
  %3639 = vmatprep.subr.bf16.mxu0 0
  %3640 = vmatpush1.bf16.msra.mxu0 0
  %3641 = vmatprep.subr.bf16.mxu0 0
  %3642 = vmatpush1.bf16.msra.mxu0 0
  %3643 = vmatprep.subr.bf16.mxu0 0
  %3644 = vmatpush1.bf16.msra.mxu0 0
  %3645 = vmatprep.subr.bf16.mxu0 0
  %3646 = vmatpush1.bf16.msra.mxu0 0
  %3647 = vmatprep.subr.bf16.mxu0 0
  %3648 = vmatpush1.bf16.msra.mxu0 0
  %3649 = vmatprep.subr.bf16.mxu0 0
  %3650 = vmatpush1.bf16.msra.mxu0 0
  %3651 = vmatprep.subr.bf16.mxu0 0
  %3652 = vmatpush1.bf16.msra.mxu0 0
  %3653 = vmatprep.subr.bf16.mxu0 0
  %3654 = vmatpush1.bf16.msra.mxu0 0
  %3655 = vmatprep.mubr.bf16.mxu0 0
  %3656 = vmatmul.mubr.bf16.gmra.mrb[0].mxu0 %v3401
  %v3657 = vpop.f32.mrb[0].mxu0
  %v3658 = vadd.f32 %v3446, %v3657
  %v3659 = vpop.f32.mrb[0].mxu0
  %v3660 = vadd.f32 %v3450, %v3659
  %v3661 = vpop.f32.mrb[0].mxu0
  %v3662 = vadd.f32 %v3446, %v3661
  %v3663 = vpop.f32.mrb[0].mxu0
  %v3664 = vadd.f32 %v3450, %v3663
  %3665 = vmatprep.mubr.bf16.mxu0 0
  %3666 = vmatmul.mubr.bf16.gmra.mrb[0].mxu0 %v3402
  %v3667 = vpop.f32.mrb[0].mxu0
  %v3668 = vadd.f32 %v3446, %v3667
  %v3669 = vpop.f32.mrb[0].mxu0
  %v3670 = vadd.f32 %v3450, %v3669
  %v3671 = vpop.f32.mrb[0].mxu0
  %v3672 = vadd.f32 %v3446, %v3671
  %v3673 = vpop.f32.mrb[0].mxu0
  %v3674 = vadd.f32 %v3450, %v3673
  %3675 = vmatprep.mubr.bf16.mxu0 0
  %3676 = vmatmul.mubr.bf16.gmra.mrb[0].mxu0 %v3403
  %v3677 = vpop.f32.mrb[0].mxu0
  %v3678 = vadd.f32 %v3446, %v3677
  %v3679 = vpop.f32.mrb[0].mxu0
  %v3680 = vadd.f32 %v3450, %v3679
  %v3681 = vpop.f32.mrb[0].mxu0
  %v3682 = vadd.f32 %v3446, %v3681
  %v3683 = vpop.f32.mrb[0].mxu0
  %v3684 = vadd.f32 %v3450, %v3683
  %3685 = vmatprep.mubr.bf16.mxu0 0
  %3686 = vmatmul.mubr.bf16.gmra.mrb[0].mxu0 %v3404
  %v3687 = vpop.f32.mrb[0].mxu0
  %v3688 = vadd.f32 %v3446, %v3687
  %v3689 = vpop.f32.mrb[0].mxu0
  %v3690 = vadd.f32 %v3450, %v3689
  %v3691 = vpop.f32.mrb[0].mxu0
  %v3692 = vadd.f32 %v3446, %v3691
  %v3693 = vpop.f32.mrb[0].mxu0
  %v3694 = vadd.f32 %v3450, %v3693
  %3695 = vmatprep.mubr.bf16.mxu0 0
  %3696 = vmatmul.mubr.bf16.gmra.mrb[0].mxu0 %v3405
  %v3697 = vpop.f32.mrb[0].mxu0
  %v3698 = vadd.f32 %v3446, %v3697
  %v3699 = vpop.f32.mrb[0].mxu0
  %v3700 = vadd.f32 %v3450, %v3699
  %v3701 = vpop.f32.mrb[0].mxu0
  %v3702 = vadd.f32 %v3446, %v3701
  %v3703 = vpop.f32.mrb[0].mxu0
  %v3704 = vadd.f32 %v3450, %v3703
  %3705 = vmatprep.mubr.bf16.mxu0 0
  %3706 = vmatmul.mubr.bf16.gmra.mrb[0].mxu0 %v3406
  %v3707 = vpop.f32.mrb[0].mxu0
  %v3708 = vadd.f32 %v3446, %v3707
  %v3709 = vpop.f32.mrb[0].mxu0
  %v3710 = vadd.f32 %v3450, %v3709
  %v3711 = vpop.f32.mrb[0].mxu0
  %v3712 = vadd.f32 %v3446, %v3711
  %v3713 = vpop.f32.mrb[0].mxu0
  %v3714 = vadd.f32 %v3450, %v3713
  %3715 = vmatprep.mubr.bf16.mxu0 0
  %3716 = vmatmul.mubr.bf16.gmra.mrb[0].mxu0 %v3407
  %v3717 = vpop.f32.mrb[0].mxu0
  %v3718 = vadd.f32 %v3446, %v3717
  %v3719 = vpop.f32.mrb[0].mxu0
  %v3720 = vadd.f32 %v3450, %v3719
  %v3721 = vpop.f32.mrb[0].mxu0
  %v3722 = vadd.f32 %v3446, %v3721
  %v3723 = vpop.f32.mrb[0].mxu0
  %v3724 = vadd.f32 %v3450, %v3723
  %3725 = vmatprep.mubr.bf16.mxu0 0
  %3726 = vmatmul.mubr.bf16.gmra.mrb[0].mxu0 %v3408
  %v3727 = vpop.f32.mrb[0].mxu0
  %v3728 = vadd.f32 %v3446, %v3727
  %v3729 = vpop.f32.mrb[0].mxu0
  %v3730 = vadd.f32 %v3450, %v3729
  %v3731 = vpop.f32.mrb[0].mxu0
  %v3732 = vadd.f32 %v3446, %v3731
  %v3733 = vpop.f32.mrb[0].mxu0
  %v3734 = vadd.f32 %v3450, %v3733
  %3735 = vdwg.mxu0
  %3736 = vmatprep.subr.bf16.mxu0 %v3562
  %3737 = vmatpush1.bf16.msra.mxu0 %v3561
  %3738 = vmatprep.subr.bf16.mxu0 %v3566
  %3739 = vmatpush1.bf16.msra.mxu0 %v3565
  %3740 = vmatprep.subr.bf16.mxu0 %v3570
  %3741 = vmatpush1.bf16.msra.mxu0 %v3569
  %3742 = vmatprep.subr.bf16.mxu0 %v3574
  %3743 = vmatpush1.bf16.msra.mxu0 %v3573
  %3744 = vmatprep.subr.bf16.mxu0 %v3578
  %3745 = vmatpush1.bf16.msra.mxu0 %v3577
  %3746 = vmatprep.subr.bf16.mxu0 %v3582
  %3747 = vmatpush1.bf16.msra.mxu0 %v3581
  %3748 = vmatprep.subr.bf16.mxu0 %v3586
  %3749 = vmatpush1.bf16.msra.mxu0 %v3585
  %3750 = vmatprep.subr.bf16.mxu0 %v3590
  %3751 = vmatpush1.bf16.msra.mxu0 %v3589
  %3752 = vmatprep.subr.bf16.mxu0 0
  %3753 = vmatpush1.bf16.msra.mxu0 0
  %3754 = vmatprep.subr.bf16.mxu0 0
  %3755 = vmatpush1.bf16.msra.mxu0 0
  %3756 = vmatprep.subr.bf16.mxu0 0
  %3757 = vmatpush1.bf16.msra.mxu0 0
  %3758 = vmatprep.subr.bf16.mxu0 0
  %3759 = vmatpush1.bf16.msra.mxu0 0
  %3760 = vmatprep.subr.bf16.mxu0 0
  %3761 = vmatpush1.bf16.msra.mxu0 0
  %3762 = vmatprep.subr.bf16.mxu0 0
  %3763 = vmatpush1.bf16.msra.mxu0 0
  %3764 = vmatprep.subr.bf16.mxu0 0
  %3765 = vmatpush1.bf16.msra.mxu0 0
  %3766 = vmatprep.subr.bf16.mxu0 0
  %3767 = vmatpush1.bf16.msra.mxu0 0
  %3768 = vmatprep.mubr.bf16.mxu0 0
  %3769 = vmatmul.mubr.bf16.gmra.mrb[0].mxu0 %v3401
  %v3770 = vpop.f32.mrb[0].mxu0
  %v3771 = vadd.f32 %v3454, %v3770
  %v3772 = vpop.f32.mrb[0].mxu0
  %v3773 = vadd.f32 %v3458, %v3772
  %v3774 = vpop.f32.mrb[0].mxu0
  %v3775 = vadd.f32 %v3454, %v3774
  %v3776 = vpop.f32.mrb[0].mxu0
  %v3777 = vadd.f32 %v3458, %v3776
  %3778 = vmatprep.mubr.bf16.mxu0 0
  %3779 = vmatmul.mubr.bf16.gmra.mrb[0].mxu0 %v3402
  %v3780 = vpop.f32.mrb[0].mxu0
  %v3781 = vadd.f32 %v3454, %v3780
  %v3782 = vpop.f32.mrb[0].mxu0
  %v3783 = vadd.f32 %v3458, %v3782
  %v3784 = vpop.f32.mrb[0].mxu0
  %v3785 = vadd.f32 %v3454, %v3784
  %v3786 = vpop.f32.mrb[0].mxu0
  %v3787 = vadd.f32 %v3458, %v3786
  %3788 = vmatprep.mubr.bf16.mxu0 0
  %3789 = vmatmul.mubr.bf16.gmra.mrb[0].mxu0 %v3403
  %v3790 = vpop.f32.mrb[0].mxu0
  %v3791 = vadd.f32 %v3454, %v3790
  %v3792 = vpop.f32.mrb[0].mxu0
  %v3793 = vadd.f32 %v3458, %v3792
  %v3794 = vpop.f32.mrb[0].mxu0
  %v3795 = vadd.f32 %v3454, %v3794
  %v3796 = vpop.f32.mrb[0].mxu0
  %v3797 = vadd.f32 %v3458, %v3796
  %3798 = vmatprep.mubr.bf16.mxu0 0
  %3799 = vmatmul.mubr.bf16.gmra.mrb[0].mxu0 %v3404
  %v3800 = vpop.f32.mrb[0].mxu0
  %v3801 = vadd.f32 %v3454, %v3800
  %v3802 = vpop.f32.mrb[0].mxu0
  %v3803 = vadd.f32 %v3458, %v3802
  %v3804 = vpop.f32.mrb[0].mxu0
  %v3805 = vadd.f32 %v3454, %v3804
  %v3806 = vpop.f32.mrb[0].mxu0
  %v3807 = vadd.f32 %v3458, %v3806
  %3808 = vmatprep.mubr.bf16.mxu0 0
  %3809 = vmatmul.mubr.bf16.gmra.mrb[0].mxu0 %v3405
  %v3810 = vpop.f32.mrb[0].mxu0
  %v3811 = vadd.f32 %v3454, %v3810
  %v3812 = vpop.f32.mrb[0].mxu0
  %v3813 = vadd.f32 %v3458, %v3812
  %v3814 = vpop.f32.mrb[0].mxu0
  %v3815 = vadd.f32 %v3454, %v3814
  %v3816 = vpop.f32.mrb[0].mxu0
  %v3817 = vadd.f32 %v3458, %v3816
  %3818 = vmatprep.mubr.bf16.mxu0 0
  %3819 = vmatmul.mubr.bf16.gmra.mrb[0].mxu0 %v3406
  %v3820 = vpop.f32.mrb[0].mxu0
  %v3821 = vadd.f32 %v3454, %v3820
  %v3822 = vpop.f32.mrb[0].mxu0
  %v3823 = vadd.f32 %v3458, %v3822
  %v3824 = vpop.f32.mrb[0].mxu0
  %v3825 = vadd.f32 %v3454, %v3824
  %v3826 = vpop.f32.mrb[0].mxu0
  %v3827 = vadd.f32 %v3458, %v3826
  %3828 = vmatprep.mubr.bf16.mxu0 0
  %3829 = vmatmul.mubr.bf16.gmra.mrb[0].mxu0 %v3407
  %v3830 = vpop.f32.mrb[0].mxu0
  %v3831 = vadd.f32 %v3454, %v3830
  %v3832 = vpop.f32.mrb[0].mxu0
  %v3833 = vadd.f32 %v3458, %v3832
  %v3834 = vpop.f32.mrb[0].mxu0
  %v3835 = vadd.f32 %v3454, %v3834
  %v3836 = vpop.f32.mrb[0].mxu0
  %v3837 = vadd.f32 %v3458, %v3836
  %3838 = vmatprep.mubr.bf16.mxu0 0
  %3839 = vmatmul.mubr.bf16.gmra.mrb[0].mxu0 %v3408
  %v3840 = vpop.f32.mrb[0].mxu0
  %v3841 = vadd.f32 %v3454, %v3840
  %v3842 = vpop.f32.mrb[0].mxu0
  %v3843 = vadd.f32 %v3458, %v3842
  %v3844 = vpop.f32.mrb[0].mxu0
  %v3845 = vadd.f32 %v3454, %v3844
  %v3846 = vpop.f32.mrb[0].mxu0
  %v3847 = vadd.f32 %v3458, %v3846
  %3848 = vdwg.mxu0
  %3849 = vst [vmem:[#allocation2] sm:$0xff] %v3658
  %3850 = vst [vmem:[#allocation2 + $0x8] sm:$0xff] %v3660
  %3851 = vst [vmem:[#allocation2 + $0x10] sm:$0xff] %v3771
  %3852 = vst [vmem:[#allocation2 + $0x18] sm:$0xff] %v3773
  %3853 = vst [vmem:[#allocation2 + $0x20] sm:$0xff] %v3662
  %3854 = vst [vmem:[#allocation2 + $0x28] sm:$0xff] %v3664
  %3855 = vst [vmem:[#allocation2 + $0x30] sm:$0xff] %v3775
  %3856 = vst [vmem:[#allocation2 + $0x38] sm:$0xff] %v3777
  %3857 = vst [vmem:[#allocation2 + $0x40] sm:$0xff] %v3668
  %3858 = vst [vmem:[#allocation2 + $0x48] sm:$0xff] %v3670
  %3859 = vst [vmem:[#allocation2 + $0x50] sm:$0xff] %v3781
  %3860 = vst [vmem:[#allocation2 + $0x58] sm:$0xff] %v3783
  %3861 = vst [vmem:[#allocation2 + $0x60] sm:$0xff] %v3672
  %3862 = vst [vmem:[#allocation2 + $0x68] sm:$0xff] %v3674
  %3863 = vst [vmem:[#allocation2 + $0x70] sm:$0xff] %v3785
  %3864 = vst [vmem:[#allocation2 + $0x78] sm:$0xff] %v3787
  %3865 = vst [vmem:[#allocation2 + $0x80] sm:$0xff] %v3678
  %3866 = vst [vmem:[#allocation2 + $0x88] sm:$0xff] %v3680
  %3867 = vst [vmem:[#allocation2 + $0x90] sm:$0xff] %v3791
  %3868 = vst [vmem:[#allocation2 + $0x98] sm:$0xff] %v3793
  %3869 = vst [vmem:[#allocation2 + $0xa0] sm:$0xff] %v3682
  %3870 = vst [vmem:[#allocation2 + $0xa8] sm:$0xff] %v3684
  %3871 = vst [vmem:[#allocation2 + $0xb0] sm:$0xff] %v3795
  %3872 = vst [vmem:[#allocation2 + $0xb8] sm:$0xff] %v3797
  %3873 = vst [vmem:[#allocation2 + $0xc0] sm:$0xff] %v3688
  %3874 = vst [vmem:[#allocation2 + $0xc8] sm:$0xff] %v3690
  %3875 = vst [vmem:[#allocation2 + $0xd0] sm:$0xff] %v3801
  %3876 = vst [vmem:[#allocation2 + $0xd8] sm:$0xff] %v3803
  %3877 = vst [vmem:[#allocation2 + $0xe0] sm:$0xff] %v3692
  %3878 = vst [vmem:[#allocation2 + $0xe8] sm:$0xff] %v3694
  %3879 = vst [vmem:[#allocation2 + $0xf0] sm:$0xff] %v3805
  %3880 = vst [vmem:[#allocation2 + $0xf8] sm:$0xff] %v3807
  %3881 = vst [vmem:[#allocation2 + $0x100] sm:$0xff] %v3698
  %3882 = vst [vmem:[#allocation2 + $0x108] sm:$0xff] %v3700
  %3883 = vst [vmem:[#allocation2 + $0x110] sm:$0xff] %v3811
  %3884 = vst [vmem:[#allocation2 + $0x118] sm:$0xff] %v3813
  %3885 = vst [vmem:[#allocation2 + $0x120] sm:$0xff] %v3702
  %3886 = vst [vmem:[#allocation2 + $0x128] sm:$0xff] %v3704
  %3887 = vst [vmem:[#allocation2 + $0x130] sm:$0xff] %v3815
  %3888 = vst [vmem:[#allocation2 + $0x138] sm:$0xff] %v3817
  %3889 = vst [vmem:[#allocation2 + $0x140] sm:$0xff] %v3708
  %3890 = vst [vmem:[#allocation2 + $0x148] sm:$0xff] %v3710
  %3891 = vst [vmem:[#allocation2 + $0x150] sm:$0xff] %v3821
  %3892 = vst [vmem:[#allocation2 + $0x158] sm:$0xff] %v3823
  %3893 = vst [vmem:[#allocation2 + $0x160] sm:$0xff] %v3712
  %3894 = vst [vmem:[#allocation2 + $0x168] sm:$0xff] %v3714
  %3895 = vst [vmem:[#allocation2 + $0x170] sm:$0xff] %v3825
  %3896 = vst [vmem:[#allocation2 + $0x178] sm:$0xff] %v3827
  %3897 = vst [vmem:[#allocation2 + $0x180] sm:$0xff] %v3718
  %3898 = vst [vmem:[#allocation2 + $0x188] sm:$0xff] %v3720
  %3899 = vst [vmem:[#allocation2 + $0x190] sm:$0xff] %v3831
  %3900 = vst [vmem:[#allocation2 + $0x198] sm:$0xff] %v3833
  %3901 = vst [vmem:[#allocation2 + $0x1a0] sm:$0xff] %v3722
  %3902 = vst [vmem:[#allocation2 + $0x1a8] sm:$0xff] %v3724
  %3903 = vst [vmem:[#allocation2 + $0x1b0] sm:$0xff] %v3835
  %3904 = vst [vmem:[#allocation2 + $0x1b8] sm:$0xff] %v3837
  %3905 = vst [vmem:[#allocation2 + $0x1c0] sm:$0xff] %v3728
  %3906 = vst [vmem:[#allocation2 + $0x1c8] sm:$0xff] %v3730
  %3907 = vst [vmem:[#allocation2 + $0x1d0] sm:$0xff] %v3841
  %3908 = vst [vmem:[#allocation2 + $0x1d8] sm:$0xff] %v3843
  %3909 = vst [vmem:[#allocation2 + $0x1e0] sm:$0xff] %v3732
  %3910 = vst [vmem:[#allocation2 + $0x1e8] sm:$0xff] %v3734
  %3911 = vst [vmem:[#allocation2 + $0x1f0] sm:$0xff] %v3845
  %3912 = vst [vmem:[#allocation2 + $0x1f8] sm:$0xff] %v3847
  %v3913 = vld [vmem:[%s3031] sm:$0xff]
  %v3914 = vld [vmem:[%s3031 + $0x8] sm:$0xff]
  %v3915 = vld [vmem:[%s3031 + $0x10] sm:$0xff]
  %v3916 = vld [vmem:[%s3031 + $0x18] sm:$0xff]
  %v3917 = vld [vmem:[%s3031 + $0x20] sm:$0xff]
  %v3918 = vld [vmem:[%s3031 + $0x28] sm:$0xff]
  %v3919 = vld [vmem:[%s3031 + $0x30] sm:$0xff]
  %v3920 = vld [vmem:[%s3031 + $0x38] sm:$0xff]
  %v3921 = vld [vmem:[%s5] sm:$0xff]
  %v3922 = vld [vmem:[%s5 + $0x8] sm:$0xff]
  %v3923 = vld [vmem:[%s5 + $0x10] sm:$0xff]
  %v3924 = vld [vmem:[%s5 + $0x18] sm:$0xff]
  %v3925 = vld [vmem:[%s5 + $0x20] sm:$0xff]
  %v3926 = vld [vmem:[%s5 + $0x28] sm:$0xff]
  %v3927 = vld [vmem:[%s5 + $0x30] sm:$0xff]
  %v3928 = vld [vmem:[%s5 + $0x38] sm:$0xff]
  %v3929 = vld [vmem:[%s5 + $0x40] sm:$0xff]
  %v3930 = vld [vmem:[%s5 + $0x48] sm:$0xff]
  %v3931 = vld [vmem:[%s5 + $0x50] sm:$0xff]
  %v3932 = vld [vmem:[%s5 + $0x58] sm:$0xff]
  %v3933 = vld [vmem:[%s5 + $0x60] sm:$0xff]
  %v3934 = vld [vmem:[%s5 + $0x68] sm:$0xff]
  %v3935 = vld [vmem:[%s5 + $0x70] sm:$0xff]
  %v3936 = vld [vmem:[%s5 + $0x78] sm:$0xff]
  %v3937 = vld [vmem:[%s5 + $0x80] sm:$0xff]
  %v3938 = vld [vmem:[%s5 + $0x88] sm:$0xff]
  %v3939 = vld [vmem:[%s5 + $0x90] sm:$0xff]
  %v3940 = vld [vmem:[%s5 + $0x98] sm:$0xff]
  %v3941 = vld [vmem:[%s5 + $0xa0] sm:$0xff]
  %v3942 = vld [vmem:[%s5 + $0xa8] sm:$0xff]
  %v3943 = vld [vmem:[%s5 + $0xb0] sm:$0xff]
  %v3944 = vld [vmem:[%s5 + $0xb8] sm:$0xff]
  %v3945 = vld [vmem:[%s5 + $0xc0] sm:$0xff]
  %v3946 = vld [vmem:[%s5 + $0xc8] sm:$0xff]
  %v3947 = vld [vmem:[%s5 + $0xd0] sm:$0xff]
  %v3948 = vld [vmem:[%s5 + $0xd8] sm:$0xff]
  %v3949 = vld [vmem:[%s5 + $0xe0] sm:$0xff]
  %v3950 = vld [vmem:[%s5 + $0xe8] sm:$0xff]
  %v3951 = vld [vmem:[%s5 + $0xf0] sm:$0xff]
  %v3952 = vld [vmem:[%s5 + $0xf8] sm:$0xff]
  %v3985 = vunpack.c.l.b16 %v3921
  %v3986 = vunpack.c.h.b16 %v3921
  %v3987 = vunpack.c.l.b16 %v3922
  %v3988 = vunpack.c.h.b16 %v3922
  %v3989 = vunpack.c.l.b16 %v3923
  %v3990 = vunpack.c.h.b16 %v3923
  %v3991 = vunpack.c.l.b16 %v3924
  %v3992 = vunpack.c.h.b16 %v3924
  %v3993 = vunpack.c.l.b16 %v3925
  %v3994 = vunpack.c.h.b16 %v3925
  %v3995 = vunpack.c.l.b16 %v3926
  %v3996 = vunpack.c.h.b16 %v3926
  %v3997 = vunpack.c.l.b16 %v3927
  %v3998 = vunpack.c.h.b16 %v3927
  %v3999 = vunpack.c.l.b16 %v3928
  %v4000 = vunpack.c.h.b16 %v3928
  %v4001 = vunpack.c.l.b16 %v3929
  %v4002 = vunpack.c.h.b16 %v3929
  %v4003 = vunpack.c.l.b16 %v3930
  %v4004 = vunpack.c.h.b16 %v3930
  %v4005 = vunpack.c.l.b16 %v3931
  %v4006 = vunpack.c.h.b16 %v3931
  %v4007 = vunpack.c.l.b16 %v3932
  %v4008 = vunpack.c.h.b16 %v3932
  %v4009 = vunpack.c.l.b16 %v3933
  %v4010 = vunpack.c.h.b16 %v3933
  %v4011 = vunpack.c.l.b16 %v3934
  %v4012 = vunpack.c.h.b16 %v3934
  %v4013 = vunpack.c.l.b16 %v3935
  %v4014 = vunpack.c.h.b16 %v3935
  %v4015 = vunpack.c.l.b16 %v3936
  %v4016 = vunpack.c.h.b16 %v3936
  %v4017 = vunpack.c.l.b16 %v3937
  %v4018 = vunpack.c.h.b16 %v3937
  %v4019 = vunpack.c.l.b16 %v3938
  %v4020 = vunpack.c.h.b16 %v3938
  %v4021 = vunpack.c.l.b16 %v3939
  %v4022 = vunpack.c.h.b16 %v3939
  %v4023 = vunpack.c.l.b16 %v3940
  %v4024 = vunpack.c.h.b16 %v3940
  %v4025 = vunpack.c.l.b16 %v3941
  %v4026 = vunpack.c.h.b16 %v3941
  %v4027 = vunpack.c.l.b16 %v3942
  %v4028 = vunpack.c.h.b16 %v3942
  %v4029 = vunpack.c.l.b16 %v3943
  %v4030 = vunpack.c.h.b16 %v3943
  %v4031 = vunpack.c.l.b16 %v3944
  %v4032 = vunpack.c.h.b16 %v3944
  %v4033 = vunpack.c.l.b16 %v3945
  %v4034 = vunpack.c.h.b16 %v3945
  %v4035 = vunpack.c.l.b16 %v3946
  %v4036 = vunpack.c.h.b16 %v3946
  %v4037 = vunpack.c.l.b16 %v3947
  %v4038 = vunpack.c.h.b16 %v3947
  %v4039 = vunpack.c.l.b16 %v3948
  %v4040 = vunpack.c.h.b16 %v3948
  %v4041 = vunpack.c.l.b16 %v3949
  %v4042 = vunpack.c.h.b16 %v3949
  %v4043 = vunpack.c.l.b16 %v3950
  %v4044 = vunpack.c.h.b16 %v3950
  %v4045 = vunpack.c.l.b16 %v3951
  %v4046 = vunpack.c.h.b16 %v3951
  %v4047 = vunpack.c.l.b16 %v3952
  %v4048 = vunpack.c.h.b16 %v3952
  %v4049 = vpack.c.b16 %v3989, %v3985
  %v4050 = vpack.c.b16 %v3990, %v3986
  %v4051 = vpack.c.b16 %v3991, %v3987
  %v4052 = vpack.c.b16 %v3992, %v3988
  %v4053 = vpack.c.b16 %v3997, %v3993
  %v4054 = vpack.c.b16 %v3998, %v3994
  %v4055 = vpack.c.b16 %v3999, %v3995
  %v4056 = vpack.c.b16 %v4000, %v3996
  %v4057 = vpack.c.b16 %v4005, %v4001
  %v4058 = vpack.c.b16 %v4006, %v4002
  %v4059 = vpack.c.b16 %v4007, %v4003
  %v4060 = vpack.c.b16 %v4008, %v4004
  %v4061 = vpack.c.b16 %v4013, %v4009
  %v4062 = vpack.c.b16 %v4014, %v4010
  %v4063 = vpack.c.b16 %v4015, %v4011
  %v4064 = vpack.c.b16 %v4016, %v4012
  %v4065 = vpack.c.b16 %v4021, %v4017
  %v4066 = vpack.c.b16 %v4022, %v4018
  %v4067 = vpack.c.b16 %v4023, %v4019
  %v4068 = vpack.c.b16 %v4024, %v4020
  %v4069 = vpack.c.b16 %v4029, %v4025
  %v4070 = vpack.c.b16 %v4030, %v4026
  %v4071 = vpack.c.b16 %v4031, %v4027
  %v4072 = vpack.c.b16 %v4032, %v4028
  %v4073 = vpack.c.b16 %v4037, %v4033
  %v4074 = vpack.c.b16 %v4038, %v4034
  %v4075 = vpack.c.b16 %v4039, %v4035
  %v4076 = vpack.c.b16 %v4040, %v4036
  %v4077 = vpack.c.b16 %v4045, %v4041
  %v4078 = vpack.c.b16 %v4046, %v4042
  %v4079 = vpack.c.b16 %v4047, %v4043
  %v4080 = vpack.c.b16 %v4048, %v4044
  %4113 = vmatprep.subr.bf16.mxu0 %v4050
  %4114 = vmatpush1.bf16.msra.mxu0 %v4049
  %4115 = vmatprep.subr.bf16.mxu0 %v4054
  %4116 = vmatpush1.bf16.msra.mxu0 %v4053
  %4117 = vmatprep.subr.bf16.mxu0 %v4058
  %4118 = vmatpush1.bf16.msra.mxu0 %v4057
  %4119 = vmatprep.subr.bf16.mxu0 %v4062
  %4120 = vmatpush1.bf16.msra.mxu0 %v4061
  %4121 = vmatprep.subr.bf16.mxu0 %v4066
  %4122 = vmatpush1.bf16.msra.mxu0 %v4065
  %4123 = vmatprep.subr.bf16.mxu0 %v4070
  %4124 = vmatpush1.bf16.msra.mxu0 %v4069
  %4125 = vmatprep.subr.bf16.mxu0 %v4074
  %4126 = vmatpush1.bf16.msra.mxu0 %v4073
  %4127 = vmatprep.subr.bf16.mxu0 %v4078
  %4128 = vmatpush1.bf16.msra.mxu0 %v4077
  %4129 = vmatprep.subr.bf16.mxu0 0
  %4130 = vmatpush1.bf16.msra.mxu0 0
  %4131 = vmatprep.subr.bf16.mxu0 0
  %4132 = vmatpush1.bf16.msra.mxu0 0
  %4133 = vmatprep.subr.bf16.mxu0 0
  %4134 = vmatpush1.bf16.msra.mxu0 0
  %4135 = vmatprep.subr.bf16.mxu0 0
  %4136 = vmatpush1.bf16.msra.mxu0 0
  %4137 = vmatprep.subr.bf16.mxu0 0
  %4138 = vmatpush1.bf16.msra.mxu0 0
  %4139 = vmatprep.subr.bf16.mxu0 0
  %4140 = vmatpush1.bf16.msra.mxu0 0
  %4141 = vmatprep.subr.bf16.mxu0 0
  %4142 = vmatpush1.bf16.msra.mxu0 0
  %4143 = vmatprep.subr.bf16.mxu0 0
  %4144 = vmatpush1.bf16.msra.mxu0 0
  %4145 = vmatprep.mubr.bf16.mxu0 0
  %4146 = vmatmul.mubr.bf16.gmra.mrb[0].mxu0 0
  %v4147 = vpop.f32.mrb[0].mxu0
  %v4148 = vadd.f32 0.0, %v4147
  %v4149 = vpop.f32.mrb[0].mxu0
  %v4150 = vadd.f32 0.0, %v4149
  %v4151 = vpop.f32.mrb[0].mxu0
  %v4152 = vadd.f32 0.0, %v4151
  %v4153 = vpop.f32.mrb[0].mxu0
  %v4154 = vadd.f32 0.0, %v4153
  %4155 = vdwg.mxu0
  %4156 = vmatprep.subr.bf16.mxu0 %v4052
  %4157 = vmatpush1.bf16.msra.mxu0 %v4051
  %4158 = vmatprep.subr.bf16.mxu0 %v4056
  %4159 = vmatpush1.bf16.msra.mxu0 %v4055
  %4160 = vmatprep.subr.bf16.mxu0 %v4060
  %4161 = vmatpush1.bf16.msra.mxu0 %v4059
  %4162 = vmatprep.subr.bf16.mxu0 %v4064
  %4163 = vmatpush1.bf16.msra.mxu0 %v4063
  %4164 = vmatprep.subr.bf16.mxu0 %v4068
  %4165 = vmatpush1.bf16.msra.mxu0 %v4067
  %4166 = vmatprep.subr.bf16.mxu0 %v4072
  %4167 = vmatpush1.bf16.msra.mxu0 %v4071
  %4168 = vmatprep.subr.bf16.mxu0 %v4076
  %4169 = vmatpush1.bf16.msra.mxu0 %v4075
  %4170 = vmatprep.subr.bf16.mxu0 %v4080
  %4171 = vmatpush1.bf16.msra.mxu0 %v4079
  %4172 = vmatprep.subr.bf16.mxu0 0
  %4173 = vmatpush1.bf16.msra.mxu0 0
  %4174 = vmatprep.subr.bf16.mxu0 0
  %4175 = vmatpush1.bf16.msra.mxu0 0
  %4176 = vmatprep.subr.bf16.mxu0 0
  %4177 = vmatpush1.bf16.msra.mxu0 0
  %4178 = vmatprep.subr.bf16.mxu0 0
  %4179 = vmatpush1.bf16.msra.mxu0 0
  %4180 = vmatprep.subr.bf16.mxu0 0
  %4181 = vmatpush1.bf16.msra.mxu0 0
  %4182 = vmatprep.subr.bf16.mxu0 0
  %4183 = vmatpush1.bf16.msra.mxu0 0
  %4184 = vmatprep.subr.bf16.mxu0 0
  %4185 = vmatpush1.bf16.msra.mxu0 0
  %4186 = vmatprep.subr.bf16.mxu0 0
  %4187 = vmatpush1.bf16.msra.mxu0 0
  %4188 = vmatprep.mubr.bf16.mxu0 0
  %4189 = vmatmul.mubr.bf16.gmra.mrb[0].mxu0 0
  %v4190 = vpop.f32.mrb[0].mxu0
  %v4191 = vadd.f32 0.0, %v4190
  %v4192 = vpop.f32.mrb[0].mxu0
  %v4193 = vadd.f32 0.0, %v4192
  %v4194 = vpop.f32.mrb[0].mxu0
  %v4195 = vadd.f32 0.0, %v4194
  %v4196 = vpop.f32.mrb[0].mxu0
  %v4197 = vadd.f32 0.0, %v4196
  %4198 = vdwg.mxu0
  %v4199 = vadd.f32 %v3913, %v4148
  %v4200 = vadd.f32 %v3914, %v4150
  %v4201 = vadd.f32 %v3915, %v4191
  %v4202 = vadd.f32 %v3916, %v4193
  %v4203 = vadd.f32 %v3917, %v4152
  %v4204 = vadd.f32 %v3918, %v4154
  %v4205 = vadd.f32 %v3919, %v4195
  %v4206 = vadd.f32 %v3920, %v4197
  %v4207 = vxor.u32 %v4199, 2147483648
  %v4208 = vxor.u32 %v4203, 2147483648
  %v4209 = vmul.f32 %v4207, 1.442695
  %v4210 = vpow.pop %v4209
  %v4211 = vmul.f32 %v4208, 1.442695
  %v4212 = vpow.pop %v4211
  %v4213 = vadd.f32 %v4210, 1.0
  %v4214 = vadd.f32 %v4212, 1.0
  %v4215 = vrcp.pop %v4213
  %v4216 = vmul.f32 1.0, %v4215
  %v4217 = vrcp.pop %v4214
  %v4218 = vmul.f32 1.0, %v4217
  %v4219 = vxor.u32 %v4200, 2147483648
  %v4220 = vxor.u32 %v4204, 2147483648
  %v4221 = vmul.f32 %v4219, 1.442695
  %v4222 = vpow.pop %v4221
  %v4223 = vmul.f32 %v4220, 1.442695
  %v4224 = vpow.pop %v4223
  %v4225 = vadd.f32 %v4222, 1.0
  %v4226 = vadd.f32 %v4224, 1.0
  %v4227 = vrcp.pop %v4225
  %v4228 = vmul.f32 1.0, %v4227
  %v4229 = vrcp.pop %v4226
  %v4230 = vmul.f32 1.0, %v4229
  %v4231 = vtanh.pop %v4201
  %v4232 = vtanh.pop %v4205
  %v4233 = vxor.u32 %v4202, 2147483648
  %v4234 = vxor.u32 %v4206, 2147483648
  %v4235 = vmul.f32 %v4233, 1.442695
  %v4236 = vpow.pop %v4235
  %v4237 = vmul.f32 %v4234, 1.442695
  %v4238 = vpow.pop %v4237
  %v4239 = vadd.f32 %v4236, 1.0
  %v4240 = vadd.f32 %v4238, 1.0
  %v4241 = vrcp.pop %v4239
  %v4242 = vmul.f32 1.0, %v4241
  %v4243 = vrcp.pop %v4240
  %v4244 = vmul.f32 1.0, %v4243
  %v4245 = vmul.f32 %v4228, 0.0
  %v4246 = vmul.f32 %v4230, 0.0
  %v4247 = vmul.f32 %v4216, %v4231
  %v4248 = vmul.f32 %v4218, %v4232
  %v4249 = vadd.f32 %v4245, %v4247
  %v4250 = vadd.f32 %v4246, %v4248
  %v4251 = vtanh.pop %v4249
  %v4252 = vtanh.pop %v4250
  %v4253 = vmul.f32 %v4242, %v4251
  %v4254 = vmul.f32 %v4244, %v4252
  %v4255 = vpack.c.bf16 %v4254, %v4253
  %v4257 = vunpack.c.l.b16 %v4255
  %v4258 = vunpack.c.h.b16 %v4255
  %v4259 = vpack.c.b16 %v4257, %v4257
  %v4260 = vpack.c.b16 %v4258, %v4258
  %4263 = vst [vmem:[%s3382 + $0x4] sm:$0xf] %v4259
  %4264 = vst [vmem:[%s3382 + $0xc] sm:$0xf] %v4260
  %v4265 = vld [vmem:[%s2677] sm:$0xff]
  %v4266 = vld [vmem:[%s2677 + $0x8] sm:$0xff]
  %v4267 = vld [vmem:[%s2677 + $0x10] sm:$0xff]
  %v4268 = vld [vmem:[%s2677 + $0x18] sm:$0xff]
  %v4269 = vld [vmem:[%s2677 + $0x20] sm:$0xff]
  %v4270 = vld [vmem:[%s2677 + $0x28] sm:$0xff]
  %v4271 = vld [vmem:[%s2677 + $0x30] sm:$0xff]
  %v4272 = vld [vmem:[%s2677 + $0x38] sm:$0xff]
  %v4273 = vld [vmem:[%s5] sm:$0xff]
  %v4274 = vld [vmem:[%s5 + $0x8] sm:$0xff]
  %v4275 = vld [vmem:[%s5 + $0x10] sm:$0xff]
  %v4276 = vld [vmem:[%s5 + $0x18] sm:$0xff]
  %v4277 = vld [vmem:[%s5 + $0x20] sm:$0xff]
  %v4278 = vld [vmem:[%s5 + $0x28] sm:$0xff]
  %v4279 = vld [vmem:[%s5 + $0x30] sm:$0xff]
  %v4280 = vld [vmem:[%s5 + $0x38] sm:$0xff]
  %v4281 = vld [vmem:[%s5 + $0x40] sm:$0xff]
  %v4282 = vld [vmem:[%s5 + $0x48] sm:$0xff]
  %v4283 = vld [vmem:[%s5 + $0x50] sm:$0xff]
  %v4284 = vld [vmem:[%s5 + $0x58] sm:$0xff]
  %v4285 = vld [vmem:[%s5 + $0x60] sm:$0xff]
  %v4286 = vld [vmem:[%s5 + $0x68] sm:$0xff]
  %v4287 = vld [vmem:[%s5 + $0x70] sm:$0xff]
  %v4288 = vld [vmem:[%s5 + $0x78] sm:$0xff]
  %v4289 = vld [vmem:[%s5 + $0x80] sm:$0xff]
  %v4290 = vld [vmem:[%s5 + $0x88] sm:$0xff]
  %v4291 = vld [vmem:[%s5 + $0x90] sm:$0xff]
  %v4292 = vld [vmem:[%s5 + $0x98] sm:$0xff]
  %v4293 = vld [vmem:[%s5 + $0xa0] sm:$0xff]
  %v4294 = vld [vmem:[%s5 + $0xa8] sm:$0xff]
  %v4295 = vld [vmem:[%s5 + $0xb0] sm:$0xff]
  %v4296 = vld [vmem:[%s5 + $0xb8] sm:$0xff]
  %v4297 = vld [vmem:[%s5 + $0xc0] sm:$0xff]
  %v4298 = vld [vmem:[%s5 + $0xc8] sm:$0xff]
  %v4299 = vld [vmem:[%s5 + $0xd0] sm:$0xff]
  %v4300 = vld [vmem:[%s5 + $0xd8] sm:$0xff]
  %v4301 = vld [vmem:[%s5 + $0xe0] sm:$0xff]
  %v4302 = vld [vmem:[%s5 + $0xe8] sm:$0xff]
  %v4303 = vld [vmem:[%s5 + $0xf0] sm:$0xff]
  %v4304 = vld [vmem:[%s5 + $0xf8] sm:$0xff]
  %v4337 = vunpack.c.l.b16 %v4273
  %v4338 = vunpack.c.h.b16 %v4273
  %v4339 = vunpack.c.l.b16 %v4274
  %v4340 = vunpack.c.h.b16 %v4274
  %v4341 = vunpack.c.l.b16 %v4275
  %v4342 = vunpack.c.h.b16 %v4275
  %v4343 = vunpack.c.l.b16 %v4276
  %v4344 = vunpack.c.h.b16 %v4276
  %v4345 = vunpack.c.l.b16 %v4277
  %v4346 = vunpack.c.h.b16 %v4277
  %v4347 = vunpack.c.l.b16 %v4278
  %v4348 = vunpack.c.h.b16 %v4278
  %v4349 = vunpack.c.l.b16 %v4279
  %v4350 = vunpack.c.h.b16 %v4279
  %v4351 = vunpack.c.l.b16 %v4280
  %v4352 = vunpack.c.h.b16 %v4280
  %v4353 = vunpack.c.l.b16 %v4281
  %v4354 = vunpack.c.h.b16 %v4281
  %v4355 = vunpack.c.l.b16 %v4282
  %v4356 = vunpack.c.h.b16 %v4282
  %v4357 = vunpack.c.l.b16 %v4283
  %v4358 = vunpack.c.h.b16 %v4283
  %v4359 = vunpack.c.l.b16 %v4284
  %v4360 = vunpack.c.h.b16 %v4284
  %v4361 = vunpack.c.l.b16 %v4285
  %v4362 = vunpack.c.h.b16 %v4285
  %v4363 = vunpack.c.l.b16 %v4286
  %v4364 = vunpack.c.h.b16 %v4286
  %v4365 = vunpack.c.l.b16 %v4287
  %v4366 = vunpack.c.h.b16 %v4287
  %v4367 = vunpack.c.l.b16 %v4288
  %v4368 = vunpack.c.h.b16 %v4288
  %v4369 = vunpack.c.l.b16 %v4289
  %v4370 = vunpack.c.h.b16 %v4289
  %v4371 = vunpack.c.l.b16 %v4290
  %v4372 = vunpack.c.h.b16 %v4290
  %v4373 = vunpack.c.l.b16 %v4291
  %v4374 = vunpack.c.h.b16 %v4291
  %v4375 = vunpack.c.l.b16 %v4292
  %v4376 = vunpack.c.h.b16 %v4292
  %v4377 = vunpack.c.l.b16 %v4293
  %v4378 = vunpack.c.h.b16 %v4293
  %v4379 = vunpack.c.l.b16 %v4294
  %v4380 = vunpack.c.h.b16 %v4294
  %v4381 = vunpack.c.l.b16 %v4295
  %v4382 = vunpack.c.h.b16 %v4295
  %v4383 = vunpack.c.l.b16 %v4296
  %v4384 = vunpack.c.h.b16 %v4296
  %v4385 = vunpack.c.l.b16 %v4297
  %v4386 = vunpack.c.h.b16 %v4297
  %v4387 = vunpack.c.l.b16 %v4298
  %v4388 = vunpack.c.h.b16 %v4298
  %v4389 = vunpack.c.l.b16 %v4299
  %v4390 = vunpack.c.h.b16 %v4299
  %v4391 = vunpack.c.l.b16 %v4300
  %v4392 = vunpack.c.h.b16 %v4300
  %v4393 = vunpack.c.l.b16 %v4301
  %v4394 = vunpack.c.h.b16 %v4301
  %v4395 = vunpack.c.l.b16 %v4302
  %v4396 = vunpack.c.h.b16 %v4302
  %v4397 = vunpack.c.l.b16 %v4303
  %v4398 = vunpack.c.h.b16 %v4303
  %v4399 = vunpack.c.l.b16 %v4304
  %v4400 = vunpack.c.h.b16 %v4304
  %v4401 = vpack.c.b16 %v4341, %v4337
  %v4402 = vpack.c.b16 %v4342, %v4338
  %v4403 = vpack.c.b16 %v4343, %v4339
  %v4404 = vpack.c.b16 %v4344, %v4340
  %v4405 = vpack.c.b16 %v4349, %v4345
  %v4406 = vpack.c.b16 %v4350, %v4346
  %v4407 = vpack.c.b16 %v4351, %v4347
  %v4408 = vpack.c.b16 %v4352, %v4348
  %v4409 = vpack.c.b16 %v4357, %v4353
  %v4410 = vpack.c.b16 %v4358, %v4354
  %v4411 = vpack.c.b16 %v4359, %v4355
  %v4412 = vpack.c.b16 %v4360, %v4356
  %v4413 = vpack.c.b16 %v4365, %v4361
  %v4414 = vpack.c.b16 %v4366, %v4362
  %v4415 = vpack.c.b16 %v4367, %v4363
  %v4416 = vpack.c.b16 %v4368, %v4364
  %v4417 = vpack.c.b16 %v4373, %v4369
  %v4418 = vpack.c.b16 %v4374, %v4370
  %v4419 = vpack.c.b16 %v4375, %v4371
  %v4420 = vpack.c.b16 %v4376, %v4372
  %v4421 = vpack.c.b16 %v4381, %v4377
  %v4422 = vpack.c.b16 %v4382, %v4378
  %v4423 = vpack.c.b16 %v4383, %v4379
  %v4424 = vpack.c.b16 %v4384, %v4380
  %v4425 = vpack.c.b16 %v4389, %v4385
  %v4426 = vpack.c.b16 %v4390, %v4386
  %v4427 = vpack.c.b16 %v4391, %v4387
  %v4428 = vpack.c.b16 %v4392, %v4388
  %v4429 = vpack.c.b16 %v4397, %v4393
  %v4430 = vpack.c.b16 %v4398, %v4394
  %v4431 = vpack.c.b16 %v4399, %v4395
  %v4432 = vpack.c.b16 %v4400, %v4396
  %4465 = vmatprep.subr.bf16.mxu0 %v4402
  %4466 = vmatpush1.bf16.msra.mxu0 %v4401
  %4467 = vmatprep.subr.bf16.mxu0 %v4406
  %4468 = vmatpush1.bf16.msra.mxu0 %v4405
  %4469 = vmatprep.subr.bf16.mxu0 %v4410
  %4470 = vmatpush1.bf16.msra.mxu0 %v4409
  %4471 = vmatprep.subr.bf16.mxu0 %v4414
  %4472 = vmatpush1.bf16.msra.mxu0 %v4413
  %4473 = vmatprep.subr.bf16.mxu0 %v4418
  %4474 = vmatpush1.bf16.msra.mxu0 %v4417
  %4475 = vmatprep.subr.bf16.mxu0 %v4422
  %4476 = vmatpush1.bf16.msra.mxu0 %v4421
  %4477 = vmatprep.subr.bf16.mxu0 %v4426
  %4478 = vmatpush1.bf16.msra.mxu0 %v4425
  %4479 = vmatprep.subr.bf16.mxu0 %v4430
  %4480 = vmatpush1.bf16.msra.mxu0 %v4429
  %4481 = vmatprep.subr.bf16.mxu0 0
  %4482 = vmatpush1.bf16.msra.mxu0 0
  %4483 = vmatprep.subr.bf16.mxu0 0
  %4484 = vmatpush1.bf16.msra.mxu0 0
  %4485 = vmatprep.subr.bf16.mxu0 0
  %4486 = vmatpush1.bf16.msra.mxu0 0
  %4487 = vmatprep.subr.bf16.mxu0 0
  %4488 = vmatpush1.bf16.msra.mxu0 0
  %4489 = vmatprep.subr.bf16.mxu0 0
  %4490 = vmatpush1.bf16.msra.mxu0 0
  %4491 = vmatprep.subr.bf16.mxu0 0
  %4492 = vmatpush1.bf16.msra.mxu0 0
  %4493 = vmatprep.subr.bf16.mxu0 0
  %4494 = vmatpush1.bf16.msra.mxu0 0
  %4495 = vmatprep.subr.bf16.mxu0 0
  %4496 = vmatpush1.bf16.msra.mxu0 0
  %4497 = vmatprep.mubr.bf16.mxu0 0
  %4498 = vmatmul.mubr.bf16.gmra.mrb[0].mxu0 %v4255
  %v4499 = vpop.f32.mrb[0].mxu0
  %v4500 = vadd.f32 0.0, %v4499
  %v4501 = vpop.f32.mrb[0].mxu0
  %v4502 = vadd.f32 0.0, %v4501
  %v4503 = vpop.f32.mrb[0].mxu0
  %v4504 = vadd.f32 0.0, %v4503
  %v4505 = vpop.f32.mrb[0].mxu0
  %v4506 = vadd.f32 0.0, %v4505
  %4507 = vdwg.mxu0
  %4508 = vmatprep.subr.bf16.mxu0 %v4404
  %4509 = vmatpush1.bf16.msra.mxu0 %v4403
  %4510 = vmatprep.subr.bf16.mxu0 %v4408
  %4511 = vmatpush1.bf16.msra.mxu0 %v4407
  %4512 = vmatprep.subr.bf16.mxu0 %v4412
  %4513 = vmatpush1.bf16.msra.mxu0 %v4411
  %4514 = vmatprep.subr.bf16.mxu0 %v4416
  %4515 = vmatpush1.bf16.msra.mxu0 %v4415
  %4516 = vmatprep.subr.bf16.mxu0 %v4420
  %4517 = vmatpush1.bf16.msra.mxu0 %v4419
  %4518 = vmatprep.subr.bf16.mxu0 %v4424
  %4519 = vmatpush1.bf16.msra.mxu0 %v4423
  %4520 = vmatprep.subr.bf16.mxu0 %v4428
  %4521 = vmatpush1.bf16.msra.mxu0 %v4427
  %4522 = vmatprep.subr.bf16.mxu0 %v4432
  %4523 = vmatpush1.bf16.msra.mxu0 %v4431
  %4524 = vmatprep.subr.bf16.mxu0 0
  %4525 = vmatpush1.bf16.msra.mxu0 0
  %4526 = vmatprep.subr.bf16.mxu0 0
  %4527 = vmatpush1.bf16.msra.mxu0 0
  %4528 = vmatprep.subr.bf16.mxu0 0
  %4529 = vmatpush1.bf16.msra.mxu0 0
  %4530 = vmatprep.subr.bf16.mxu0 0
  %4531 = vmatpush1.bf16.msra.mxu0 0
  %4532 = vmatprep.subr.bf16.mxu0 0
  %4533 = vmatpush1.bf16.msra.mxu0 0
  %4534 = vmatprep.subr.bf16.mxu0 0
  %4535 = vmatpush1.bf16.msra.mxu0 0
  %4536 = vmatprep.subr.bf16.mxu0 0
  %4537 = vmatpush1.bf16.msra.mxu0 0
  %4538 = vmatprep.subr.bf16.mxu0 0
  %4539 = vmatpush1.bf16.msra.mxu0 0
  %4540 = vmatprep.mubr.bf16.mxu0 0
  %4541 = vmatmul.mubr.bf16.gmra.mrb[0].mxu0 %v4255
  %v4542 = vpop.f32.mrb[0].mxu0
  %v4543 = vadd.f32 0.0, %v4542
  %v4544 = vpop.f32.mrb[0].mxu0
  %v4545 = vadd.f32 0.0, %v4544
  %v4546 = vpop.f32.mrb[0].mxu0
  %v4547 = vadd.f32 0.0, %v4546
  %v4548 = vpop.f32.mrb[0].mxu0
  %v4549 = vadd.f32 0.0, %v4548
  %4550 = vdwg.mxu0
  %v4551 = vadd.f32 %v4265, %v4500
  %v4552 = vadd.f32 %v4266, %v4502
  %v4553 = vadd.f32 %v4267, %v4543
  %v4554 = vadd.f32 %v4268, %v4545
  %v4555 = vadd.f32 %v4269, %v4504
  %v4556 = vadd.f32 %v4270, %v4506
  %v4557 = vadd.f32 %v4271, %v4547
  %v4558 = vadd.f32 %v4272, %v4549
  %v4559 = vxor.u32 %v4551, 2147483648
  %v4560 = vxor.u32 %v4555, 2147483648
  %v4561 = vmul.f32 %v4559, 1.442695
  %v4562 = vpow.pop %v4561
  %v4563 = vmul.f32 %v4560, 1.442695
  %v4564 = vpow.pop %v4563
  %v4565 = vadd.f32 %v4562, 1.0
  %v4566 = vadd.f32 %v4564, 1.0
  %v4567 = vrcp.pop %v4565
  %v4568 = vmul.f32 1.0, %v4567
  %v4569 = vrcp.pop %v4566
  %v4570 = vmul.f32 1.0, %v4569
  %v4571 = vxor.u32 %v4552, 2147483648
  %v4572 = vxor.u32 %v4556, 2147483648
  %v4573 = vmul.f32 %v4571, 1.442695
  %v4574 = vpow.pop %v4573
  %v4575 = vmul.f32 %v4572, 1.442695
  %v4576 = vpow.pop %v4575
  %v4577 = vadd.f32 %v4574, 1.0
  %v4578 = vadd.f32 %v4576, 1.0
  %v4579 = vrcp.pop %v4577
  %v4580 = vmul.f32 1.0, %v4579
  %v4581 = vrcp.pop %v4578
  %v4582 = vmul.f32 1.0, %v4581
  %v4583 = vtanh.pop %v4553
  %v4584 = vtanh.pop %v4557
  %v4585 = vxor.u32 %v4554, 2147483648
  %v4586 = vxor.u32 %v4558, 2147483648
  %v4587 = vmul.f32 %v4585, 1.442695
  %v4588 = vpow.pop %v4587
  %v4589 = vmul.f32 %v4586, 1.442695
  %v4590 = vpow.pop %v4589
  %v4591 = vadd.f32 %v4588, 1.0
  %v4592 = vadd.f32 %v4590, 1.0
  %v4593 = vrcp.pop %v4591
  %v4594 = vmul.f32 1.0, %v4593
  %v4595 = vrcp.pop %v4592
  %v4596 = vmul.f32 1.0, %v4595
  %v4597 = vmul.f32 %v4580, %v4249
  %v4598 = vmul.f32 %v4582, %v4250
  %v4599 = vmul.f32 %v4568, %v4583
  %v4600 = vmul.f32 %v4570, %v4584
  %v4601 = vadd.f32 %v4597, %v4599
  %v4602 = vadd.f32 %v4598, %v4600
  %v4603 = vtanh.pop %v4601
  %v4604 = vtanh.pop %v4602
  %v4605 = vmul.f32 %v4594, %v4603
  %v4606 = vmul.f32 %v4596, %v4604
  %v4607 = vpack.c.bf16 %v4606, %v4605
  %v4609 = vunpack.c.l.b16 %v4607
  %v4610 = vunpack.c.h.b16 %v4607
  %v4611 = vpack.c.b16 %v4609, %v4609
  %v4612 = vpack.c.b16 %v4610, %v4610
  %4615 = vst [vmem:[%s3028 + $0x4] sm:$0xf] %v4611
  %4616 = vst [vmem:[%s3028 + $0xc] sm:$0xf] %v4612
  %v4617 = vld [vmem:[%s2323] sm:$0xff]
  %v4618 = vld [vmem:[%s2323 + $0x8] sm:$0xff]
  %v4619 = vld [vmem:[%s2323 + $0x10] sm:$0xff]
  %v4620 = vld [vmem:[%s2323 + $0x18] sm:$0xff]
  %v4621 = vld [vmem:[%s2323 + $0x20] sm:$0xff]
  %v4622 = vld [vmem:[%s2323 + $0x28] sm:$0xff]
  %v4623 = vld [vmem:[%s2323 + $0x30] sm:$0xff]
  %v4624 = vld [vmem:[%s2323 + $0x38] sm:$0xff]
  %v4625 = vld [vmem:[%s5] sm:$0xff]
  %v4626 = vld [vmem:[%s5 + $0x8] sm:$0xff]
  %v4627 = vld [vmem:[%s5 + $0x10] sm:$0xff]
  %v4628 = vld [vmem:[%s5 + $0x18] sm:$0xff]
  %v4629 = vld [vmem:[%s5 + $0x20] sm:$0xff]
  %v4630 = vld [vmem:[%s5 + $0x28] sm:$0xff]
  %v4631 = vld [vmem:[%s5 + $0x30] sm:$0xff]
  %v4632 = vld [vmem:[%s5 + $0x38] sm:$0xff]
  %v4633 = vld [vmem:[%s5 + $0x40] sm:$0xff]
  %v4634 = vld [vmem:[%s5 + $0x48] sm:$0xff]
  %v4635 = vld [vmem:[%s5 + $0x50] sm:$0xff]
  %v4636 = vld [vmem:[%s5 + $0x58] sm:$0xff]
  %v4637 = vld [vmem:[%s5 + $0x60] sm:$0xff]
  %v4638 = vld [vmem:[%s5 + $0x68] sm:$0xff]
  %v4639 = vld [vmem:[%s5 + $0x70] sm:$0xff]
  %v4640 = vld [vmem:[%s5 + $0x78] sm:$0xff]
  %v4641 = vld [vmem:[%s5 + $0x80] sm:$0xff]
  %v4642 = vld [vmem:[%s5 + $0x88] sm:$0xff]
  %v4643 = vld [vmem:[%s5 + $0x90] sm:$0xff]
  %v4644 = vld [vmem:[%s5 + $0x98] sm:$0xff]
  %v4645 = vld [vmem:[%s5 + $0xa0] sm:$0xff]
  %v4646 = vld [vmem:[%s5 + $0xa8] sm:$0xff]
  %v4647 = vld [vmem:[%s5 + $0xb0] sm:$0xff]
  %v4648 = vld [vmem:[%s5 + $0xb8] sm:$0xff]
  %v4649 = vld [vmem:[%s5 + $0xc0] sm:$0xff]
  %v4650 = vld [vmem:[%s5 + $0xc8] sm:$0xff]
  %v4651 = vld [vmem:[%s5 + $0xd0] sm:$0xff]
  %v4652 = vld [vmem:[%s5 + $0xd8] sm:$0xff]
  %v4653 = vld [vmem:[%s5 + $0xe0] sm:$0xff]
  %v4654 = vld [vmem:[%s5 + $0xe8] sm:$0xff]
  %v4655 = vld [vmem:[%s5 + $0xf0] sm:$0xff]
  %v4656 = vld [vmem:[%s5 + $0xf8] sm:$0xff]
  %v4689 = vunpack.c.l.b16 %v4625
  %v4690 = vunpack.c.h.b16 %v4625
  %v4691 = vunpack.c.l.b16 %v4626
  %v4692 = vunpack.c.h.b16 %v4626
  %v4693 = vunpack.c.l.b16 %v4627
  %v4694 = vunpack.c.h.b16 %v4627
  %v4695 = vunpack.c.l.b16 %v4628
  %v4696 = vunpack.c.h.b16 %v4628
  %v4697 = vunpack.c.l.b16 %v4629
  %v4698 = vunpack.c.h.b16 %v4629
  %v4699 = vunpack.c.l.b16 %v4630
  %v4700 = vunpack.c.h.b16 %v4630
  %v4701 = vunpack.c.l.b16 %v4631
  %v4702 = vunpack.c.h.b16 %v4631
  %v4703 = vunpack.c.l.b16 %v4632
  %v4704 = vunpack.c.h.b16 %v4632
  %v4705 = vunpack.c.l.b16 %v4633
  %v4706 = vunpack.c.h.b16 %v4633
  %v4707 = vunpack.c.l.b16 %v4634
  %v4708 = vunpack.c.h.b16 %v4634
  %v4709 = vunpack.c.l.b16 %v4635
  %v4710 = vunpack.c.h.b16 %v4635
  %v4711 = vunpack.c.l.b16 %v4636
  %v4712 = vunpack.c.h.b16 %v4636
  %v4713 = vunpack.c.l.b16 %v4637
  %v4714 = vunpack.c.h.b16 %v4637
  %v4715 = vunpack.c.l.b16 %v4638
  %v4716 = vunpack.c.h.b16 %v4638
  %v4717 = vunpack.c.l.b16 %v4639
  %v4718 = vunpack.c.h.b16 %v4639
  %v4719 = vunpack.c.l.b16 %v4640
  %v4720 = vunpack.c.h.b16 %v4640
  %v4721 = vunpack.c.l.b16 %v4641
  %v4722 = vunpack.c.h.b16 %v4641
  %v4723 = vunpack.c.l.b16 %v4642
  %v4724 = vunpack.c.h.b16 %v4642
  %v4725 = vunpack.c.l.b16 %v4643
  %v4726 = vunpack.c.h.b16 %v4643
  %v4727 = vunpack.c.l.b16 %v4644
  %v4728 = vunpack.c.h.b16 %v4644
  %v4729 = vunpack.c.l.b16 %v4645
  %v4730 = vunpack.c.h.b16 %v4645
  %v4731 = vunpack.c.l.b16 %v4646
  %v4732 = vunpack.c.h.b16 %v4646
  %v4733 = vunpack.c.l.b16 %v4647
  %v4734 = vunpack.c.h.b16 %v4647
  %v4735 = vunpack.c.l.b16 %v4648
  %v4736 = vunpack.c.h.b16 %v4648
  %v4737 = vunpack.c.l.b16 %v4649
  %v4738 = vunpack.c.h.b16 %v4649
  %v4739 = vunpack.c.l.b16 %v4650
  %v4740 = vunpack.c.h.b16 %v4650
  %v4741 = vunpack.c.l.b16 %v4651
  %v4742 = vunpack.c.h.b16 %v4651
  %v4743 = vunpack.c.l.b16 %v4652
  %v4744 = vunpack.c.h.b16 %v4652
  %v4745 = vunpack.c.l.b16 %v4653
  %v4746 = vunpack.c.h.b16 %v4653
  %v4747 = vunpack.c.l.b16 %v4654
  %v4748 = vunpack.c.h.b16 %v4654
  %v4749 = vunpack.c.l.b16 %v4655
  %v4750 = vunpack.c.h.b16 %v4655
  %v4751 = vunpack.c.l.b16 %v4656
  %v4752 = vunpack.c.h.b16 %v4656
  %v4753 = vpack.c.b16 %v4693, %v4689
  %v4754 = vpack.c.b16 %v4694, %v4690
  %v4755 = vpack.c.b16 %v4695, %v4691
  %v4756 = vpack.c.b16 %v4696, %v4692
  %v4757 = vpack.c.b16 %v4701, %v4697
  %v4758 = vpack.c.b16 %v4702, %v4698
  %v4759 = vpack.c.b16 %v4703, %v4699
  %v4760 = vpack.c.b16 %v4704, %v4700
  %v4761 = vpack.c.b16 %v4709, %v4705
  %v4762 = vpack.c.b16 %v4710, %v4706
  %v4763 = vpack.c.b16 %v4711, %v4707
  %v4764 = vpack.c.b16 %v4712, %v4708
  %v4765 = vpack.c.b16 %v4717, %v4713
  %v4766 = vpack.c.b16 %v4718, %v4714
  %v4767 = vpack.c.b16 %v4719, %v4715
  %v4768 = vpack.c.b16 %v4720, %v4716
  %v4769 = vpack.c.b16 %v4725, %v4721
  %v4770 = vpack.c.b16 %v4726, %v4722
  %v4771 = vpack.c.b16 %v4727, %v4723
  %v4772 = vpack.c.b16 %v4728, %v4724
  %v4773 = vpack.c.b16 %v4733, %v4729
  %v4774 = vpack.c.b16 %v4734, %v4730
  %v4775 = vpack.c.b16 %v4735, %v4731
  %v4776 = vpack.c.b16 %v4736, %v4732
  %v4777 = vpack.c.b16 %v4741, %v4737
  %v4778 = vpack.c.b16 %v4742, %v4738
  %v4779 = vpack.c.b16 %v4743, %v4739
  %v4780 = vpack.c.b16 %v4744, %v4740
  %v4781 = vpack.c.b16 %v4749, %v4745
  %v4782 = vpack.c.b16 %v4750, %v4746
  %v4783 = vpack.c.b16 %v4751, %v4747
  %v4784 = vpack.c.b16 %v4752, %v4748
  %4817 = vmatprep.subr.bf16.mxu0 %v4754
  %4818 = vmatpush1.bf16.msra.mxu0 %v4753
  %4819 = vmatprep.subr.bf16.mxu0 %v4758
  %4820 = vmatpush1.bf16.msra.mxu0 %v4757
  %4821 = vmatprep.subr.bf16.mxu0 %v4762
  %4822 = vmatpush1.bf16.msra.mxu0 %v4761
  %4823 = vmatprep.subr.bf16.mxu0 %v4766
  %4824 = vmatpush1.bf16.msra.mxu0 %v4765
  %4825 = vmatprep.subr.bf16.mxu0 %v4770
  %4826 = vmatpush1.bf16.msra.mxu0 %v4769
  %4827 = vmatprep.subr.bf16.mxu0 %v4774
  %4828 = vmatpush1.bf16.msra.mxu0 %v4773
  %4829 = vmatprep.subr.bf16.mxu0 %v4778
  %4830 = vmatpush1.bf16.msra.mxu0 %v4777
  %4831 = vmatprep.subr.bf16.mxu0 %v4782
  %4832 = vmatpush1.bf16.msra.mxu0 %v4781
  %4833 = vmatprep.subr.bf16.mxu0 0
  %4834 = vmatpush1.bf16.msra.mxu0 0
  %4835 = vmatprep.subr.bf16.mxu0 0
  %4836 = vmatpush1.bf16.msra.mxu0 0
  %4837 = vmatprep.subr.bf16.mxu0 0
  %4838 = vmatpush1.bf16.msra.mxu0 0
  %4839 = vmatprep.subr.bf16.mxu0 0
  %4840 = vmatpush1.bf16.msra.mxu0 0
  %4841 = vmatprep.subr.bf16.mxu0 0
  %4842 = vmatpush1.bf16.msra.mxu0 0
  %4843 = vmatprep.subr.bf16.mxu0 0
  %4844 = vmatpush1.bf16.msra.mxu0 0
  %4845 = vmatprep.subr.bf16.mxu0 0
  %4846 = vmatpush1.bf16.msra.mxu0 0
  %4847 = vmatprep.subr.bf16.mxu0 0
  %4848 = vmatpush1.bf16.msra.mxu0 0
  %4849 = vmatprep.mubr.bf16.mxu0 0
  %4850 = vmatmul.mubr.bf16.gmra.mrb[0].mxu0 %v4607
  %v4851 = vpop.f32.mrb[0].mxu0
  %v4852 = vadd.f32 0.0, %v4851
  %v4853 = vpop.f32.mrb[0].mxu0
  %v4854 = vadd.f32 0.0, %v4853
  %v4855 = vpop.f32.mrb[0].mxu0
  %v4856 = vadd.f32 0.0, %v4855
  %v4857 = vpop.f32.mrb[0].mxu0
  %v4858 = vadd.f32 0.0, %v4857
  %4859 = vdwg.mxu0
  %4860 = vmatprep.subr.bf16.mxu0 %v4756
  %4861 = vmatpush1.bf16.msra.mxu0 %v4755
  %4862 = vmatprep.subr.bf16.mxu0 %v4760
  %4863 = vmatpush1.bf16.msra.mxu0 %v4759
  %4864 = vmatprep.subr.bf16.mxu0 %v4764
  %4865 = vmatpush1.bf16.msra.mxu0 %v4763
  %4866 = vmatprep.subr.bf16.mxu0 %v4768
  %4867 = vmatpush1.bf16.msra.mxu0 %v4767
  %4868 = vmatprep.subr.bf16.mxu0 %v4772
  %4869 = vmatpush1.bf16.msra.mxu0 %v4771
  %4870 = vmatprep.subr.bf16.mxu0 %v4776
  %4871 = vmatpush1.bf16.msra.mxu0 %v4775
  %4872 = vmatprep.subr.bf16.mxu0 %v4780
  %4873 = vmatpush1.bf16.msra.mxu0 %v4779
  %4874 = vmatprep.subr.bf16.mxu0 %v4784
  %4875 = vmatpush1.bf16.msra.mxu0 %v4783
  %4876 = vmatprep.subr.bf16.mxu0 0
  %4877 = vmatpush1.bf16.msra.mxu0 0
  %4878 = vmatprep.subr.bf16.mxu0 0
  %4879 = vmatpush1.bf16.msra.mxu0 0
  %4880 = vmatprep.subr.bf16.mxu0 0
  %4881 = vmatpush1.bf16.msra.mxu0 0
  %4882 = vmatprep.subr.bf16.mxu0 0
  %4883 = vmatpush1.bf16.msra.mxu0 0
  %4884 = vmatprep.subr.bf16.mxu0 0
  %4885 = vmatpush1.bf16.msra.mxu0 0
  %4886 = vmatprep.subr.bf16.mxu0 0
  %4887 = vmatpush1.bf16.msra.mxu0 0
  %4888 = vmatprep.subr.bf16.mxu0 0
  %4889 = vmatpush1.bf16.msra.mxu0 0
  %4890 = vmatprep.subr.bf16.mxu0 0
  %4891 = vmatpush1.bf16.msra.mxu0 0
  %4892 = vmatprep.mubr.bf16.mxu0 0
  %4893 = vmatmul.mubr.bf16.gmra.mrb[0].mxu0 %v4607
  %v4894 = vpop.f32.mrb[0].mxu0
  %v4895 = vadd.f32 0.0, %v4894
  %v4896 = vpop.f32.mrb[0].mxu0
  %v4897 = vadd.f32 0.0, %v4896
  %v4898 = vpop.f32.mrb[0].mxu0
  %v4899 = vadd.f32 0.0, %v4898
  %v4900 = vpop.f32.mrb[0].mxu0
  %v4901 = vadd.f32 0.0, %v4900
  %4902 = vdwg.mxu0
  %v4903 = vadd.f32 %v4617, %v4852
  %v4904 = vadd.f32 %v4618, %v4854
  %v4905 = vadd.f32 %v4619, %v4895
  %v4906 = vadd.f32 %v4620, %v4897
  %v4907 = vadd.f32 %v4621, %v4856
  %v4908 = vadd.f32 %v4622, %v4858
  %v4909 = vadd.f32 %v4623, %v4899
  %v4910 = vadd.f32 %v4624, %v4901
  %v4911 = vxor.u32 %v4903, 2147483648
  %v4912 = vxor.u32 %v4907, 2147483648
  %v4913 = vmul.f32 %v4911, 1.442695
  %v4914 = vpow.pop %v4913
  %v4915 = vmul.f32 %v4912, 1.442695
  %v4916 = vpow.pop %v4915
  %v4917 = vadd.f32 %v4914, 1.0
  %v4918 = vadd.f32 %v4916, 1.0
  %v4919 = vrcp.pop %v4917
  %v4920 = vmul.f32 1.0, %v4919
  %v4921 = vrcp.pop %v4918
  %v4922 = vmul.f32 1.0, %v4921
  %v4923 = vxor.u32 %v4904, 2147483648
  %v4924 = vxor.u32 %v4908, 2147483648
  %v4925 = vmul.f32 %v4923, 1.442695
  %v4926 = vpow.pop %v4925
  %v4927 = vmul.f32 %v4924, 1.442695
  %v4928 = vpow.pop %v4927
  %v4929 = vadd.f32 %v4926, 1.0
  %v4930 = vadd.f32 %v4928, 1.0
  %v4931 = vrcp.pop %v4929
  %v4932 = vmul.f32 1.0, %v4931
  %v4933 = vrcp.pop %v4930
  %v4934 = vmul.f32 1.0, %v4933
  %v4935 = vtanh.pop %v4905
  %v4936 = vtanh.pop %v4909
  %v4937 = vxor.u32 %v4906, 2147483648
  %v4938 = vxor.u32 %v4910, 2147483648
  %v4939 = vmul.f32 %v4937, 1.442695
  %v4940 = vpow.pop %v4939
  %v4941 = vmul.f32 %v4938, 1.442695
  %v4942 = vpow.pop %v4941
  %v4943 = vadd.f32 %v4940, 1.0
  %v4944 = vadd.f32 %v4942, 1.0
  %v4945 = vrcp.pop %v4943
  %v4946 = vmul.f32 1.0, %v4945
  %v4947 = vrcp.pop %v4944
  %v4948 = vmul.f32 1.0, %v4947
  %v4949 = vmul.f32 %v4932, %v4601
  %v4950 = vmul.f32 %v4934, %v4602
  %v4951 = vmul.f32 %v4920, %v4935
  %v4952 = vmul.f32 %v4922, %v4936
  %v4953 = vadd.f32 %v4949, %v4951
  %v4954 = vadd.f32 %v4950, %v4952
  %v4955 = vtanh.pop %v4953
  %v4956 = vtanh.pop %v4954
  %v4957 = vmul.f32 %v4946, %v4955
  %v4958 = vmul.f32 %v4948, %v4956
  %v4959 = vpack.c.bf16 %v4958, %v4957
  %v4961 = vunpack.c.l.b16 %v4959
  %v4962 = vunpack.c.h.b16 %v4959
  %v4963 = vpack.c.b16 %v4961, %v4961
  %v4964 = vpack.c.b16 %v4962, %v4962
  %4967 = vst [vmem:[%s2674 + $0x4] sm:$0xf] %v4963
  %4968 = vst [vmem:[%s2674 + $0xc] sm:$0xf] %v4964
  %v4969 = vld [vmem:[%s1969] sm:$0xff]
  %v4970 = vld [vmem:[%s1969 + $0x8] sm:$0xff]
  %v4971 = vld [vmem:[%s1969 + $0x10] sm:$0xff]
  %v4972 = vld [vmem:[%s1969 + $0x18] sm:$0xff]
  %v4973 = vld [vmem:[%s1969 + $0x20] sm:$0xff]
  %v4974 = vld [vmem:[%s1969 + $0x28] sm:$0xff]
  %v4975 = vld [vmem:[%s1969 + $0x30] sm:$0xff]
  %v4976 = vld [vmem:[%s1969 + $0x38] sm:$0xff]
  %v4977 = vld [vmem:[%s5] sm:$0xff]
  %v4978 = vld [vmem:[%s5 + $0x8] sm:$0xff]
  %v4979 = vld [vmem:[%s5 + $0x10] sm:$0xff]
  %v4980 = vld [vmem:[%s5 + $0x18] sm:$0xff]
  %v4981 = vld [vmem:[%s5 + $0x20] sm:$0xff]
  %v4982 = vld [vmem:[%s5 + $0x28] sm:$0xff]
  %v4983 = vld [vmem:[%s5 + $0x30] sm:$0xff]
  %v4984 = vld [vmem:[%s5 + $0x38] sm:$0xff]
  %v4985 = vld [vmem:[%s5 + $0x40] sm:$0xff]
  %v4986 = vld [vmem:[%s5 + $0x48] sm:$0xff]
  %v4987 = vld [vmem:[%s5 + $0x50] sm:$0xff]
  %v4988 = vld [vmem:[%s5 + $0x58] sm:$0xff]
  %v4989 = vld [vmem:[%s5 + $0x60] sm:$0xff]
  %v4990 = vld [vmem:[%s5 + $0x68] sm:$0xff]
  %v4991 = vld [vmem:[%s5 + $0x70] sm:$0xff]
  %v4992 = vld [vmem:[%s5 + $0x78] sm:$0xff]
  %v4993 = vld [vmem:[%s5 + $0x80] sm:$0xff]
  %v4994 = vld [vmem:[%s5 + $0x88] sm:$0xff]
  %v4995 = vld [vmem:[%s5 + $0x90] sm:$0xff]
  %v4996 = vld [vmem:[%s5 + $0x98] sm:$0xff]
  %v4997 = vld [vmem:[%s5 + $0xa0] sm:$0xff]
  %v4998 = vld [vmem:[%s5 + $0xa8] sm:$0xff]
  %v4999 = vld [vmem:[%s5 + $0xb0] sm:$0xff]
  %v5000 = vld [vmem:[%s5 + $0xb8] sm:$0xff]
  %v5001 = vld [vmem:[%s5 + $0xc0] sm:$0xff]
  %v5002 = vld [vmem:[%s5 + $0xc8] sm:$0xff]
  %v5003 = vld [vmem:[%s5 + $0xd0] sm:$0xff]
  %v5004 = vld [vmem:[%s5 + $0xd8] sm:$0xff]
  %v5005 = vld [vmem:[%s5 + $0xe0] sm:$0xff]
  %v5006 = vld [vmem:[%s5 + $0xe8] sm:$0xff]
  %v5007 = vld [vmem:[%s5 + $0xf0] sm:$0xff]
  %v5008 = vld [vmem:[%s5 + $0xf8] sm:$0xff]
  %v5041 = vunpack.c.l.b16 %v4977
  %v5042 = vunpack.c.h.b16 %v4977
  %v5043 = vunpack.c.l.b16 %v4978
  %v5044 = vunpack.c.h.b16 %v4978
  %v5045 = vunpack.c.l.b16 %v4979
  %v5046 = vunpack.c.h.b16 %v4979
  %v5047 = vunpack.c.l.b16 %v4980
  %v5048 = vunpack.c.h.b16 %v4980
  %v5049 = vunpack.c.l.b16 %v4981
  %v5050 = vunpack.c.h.b16 %v4981
  %v5051 = vunpack.c.l.b16 %v4982
  %v5052 = vunpack.c.h.b16 %v4982
  %v5053 = vunpack.c.l.b16 %v4983
  %v5054 = vunpack.c.h.b16 %v4983
  %v5055 = vunpack.c.l.b16 %v4984
  %v5056 = vunpack.c.h.b16 %v4984
  %v5057 = vunpack.c.l.b16 %v4985
  %v5058 = vunpack.c.h.b16 %v4985
  %v5059 = vunpack.c.l.b16 %v4986
  %v5060 = vunpack.c.h.b16 %v4986
  %v5061 = vunpack.c.l.b16 %v4987
  %v5062 = vunpack.c.h.b16 %v4987
  %v5063 = vunpack.c.l.b16 %v4988
  %v5064 = vunpack.c.h.b16 %v4988
  %v5065 = vunpack.c.l.b16 %v4989
  %v5066 = vunpack.c.h.b16 %v4989
  %v5067 = vunpack.c.l.b16 %v4990
  %v5068 = vunpack.c.h.b16 %v4990
  %v5069 = vunpack.c.l.b16 %v4991
  %v5070 = vunpack.c.h.b16 %v4991
  %v5071 = vunpack.c.l.b16 %v4992
  %v5072 = vunpack.c.h.b16 %v4992
  %v5073 = vunpack.c.l.b16 %v4993
  %v5074 = vunpack.c.h.b16 %v4993
  %v5075 = vunpack.c.l.b16 %v4994
  %v5076 = vunpack.c.h.b16 %v4994
  %v5077 = vunpack.c.l.b16 %v4995
  %v5078 = vunpack.c.h.b16 %v4995
  %v5079 = vunpack.c.l.b16 %v4996
  %v5080 = vunpack.c.h.b16 %v4996
  %v5081 = vunpack.c.l.b16 %v4997
  %v5082 = vunpack.c.h.b16 %v4997
  %v5083 = vunpack.c.l.b16 %v4998
  %v5084 = vunpack.c.h.b16 %v4998
  %v5085 = vunpack.c.l.b16 %v4999
  %v5086 = vunpack.c.h.b16 %v4999
  %v5087 = vunpack.c.l.b16 %v5000
  %v5088 = vunpack.c.h.b16 %v5000
  %v5089 = vunpack.c.l.b16 %v5001
  %v5090 = vunpack.c.h.b16 %v5001
  %v5091 = vunpack.c.l.b16 %v5002
  %v5092 = vunpack.c.h.b16 %v5002
  %v5093 = vunpack.c.l.b16 %v5003
  %v5094 = vunpack.c.h.b16 %v5003
  %v5095 = vunpack.c.l.b16 %v5004
  %v5096 = vunpack.c.h.b16 %v5004
  %v5097 = vunpack.c.l.b16 %v5005
  %v5098 = vunpack.c.h.b16 %v5005
  %v5099 = vunpack.c.l.b16 %v5006
  %v5100 = vunpack.c.h.b16 %v5006
  %v5101 = vunpack.c.l.b16 %v5007
  %v5102 = vunpack.c.h.b16 %v5007
  %v5103 = vunpack.c.l.b16 %v5008
  %v5104 = vunpack.c.h.b16 %v5008
  %v5105 = vpack.c.b16 %v5045, %v5041
  %v5106 = vpack.c.b16 %v5046, %v5042
  %v5107 = vpack.c.b16 %v5047, %v5043
  %v5108 = vpack.c.b16 %v5048, %v5044
  %v5109 = vpack.c.b16 %v5053, %v5049
  %v5110 = vpack.c.b16 %v5054, %v5050
  %v5111 = vpack.c.b16 %v5055, %v5051
  %v5112 = vpack.c.b16 %v5056, %v5052
  %v5113 = vpack.c.b16 %v5061, %v5057
  %v5114 = vpack.c.b16 %v5062, %v5058
  %v5115 = vpack.c.b16 %v5063, %v5059
  %v5116 = vpack.c.b16 %v5064, %v5060
  %v5117 = vpack.c.b16 %v5069, %v5065
  %v5118 = vpack.c.b16 %v5070, %v5066
  %v5119 = vpack.c.b16 %v5071, %v5067
  %v5120 = vpack.c.b16 %v5072, %v5068
  %v5121 = vpack.c.b16 %v5077, %v5073
  %v5122 = vpack.c.b16 %v5078, %v5074
  %v5123 = vpack.c.b16 %v5079, %v5075
  %v5124 = vpack.c.b16 %v5080, %v5076
  %v5125 = vpack.c.b16 %v5085, %v5081
  %v5126 = vpack.c.b16 %v5086, %v5082
  %v5127 = vpack.c.b16 %v5087, %v5083
  %v5128 = vpack.c.b16 %v5088, %v5084
  %v5129 = vpack.c.b16 %v5093, %v5089
  %v5130 = vpack.c.b16 %v5094, %v5090
  %v5131 = vpack.c.b16 %v5095, %v5091
  %v5132 = vpack.c.b16 %v5096, %v5092
  %v5133 = vpack.c.b16 %v5101, %v5097
  %v5134 = vpack.c.b16 %v5102, %v5098
  %v5135 = vpack.c.b16 %v5103, %v5099
  %v5136 = vpack.c.b16 %v5104, %v5100
  %5169 = vmatprep.subr.bf16.mxu0 %v5106
  %5170 = vmatpush1.bf16.msra.mxu0 %v5105
  %5171 = vmatprep.subr.bf16.mxu0 %v5110
  %5172 = vmatpush1.bf16.msra.mxu0 %v5109
  %5173 = vmatprep.subr.bf16.mxu0 %v5114
  %5174 = vmatpush1.bf16.msra.mxu0 %v5113
  %5175 = vmatprep.subr.bf16.mxu0 %v5118
  %5176 = vmatpush1.bf16.msra.mxu0 %v5117
  %5177 = vmatprep.subr.bf16.mxu0 %v5122
  %5178 = vmatpush1.bf16.msra.mxu0 %v5121
  %5179 = vmatprep.subr.bf16.mxu0 %v5126
  %5180 = vmatpush1.bf16.msra.mxu0 %v5125
  %5181 = vmatprep.subr.bf16.mxu0 %v5130
  %5182 = vmatpush1.bf16.msra.mxu0 %v5129
  %5183 = vmatprep.subr.bf16.mxu0 %v5134
  %5184 = vmatpush1.bf16.msra.mxu0 %v5133
  %5185 = vmatprep.subr.bf16.mxu0 0
  %5186 = vmatpush1.bf16.msra.mxu0 0
  %5187 = vmatprep.subr.bf16.mxu0 0
  %5188 = vmatpush1.bf16.msra.mxu0 0
  %5189 = vmatprep.subr.bf16.mxu0 0
  %5190 = vmatpush1.bf16.msra.mxu0 0
  %5191 = vmatprep.subr.bf16.mxu0 0
  %5192 = vmatpush1.bf16.msra.mxu0 0
  %5193 = vmatprep.subr.bf16.mxu0 0
  %5194 = vmatpush1.bf16.msra.mxu0 0
  %5195 = vmatprep.subr.bf16.mxu0 0
  %5196 = vmatpush1.bf16.msra.mxu0 0
  %5197 = vmatprep.subr.bf16.mxu0 0
  %5198 = vmatpush1.bf16.msra.mxu0 0
  %5199 = vmatprep.subr.bf16.mxu0 0
  %5200 = vmatpush1.bf16.msra.mxu0 0
  %5201 = vmatprep.mubr.bf16.mxu0 0
  %5202 = vmatmul.mubr.bf16.gmra.mrb[0].mxu0 %v4959
  %v5203 = vpop.f32.mrb[0].mxu0
  %v5204 = vadd.f32 0.0, %v5203
  %v5205 = vpop.f32.mrb[0].mxu0
  %v5206 = vadd.f32 0.0, %v5205
  %v5207 = vpop.f32.mrb[0].mxu0
  %v5208 = vadd.f32 0.0, %v5207
  %v5209 = vpop.f32.mrb[0].mxu0
  %v5210 = vadd.f32 0.0, %v5209
  %5211 = vdwg.mxu0
  %5212 = vmatprep.subr.bf16.mxu0 %v5108
  %5213 = vmatpush1.bf16.msra.mxu0 %v5107
  %5214 = vmatprep.subr.bf16.mxu0 %v5112
  %5215 = vmatpush1.bf16.msra.mxu0 %v5111
  %5216 = vmatprep.subr.bf16.mxu0 %v5116
  %5217 = vmatpush1.bf16.msra.mxu0 %v5115
  %5218 = vmatprep.subr.bf16.mxu0 %v5120
  %5219 = vmatpush1.bf16.msra.mxu0 %v5119
  %5220 = vmatprep.subr.bf16.mxu0 %v5124
  %5221 = vmatpush1.bf16.msra.mxu0 %v5123
  %5222 = vmatprep.subr.bf16.mxu0 %v5128
  %5223 = vmatpush1.bf16.msra.mxu0 %v5127
  %5224 = vmatprep.subr.bf16.mxu0 %v5132
  %5225 = vmatpush1.bf16.msra.mxu0 %v5131
  %5226 = vmatprep.subr.bf16.mxu0 %v5136
  %5227 = vmatpush1.bf16.msra.mxu0 %v5135
  %5228 = vmatprep.subr.bf16.mxu0 0
  %5229 = vmatpush1.bf16.msra.mxu0 0
  %5230 = vmatprep.subr.bf16.mxu0 0
  %5231 = vmatpush1.bf16.msra.mxu0 0
  %5232 = vmatprep.subr.bf16.mxu0 0
  %5233 = vmatpush1.bf16.msra.mxu0 0
  %5234 = vmatprep.subr.bf16.mxu0 0
  %5235 = vmatpush1.bf16.msra.mxu0 0
  %5236 = vmatprep.subr.bf16.mxu0 0
  %5237 = vmatpush1.bf16.msra.mxu0 0
  %5238 = vmatprep.subr.bf16.mxu0 0
  %5239 = vmatpush1.bf16.msra.mxu0 0
  %5240 = vmatprep.subr.bf16.mxu0 0
  %5241 = vmatpush1.bf16.msra.mxu0 0
  %5242 = vmatprep.subr.bf16.mxu0 0
  %5243 = vmatpush1.bf16.msra.mxu0 0
  %5244 = vmatprep.mubr.bf16.mxu0 0
  %5245 = vmatmul.mubr.bf16.gmra.mrb[0].mxu0 %v4959
  %v5246 = vpop.f32.mrb[0].mxu0
  %v5247 = vadd.f32 0.0, %v5246
  %v5248 = vpop.f32.mrb[0].mxu0
  %v5249 = vadd.f32 0.0, %v5248
  %v5250 = vpop.f32.mrb[0].mxu0
  %v5251 = vadd.f32 0.0, %v5250
  %v5252 = vpop.f32.mrb[0].mxu0
  %v5253 = vadd.f32 0.0, %v5252
  %5254 = vdwg.mxu0
  %v5255 = vadd.f32 %v4969, %v5204
  %v5256 = vadd.f32 %v4970, %v5206
  %v5257 = vadd.f32 %v4971, %v5247
  %v5258 = vadd.f32 %v4972, %v5249
  %v5259 = vadd.f32 %v4973, %v5208
  %v5260 = vadd.f32 %v4974, %v5210
  %v5261 = vadd.f32 %v4975, %v5251
  %v5262 = vadd.f32 %v4976, %v5253
  %v5263 = vxor.u32 %v5255, 2147483648
  %v5264 = vxor.u32 %v5259, 2147483648
  %v5265 = vmul.f32 %v5263, 1.442695
  %v5266 = vpow.pop %v5265
  %v5267 = vmul.f32 %v5264, 1.442695
  %v5268 = vpow.pop %v5267
  %v5269 = vadd.f32 %v5266, 1.0
  %v5270 = vadd.f32 %v5268, 1.0
  %v5271 = vrcp.pop %v5269
  %v5272 = vmul.f32 1.0, %v5271
  %v5273 = vrcp.pop %v5270
  %v5274 = vmul.f32 1.0, %v5273
  %v5275 = vxor.u32 %v5256, 2147483648
  %v5276 = vxor.u32 %v5260, 2147483648
  %v5277 = vmul.f32 %v5275, 1.442695
  %v5278 = vpow.pop %v5277
  %v5279 = vmul.f32 %v5276, 1.442695
  %v5280 = vpow.pop %v5279
  %v5281 = vadd.f32 %v5278, 1.0
  %v5282 = vadd.f32 %v5280, 1.0
  %v5283 = vrcp.pop %v5281
  %v5284 = vmul.f32 1.0, %v5283
  %v5285 = vrcp.pop %v5282
  %v5286 = vmul.f32 1.0, %v5285
  %v5287 = vtanh.pop %v5257
  %v5288 = vtanh.pop %v5261
  %v5289 = vxor.u32 %v5258, 2147483648
  %v5290 = vxor.u32 %v5262, 2147483648
  %v5291 = vmul.f32 %v5289, 1.442695
  %v5292 = vpow.pop %v5291
  %v5293 = vmul.f32 %v5290, 1.442695
  %v5294 = vpow.pop %v5293
  %v5295 = vadd.f32 %v5292, 1.0
  %v5296 = vadd.f32 %v5294, 1.0
  %v5297 = vrcp.pop %v5295
  %v5298 = vmul.f32 1.0, %v5297
  %v5299 = vrcp.pop %v5296
  %v5300 = vmul.f32 1.0, %v5299
  %v5301 = vmul.f32 %v5284, %v4953
  %v5302 = vmul.f32 %v5286, %v4954
  %v5303 = vmul.f32 %v5272, %v5287
  %v5304 = vmul.f32 %v5274, %v5288
  %v5305 = vadd.f32 %v5301, %v5303
  %v5306 = vadd.f32 %v5302, %v5304
  %v5307 = vtanh.pop %v5305
  %v5308 = vtanh.pop %v5306
  %v5309 = vmul.f32 %v5298, %v5307
  %v5310 = vmul.f32 %v5300, %v5308
  %v5311 = vpack.c.bf16 %v5310, %v5309
  %v5313 = vunpack.c.l.b16 %v5311
  %v5314 = vunpack.c.h.b16 %v5311
  %v5315 = vpack.c.b16 %v5313, %v5313
  %v5316 = vpack.c.b16 %v5314, %v5314
  %5319 = vst [vmem:[%s2320 + $0x4] sm:$0xf] %v5315
  %5320 = vst [vmem:[%s2320 + $0xc] sm:$0xf] %v5316
  %v5321 = vld [vmem:[%s1615] sm:$0xff]
  %v5322 = vld [vmem:[%s1615 + $0x8] sm:$0xff]
  %v5323 = vld [vmem:[%s1615 + $0x10] sm:$0xff]
  %v5324 = vld [vmem:[%s1615 + $0x18] sm:$0xff]
  %v5325 = vld [vmem:[%s1615 + $0x20] sm:$0xff]
  %v5326 = vld [vmem:[%s1615 + $0x28] sm:$0xff]
  %v5327 = vld [vmem:[%s1615 + $0x30] sm:$0xff]
  %v5328 = vld [vmem:[%s1615 + $0x38] sm:$0xff]
  %v5329 = vld [vmem:[%s5] sm:$0xff]
  %v5330 = vld [vmem:[%s5 + $0x8] sm:$0xff]
  %v5331 = vld [vmem:[%s5 + $0x10] sm:$0xff]
  %v5332 = vld [vmem:[%s5 + $0x18] sm:$0xff]
  %v5333 = vld [vmem:[%s5 + $0x20] sm:$0xff]
  %v5334 = vld [vmem:[%s5 + $0x28] sm:$0xff]
  %v5335 = vld [vmem:[%s5 + $0x30] sm:$0xff]
  %v5336 = vld [vmem:[%s5 + $0x38] sm:$0xff]
  %v5337 = vld [vmem:[%s5 + $0x40] sm:$0xff]
  %v5338 = vld [vmem:[%s5 + $0x48] sm:$0xff]
  %v5339 = vld [vmem:[%s5 + $0x50] sm:$0xff]
  %v5340 = vld [vmem:[%s5 + $0x58] sm:$0xff]
  %v5341 = vld [vmem:[%s5 + $0x60] sm:$0xff]
  %v5342 = vld [vmem:[%s5 + $0x68] sm:$0xff]
  %v5343 = vld [vmem:[%s5 + $0x70] sm:$0xff]
  %v5344 = vld [vmem:[%s5 + $0x78] sm:$0xff]
  %v5345 = vld [vmem:[%s5 + $0x80] sm:$0xff]
  %v5346 = vld [vmem:[%s5 + $0x88] sm:$0xff]
  %v5347 = vld [vmem:[%s5 + $0x90] sm:$0xff]
  %v5348 = vld [vmem:[%s5 + $0x98] sm:$0xff]
  %v5349 = vld [vmem:[%s5 + $0xa0] sm:$0xff]
  %v5350 = vld [vmem:[%s5 + $0xa8] sm:$0xff]
  %v5351 = vld [vmem:[%s5 + $0xb0] sm:$0xff]
  %v5352 = vld [vmem:[%s5 + $0xb8] sm:$0xff]
  %v5353 = vld [vmem:[%s5 + $0xc0] sm:$0xff]
  %v5354 = vld [vmem:[%s5 + $0xc8] sm:$0xff]
  %v5355 = vld [vmem:[%s5 + $0xd0] sm:$0xff]
  %v5356 = vld [vmem:[%s5 + $0xd8] sm:$0xff]
  %v5357 = vld [vmem:[%s5 + $0xe0] sm:$0xff]
  %v5358 = vld [vmem:[%s5 + $0xe8] sm:$0xff]
  %v5359 = vld [vmem:[%s5 + $0xf0] sm:$0xff]
  %v5360 = vld [vmem:[%s5 + $0xf8] sm:$0xff]
  %v5393 = vunpack.c.l.b16 %v5329
  %v5394 = vunpack.c.h.b16 %v5329
  %v5395 = vunpack.c.l.b16 %v5330
  %v5396 = vunpack.c.h.b16 %v5330
  %v5397 = vunpack.c.l.b16 %v5331
  %v5398 = vunpack.c.h.b16 %v5331
  %v5399 = vunpack.c.l.b16 %v5332
  %v5400 = vunpack.c.h.b16 %v5332
  %v5401 = vunpack.c.l.b16 %v5333
  %v5402 = vunpack.c.h.b16 %v5333
  %v5403 = vunpack.c.l.b16 %v5334
  %v5404 = vunpack.c.h.b16 %v5334
  %v5405 = vunpack.c.l.b16 %v5335
  %v5406 = vunpack.c.h.b16 %v5335
  %v5407 = vunpack.c.l.b16 %v5336
  %v5408 = vunpack.c.h.b16 %v5336
  %v5409 = vunpack.c.l.b16 %v5337
  %v5410 = vunpack.c.h.b16 %v5337
  %v5411 = vunpack.c.l.b16 %v5338
  %v5412 = vunpack.c.h.b16 %v5338
  %v5413 = vunpack.c.l.b16 %v5339
  %v5414 = vunpack.c.h.b16 %v5339
  %v5415 = vunpack.c.l.b16 %v5340
  %v5416 = vunpack.c.h.b16 %v5340
  %v5417 = vunpack.c.l.b16 %v5341
  %v5418 = vunpack.c.h.b16 %v5341
  %v5419 = vunpack.c.l.b16 %v5342
  %v5420 = vunpack.c.h.b16 %v5342
  %v5421 = vunpack.c.l.b16 %v5343
  %v5422 = vunpack.c.h.b16 %v5343
  %v5423 = vunpack.c.l.b16 %v5344
  %v5424 = vunpack.c.h.b16 %v5344
  %v5425 = vunpack.c.l.b16 %v5345
  %v5426 = vunpack.c.h.b16 %v5345
  %v5427 = vunpack.c.l.b16 %v5346
  %v5428 = vunpack.c.h.b16 %v5346
  %v5429 = vunpack.c.l.b16 %v5347
  %v5430 = vunpack.c.h.b16 %v5347
  %v5431 = vunpack.c.l.b16 %v5348
  %v5432 = vunpack.c.h.b16 %v5348
  %v5433 = vunpack.c.l.b16 %v5349
  %v5434 = vunpack.c.h.b16 %v5349
  %v5435 = vunpack.c.l.b16 %v5350
  %v5436 = vunpack.c.h.b16 %v5350
  %v5437 = vunpack.c.l.b16 %v5351
  %v5438 = vunpack.c.h.b16 %v5351
  %v5439 = vunpack.c.l.b16 %v5352
  %v5440 = vunpack.c.h.b16 %v5352
  %v5441 = vunpack.c.l.b16 %v5353
  %v5442 = vunpack.c.h.b16 %v5353
  %v5443 = vunpack.c.l.b16 %v5354
  %v5444 = vunpack.c.h.b16 %v5354
  %v5445 = vunpack.c.l.b16 %v5355
  %v5446 = vunpack.c.h.b16 %v5355
  %v5447 = vunpack.c.l.b16 %v5356
  %v5448 = vunpack.c.h.b16 %v5356
  %v5449 = vunpack.c.l.b16 %v5357
  %v5450 = vunpack.c.h.b16 %v5357
  %v5451 = vunpack.c.l.b16 %v5358
  %v5452 = vunpack.c.h.b16 %v5358
  %v5453 = vunpack.c.l.b16 %v5359
  %v5454 = vunpack.c.h.b16 %v5359
  %v5455 = vunpack.c.l.b16 %v5360
  %v5456 = vunpack.c.h.b16 %v5360
  %v5457 = vpack.c.b16 %v5397, %v5393
  %v5458 = vpack.c.b16 %v5398, %v5394
  %v5459 = vpack.c.b16 %v5399, %v5395
  %v5460 = vpack.c.b16 %v5400, %v5396
  %v5461 = vpack.c.b16 %v5405, %v5401
  %v5462 = vpack.c.b16 %v5406, %v5402
  %v5463 = vpack.c.b16 %v5407, %v5403
  %v5464 = vpack.c.b16 %v5408, %v5404
  %v5465 = vpack.c.b16 %v5413, %v5409
  %v5466 = vpack.c.b16 %v5414, %v5410
  %v5467 = vpack.c.b16 %v5415, %v5411
  %v5468 = vpack.c.b16 %v5416, %v5412
  %v5469 = vpack.c.b16 %v5421, %v5417
  %v5470 = vpack.c.b16 %v5422, %v5418
  %v5471 = vpack.c.b16 %v5423, %v5419
  %v5472 = vpack.c.b16 %v5424, %v5420
  %v5473 = vpack.c.b16 %v5429, %v5425
  %v5474 = vpack.c.b16 %v5430, %v5426
  %v5475 = vpack.c.b16 %v5431, %v5427
  %v5476 = vpack.c.b16 %v5432, %v5428
  %v5477 = vpack.c.b16 %v5437, %v5433
  %v5478 = vpack.c.b16 %v5438, %v5434
  %v5479 = vpack.c.b16 %v5439, %v5435
  %v5480 = vpack.c.b16 %v5440, %v5436
  %v5481 = vpack.c.b16 %v5445, %v5441
  %v5482 = vpack.c.b16 %v5446, %v5442
  %v5483 = vpack.c.b16 %v5447, %v5443
  %v5484 = vpack.c.b16 %v5448, %v5444
  %v5485 = vpack.c.b16 %v5453, %v5449
  %v5486 = vpack.c.b16 %v5454, %v5450
  %v5487 = vpack.c.b16 %v5455, %v5451
  %v5488 = vpack.c.b16 %v5456, %v5452
  %5521 = vmatprep.subr.bf16.mxu0 %v5458
  %5522 = vmatpush1.bf16.msra.mxu0 %v5457
  %5523 = vmatprep.subr.bf16.mxu0 %v5462
  %5524 = vmatpush1.bf16.msra.mxu0 %v5461
  %5525 = vmatprep.subr.bf16.mxu0 %v5466
  %5526 = vmatpush1.bf16.msra.mxu0 %v5465
  %5527 = vmatprep.subr.bf16.mxu0 %v5470
  %5528 = vmatpush1.bf16.msra.mxu0 %v5469
  %5529 = vmatprep.subr.bf16.mxu0 %v5474
  %5530 = vmatpush1.bf16.msra.mxu0 %v5473
  %5531 = vmatprep.subr.bf16.mxu0 %v5478
  %5532 = vmatpush1.bf16.msra.mxu0 %v5477
  %5533 = vmatprep.subr.bf16.mxu0 %v5482
  %5534 = vmatpush1.bf16.msra.mxu0 %v5481
  %5535 = vmatprep.subr.bf16.mxu0 %v5486
  %5536 = vmatpush1.bf16.msra.mxu0 %v5485
  %5537 = vmatprep.subr.bf16.mxu0 0
  %5538 = vmatpush1.bf16.msra.mxu0 0
  %5539 = vmatprep.subr.bf16.mxu0 0
  %5540 = vmatpush1.bf16.msra.mxu0 0
  %5541 = vmatprep.subr.bf16.mxu0 0
  %5542 = vmatpush1.bf16.msra.mxu0 0
  %5543 = vmatprep.subr.bf16.mxu0 0
  %5544 = vmatpush1.bf16.msra.mxu0 0
  %5545 = vmatprep.subr.bf16.mxu0 0
  %5546 = vmatpush1.bf16.msra.mxu0 0
  %5547 = vmatprep.subr.bf16.mxu0 0
  %5548 = vmatpush1.bf16.msra.mxu0 0
  %5549 = vmatprep.subr.bf16.mxu0 0
  %5550 = vmatpush1.bf16.msra.mxu0 0
  %5551 = vmatprep.subr.bf16.mxu0 0
  %5552 = vmatpush1.bf16.msra.mxu0 0
  %5553 = vmatprep.mubr.bf16.mxu0 0
  %5554 = vmatmul.mubr.bf16.gmra.mrb[0].mxu0 %v5311
  %v5555 = vpop.f32.mrb[0].mxu0
  %v5556 = vadd.f32 0.0, %v5555
  %v5557 = vpop.f32.mrb[0].mxu0
  %v5558 = vadd.f32 0.0, %v5557
  %v5559 = vpop.f32.mrb[0].mxu0
  %v5560 = vadd.f32 0.0, %v5559
  %v5561 = vpop.f32.mrb[0].mxu0
  %v5562 = vadd.f32 0.0, %v5561
  %5563 = vdwg.mxu0
  %5564 = vmatprep.subr.bf16.mxu0 %v5460
  %5565 = vmatpush1.bf16.msra.mxu0 %v5459
  %5566 = vmatprep.subr.bf16.mxu0 %v5464
  %5567 = vmatpush1.bf16.msra.mxu0 %v5463
  %5568 = vmatprep.subr.bf16.mxu0 %v5468
  %5569 = vmatpush1.bf16.msra.mxu0 %v5467
  %5570 = vmatprep.subr.bf16.mxu0 %v5472
  %5571 = vmatpush1.bf16.msra.mxu0 %v5471
  %5572 = vmatprep.subr.bf16.mxu0 %v5476
  %5573 = vmatpush1.bf16.msra.mxu0 %v5475
  %5574 = vmatprep.subr.bf16.mxu0 %v5480
  %5575 = vmatpush1.bf16.msra.mxu0 %v5479
  %5576 = vmatprep.subr.bf16.mxu0 %v5484
  %5577 = vmatpush1.bf16.msra.mxu0 %v5483
  %5578 = vmatprep.subr.bf16.mxu0 %v5488
  %5579 = vmatpush1.bf16.msra.mxu0 %v5487
  %5580 = vmatprep.subr.bf16.mxu0 0
  %5581 = vmatpush1.bf16.msra.mxu0 0
  %5582 = vmatprep.subr.bf16.mxu0 0
  %5583 = vmatpush1.bf16.msra.mxu0 0
  %5584 = vmatprep.subr.bf16.mxu0 0
  %5585 = vmatpush1.bf16.msra.mxu0 0
  %5586 = vmatprep.subr.bf16.mxu0 0
  %5587 = vmatpush1.bf16.msra.mxu0 0
  %5588 = vmatprep.subr.bf16.mxu0 0
  %5589 = vmatpush1.bf16.msra.mxu0 0
  %5590 = vmatprep.subr.bf16.mxu0 0
  %5591 = vmatpush1.bf16.msra.mxu0 0
  %5592 = vmatprep.subr.bf16.mxu0 0
  %5593 = vmatpush1.bf16.msra.mxu0 0
  %5594 = vmatprep.subr.bf16.mxu0 0
  %5595 = vmatpush1.bf16.msra.mxu0 0
  %5596 = vmatprep.mubr.bf16.mxu0 0
  %5597 = vmatmul.mubr.bf16.gmra.mrb[0].mxu0 %v5311
  %v5598 = vpop.f32.mrb[0].mxu0
  %v5599 = vadd.f32 0.0, %v5598
  %v5600 = vpop.f32.mrb[0].mxu0
  %v5601 = vadd.f32 0.0, %v5600
  %v5602 = vpop.f32.mrb[0].mxu0
  %v5603 = vadd.f32 0.0, %v5602
  %v5604 = vpop.f32.mrb[0].mxu0
  %v5605 = vadd.f32 0.0, %v5604
  %5606 = vdwg.mxu0
  %v5607 = vadd.f32 %v5321, %v5556
  %v5608 = vadd.f32 %v5322, %v5558
  %v5609 = vadd.f32 %v5323, %v5599
  %v5610 = vadd.f32 %v5324, %v5601
  %v5611 = vadd.f32 %v5325, %v5560
  %v5612 = vadd.f32 %v5326, %v5562
  %v5613 = vadd.f32 %v5327, %v5603
  %v5614 = vadd.f32 %v5328, %v5605
  %v5615 = vxor.u32 %v5607, 2147483648
  %v5616 = vxor.u32 %v5611, 2147483648
  %v5617 = vmul.f32 %v5615, 1.442695
  %v5618 = vpow.pop %v5617
  %v5619 = vmul.f32 %v5616, 1.442695
  %v5620 = vpow.pop %v5619
  %v5621 = vadd.f32 %v5618, 1.0
  %v5622 = vadd.f32 %v5620, 1.0
  %v5623 = vrcp.pop %v5621
  %v5624 = vmul.f32 1.0, %v5623
  %v5625 = vrcp.pop %v5622
  %v5626 = vmul.f32 1.0, %v5625
  %v5627 = vxor.u32 %v5608, 2147483648
  %v5628 = vxor.u32 %v5612, 2147483648
  %v5629 = vmul.f32 %v5627, 1.442695
  %v5630 = vpow.pop %v5629
  %v5631 = vmul.f32 %v5628, 1.442695
  %v5632 = vpow.pop %v5631
  %v5633 = vadd.f32 %v5630, 1.0
  %v5634 = vadd.f32 %v5632, 1.0
  %v5635 = vrcp.pop %v5633
  %v5636 = vmul.f32 1.0, %v5635
  %v5637 = vrcp.pop %v5634
  %v5638 = vmul.f32 1.0, %v5637
  %v5639 = vtanh.pop %v5609
  %v5640 = vtanh.pop %v5613
  %v5641 = vxor.u32 %v5610, 2147483648
  %v5642 = vxor.u32 %v5614, 2147483648
  %v5643 = vmul.f32 %v5641, 1.442695
  %v5644 = vpow.pop %v5643
  %v5645 = vmul.f32 %v5642, 1.442695
  %v5646 = vpow.pop %v5645
  %v5647 = vadd.f32 %v5644, 1.0
  %v5648 = vadd.f32 %v5646, 1.0
  %v5649 = vrcp.pop %v5647
  %v5650 = vmul.f32 1.0, %v5649
  %v5651 = vrcp.pop %v5648
  %v5652 = vmul.f32 1.0, %v5651
  %v5653 = vmul.f32 %v5636, %v5305
  %v5654 = vmul.f32 %v5638, %v5306
  %v5655 = vmul.f32 %v5624, %v5639
  %v5656 = vmul.f32 %v5626, %v5640
  %v5657 = vadd.f32 %v5653, %v5655
  %v5658 = vadd.f32 %v5654, %v5656
  %v5659 = vtanh.pop %v5657
  %v5660 = vtanh.pop %v5658
  %v5661 = vmul.f32 %v5650, %v5659
  %v5662 = vmul.f32 %v5652, %v5660
  %v5663 = vpack.c.bf16 %v5662, %v5661
  %v5665 = vunpack.c.l.b16 %v5663
  %v5666 = vunpack.c.h.b16 %v5663
  %v5667 = vpack.c.b16 %v5665, %v5665
  %v5668 = vpack.c.b16 %v5666, %v5666
  %5671 = vst [vmem:[%s1966 + $0x4] sm:$0xf] %v5667
  %5672 = vst [vmem:[%s1966 + $0xc] sm:$0xf] %v5668
  %v5673 = vld [vmem:[%s1261] sm:$0xff]
  %v5674 = vld [vmem:[%s1261 + $0x8] sm:$0xff]
  %v5675 = vld [vmem:[%s1261 + $0x10] sm:$0xff]
  %v5676 = vld [vmem:[%s1261 + $0x18] sm:$0xff]
  %v5677 = vld [vmem:[%s1261 + $0x20] sm:$0xff]
  %v5678 = vld [vmem:[%s1261 + $0x28] sm:$0xff]
  %v5679 = vld [vmem:[%s1261 + $0x30] sm:$0xff]
  %v5680 = vld [vmem:[%s1261 + $0x38] sm:$0xff]
  %v5681 = vld [vmem:[%s5] sm:$0xff]
  %v5682 = vld [vmem:[%s5 + $0x8] sm:$0xff]
  %v5683 = vld [vmem:[%s5 + $0x10] sm:$0xff]
  %v5684 = vld [vmem:[%s5 + $0x18] sm:$0xff]
  %v5685 = vld [vmem:[%s5 + $0x20] sm:$0xff]
  %v5686 = vld [vmem:[%s5 + $0x28] sm:$0xff]
  %v5687 = vld [vmem:[%s5 + $0x30] sm:$0xff]
  %v5688 = vld [vmem:[%s5 + $0x38] sm:$0xff]
  %v5689 = vld [vmem:[%s5 + $0x40] sm:$0xff]
  %v5690 = vld [vmem:[%s5 + $0x48] sm:$0xff]
  %v5691 = vld [vmem:[%s5 + $0x50] sm:$0xff]
  %v5692 = vld [vmem:[%s5 + $0x58] sm:$0xff]
  %v5693 = vld [vmem:[%s5 + $0x60] sm:$0xff]
  %v5694 = vld [vmem:[%s5 + $0x68] sm:$0xff]
  %v5695 = vld [vmem:[%s5 + $0x70] sm:$0xff]
  %v5696 = vld [vmem:[%s5 + $0x78] sm:$0xff]
  %v5697 = vld [vmem:[%s5 + $0x80] sm:$0xff]
  %v5698 = vld [vmem:[%s5 + $0x88] sm:$0xff]
  %v5699 = vld [vmem:[%s5 + $0x90] sm:$0xff]
  %v5700 = vld [vmem:[%s5 + $0x98] sm:$0xff]
  %v5701 = vld [vmem:[%s5 + $0xa0] sm:$0xff]
  %v5702 = vld [vmem:[%s5 + $0xa8] sm:$0xff]
  %v5703 = vld [vmem:[%s5 + $0xb0] sm:$0xff]
  %v5704 = vld [vmem:[%s5 + $0xb8] sm:$0xff]
  %v5705 = vld [vmem:[%s5 + $0xc0] sm:$0xff]
  %v5706 = vld [vmem:[%s5 + $0xc8] sm:$0xff]
  %v5707 = vld [vmem:[%s5 + $0xd0] sm:$0xff]
  %v5708 = vld [vmem:[%s5 + $0xd8] sm:$0xff]
  %v5709 = vld [vmem:[%s5 + $0xe0] sm:$0xff]
  %v5710 = vld [vmem:[%s5 + $0xe8] sm:$0xff]
  %v5711 = vld [vmem:[%s5 + $0xf0] sm:$0xff]
  %v5712 = vld [vmem:[%s5 + $0xf8] sm:$0xff]
  %v5745 = vunpack.c.l.b16 %v5681
  %v5746 = vunpack.c.h.b16 %v5681
  %v5747 = vunpack.c.l.b16 %v5682
  %v5748 = vunpack.c.h.b16 %v5682
  %v5749 = vunpack.c.l.b16 %v5683
  %v5750 = vunpack.c.h.b16 %v5683
  %v5751 = vunpack.c.l.b16 %v5684
  %v5752 = vunpack.c.h.b16 %v5684
  %v5753 = vunpack.c.l.b16 %v5685
  %v5754 = vunpack.c.h.b16 %v5685
  %v5755 = vunpack.c.l.b16 %v5686
  %v5756 = vunpack.c.h.b16 %v5686
  %v5757 = vunpack.c.l.b16 %v5687
  %v5758 = vunpack.c.h.b16 %v5687
  %v5759 = vunpack.c.l.b16 %v5688
  %v5760 = vunpack.c.h.b16 %v5688
  %v5761 = vunpack.c.l.b16 %v5689
  %v5762 = vunpack.c.h.b16 %v5689
  %v5763 = vunpack.c.l.b16 %v5690
  %v5764 = vunpack.c.h.b16 %v5690
  %v5765 = vunpack.c.l.b16 %v5691
  %v5766 = vunpack.c.h.b16 %v5691
  %v5767 = vunpack.c.l.b16 %v5692
  %v5768 = vunpack.c.h.b16 %v5692
  %v5769 = vunpack.c.l.b16 %v5693
  %v5770 = vunpack.c.h.b16 %v5693
  %v5771 = vunpack.c.l.b16 %v5694
  %v5772 = vunpack.c.h.b16 %v5694
  %v5773 = vunpack.c.l.b16 %v5695
  %v5774 = vunpack.c.h.b16 %v5695
  %v5775 = vunpack.c.l.b16 %v5696
  %v5776 = vunpack.c.h.b16 %v5696
  %v5777 = vunpack.c.l.b16 %v5697
  %v5778 = vunpack.c.h.b16 %v5697
  %v5779 = vunpack.c.l.b16 %v5698
  %v5780 = vunpack.c.h.b16 %v5698
  %v5781 = vunpack.c.l.b16 %v5699
  %v5782 = vunpack.c.h.b16 %v5699
  %v5783 = vunpack.c.l.b16 %v5700
  %v5784 = vunpack.c.h.b16 %v5700
  %v5785 = vunpack.c.l.b16 %v5701
  %v5786 = vunpack.c.h.b16 %v5701
  %v5787 = vunpack.c.l.b16 %v5702
  %v5788 = vunpack.c.h.b16 %v5702
  %v5789 = vunpack.c.l.b16 %v5703
  %v5790 = vunpack.c.h.b16 %v5703
  %v5791 = vunpack.c.l.b16 %v5704
  %v5792 = vunpack.c.h.b16 %v5704
  %v5793 = vunpack.c.l.b16 %v5705
  %v5794 = vunpack.c.h.b16 %v5705
  %v5795 = vunpack.c.l.b16 %v5706
  %v5796 = vunpack.c.h.b16 %v5706
  %v5797 = vunpack.c.l.b16 %v5707
  %v5798 = vunpack.c.h.b16 %v5707
  %v5799 = vunpack.c.l.b16 %v5708
  %v5800 = vunpack.c.h.b16 %v5708
  %v5801 = vunpack.c.l.b16 %v5709
  %v5802 = vunpack.c.h.b16 %v5709
  %v5803 = vunpack.c.l.b16 %v5710
  %v5804 = vunpack.c.h.b16 %v5710
  %v5805 = vunpack.c.l.b16 %v5711
  %v5806 = vunpack.c.h.b16 %v5711
  %v5807 = vunpack.c.l.b16 %v5712
  %v5808 = vunpack.c.h.b16 %v5712
  %v5809 = vpack.c.b16 %v5749, %v5745
  %v5810 = vpack.c.b16 %v5750, %v5746
  %v5811 = vpack.c.b16 %v5751, %v5747
  %v5812 = vpack.c.b16 %v5752, %v5748
  %v5813 = vpack.c.b16 %v5757, %v5753
  %v5814 = vpack.c.b16 %v5758, %v5754
  %v5815 = vpack.c.b16 %v5759, %v5755
  %v5816 = vpack.c.b16 %v5760, %v5756
  %v5817 = vpack.c.b16 %v5765, %v5761
  %v5818 = vpack.c.b16 %v5766, %v5762
  %v5819 = vpack.c.b16 %v5767, %v5763
  %v5820 = vpack.c.b16 %v5768, %v5764
  %v5821 = vpack.c.b16 %v5773, %v5769
  %v5822 = vpack.c.b16 %v5774, %v5770
  %v5823 = vpack.c.b16 %v5775, %v5771
  %v5824 = vpack.c.b16 %v5776, %v5772
  %v5825 = vpack.c.b16 %v5781, %v5777
  %v5826 = vpack.c.b16 %v5782, %v5778
  %v5827 = vpack.c.b16 %v5783, %v5779
  %v5828 = vpack.c.b16 %v5784, %v5780
  %v5829 = vpack.c.b16 %v5789, %v5785
  %v5830 = vpack.c.b16 %v5790, %v5786
  %v5831 = vpack.c.b16 %v5791, %v5787
  %v5832 = vpack.c.b16 %v5792, %v5788
  %v5833 = vpack.c.b16 %v5797, %v5793
  %v5834 = vpack.c.b16 %v5798, %v5794
  %v5835 = vpack.c.b16 %v5799, %v5795
  %v5836 = vpack.c.b16 %v5800, %v5796
  %v5837 = vpack.c.b16 %v5805, %v5801
  %v5838 = vpack.c.b16 %v5806, %v5802
  %v5839 = vpack.c.b16 %v5807, %v5803
  %v5840 = vpack.c.b16 %v5808, %v5804
  %5873 = vmatprep.subr.bf16.mxu0 %v5810
  %5874 = vmatpush1.bf16.msra.mxu0 %v5809
  %5875 = vmatprep.subr.bf16.mxu0 %v5814
  %5876 = vmatpush1.bf16.msra.mxu0 %v5813
  %5877 = vmatprep.subr.bf16.mxu0 %v5818
  %5878 = vmatpush1.bf16.msra.mxu0 %v5817
  %5879 = vmatprep.subr.bf16.mxu0 %v5822
  %5880 = vmatpush1.bf16.msra.mxu0 %v5821
  %5881 = vmatprep.subr.bf16.mxu0 %v5826
  %5882 = vmatpush1.bf16.msra.mxu0 %v5825
  %5883 = vmatprep.subr.bf16.mxu0 %v5830
  %5884 = vmatpush1.bf16.msra.mxu0 %v5829
  %5885 = vmatprep.subr.bf16.mxu0 %v5834
  %5886 = vmatpush1.bf16.msra.mxu0 %v5833
  %5887 = vmatprep.subr.bf16.mxu0 %v5838
  %5888 = vmatpush1.bf16.msra.mxu0 %v5837
  %5889 = vmatprep.subr.bf16.mxu0 0
  %5890 = vmatpush1.bf16.msra.mxu0 0
  %5891 = vmatprep.subr.bf16.mxu0 0
  %5892 = vmatpush1.bf16.msra.mxu0 0
  %5893 = vmatprep.subr.bf16.mxu0 0
  %5894 = vmatpush1.bf16.msra.mxu0 0
  %5895 = vmatprep.subr.bf16.mxu0 0
  %5896 = vmatpush1.bf16.msra.mxu0 0
  %5897 = vmatprep.subr.bf16.mxu0 0
  %5898 = vmatpush1.bf16.msra.mxu0 0
  %5899 = vmatprep.subr.bf16.mxu0 0
  %5900 = vmatpush1.bf16.msra.mxu0 0
  %5901 = vmatprep.subr.bf16.mxu0 0
  %5902 = vmatpush1.bf16.msra.mxu0 0
  %5903 = vmatprep.subr.bf16.mxu0 0
  %5904 = vmatpush1.bf16.msra.mxu0 0
  %5905 = vmatprep.mubr.bf16.mxu0 0
  %5906 = vmatmul.mubr.bf16.gmra.mrb[0].mxu0 %v5663
  %v5907 = vpop.f32.mrb[0].mxu0
  %v5908 = vadd.f32 0.0, %v5907
  %v5909 = vpop.f32.mrb[0].mxu0
  %v5910 = vadd.f32 0.0, %v5909
  %v5911 = vpop.f32.mrb[0].mxu0
  %v5912 = vadd.f32 0.0, %v5911
  %v5913 = vpop.f32.mrb[0].mxu0
  %v5914 = vadd.f32 0.0, %v5913
  %5915 = vdwg.mxu0
  %5916 = vmatprep.subr.bf16.mxu0 %v5812
  %5917 = vmatpush1.bf16.msra.mxu0 %v5811
  %5918 = vmatprep.subr.bf16.mxu0 %v5816
  %5919 = vmatpush1.bf16.msra.mxu0 %v5815
  %5920 = vmatprep.subr.bf16.mxu0 %v5820
  %5921 = vmatpush1.bf16.msra.mxu0 %v5819
  %5922 = vmatprep.subr.bf16.mxu0 %v5824
  %5923 = vmatpush1.bf16.msra.mxu0 %v5823
  %5924 = vmatprep.subr.bf16.mxu0 %v5828
  %5925 = vmatpush1.bf16.msra.mxu0 %v5827
  %5926 = vmatprep.subr.bf16.mxu0 %v5832
  %5927 = vmatpush1.bf16.msra.mxu0 %v5831
  %5928 = vmatprep.subr.bf16.mxu0 %v5836
  %5929 = vmatpush1.bf16.msra.mxu0 %v5835
  %5930 = vmatprep.subr.bf16.mxu0 %v5840
  %5931 = vmatpush1.bf16.msra.mxu0 %v5839
  %5932 = vmatprep.subr.bf16.mxu0 0
  %5933 = vmatpush1.bf16.msra.mxu0 0
  %5934 = vmatprep.subr.bf16.mxu0 0
  %5935 = vmatpush1.bf16.msra.mxu0 0
  %5936 = vmatprep.subr.bf16.mxu0 0
  %5937 = vmatpush1.bf16.msra.mxu0 0
  %5938 = vmatprep.subr.bf16.mxu0 0
  %5939 = vmatpush1.bf16.msra.mxu0 0
  %5940 = vmatprep.subr.bf16.mxu0 0
  %5941 = vmatpush1.bf16.msra.mxu0 0
  %5942 = vmatprep.subr.bf16.mxu0 0
  %5943 = vmatpush1.bf16.msra.mxu0 0
  %5944 = vmatprep.subr.bf16.mxu0 0
  %5945 = vmatpush1.bf16.msra.mxu0 0
  %5946 = vmatprep.subr.bf16.mxu0 0
  %5947 = vmatpush1.bf16.msra.mxu0 0
  %5948 = vmatprep.mubr.bf16.mxu0 0
  %5949 = vmatmul.mubr.bf16.gmra.mrb[0].mxu0 %v5663
  %v5950 = vpop.f32.mrb[0].mxu0
  %v5951 = vadd.f32 0.0, %v5950
  %v5952 = vpop.f32.mrb[0].mxu0
  %v5953 = vadd.f32 0.0, %v5952
  %v5954 = vpop.f32.mrb[0].mxu0
  %v5955 = vadd.f32 0.0, %v5954
  %v5956 = vpop.f32.mrb[0].mxu0
  %v5957 = vadd.f32 0.0, %v5956
  %5958 = vdwg.mxu0
  %v5959 = vadd.f32 %v5673, %v5908
  %v5960 = vadd.f32 %v5674, %v5910
  %v5961 = vadd.f32 %v5675, %v5951
  %v5962 = vadd.f32 %v5676, %v5953
  %v5963 = vadd.f32 %v5677, %v5912
  %v5964 = vadd.f32 %v5678, %v5914
  %v5965 = vadd.f32 %v5679, %v5955
  %v5966 = vadd.f32 %v5680, %v5957
  %v5967 = vxor.u32 %v5959, 2147483648
  %v5968 = vxor.u32 %v5963, 2147483648
  %v5969 = vmul.f32 %v5967, 1.442695
  %v5970 = vpow.pop %v5969
  %v5971 = vmul.f32 %v5968, 1.442695
  %v5972 = vpow.pop %v5971
  %v5973 = vadd.f32 %v5970, 1.0
  %v5974 = vadd.f32 %v5972, 1.0
  %v5975 = vrcp.pop %v5973
  %v5976 = vmul.f32 1.0, %v5975
  %v5977 = vrcp.pop %v5974
  %v5978 = vmul.f32 1.0, %v5977
  %v5979 = vxor.u32 %v5960, 2147483648
  %v5980 = vxor.u32 %v5964, 2147483648
  %v5981 = vmul.f32 %v5979, 1.442695
  %v5982 = vpow.pop %v5981
  %v5983 = vmul.f32 %v5980, 1.442695
  %v5984 = vpow.pop %v5983
  %v5985 = vadd.f32 %v5982, 1.0
  %v5986 = vadd.f32 %v5984, 1.0
  %v5987 = vrcp.pop %v5985
  %v5988 = vmul.f32 1.0, %v5987
  %v5989 = vrcp.pop %v5986
  %v5990 = vmul.f32 1.0, %v5989
  %v5991 = vtanh.pop %v5961
  %v5992 = vtanh.pop %v5965
  %v5993 = vxor.u32 %v5962, 2147483648
  %v5994 = vxor.u32 %v5966, 2147483648
  %v5995 = vmul.f32 %v5993, 1.442695
  %v5996 = vpow.pop %v5995
  %v5997 = vmul.f32 %v5994, 1.442695
  %v5998 = vpow.pop %v5997
  %v5999 = vadd.f32 %v5996, 1.0
  %v6000 = vadd.f32 %v5998, 1.0
  %v6001 = vrcp.pop %v5999
  %v6002 = vmul.f32 1.0, %v6001
  %v6003 = vrcp.pop %v6000
  %v6004 = vmul.f32 1.0, %v6003
  %v6005 = vmul.f32 %v5988, %v5657
  %v6006 = vmul.f32 %v5990, %v5658
  %v6007 = vmul.f32 %v5976, %v5991
  %v6008 = vmul.f32 %v5978, %v5992
  %v6009 = vadd.f32 %v6005, %v6007
  %v6010 = vadd.f32 %v6006, %v6008
  %v6011 = vtanh.pop %v6009
  %v6012 = vtanh.pop %v6010
  %v6013 = vmul.f32 %v6002, %v6011
  %v6014 = vmul.f32 %v6004, %v6012
  %v6015 = vpack.c.bf16 %v6014, %v6013
  %v6017 = vunpack.c.l.b16 %v6015
  %v6018 = vunpack.c.h.b16 %v6015
  %v6019 = vpack.c.b16 %v6017, %v6017
  %v6020 = vpack.c.b16 %v6018, %v6018
  %6023 = vst [vmem:[%s1612 + $0x4] sm:$0xf] %v6019
  %6024 = vst [vmem:[%s1612 + $0xc] sm:$0xf] %v6020
  %v6025 = vld [vmem:[%s907] sm:$0xff]
  %v6026 = vld [vmem:[%s907 + $0x8] sm:$0xff]
  %v6027 = vld [vmem:[%s907 + $0x10] sm:$0xff]
  %v6028 = vld [vmem:[%s907 + $0x18] sm:$0xff]
  %v6029 = vld [vmem:[%s907 + $0x20] sm:$0xff]
  %v6030 = vld [vmem:[%s907 + $0x28] sm:$0xff]
  %v6031 = vld [vmem:[%s907 + $0x30] sm:$0xff]
  %v6032 = vld [vmem:[%s907 + $0x38] sm:$0xff]
  %v6033 = vld [vmem:[%s5] sm:$0xff]
  %v6034 = vld [vmem:[%s5 + $0x8] sm:$0xff]
  %v6035 = vld [vmem:[%s5 + $0x10] sm:$0xff]
  %v6036 = vld [vmem:[%s5 + $0x18] sm:$0xff]
  %v6037 = vld [vmem:[%s5 + $0x20] sm:$0xff]
  %v6038 = vld [vmem:[%s5 + $0x28] sm:$0xff]
  %v6039 = vld [vmem:[%s5 + $0x30] sm:$0xff]
  %v6040 = vld [vmem:[%s5 + $0x38] sm:$0xff]
  %v6041 = vld [vmem:[%s5 + $0x40] sm:$0xff]
  %v6042 = vld [vmem:[%s5 + $0x48] sm:$0xff]
  %v6043 = vld [vmem:[%s5 + $0x50] sm:$0xff]
  %v6044 = vld [vmem:[%s5 + $0x58] sm:$0xff]
  %v6045 = vld [vmem:[%s5 + $0x60] sm:$0xff]
  %v6046 = vld [vmem:[%s5 + $0x68] sm:$0xff]
  %v6047 = vld [vmem:[%s5 + $0x70] sm:$0xff]
  %v6048 = vld [vmem:[%s5 + $0x78] sm:$0xff]
  %v6049 = vld [vmem:[%s5 + $0x80] sm:$0xff]
  %v6050 = vld [vmem:[%s5 + $0x88] sm:$0xff]
  %v6051 = vld [vmem:[%s5 + $0x90] sm:$0xff]
  %v6052 = vld [vmem:[%s5 + $0x98] sm:$0xff]
  %v6053 = vld [vmem:[%s5 + $0xa0] sm:$0xff]
  %v6054 = vld [vmem:[%s5 + $0xa8] sm:$0xff]
  %v6055 = vld [vmem:[%s5 + $0xb0] sm:$0xff]
  %v6056 = vld [vmem:[%s5 + $0xb8] sm:$0xff]
  %v6057 = vld [vmem:[%s5 + $0xc0] sm:$0xff]
  %v6058 = vld [vmem:[%s5 + $0xc8] sm:$0xff]
  %v6059 = vld [vmem:[%s5 + $0xd0] sm:$0xff]
  %v6060 = vld [vmem:[%s5 + $0xd8] sm:$0xff]
  %v6061 = vld [vmem:[%s5 + $0xe0] sm:$0xff]
  %v6062 = vld [vmem:[%s5 + $0xe8] sm:$0xff]
  %v6063 = vld [vmem:[%s5 + $0xf0] sm:$0xff]
  %v6064 = vld [vmem:[%s5 + $0xf8] sm:$0xff]
  %v6097 = vunpack.c.l.b16 %v6033
  %v6098 = vunpack.c.h.b16 %v6033
  %v6099 = vunpack.c.l.b16 %v6034
  %v6100 = vunpack.c.h.b16 %v6034
  %v6101 = vunpack.c.l.b16 %v6035
  %v6102 = vunpack.c.h.b16 %v6035
  %v6103 = vunpack.c.l.b16 %v6036
  %v6104 = vunpack.c.h.b16 %v6036
  %v6105 = vunpack.c.l.b16 %v6037
  %v6106 = vunpack.c.h.b16 %v6037
  %v6107 = vunpack.c.l.b16 %v6038
  %v6108 = vunpack.c.h.b16 %v6038
  %v6109 = vunpack.c.l.b16 %v6039
  %v6110 = vunpack.c.h.b16 %v6039
  %v6111 = vunpack.c.l.b16 %v6040
  %v6112 = vunpack.c.h.b16 %v6040
  %v6113 = vunpack.c.l.b16 %v6041
  %v6114 = vunpack.c.h.b16 %v6041
  %v6115 = vunpack.c.l.b16 %v6042
  %v6116 = vunpack.c.h.b16 %v6042
  %v6117 = vunpack.c.l.b16 %v6043
  %v6118 = vunpack.c.h.b16 %v6043
  %v6119 = vunpack.c.l.b16 %v6044
  %v6120 = vunpack.c.h.b16 %v6044
  %v6121 = vunpack.c.l.b16 %v6045
  %v6122 = vunpack.c.h.b16 %v6045
  %v6123 = vunpack.c.l.b16 %v6046
  %v6124 = vunpack.c.h.b16 %v6046
  %v6125 = vunpack.c.l.b16 %v6047
  %v6126 = vunpack.c.h.b16 %v6047
  %v6127 = vunpack.c.l.b16 %v6048
  %v6128 = vunpack.c.h.b16 %v6048
  %v6129 = vunpack.c.l.b16 %v6049
  %v6130 = vunpack.c.h.b16 %v6049
  %v6131 = vunpack.c.l.b16 %v6050
  %v6132 = vunpack.c.h.b16 %v6050
  %v6133 = vunpack.c.l.b16 %v6051
  %v6134 = vunpack.c.h.b16 %v6051
  %v6135 = vunpack.c.l.b16 %v6052
  %v6136 = vunpack.c.h.b16 %v6052
  %v6137 = vunpack.c.l.b16 %v6053
  %v6138 = vunpack.c.h.b16 %v6053
  %v6139 = vunpack.c.l.b16 %v6054
  %v6140 = vunpack.c.h.b16 %v6054
  %v6141 = vunpack.c.l.b16 %v6055
  %v6142 = vunpack.c.h.b16 %v6055
  %v6143 = vunpack.c.l.b16 %v6056
  %v6144 = vunpack.c.h.b16 %v6056
  %v6145 = vunpack.c.l.b16 %v6057
  %v6146 = vunpack.c.h.b16 %v6057
  %v6147 = vunpack.c.l.b16 %v6058
  %v6148 = vunpack.c.h.b16 %v6058
  %v6149 = vunpack.c.l.b16 %v6059
  %v6150 = vunpack.c.h.b16 %v6059
  %v6151 = vunpack.c.l.b16 %v6060
  %v6152 = vunpack.c.h.b16 %v6060
  %v6153 = vunpack.c.l.b16 %v6061
  %v6154 = vunpack.c.h.b16 %v6061
  %v6155 = vunpack.c.l.b16 %v6062
  %v6156 = vunpack.c.h.b16 %v6062
  %v6157 = vunpack.c.l.b16 %v6063
  %v6158 = vunpack.c.h.b16 %v6063
  %v6159 = vunpack.c.l.b16 %v6064
  %v6160 = vunpack.c.h.b16 %v6064
  %v6161 = vpack.c.b16 %v6101, %v6097
  %v6162 = vpack.c.b16 %v6102, %v6098
  %v6163 = vpack.c.b16 %v6103, %v6099
  %v6164 = vpack.c.b16 %v6104, %v6100
  %v6165 = vpack.c.b16 %v6109, %v6105
  %v6166 = vpack.c.b16 %v6110, %v6106
  %v6167 = vpack.c.b16 %v6111, %v6107
  %v6168 = vpack.c.b16 %v6112, %v6108
  %v6169 = vpack.c.b16 %v6117, %v6113
  %v6170 = vpack.c.b16 %v6118, %v6114
  %v6171 = vpack.c.b16 %v6119, %v6115
  %v6172 = vpack.c.b16 %v6120, %v6116
  %v6173 = vpack.c.b16 %v6125, %v6121
  %v6174 = vpack.c.b16 %v6126, %v6122
  %v6175 = vpack.c.b16 %v6127, %v6123
  %v6176 = vpack.c.b16 %v6128, %v6124
  %v6177 = vpack.c.b16 %v6133, %v6129
  %v6178 = vpack.c.b16 %v6134, %v6130
  %v6179 = vpack.c.b16 %v6135, %v6131
  %v6180 = vpack.c.b16 %v6136, %v6132
  %v6181 = vpack.c.b16 %v6141, %v6137
  %v6182 = vpack.c.b16 %v6142, %v6138
  %v6183 = vpack.c.b16 %v6143, %v6139
  %v6184 = vpack.c.b16 %v6144, %v6140
  %v6185 = vpack.c.b16 %v6149, %v6145
  %v6186 = vpack.c.b16 %v6150, %v6146
  %v6187 = vpack.c.b16 %v6151, %v6147
  %v6188 = vpack.c.b16 %v6152, %v6148
  %v6189 = vpack.c.b16 %v6157, %v6153
  %v6190 = vpack.c.b16 %v6158, %v6154
  %v6191 = vpack.c.b16 %v6159, %v6155
  %v6192 = vpack.c.b16 %v6160, %v6156
  %6225 = vmatprep.subr.bf16.mxu0 %v6162
  %6226 = vmatpush1.bf16.msra.mxu0 %v6161
  %6227 = vmatprep.subr.bf16.mxu0 %v6166
  %6228 = vmatpush1.bf16.msra.mxu0 %v6165
  %6229 = vmatprep.subr.bf16.mxu0 %v6170
  %6230 = vmatpush1.bf16.msra.mxu0 %v6169
  %6231 = vmatprep.subr.bf16.mxu0 %v6174
  %6232 = vmatpush1.bf16.msra.mxu0 %v6173
  %6233 = vmatprep.subr.bf16.mxu0 %v6178
  %6234 = vmatpush1.bf16.msra.mxu0 %v6177
  %6235 = vmatprep.subr.bf16.mxu0 %v6182
  %6236 = vmatpush1.bf16.msra.mxu0 %v6181
  %6237 = vmatprep.subr.bf16.mxu0 %v6186
  %6238 = vmatpush1.bf16.msra.mxu0 %v6185
  %6239 = vmatprep.subr.bf16.mxu0 %v6190
  %6240 = vmatpush1.bf16.msra.mxu0 %v6189
  %6241 = vmatprep.subr.bf16.mxu0 0
  %6242 = vmatpush1.bf16.msra.mxu0 0
  %6243 = vmatprep.subr.bf16.mxu0 0
  %6244 = vmatpush1.bf16.msra.mxu0 0
  %6245 = vmatprep.subr.bf16.mxu0 0
  %6246 = vmatpush1.bf16.msra.mxu0 0
  %6247 = vmatprep.subr.bf16.mxu0 0
  %6248 = vmatpush1.bf16.msra.mxu0 0
  %6249 = vmatprep.subr.bf16.mxu0 0
  %6250 = vmatpush1.bf16.msra.mxu0 0
  %6251 = vmatprep.subr.bf16.mxu0 0
  %6252 = vmatpush1.bf16.msra.mxu0 0
  %6253 = vmatprep.subr.bf16.mxu0 0
  %6254 = vmatpush1.bf16.msra.mxu0 0
  %6255 = vmatprep.subr.bf16.mxu0 0
  %6256 = vmatpush1.bf16.msra.mxu0 0
  %6257 = vmatprep.mubr.bf16.mxu0 0
  %6258 = vmatmul.mubr.bf16.gmra.mrb[0].mxu0 %v6015
  %v6259 = vpop.f32.mrb[0].mxu0
  %v6260 = vadd.f32 0.0, %v6259
  %v6261 = vpop.f32.mrb[0].mxu0
  %v6262 = vadd.f32 0.0, %v6261
  %v6263 = vpop.f32.mrb[0].mxu0
  %v6264 = vadd.f32 0.0, %v6263
  %v6265 = vpop.f32.mrb[0].mxu0
  %v6266 = vadd.f32 0.0, %v6265
  %6267 = vdwg.mxu0
  %6268 = vmatprep.subr.bf16.mxu0 %v6164
  %6269 = vmatpush1.bf16.msra.mxu0 %v6163
  %6270 = vmatprep.subr.bf16.mxu0 %v6168
  %6271 = vmatpush1.bf16.msra.mxu0 %v6167
  %6272 = vmatprep.subr.bf16.mxu0 %v6172
  %6273 = vmatpush1.bf16.msra.mxu0 %v6171
  %6274 = vmatprep.subr.bf16.mxu0 %v6176
  %6275 = vmatpush1.bf16.msra.mxu0 %v6175
  %6276 = vmatprep.subr.bf16.mxu0 %v6180
  %6277 = vmatpush1.bf16.msra.mxu0 %v6179
  %6278 = vmatprep.subr.bf16.mxu0 %v6184
  %6279 = vmatpush1.bf16.msra.mxu0 %v6183
  %6280 = vmatprep.subr.bf16.mxu0 %v6188
  %6281 = vmatpush1.bf16.msra.mxu0 %v6187
  %6282 = vmatprep.subr.bf16.mxu0 %v6192
  %6283 = vmatpush1.bf16.msra.mxu0 %v6191
  %6284 = vmatprep.subr.bf16.mxu0 0
  %6285 = vmatpush1.bf16.msra.mxu0 0
  %6286 = vmatprep.subr.bf16.mxu0 0
  %6287 = vmatpush1.bf16.msra.mxu0 0
  %6288 = vmatprep.subr.bf16.mxu0 0
  %6289 = vmatpush1.bf16.msra.mxu0 0
  %6290 = vmatprep.subr.bf16.mxu0 0
  %6291 = vmatpush1.bf16.msra.mxu0 0
  %6292 = vmatprep.subr.bf16.mxu0 0
  %6293 = vmatpush1.bf16.msra.mxu0 0
  %6294 = vmatprep.subr.bf16.mxu0 0
  %6295 = vmatpush1.bf16.msra.mxu0 0
  %6296 = vmatprep.subr.bf16.mxu0 0
  %6297 = vmatpush1.bf16.msra.mxu0 0
  %6298 = vmatprep.subr.bf16.mxu0 0
  %6299 = vmatpush1.bf16.msra.mxu0 0
  %6300 = vmatprep.mubr.bf16.mxu0 0
  %6301 = vmatmul.mubr.bf16.gmra.mrb[0].mxu0 %v6015
  %v6302 = vpop.f32.mrb[0].mxu0
  %v6303 = vadd.f32 0.0, %v6302
  %v6304 = vpop.f32.mrb[0].mxu0
  %v6305 = vadd.f32 0.0, %v6304
  %v6306 = vpop.f32.mrb[0].mxu0
  %v6307 = vadd.f32 0.0, %v6306
  %v6308 = vpop.f32.mrb[0].mxu0
  %v6309 = vadd.f32 0.0, %v6308
  %6310 = vdwg.mxu0
  %v6311 = vadd.f32 %v6025, %v6260
  %v6312 = vadd.f32 %v6026, %v6262
  %v6313 = vadd.f32 %v6027, %v6303
  %v6314 = vadd.f32 %v6028, %v6305
  %v6315 = vadd.f32 %v6029, %v6264
  %v6316 = vadd.f32 %v6030, %v6266
  %v6317 = vadd.f32 %v6031, %v6307
  %v6318 = vadd.f32 %v6032, %v6309
  %v6319 = vxor.u32 %v6311, 2147483648
  %v6320 = vxor.u32 %v6315, 2147483648
  %v6321 = vmul.f32 %v6319, 1.442695
  %v6322 = vpow.pop %v6321
  %v6323 = vmul.f32 %v6320, 1.442695
  %v6324 = vpow.pop %v6323
  %v6325 = vadd.f32 %v6322, 1.0
  %v6326 = vadd.f32 %v6324, 1.0
  %v6327 = vrcp.pop %v6325
  %v6328 = vmul.f32 1.0, %v6327
  %v6329 = vrcp.pop %v6326
  %v6330 = vmul.f32 1.0, %v6329
  %v6331 = vxor.u32 %v6312, 2147483648
  %v6332 = vxor.u32 %v6316, 2147483648
  %v6333 = vmul.f32 %v6331, 1.442695
  %v6334 = vpow.pop %v6333
  %v6335 = vmul.f32 %v6332, 1.442695
  %v6336 = vpow.pop %v6335
  %v6337 = vadd.f32 %v6334, 1.0
  %v6338 = vadd.f32 %v6336, 1.0
  %v6339 = vrcp.pop %v6337
  %v6340 = vmul.f32 1.0, %v6339
  %v6341 = vrcp.pop %v6338
  %v6342 = vmul.f32 1.0, %v6341
  %v6343 = vtanh.pop %v6313
  %v6344 = vtanh.pop %v6317
  %v6345 = vxor.u32 %v6314, 2147483648
  %v6346 = vxor.u32 %v6318, 2147483648
  %v6347 = vmul.f32 %v6345, 1.442695
  %v6348 = vpow.pop %v6347
  %v6349 = vmul.f32 %v6346, 1.442695
  %v6350 = vpow.pop %v6349
  %v6351 = vadd.f32 %v6348, 1.0
  %v6352 = vadd.f32 %v6350, 1.0
  %v6353 = vrcp.pop %v6351
  %v6354 = vmul.f32 1.0, %v6353
  %v6355 = vrcp.pop %v6352
  %v6356 = vmul.f32 1.0, %v6355
  %v6357 = vmul.f32 %v6340, %v6009
  %v6358 = vmul.f32 %v6342, %v6010
  %v6359 = vmul.f32 %v6328, %v6343
  %v6360 = vmul.f32 %v6330, %v6344
  %v6361 = vadd.f32 %v6357, %v6359
  %v6362 = vadd.f32 %v6358, %v6360
  %v6363 = vtanh.pop %v6361
  %v6364 = vtanh.pop %v6362
  %v6365 = vmul.f32 %v6354, %v6363
  %v6366 = vmul.f32 %v6356, %v6364
  %v6367 = vpack.c.bf16 %v6366, %v6365
  %v6369 = vunpack.c.l.b16 %v6367
  %v6370 = vunpack.c.h.b16 %v6367
  %v6371 = vpack.c.b16 %v6369, %v6369
  %v6372 = vpack.c.b16 %v6370, %v6370
  %6375 = vst [vmem:[%s1258 + $0x4] sm:$0xf] %v6371
  %6376 = vst [vmem:[%s1258 + $0xc] sm:$0xf] %v6372
  %v6377 = vld [vmem:[#allocation2] sm:$0xff]
  %v6378 = vld [vmem:[#allocation2 + $0x8] sm:$0xff]
  %v6379 = vld [vmem:[#allocation2 + $0x10] sm:$0xff]
  %v6380 = vld [vmem:[#allocation2 + $0x18] sm:$0xff]
  %v6381 = vld [vmem:[#allocation2 + $0x20] sm:$0xff]
  %v6382 = vld [vmem:[#allocation2 + $0x28] sm:$0xff]
  %v6383 = vld [vmem:[#allocation2 + $0x30] sm:$0xff]
  %v6384 = vld [vmem:[#allocation2 + $0x38] sm:$0xff]
  %v6385 = vld [vmem:[%s5] sm:$0xff]
  %v6386 = vld [vmem:[%s5 + $0x8] sm:$0xff]
  %v6387 = vld [vmem:[%s5 + $0x10] sm:$0xff]
  %v6388 = vld [vmem:[%s5 + $0x18] sm:$0xff]
  %v6389 = vld [vmem:[%s5 + $0x20] sm:$0xff]
  %v6390 = vld [vmem:[%s5 + $0x28] sm:$0xff]
  %v6391 = vld [vmem:[%s5 + $0x30] sm:$0xff]
  %v6392 = vld [vmem:[%s5 + $0x38] sm:$0xff]
  %v6393 = vld [vmem:[%s5 + $0x40] sm:$0xff]
  %v6394 = vld [vmem:[%s5 + $0x48] sm:$0xff]
  %v6395 = vld [vmem:[%s5 + $0x50] sm:$0xff]
  %v6396 = vld [vmem:[%s5 + $0x58] sm:$0xff]
  %v6397 = vld [vmem:[%s5 + $0x60] sm:$0xff]
  %v6398 = vld [vmem:[%s5 + $0x68] sm:$0xff]
  %v6399 = vld [vmem:[%s5 + $0x70] sm:$0xff]
  %v6400 = vld [vmem:[%s5 + $0x78] sm:$0xff]
  %v6401 = vld [vmem:[%s5 + $0x80] sm:$0xff]
  %v6402 = vld [vmem:[%s5 + $0x88] sm:$0xff]
  %v6403 = vld [vmem:[%s5 + $0x90] sm:$0xff]
  %v6404 = vld [vmem:[%s5 + $0x98] sm:$0xff]
  %v6405 = vld [vmem:[%s5 + $0xa0] sm:$0xff]
  %v6406 = vld [vmem:[%s5 + $0xa8] sm:$0xff]
  %v6407 = vld [vmem:[%s5 + $0xb0] sm:$0xff]
  %v6408 = vld [vmem:[%s5 + $0xb8] sm:$0xff]
  %v6409 = vld [vmem:[%s5 + $0xc0] sm:$0xff]
  %v6410 = vld [vmem:[%s5 + $0xc8] sm:$0xff]
  %v6411 = vld [vmem:[%s5 + $0xd0] sm:$0xff]
  %v6412 = vld [vmem:[%s5 + $0xd8] sm:$0xff]
  %v6413 = vld [vmem:[%s5 + $0xe0] sm:$0xff]
  %v6414 = vld [vmem:[%s5 + $0xe8] sm:$0xff]
  %v6415 = vld [vmem:[%s5 + $0xf0] sm:$0xff]
  %v6416 = vld [vmem:[%s5 + $0xf8] sm:$0xff]
  %v6449 = vunpack.c.l.b16 %v6385
  %v6450 = vunpack.c.h.b16 %v6385
  %v6451 = vunpack.c.l.b16 %v6386
  %v6452 = vunpack.c.h.b16 %v6386
  %v6453 = vunpack.c.l.b16 %v6387
  %v6454 = vunpack.c.h.b16 %v6387
  %v6455 = vunpack.c.l.b16 %v6388
  %v6456 = vunpack.c.h.b16 %v6388
  %v6457 = vunpack.c.l.b16 %v6389
  %v6458 = vunpack.c.h.b16 %v6389
  %v6459 = vunpack.c.l.b16 %v6390
  %v6460 = vunpack.c.h.b16 %v6390
  %v6461 = vunpack.c.l.b16 %v6391
  %v6462 = vunpack.c.h.b16 %v6391
  %v6463 = vunpack.c.l.b16 %v6392
  %v6464 = vunpack.c.h.b16 %v6392
  %v6465 = vunpack.c.l.b16 %v6393
  %v6466 = vunpack.c.h.b16 %v6393
  %v6467 = vunpack.c.l.b16 %v6394
  %v6468 = vunpack.c.h.b16 %v6394
  %v6469 = vunpack.c.l.b16 %v6395
  %v6470 = vunpack.c.h.b16 %v6395
  %v6471 = vunpack.c.l.b16 %v6396
  %v6472 = vunpack.c.h.b16 %v6396
  %v6473 = vunpack.c.l.b16 %v6397
  %v6474 = vunpack.c.h.b16 %v6397
  %v6475 = vunpack.c.l.b16 %v6398
  %v6476 = vunpack.c.h.b16 %v6398
  %v6477 = vunpack.c.l.b16 %v6399
  %v6478 = vunpack.c.h.b16 %v6399
  %v6479 = vunpack.c.l.b16 %v6400
  %v6480 = vunpack.c.h.b16 %v6400
  %v6481 = vunpack.c.l.b16 %v6401
  %v6482 = vunpack.c.h.b16 %v6401
  %v6483 = vunpack.c.l.b16 %v6402
  %v6484 = vunpack.c.h.b16 %v6402
  %v6485 = vunpack.c.l.b16 %v6403
  %v6486 = vunpack.c.h.b16 %v6403
  %v6487 = vunpack.c.l.b16 %v6404
  %v6488 = vunpack.c.h.b16 %v6404
  %v6489 = vunpack.c.l.b16 %v6405
  %v6490 = vunpack.c.h.b16 %v6405
  %v6491 = vunpack.c.l.b16 %v6406
  %v6492 = vunpack.c.h.b16 %v6406
  %v6493 = vunpack.c.l.b16 %v6407
  %v6494 = vunpack.c.h.b16 %v6407
  %v6495 = vunpack.c.l.b16 %v6408
  %v6496 = vunpack.c.h.b16 %v6408
  %v6497 = vunpack.c.l.b16 %v6409
  %v6498 = vunpack.c.h.b16 %v6409
  %v6499 = vunpack.c.l.b16 %v6410
  %v6500 = vunpack.c.h.b16 %v6410
  %v6501 = vunpack.c.l.b16 %v6411
  %v6502 = vunpack.c.h.b16 %v6411
  %v6503 = vunpack.c.l.b16 %v6412
  %v6504 = vunpack.c.h.b16 %v6412
  %v6505 = vunpack.c.l.b16 %v6413
  %v6506 = vunpack.c.h.b16 %v6413
  %v6507 = vunpack.c.l.b16 %v6414
  %v6508 = vunpack.c.h.b16 %v6414
  %v6509 = vunpack.c.l.b16 %v6415
  %v6510 = vunpack.c.h.b16 %v6415
  %v6511 = vunpack.c.l.b16 %v6416
  %v6512 = vunpack.c.h.b16 %v6416
  %v6513 = vpack.c.b16 %v6453, %v6449
  %v6514 = vpack.c.b16 %v6454, %v6450
  %v6515 = vpack.c.b16 %v6455, %v6451
  %v6516 = vpack.c.b16 %v6456, %v6452
  %v6517 = vpack.c.b16 %v6461, %v6457
  %v6518 = vpack.c.b16 %v6462, %v6458
  %v6519 = vpack.c.b16 %v6463, %v6459
  %v6520 = vpack.c.b16 %v6464, %v6460
  %v6521 = vpack.c.b16 %v6469, %v6465
  %v6522 = vpack.c.b16 %v6470, %v6466
  %v6523 = vpack.c.b16 %v6471, %v6467
  %v6524 = vpack.c.b16 %v6472, %v6468
  %v6525 = vpack.c.b16 %v6477, %v6473
  %v6526 = vpack.c.b16 %v6478, %v6474
  %v6527 = vpack.c.b16 %v6479, %v6475
  %v6528 = vpack.c.b16 %v6480, %v6476
  %v6529 = vpack.c.b16 %v6485, %v6481
  %v6530 = vpack.c.b16 %v6486, %v6482
  %v6531 = vpack.c.b16 %v6487, %v6483
  %v6532 = vpack.c.b16 %v6488, %v6484
  %v6533 = vpack.c.b16 %v6493, %v6489
  %v6534 = vpack.c.b16 %v6494, %v6490
  %v6535 = vpack.c.b16 %v6495, %v6491
  %v6536 = vpack.c.b16 %v6496, %v6492
  %v6537 = vpack.c.b16 %v6501, %v6497
  %v6538 = vpack.c.b16 %v6502, %v6498
  %v6539 = vpack.c.b16 %v6503, %v6499
  %v6540 = vpack.c.b16 %v6504, %v6500
  %v6541 = vpack.c.b16 %v6509, %v6505
  %v6542 = vpack.c.b16 %v6510, %v6506
  %v6543 = vpack.c.b16 %v6511, %v6507
  %v6544 = vpack.c.b16 %v6512, %v6508
  %6577 = vmatprep.subr.bf16.mxu0 %v6514
  %6578 = vmatpush1.bf16.msra.mxu0 %v6513
  %6579 = vmatprep.subr.bf16.mxu0 %v6518
  %6580 = vmatpush1.bf16.msra.mxu0 %v6517
  %6581 = vmatprep.subr.bf16.mxu0 %v6522
  %6582 = vmatpush1.bf16.msra.mxu0 %v6521
  %6583 = vmatprep.subr.bf16.mxu0 %v6526
  %6584 = vmatpush1.bf16.msra.mxu0 %v6525
  %6585 = vmatprep.subr.bf16.mxu0 %v6530
  %6586 = vmatpush1.bf16.msra.mxu0 %v6529
  %6587 = vmatprep.subr.bf16.mxu0 %v6534
  %6588 = vmatpush1.bf16.msra.mxu0 %v6533
  %6589 = vmatprep.subr.bf16.mxu0 %v6538
  %6590 = vmatpush1.bf16.msra.mxu0 %v6537
  %6591 = vmatprep.subr.bf16.mxu0 %v6542
  %6592 = vmatpush1.bf16.msra.mxu0 %v6541
  %6593 = vmatprep.subr.bf16.mxu0 0
  %6594 = vmatpush1.bf16.msra.mxu0 0
  %6595 = vmatprep.subr.bf16.mxu0 0
  %6596 = vmatpush1.bf16.msra.mxu0 0
  %6597 = vmatprep.subr.bf16.mxu0 0
  %6598 = vmatpush1.bf16.msra.mxu0 0
  %6599 = vmatprep.subr.bf16.mxu0 0
  %6600 = vmatpush1.bf16.msra.mxu0 0
  %6601 = vmatprep.subr.bf16.mxu0 0
  %6602 = vmatpush1.bf16.msra.mxu0 0
  %6603 = vmatprep.subr.bf16.mxu0 0
  %6604 = vmatpush1.bf16.msra.mxu0 0
  %6605 = vmatprep.subr.bf16.mxu0 0
  %6606 = vmatpush1.bf16.msra.mxu0 0
  %6607 = vmatprep.subr.bf16.mxu0 0
  %6608 = vmatpush1.bf16.msra.mxu0 0
  %6609 = vmatprep.mubr.bf16.mxu0 0
  %6610 = vmatmul.mubr.bf16.gmra.mrb[0].mxu0 %v6367
  %v6611 = vpop.f32.mrb[0].mxu0
  %v6612 = vadd.f32 0.0, %v6611
  %v6613 = vpop.f32.mrb[0].mxu0
  %v6614 = vadd.f32 0.0, %v6613
  %v6615 = vpop.f32.mrb[0].mxu0
  %v6616 = vadd.f32 0.0, %v6615
  %v6617 = vpop.f32.mrb[0].mxu0
  %v6618 = vadd.f32 0.0, %v6617
  %6619 = vdwg.mxu0
  %6620 = vmatprep.subr.bf16.mxu0 %v6516
  %6621 = vmatpush1.bf16.msra.mxu0 %v6515
  %6622 = vmatprep.subr.bf16.mxu0 %v6520
  %6623 = vmatpush1.bf16.msra.mxu0 %v6519
  %6624 = vmatprep.subr.bf16.mxu0 %v6524
  %6625 = vmatpush1.bf16.msra.mxu0 %v6523
  %6626 = vmatprep.subr.bf16.mxu0 %v6528
  %6627 = vmatpush1.bf16.msra.mxu0 %v6527
  %6628 = vmatprep.subr.bf16.mxu0 %v6532
  %6629 = vmatpush1.bf16.msra.mxu0 %v6531
  %6630 = vmatprep.subr.bf16.mxu0 %v6536
  %6631 = vmatpush1.bf16.msra.mxu0 %v6535
  %6632 = vmatprep.subr.bf16.mxu0 %v6540
  %6633 = vmatpush1.bf16.msra.mxu0 %v6539
  %6634 = vmatprep.subr.bf16.mxu0 %v6544
  %6635 = vmatpush1.bf16.msra.mxu0 %v6543
  %6636 = vmatprep.subr.bf16.mxu0 0
  %6637 = vmatpush1.bf16.msra.mxu0 0
  %6638 = vmatprep.subr.bf16.mxu0 0
  %6639 = vmatpush1.bf16.msra.mxu0 0
  %6640 = vmatprep.subr.bf16.mxu0 0
  %6641 = vmatpush1.bf16.msra.mxu0 0
  %6642 = vmatprep.subr.bf16.mxu0 0
  %6643 = vmatpush1.bf16.msra.mxu0 0
  %6644 = vmatprep.subr.bf16.mxu0 0
  %6645 = vmatpush1.bf16.msra.mxu0 0
  %6646 = vmatprep.subr.bf16.mxu0 0
  %6647 = vmatpush1.bf16.msra.mxu0 0
  %6648 = vmatprep.subr.bf16.mxu0 0
  %6649 = vmatpush1.bf16.msra.mxu0 0
  %6650 = vmatprep.subr.bf16.mxu0 0
  %6651 = vmatpush1.bf16.msra.mxu0 0
  %6652 = vmatprep.mubr.bf16.mxu0 0
  %6653 = vmatmul.mubr.bf16.gmra.mrb[0].mxu0 %v6367
  %v6654 = vpop.f32.mrb[0].mxu0
  %v6655 = vadd.f32 0.0, %v6654
  %v6656 = vpop.f32.mrb[0].mxu0
  %v6657 = vadd.f32 0.0, %v6656
  %v6658 = vpop.f32.mrb[0].mxu0
  %v6659 = vadd.f32 0.0, %v6658
  %v6660 = vpop.f32.mrb[0].mxu0
  %v6661 = vadd.f32 0.0, %v6660
  %6662 = vdwg.mxu0
  %v6663 = vadd.f32 %v6377, %v6612
  %v6664 = vadd.f32 %v6378, %v6614
  %v6665 = vadd.f32 %v6379, %v6655
  %v6666 = vadd.f32 %v6380, %v6657
  %v6667 = vadd.f32 %v6381, %v6616
  %v6668 = vadd.f32 %v6382, %v6618
  %v6669 = vadd.f32 %v6383, %v6659
  %v6670 = vadd.f32 %v6384, %v6661
  %v6671 = vxor.u32 %v6663, 2147483648
  %v6672 = vxor.u32 %v6667, 2147483648
  %v6673 = vmul.f32 %v6671, 1.442695
  %v6674 = vpow.pop %v6673
  %v6675 = vmul.f32 %v6672, 1.442695
  %v6676 = vpow.pop %v6675
  %v6677 = vadd.f32 %v6674, 1.0
  %v6678 = vadd.f32 %v6676, 1.0
  %v6679 = vrcp.pop %v6677
  %v6680 = vmul.f32 1.0, %v6679
  %v6681 = vrcp.pop %v6678
  %v6682 = vmul.f32 1.0, %v6681
  %v6683 = vxor.u32 %v6664, 2147483648
  %v6684 = vxor.u32 %v6668, 2147483648
  %v6685 = vmul.f32 %v6683, 1.442695
  %v6686 = vpow.pop %v6685
  %v6687 = vmul.f32 %v6684, 1.442695
  %v6688 = vpow.pop %v6687
  %v6689 = vadd.f32 %v6686, 1.0
  %v6690 = vadd.f32 %v6688, 1.0
  %v6691 = vrcp.pop %v6689
  %v6692 = vmul.f32 1.0, %v6691
  %v6693 = vrcp.pop %v6690
  %v6694 = vmul.f32 1.0, %v6693
  %v6695 = vtanh.pop %v6665
  %v6696 = vtanh.pop %v6669
  %v6697 = vxor.u32 %v6666, 2147483648
  %v6698 = vxor.u32 %v6670, 2147483648
  %v6699 = vmul.f32 %v6697, 1.442695
  %v6700 = vpow.pop %v6699
  %v6701 = vmul.f32 %v6698, 1.442695
  %v6702 = vpow.pop %v6701
  %v6703 = vadd.f32 %v6700, 1.0
  %v6704 = vadd.f32 %v6702, 1.0
  %v6705 = vrcp.pop %v6703
  %v6706 = vmul.f32 1.0, %v6705
  %v6707 = vrcp.pop %v6704
  %v6708 = vmul.f32 1.0, %v6707
  %v6709 = vmul.f32 %v6692, %v6361
  %v6710 = vmul.f32 %v6694, %v6362
  %v6711 = vmul.f32 %v6680, %v6695
  %v6712 = vmul.f32 %v6682, %v6696
  %v6713 = vadd.f32 %v6709, %v6711
  %v6714 = vadd.f32 %v6710, %v6712
  %v6715 = vtanh.pop %v6713
  %v6716 = vtanh.pop %v6714
  %v6717 = vmul.f32 %v6706, %v6715
  %v6718 = vmul.f32 %v6708, %v6716
  %v6719 = vpack.c.bf16 %v6718, %v6717
  %v6721 = vunpack.c.l.b16 %v6719
  %v6722 = vunpack.c.h.b16 %v6719
  %v6723 = vpack.c.b16 %v6721, %v6721
  %v6724 = vpack.c.b16 %v6722, %v6722
  %6727 = vst [vmem:[%s7 + $0x4] sm:$0xf] %v6723
  %6728 = vst [vmem:[%s7 + $0xc] sm:$0xf] %v6724
  // Predicated region
  $region30: #{lstm_classifier_forward.2} parent=0 // pred_check
    _
  $region31: #{lstm_classifier_forward.2} parent=0 // pred_check_branch
    %6730 = sbr.rel (0) target = $region33
  $region32: #{lstm_classifier_forward.2} parent=0 // pred_region
    _
  $region33: #{lstm_classifier_forward.2} parent=0 // pred_fallthru
    _
  // Predicated region
  $region34: #{lstm_classifier_forward.2} parent=0 // pred_check
    _
  $region35: #{lstm_classifier_forward.2} parent=0 // pred_check_branch
    %6732 = sbr.rel (0) target = $region37
  $region36: #{lstm_classifier_forward.2} parent=0 // pred_region
    _
  $region37: #{lstm_classifier_forward.2} parent=0 // pred_fallthru
    _

</llo_original>
